<compile_context>
chip_gen: v5e
topology: v5e:2x2
jax: 0.10.0
libtpu: 0.0.40
codegen_flags: <defaults>
</compile_context>

<pallas_src>
import functools

import numpy as np
import jax
import jax.numpy as jnp
from jax import lax
from jax.experimental import pallas as pl
from jax.experimental.pallas import tpu as pltpu


_IMAGENET_MEAN = jnp.array([0.485, 0.456, 0.406], jnp.float32)
_IMAGENET_STD = jnp.array([0.229, 0.224, 0.225], jnp.float32)

STEM_CIN_PAD = 8      # image channels padded 3 -> 8 for the stem patch matrix
STEM_K_PAD = 128      # stem im2col contraction 3*3*8 = 72 padded to 128 lanes

# Toy backbone channel plan (stand-in for WRN-50-2 + OCE + decoder); channels
# are kept at their REAL widths everywhere (no 128-wide contraction padding).
C_STEM, C1, C2, C3 = 8, 16, 32, 64

_LAYERS = ("stem", "l1", "l2", "l3", "bn_f1a", "bn_f1b", "bn_f2", "bn_fuse",
           "de3", "de2", "de1", "out3", "out2", "out1")
_CONSTS = ("t_l1", "t_dn1", "t_dn2", "t_de3", "t_de2", "t_de1",
           "u_3_2", "u_2_1", "m1", "m2", "m3")
_N_IN = 1 + len(_LAYERS) + 1 + len(_CONSTS)


# ----------------------------------------------------------------------------
# Precomputed constant operators (built once, outside the kernel)
# ----------------------------------------------------------------------------
def _tap_matrices(h_in, w_in, stride):
    """Nine 0/1 gather matrices T[t]: [h_out*w_out, h_in*w_in], one per tap of a
    3x3 / pad-1 / stride-s conv on flattened spatial (zero rows = padding).
    Lets every conv do its im2col IN-KERNEL as plain matmuls."""
    h_out = (h_in - 1) // stride + 1
    w_out = (w_in - 1) // stride + 1
    t_mat = np.zeros((9, h_out * w_out, h_in * w_in), np.float32)
    for di in range(3):
        for dj in range(3):
            t = di * 3 + dj
            for oy in range(h_out):
                iy = stride * oy + di - 1
                if iy < 0 or iy >= h_in:
                    continue
                for ox in range(w_out):
                    ix = stride * ox + dj - 1
                    if 0 <= ix < w_in:
                        t_mat[t, oy * w_out + ox, iy * w_in + ix] = 1.0
    return jnp.asarray(t_mat, jnp.bfloat16)


def _nearest_up2_matrix(h, w):
    """[(2h)*(2w), h*w] nearest-neighbour 2x upsample operator (flattened)."""
    u = np.zeros((4 * h * w, h * w), np.float32)
    for oy in range(2 * h):
        for ox in range(2 * w):
            u[oy * (2 * w) + ox, (oy // 2) * w + (ox // 2)] = 1.0
    return jnp.asarray(u, jnp.bfloat16)


def _interp_matrix(src, dst):
    """1-D bilinear (align_corners=True) interpolation matrix [dst, src]."""
    m = np.zeros((dst, src), np.float32)
    if src == 1:
        m[:, 0] = 1.0
        return m
    if dst == 1:
        m[0, 0] = 1.0
        return m
    pos = np.arange(dst, dtype=np.float64) * (src - 1) / (dst - 1)
    lo = np.floor(pos).astype(np.int64)
    hi = np.minimum(lo + 1, src - 1)
    frac = (pos - lo).astype(np.float32)
    m[np.arange(dst), lo] += 1.0 - frac
    m[np.arange(dst), hi] += frac
    return m


def _interp_kron(h, w, big_h, big_w):
    """[h*w, H*W] bilinear upsample operator on flattened spatial, bf16.
    TODO(synk): matches F.interpolate(mode='bilinear', align_corners=True)."""
    wr = _interp_matrix(h, big_h)
    wc = _interp_matrix(w, big_w)
    k = np.einsum("Yy,Xx->yxYX", wr, wc).reshape(h * w, big_h * big_w)
    return jnp.asarray(k, jnp.bfloat16)


def build_constants(input_size):
    """All data-independent operators so the kernel body is pure matmul/VPU work."""
    big_h, big_w = input_size
    assert big_h % 16 == 0 and big_w % 16 == 0
    h0, w0 = big_h // 2, big_w // 2     # stem output resolution
    h1, w1 = big_h // 4, big_w // 4     # scale 1 (f1 / d1 / d1b)
    h2, w2 = big_h // 8, big_w // 8     # scale 2
    h3, w3 = big_h // 16, big_w // 16   # scale 3 / bottleneck / decoder input
    return {
        "t_l1": _tap_matrices(h0, w0, 2),
        "t_dn1": _tap_matrices(h1, w1, 2),
        "t_dn2": _tap_matrices(h2, w2, 2),
        "t_de3": _tap_matrices(h3, w3, 1),
        "t_de2": _tap_matrices(h2, w2, 1),
        "t_de1": _tap_matrices(h1, w1, 1),
        "u_3_2": _nearest_up2_matrix(h3, w3),
        "u_2_1": _nearest_up2_matrix(h2, w2),
        "m1": _interp_kron(h1, w1, big_h, big_w),
        "m2": _interp_kron(h2, w2, big_h, big_w),
        "m3": _interp_kron(h3, w3, big_h, big_w),
    }


# ----------------------------------------------------------------------------
# Deterministic parameter init + one-time weight preparation (fold/cast)
# ----------------------------------------------------------------------------
def _init_block(key, cout, cin, k):
    kw_, kg, kb = jax.random.split(key, 3)
    w = jax.random.normal(kw_, (cout, cin, k, k), jnp.float32) * jnp.sqrt(
        2.0 / (cin * k * k))
    gamma = 1.0 + 0.1 * jax.random.normal(kg, (cout,), jnp.float32)
    beta = 0.1 * jax.random.normal(kb, (cout,), jnp.float32)
    return (w, gamma, beta)


def _fold_bn(raw):
    # TODO(synk): with pretrained BN running stats the fold must also include
    #             mean/var/eps; the toy blocks only carry gamma/beta.
    w, gamma, beta = raw
    return w * gamma[:, None, None, None], beta


def _prep_taps(raw):
    """3x3 conv weight -> per-tap [9, cin, cout] bf16 (real channel counts)."""
    wf, beta = _fold_bn(raw)
    cout, cin, kh, kw = wf.shape
    wt = jnp.transpose(wf, (2, 3, 1, 0)).reshape(kh * kw, cin, cout)
    return wt.astype(jnp.bfloat16), beta.astype(jnp.float32)


def _prep_1x1(raw):
    wf, beta = _fold_bn(raw)
    return (jnp.transpose(wf[:, :, 0, 0], (1, 0)).astype(jnp.bfloat16),
            beta.astype(jnp.float32))


def _prep_stem(raw):
    """Stem 3x3/s2 conv as an im2col matmul weight [128, 8]: ImageNet 1/std is
    folded per input channel, Cin padded 3->8, K = 72 padded to 128 lanes."""
    wf, beta = _fold_bn(raw)
    wf = wf * (1.0 / _IMAGENET_STD)[None, :, None, None]
    cout, cin, kh, kw = wf.shape
    wf = jnp.pad(wf, ((0, 0), (0, STEM_CIN_PAD - cin), (0, 0), (0, 0)))
    wm = jnp.transpose(wf, (2, 3, 1, 0)).reshape(kh * kw * STEM_CIN_PAD, cout)
    wm = jnp.pad(wm, ((0, STEM_K_PAD - wm.shape[0]), (0, 0)))
    return wm.astype(jnp.bfloat16), beta.astype(jnp.float32)


def init_params(key):
    keys = jax.random.split(key, 14)
    raw = {
        "stem": _init_block(keys[0], C_STEM, 3, 3),
        "l1": _init_block(keys[1], C1, C_STEM, 3),
        "l2": _init_block(keys[2], C2, C1, 3),
        "l3": _init_block(keys[3], C3, C2, 3),
        "bn_f1a": _init_block(keys[4], C2, C1, 3),
        "bn_f1b": _init_block(keys[5], C3, C2, 3),
        "bn_f2": _init_block(keys[6], C3, C2, 3),
        "bn_fuse": _init_block(keys[7], C3, 3 * C3, 1),
        "de3": _init_block(keys[8], C3, C3, 3),
        "de2": _init_block(keys[9], C2, C3, 3),
        "de1": _init_block(keys[10], C1, C2, 3),
        "out3": _init_block(keys[11], C3, C3, 1),
        "out2": _init_block(keys[12], C2, C2, 1),
        "out1": _init_block(keys[13], C1, C1, 1),
    }
    weights, biases = {}, []
    for name in _LAYERS:
        if name == "stem":
            wm, b = _prep_stem(raw[name])
        elif name in ("bn_fuse", "out3", "out2", "out1"):
            wm, b = _prep_1x1(raw[name])
        else:
            wm, b = _prep_taps(raw[name])
        weights[name] = wm
        biases.append(jnp.pad(b, (0, 128 - b.shape[0])))
    bias_pack = jnp.pad(jnp.stack(biases, 0), ((0, 16 - len(biases)), (0, 0)))
    return {"w": weights, "bias": bias_pack.astype(jnp.float32)}


# ----------------------------------------------------------------------------
# XLA glue: stem patch matrix (tiny; every other conv im2cols inside the kernel)
# ----------------------------------------------------------------------------
def _stem_patches(x_nchw):
    x = jnp.transpose(x_nchw, (0, 2, 3, 1)).astype(jnp.float32)
    x = x - _IMAGENET_MEAN[None, None, None, :]   # 1/std folded into stem weights
    x = jnp.pad(x, ((0, 0), (0, 0), (0, 0), (0, STEM_CIN_PAD - 3)))
    batch, h, w, c = x.shape
    xp = jnp.pad(x, ((0, 0), (1, 1), (1, 1), (0, 0)))
    ho, wo = h // 2, w // 2
    cols = [xp[:, i:i + 2 * ho - 1:2, j:j + 2 * wo - 1:2, :]
            for i in range(3) for j in range(3)]
    col = jnp.stack(cols, axis=3).reshape(batch, ho * wo, 9 * c)
    col = jnp.pad(col, ((0, 0), (0, 0), (0, STEM_K_PAD - 9 * c)))
    return col.astype(jnp.bfloat16)


# ----------------------------------------------------------------------------
# The single fused Pallas kernel (one batch element per grid step)
# ----------------------------------------------------------------------------
def _recontrast_kernel(*refs, training, amap_mode):
    (patch_ref,
     w_stem, w_l1, w_l2, w_l3, w_f1a, w_f1b, w_f2, w_fuse,
     w_de3, w_de2, w_de1, w_out3, w_out2, w_out1,
     bias_ref,
     t_l1, t_dn1, t_dn2, t_de3, t_de2, t_de1,
     u_3_2, u_2_1, m1, m2, m3) = refs[:_N_IN]
    out_refs = refs[_N_IN:]
    bf, f32 = jnp.bfloat16, jnp.float32

    def bias(i, c):
        return bias_ref[i:i + 1, :c]                          # [1, c] f32

    def conv3(x, t_ref, w_ref, brow):
        """3x3 / pad-1 conv (+ folded BN + ReLU) on flattened spatial [hw, c]
        as 9 (gather-matmul, weight-matmul) pairs, f32 accumulation."""
        xb = x.astype(bf)
        acc = brow
        for t in range(9):                                    # static unroll
            g = jnp.dot(t_ref[t], xb, preferred_element_type=f32)     # gather
            acc = acc + jnp.dot(g.astype(bf), w_ref[t],
                                preferred_element_type=f32)           # weights
        return jnp.maximum(acc, 0.0)

    def mm(x, w_ref, brow, relu):
        y = jnp.dot(x.astype(bf), w_ref[...], preferred_element_type=f32) + brow
        return jnp.maximum(y, 0.0) if relu else y

    # ---- encoder (== encoder_freeze: untrained deepcopy shares weights) -------
    # TODO(synk): a trained checkpoint has divergent encoder/encoder_freeze
    #             weights and needs the doubled-batch decoder flow.
    h = mm(patch_ref[0], w_stem, bias(0, C_STEM), relu=True)   # H/2 x W/2, 8
    f1 = conv3(h, t_l1, w_l1, bias(1, C1))                     # H/4, 16
    f2 = conv3(f1, t_dn1, w_l2, bias(2, C2))                   # H/8, 32
    f3 = conv3(f2, t_dn2, w_l3, bias(3, C3))                   # H/16, 64

    # ---- bottleneck ------------------------------------------------------------
    b1 = conv3(f1, t_dn1, w_f1a, bias(4, C2))
    b1 = conv3(b1, t_dn2, w_f1b, bias(5, C3))
    b2 = conv3(f2, t_dn2, w_f2, bias(6, C3))
    z = mm(jnp.concatenate([b1, b2, f3], axis=-1), w_fuse, bias(7, C3), relu=True)

    # ---- decoder ---------------------------------------------------------------
    d3 = conv3(z, t_de3, w_de3, bias(8, C3))                             # H/16
    d3u = jnp.dot(u_3_2[...], d3.astype(bf), preferred_element_type=f32)  # -> H/8
    d2 = conv3(d3u, t_de2, w_de2, bias(9, C2))
    d2u = jnp.dot(u_2_1[...], d2.astype(bf), preferred_element_type=f32)  # -> H/4
    d1 = conv3(d2u, t_de1, w_de1, bias(10, C1))
    d3b = mm(d3, w_out3, bias(11, C3), relu=False)
    d2b = mm(d2, w_out2, bias(12, C2), relu=False)
    d1b = mm(d1, w_out1, bias(13, C1), relu=False)

    if training:
        for r, v in zip(out_refs, (f1, f2, f3, d1, d2, d3, d1b, d2b, d3b)):
            r[0] = v.astype(r.dtype)
        return

    # ---- fused anomaly map: cosine dissimilarity + bilinear upsample -----------
    def dissim(a, b):
        dotp = jnp.sum(a * b, axis=-1, keepdims=True)         # lane reductions
        na = jnp.sum(a * a, axis=-1, keepdims=True)
        nb = jnp.sum(b * b, axis=-1, keepdims=True)
        inv = lax.rsqrt(na + 1e-8) * lax.rsqrt(nb + 1e-8)     # EUP, no div/sqrt
        return 1.0 - dotp * inv                               # [hw, 1] f32

    if amap_mode == "add":      # fold the two pairs that share a scale pre-upsample
        d_list = ((dissim(f1, d1) + dissim(f1, d1b), m1),
                  (dissim(f2, d2) + dissim(f2, d2b), m2),
                  (dissim(f3, d3) + dissim(f3, d3b), m3))
    else:
        d_list = tuple((dissim(fe, fd), m) for fe, fd, m in
                       ((f1, d1, m1), (f2, d2, m2), (f3, d3, m3),
                        (f1, d1b, m1), (f2, d2b, m2), (f3, d3b, m3)))

    hw_img = m1.shape[-1]
    chunk = 256 if hw_img % 256 == 0 else hw_img              # bound vreg pressure
    pieces = []
    for c0 in range(0, hw_img, chunk):
        acc = (jnp.ones if amap_mode == "mul" else jnp.zeros)((1, chunk), f32)
        for d, m in d_list:
            # bilinear upsample of the [hw, 1] dissimilarity via the precomputed
            # bf16 interpolation operator: broadcast multiply + sublane reduce.
            up = jnp.sum(d * m[:, c0:c0 + chunk], axis=0, keepdims=True)
            acc = acc * up if amap_mode == "mul" else acc + up
        pieces.append(acc)
    amap = pieces[0] if len(pieces) == 1 else jnp.concatenate(pieces, axis=-1)
    out_refs[0][0] = amap                                     # lane-dense [1, H*W]


# ----------------------------------------------------------------------------
# Wrapper
# ----------------------------------------------------------------------------
def _zero_index_map(ndim, b):
    return (0,) * ndim


def recontrast_forward(x_nchw, params, consts, input_size=(32, 32),
                       amap_mode="add", training=False):
    """Eval: anomaly map [B, H, W].  Training: (en_freeze + en, de) NHWC lists."""
    big_h, big_w = input_size
    batch = x_nchw.shape[0]
    patches = _stem_patches(x_nchw)

    inputs = ([patches] + [params["w"][n] for n in _LAYERS] + [params["bias"]]
              + [consts[k] for k in _CONSTS])
    in_specs = [pl.BlockSpec((1,) + patches.shape[1:], lambda b: (b, 0, 0))]
    for arr in inputs[1:]:
        in_specs.append(pl.BlockSpec(arr.shape,
                                     functools.partial(_zero_index_map, arr.ndim)))

    if training:
        s1 = (big_h // 4) * (big_w // 4)
        s2 = (big_h // 8) * (big_w // 8)
        s3 = (big_h // 16) * (big_w // 16)
        dims = ((s1, C1), (s2, C2), (s3, C3), (s1, C1), (s2, C2), (s3, C3),
                (s1, C1), (s2, C2), (s3, C3))
        out_shape = tuple(jax.ShapeDtypeStruct((batch,) + d, jnp.float32)
                          for d in dims)
        out_specs = tuple(pl.BlockSpec((1,) + d, lambda b: (b, 0, 0))
                          for d in dims)
    else:
        out_shape = jax.ShapeDtypeStruct((batch, 1, big_h * big_w), jnp.float32)
        out_specs = pl.BlockSpec((1, 1, big_h * big_w), lambda b: (b, 0, 0))

    kernel = functools.partial(_recontrast_kernel, training=training,
                               amap_mode=amap_mode)
    out = pl.pallas_call(
        kernel,
        out_shape=out_shape,
        grid=(batch,),
        in_specs=in_specs,
        out_specs=out_specs,
        compiler_params=pltpu.CompilerParams(
            dimension_semantics=("parallel",)),   # batch across TCs on v7x
    )(*inputs)

    if training:
        f1, f2, f3, d1, d2, d3, d1b, d2b, d3b = out

        def r(a, s):
            return a.reshape(batch, big_h // s, big_w // s, a.shape[-1])

        en = [r(f1, 4), r(f2, 8), r(f3, 16)]
        de = [r(d1, 4), r(d2, 8), r(d3, 16), r(d1b, 4), r(d2b, 8), r(d3b, 16)]
        return (en + en, de)
    return out.reshape(batch, big_h, big_w)


# ----------------------------------------------------------------------------
if __name__ == "__main__":
    key = jax.random.PRNGKey(0)
    k_param, k_x = jax.random.split(key)
    params = init_params(k_param)
    consts = build_constants((32, 32))
    x = jax.random.uniform(k_x, (2, 3, 32, 32), jnp.float32)  # NCHW like PyTorch

    fwd = jax.jit(functools.partial(recontrast_forward, input_size=(32, 32),
                                    amap_mode="add", training=False))
    out = jax.block_until_ready(fwd(x, params, consts))

    assert out.shape == (2, 32, 32), out.shape
    assert out.dtype == jnp.float32
    assert bool(jnp.all(jnp.isfinite(out)))
    print("KERNEL_OK")
</pallas_src>

<mosaic_0001>
module attributes {stable_mosaic.version = 11 : i64} {
  func.func @_recontrast_kernel(%arg0: i32, %arg1: memref<1x256x128xbf16, #tpu.memory_space<vmem>>, %arg2: memref<128x8xbf16, #tpu.memory_space<vmem>>, %arg3: memref<9x8x16xbf16, #tpu.memory_space<vmem>>, %arg4: memref<9x16x32xbf16, #tpu.memory_space<vmem>>, %arg5: memref<9x32x64xbf16, #tpu.memory_space<vmem>>, %arg6: memref<9x16x32xbf16, #tpu.memory_space<vmem>>, %arg7: memref<9x32x64xbf16, #tpu.memory_space<vmem>>, %arg8: memref<9x32x64xbf16, #tpu.memory_space<vmem>>, %arg9: memref<192x64xbf16, #tpu.memory_space<vmem>>, %arg10: memref<9x64x64xbf16, #tpu.memory_space<vmem>>, %arg11: memref<9x64x32xbf16, #tpu.memory_space<vmem>>, %arg12: memref<9x32x16xbf16, #tpu.memory_space<vmem>>, %arg13: memref<64x64xbf16, #tpu.memory_space<vmem>>, %arg14: memref<32x32xbf16, #tpu.memory_space<vmem>>, %arg15: memref<16x16xbf16, #tpu.memory_space<vmem>>, %arg16: memref<16x128xf32, #tpu.memory_space<vmem>>, %arg17: memref<9x64x256xbf16, #tpu.memory_space<vmem>>, %arg18: memref<9x16x64xbf16, #tpu.memory_space<vmem>>, %arg19: memref<9x4x16xbf16, #tpu.memory_space<vmem>>, %arg20: memref<9x4x4xbf16, #tpu.memory_space<vmem>>, %arg21: memref<9x16x16xbf16, #tpu.memory_space<vmem>>, %arg22: memref<9x64x64xbf16, #tpu.memory_space<vmem>>, %arg23: memref<16x4xbf16, #tpu.memory_space<vmem>>, %arg24: memref<64x16xbf16, #tpu.memory_space<vmem>>, %arg25: memref<64x1024xbf16, #tpu.memory_space<vmem>>, %arg26: memref<16x1024xbf16, #tpu.memory_space<vmem>>, %arg27: memref<4x1024xbf16, #tpu.memory_space<vmem>>, %arg28: memref<1x1x1024xf32, #tpu.memory_space<vmem>>) attributes {dimension_semantics = [#tpu.dimension_semantics<parallel>], iteration_bounds = array<i64: 2>, scalar_prefetch = 0 : i64, scratch_operands = 0 : i64, tpu.core_type = #tpu.core_type<tc>, window_params = [{transform_indices = @transform_0, window_bounds = array<i64: 1, 256, 128>}, {pipeline_mode = #tpu.pipeline_mode<synchronous>, transform_indices = @transform_1, window_bounds = array<i64: 128, 8>}, {pipeline_mode = #tpu.pipeline_mode<synchronous>, transform_indices = @transform_2, window_bounds = array<i64: 9, 8, 16>}, {pipeline_mode = #tpu.pipeline_mode<synchronous>, transform_indices = @transform_3, window_bounds = array<i64: 9, 16, 32>}, {pipeline_mode = #tpu.pipeline_mode<synchronous>, transform_indices = @transform_4, window_bounds = array<i64: 9, 32, 64>}, {pipeline_mode = #tpu.pipeline_mode<synchronous>, transform_indices = @transform_5, window_bounds = array<i64: 9, 16, 32>}, {pipeline_mode = #tpu.pipeline_mode<synchronous>, transform_indices = @transform_6, window_bounds = array<i64: 9, 32, 64>}, {pipeline_mode = #tpu.pipeline_mode<synchronous>, transform_indices = @transform_7, window_bounds = array<i64: 9, 32, 64>}, {pipeline_mode = #tpu.pipeline_mode<synchronous>, transform_indices = @transform_8, window_bounds = array<i64: 192, 64>}, {pipeline_mode = #tpu.pipeline_mode<synchronous>, transform_indices = @transform_9, window_bounds = array<i64: 9, 64, 64>}, {pipeline_mode = #tpu.pipeline_mode<synchronous>, transform_indices = @transform_10, window_bounds = array<i64: 9, 64, 32>}, {pipeline_mode = #tpu.pipeline_mode<synchronous>, transform_indices = @transform_11, window_bounds = array<i64: 9, 32, 16>}, {pipeline_mode = #tpu.pipeline_mode<synchronous>, transform_indices = @transform_12, window_bounds = array<i64: 64, 64>}, {pipeline_mode = #tpu.pipeline_mode<synchronous>, transform_indices = @transform_13, window_bounds = array<i64: 32, 32>}, {pipeline_mode = #tpu.pipeline_mode<synchronous>, transform_indices = @transform_14, window_bounds = array<i64: 16, 16>}, {pipeline_mode = #tpu.pipeline_mode<synchronous>, transform_indices = @transform_15, window_bounds = array<i64: 16, 128>}, {pipeline_mode = #tpu.pipeline_mode<synchronous>, transform_indices = @transform_16, window_bounds = array<i64: 9, 64, 256>}, {pipeline_mode = #tpu.pipeline_mode<synchronous>, transform_indices = @transform_17, window_bounds = array<i64: 9, 16, 64>}, {pipeline_mode = #tpu.pipeline_mode<synchronous>, transform_indices = @transform_18, window_bounds = array<i64: 9, 4, 16>}, {pipeline_mode = #tpu.pipeline_mode<synchronous>, transform_indices = @transform_19, window_bounds = array<i64: 9, 4, 4>}, {pipeline_mode = #tpu.pipeline_mode<synchronous>, transform_indices = @transform_20, window_bounds = array<i64: 9, 16, 16>}, {pipeline_mode = #tpu.pipeline_mode<synchronous>, transform_indices = @transform_21, window_bounds = array<i64: 9, 64, 64>}, {pipeline_mode = #tpu.pipeline_mode<synchronous>, transform_indices = @transform_22, window_bounds = array<i64: 16, 4>}, {pipeline_mode = #tpu.pipeline_mode<synchronous>, transform_indices = @transform_23, window_bounds = array<i64: 64, 16>}, {pipeline_mode = #tpu.pipeline_mode<synchronous>, transform_indices = @transform_24, window_bounds = array<i64: 64, 1024>}, {pipeline_mode = #tpu.pipeline_mode<synchronous>, transform_indices = @transform_25, window_bounds = array<i64: 16, 1024>}, {pipeline_mode = #tpu.pipeline_mode<synchronous>, transform_indices = @transform_26, window_bounds = array<i64: 4, 1024>}, {transform_indices = @transform_27, window_bounds = array<i64: 1, 1, 1024>}]} {
    %c0 = arith.constant 0 : index
    %c0_0 = arith.constant 0 : index
    %c0_1 = arith.constant 0 : index
    %0 = vector.load %arg1[%c0, %c0_0, %c0_1] : memref<1x256x128xbf16, #tpu.memory_space<vmem>>, vector<1x256x128xbf16>
    %1 = vector.shape_cast %0 : vector<1x256x128xbf16> to vector<256x128xbf16>
    %c0_2 = arith.constant 0 : index
    %c0_3 = arith.constant 0 : index
    %2 = vector.load %arg16[%c0_2, %c0_3] : memref<16x128xf32, #tpu.memory_space<vmem>>, vector<1x8xf32>
    %c0_4 = arith.constant 0 : index
    %c0_5 = arith.constant 0 : index
    %3 = vector.load %arg2[%c0_4, %c0_5] : memref<128x8xbf16, #tpu.memory_space<vmem>>, vector<128x8xbf16>
    %cst = arith.constant dense<0.000000e+00> : vector<256x8xf32>
    %4 = tpu.matmul %1, %3, %cst {dimension_numbers = #tpu.dot_dimension_numbers<[1], [0], [0], [1], [0, 0, 1, 1], [], []>} : vector<256x128xbf16>, vector<128x8xbf16>, vector<256x8xf32> -> vector<256x8xf32>
    %5 = vector.broadcast %2 : vector<1x8xf32> to vector<256x8xf32>
    %6 = arith.addf %4, %5 : vector<256x8xf32>
    %cst_6 = arith.constant 0.000000e+00 : f32
    %7 = vector.broadcast %cst_6 : f32 to vector<256x8xf32>
    %8 = arith.maximumf %6, %7 : vector<256x8xf32>
    %c1 = arith.constant 1 : index
    %c0_7 = arith.constant 0 : index
    %9 = vector.load %arg16[%c1, %c0_7] : memref<16x128xf32, #tpu.memory_space<vmem>>, vector<1x16xf32>
    %10 = arith.truncf %8 : vector<256x8xf32> to vector<256x8xbf16>
    %c0_8 = arith.constant 0 : index
    %c0_9 = arith.constant 0 : index
    %c0_10 = arith.constant 0 : index
    %11 = vector.load %arg17[%c0_8, %c0_9, %c0_10] : memref<9x64x256xbf16, #tpu.memory_space<vmem>>, vector<1x64x256xbf16>
    %12 = vector.shape_cast %11 : vector<1x64x256xbf16> to vector<64x256xbf16>
    %cst_11 = arith.constant dense<0.000000e+00> : vector<64x8xf32>
    %13 = tpu.matmul %12, %10, %cst_11 {dimension_numbers = #tpu.dot_dimension_numbers<[1], [0], [0], [1], [0, 0, 1, 1], [], []>} : vector<64x256xbf16>, vector<256x8xbf16>, vector<64x8xf32> -> vector<64x8xf32>
    %14 = arith.truncf %13 : vector<64x8xf32> to vector<64x8xbf16>
    %c0_12 = arith.constant 0 : index
    %c0_13 = arith.constant 0 : index
    %c0_14 = arith.constant 0 : index
    %15 = vector.load %arg3[%c0_12, %c0_13, %c0_14] : memref<9x8x16xbf16, #tpu.memory_space<vmem>>, vector<1x8x16xbf16>
    %16 = vector.shape_cast %15 : vector<1x8x16xbf16> to vector<8x16xbf16>
    %cst_15 = arith.constant dense<0.000000e+00> : vector<64x16xf32>
    %17 = tpu.matmul %14, %16, %cst_15 {dimension_numbers = #tpu.dot_dimension_numbers<[1], [0], [0], [1], [0, 0, 1, 1], [], []>} : vector<64x8xbf16>, vector<8x16xbf16>, vector<64x16xf32> -> vector<64x16xf32>
    %18 = vector.broadcast %9 : vector<1x16xf32> to vector<64x16xf32>
    %19 = arith.addf %18, %17 : vector<64x16xf32>
    %c1_16 = arith.constant 1 : index
    %c0_17 = arith.constant 0 : index
    %c0_18 = arith.constant 0 : index
    %20 = vector.load %arg17[%c1_16, %c0_17, %c0_18] : memref<9x64x256xbf16, #tpu.memory_space<vmem>>, vector<1x64x256xbf16>
    %21 = vector.shape_cast %20 : vector<1x64x256xbf16> to vector<64x256xbf16>
    %cst_19 = arith.constant dense<0.000000e+00> : vector<64x8xf32>
    %22 = tpu.matmul %21, %10, %cst_19 {dimension_numbers = #tpu.dot_dimension_numbers<[1], [0], [0], [1], [0, 0, 1, 1], [], []>} : vector<64x256xbf16>, vector<256x8xbf16>, vector<64x8xf32> -> vector<64x8xf32>
    %23 = arith.truncf %22 : vector<64x8xf32> to vector<64x8xbf16>
    %c1_20 = arith.constant 1 : index
    %c0_21 = arith.constant 0 : index
    %c0_22 = arith.constant 0 : index
    %24 = vector.load %arg3[%c1_20, %c0_21, %c0_22] : memref<9x8x16xbf16, #tpu.memory_space<vmem>>, vector<1x8x16xbf16>
    %25 = vector.shape_cast %24 : vector<1x8x16xbf16> to vector<8x16xbf16>
    %cst_23 = arith.constant dense<0.000000e+00> : vector<64x16xf32>
    %26 = tpu.matmul %23, %25, %cst_23 {dimension_numbers = #tpu.dot_dimension_numbers<[1], [0], [0], [1], [0, 0, 1, 1], [], []>} : vector<64x8xbf16>, vector<8x16xbf16>, vector<64x16xf32> -> vector<64x16xf32>
    %27 = arith.addf %19, %26 : vector<64x16xf32>
    %c2 = arith.constant 2 : index
    %c0_24 = arith.constant 0 : index
    %c0_25 = arith.constant 0 : index
    %28 = vector.load %arg17[%c2, %c0_24, %c0_25] : memref<9x64x256xbf16, #tpu.memory_space<vmem>>, vector<1x64x256xbf16>
    %29 = vector.shape_cast %28 : vector<1x64x256xbf16> to vector<64x256xbf16>
    %cst_26 = arith.constant dense<0.000000e+00> : vector<64x8xf32>
    %30 = tpu.matmul %29, %10, %cst_26 {dimension_numbers = #tpu.dot_dimension_numbers<[1], [0], [0], [1], [0, 0, 1, 1], [], []>} : vector<64x256xbf16>, vector<256x8xbf16>, vector<64x8xf32> -> vector<64x8xf32>
    %31 = arith.truncf %30 : vector<64x8xf32> to vector<64x8xbf16>
    %c2_27 = arith.constant 2 : index
    %c0_28 = arith.constant 0 : index
    %c0_29 = arith.constant 0 : index
    %32 = vector.load %arg3[%c2_27, %c0_28, %c0_29] : memref<9x8x16xbf16, #tpu.memory_space<vmem>>, vector<1x8x16xbf16>
    %33 = vector.shape_cast %32 : vector<1x8x16xbf16> to vector<8x16xbf16>
    %cst_30 = arith.constant dense<0.000000e+00> : vector<64x16xf32>
    %34 = tpu.matmul %31, %33, %cst_30 {dimension_numbers = #tpu.dot_dimension_numbers<[1], [0], [0], [1], [0, 0, 1, 1], [], []>} : vector<64x8xbf16>, vector<8x16xbf16>, vector<64x16xf32> -> vector<64x16xf32>
    %35 = arith.addf %27, %34 : vector<64x16xf32>
    %c3 = arith.constant 3 : index
    %c0_31 = arith.constant 0 : index
    %c0_32 = arith.constant 0 : index
    %36 = vector.load %arg17[%c3, %c0_31, %c0_32] : memref<9x64x256xbf16, #tpu.memory_space<vmem>>, vector<1x64x256xbf16>
    %37 = vector.shape_cast %36 : vector<1x64x256xbf16> to vector<64x256xbf16>
    %cst_33 = arith.constant dense<0.000000e+00> : vector<64x8xf32>
    %38 = tpu.matmul %37, %10, %cst_33 {dimension_numbers = #tpu.dot_dimension_numbers<[1], [0], [0], [1], [0, 0, 1, 1], [], []>} : vector<64x256xbf16>, vector<256x8xbf16>, vector<64x8xf32> -> vector<64x8xf32>
    %39 = arith.truncf %38 : vector<64x8xf32> to vector<64x8xbf16>
    %c3_34 = arith.constant 3 : index
    %c0_35 = arith.constant 0 : index
    %c0_36 = arith.constant 0 : index
    %40 = vector.load %arg3[%c3_34, %c0_35, %c0_36] : memref<9x8x16xbf16, #tpu.memory_space<vmem>>, vector<1x8x16xbf16>
    %41 = vector.shape_cast %40 : vector<1x8x16xbf16> to vector<8x16xbf16>
    %cst_37 = arith.constant dense<0.000000e+00> : vector<64x16xf32>
    %42 = tpu.matmul %39, %41, %cst_37 {dimension_numbers = #tpu.dot_dimension_numbers<[1], [0], [0], [1], [0, 0, 1, 1], [], []>} : vector<64x8xbf16>, vector<8x16xbf16>, vector<64x16xf32> -> vector<64x16xf32>
    %43 = arith.addf %35, %42 : vector<64x16xf32>
    %c4 = arith.constant 4 : index
    %c0_38 = arith.constant 0 : index
    %c0_39 = arith.constant 0 : index
    %44 = vector.load %arg17[%c4, %c0_38, %c0_39] : memref<9x64x256xbf16, #tpu.memory_space<vmem>>, vector<1x64x256xbf16>
    %45 = vector.shape_cast %44 : vector<1x64x256xbf16> to vector<64x256xbf16>
    %cst_40 = arith.constant dense<0.000000e+00> : vector<64x8xf32>
    %46 = tpu.matmul %45, %10, %cst_40 {dimension_numbers = #tpu.dot_dimension_numbers<[1], [0], [0], [1], [0, 0, 1, 1], [], []>} : vector<64x256xbf16>, vector<256x8xbf16>, vector<64x8xf32> -> vector<64x8xf32>
    %47 = arith.truncf %46 : vector<64x8xf32> to vector<64x8xbf16>
    %c4_41 = arith.constant 4 : index
    %c0_42 = arith.constant 0 : index
    %c0_43 = arith.constant 0 : index
    %48 = vector.load %arg3[%c4_41, %c0_42, %c0_43] : memref<9x8x16xbf16, #tpu.memory_space<vmem>>, vector<1x8x16xbf16>
    %49 = vector.shape_cast %48 : vector<1x8x16xbf16> to vector<8x16xbf16>
    %cst_44 = arith.constant dense<0.000000e+00> : vector<64x16xf32>
    %50 = tpu.matmul %47, %49, %cst_44 {dimension_numbers = #tpu.dot_dimension_numbers<[1], [0], [0], [1], [0, 0, 1, 1], [], []>} : vector<64x8xbf16>, vector<8x16xbf16>, vector<64x16xf32> -> vector<64x16xf32>
    %51 = arith.addf %43, %50 : vector<64x16xf32>
    %c5 = arith.constant 5 : index
    %c0_45 = arith.constant 0 : index
    %c0_46 = arith.constant 0 : index
    %52 = vector.load %arg17[%c5, %c0_45, %c0_46] : memref<9x64x256xbf16, #tpu.memory_space<vmem>>, vector<1x64x256xbf16>
    %53 = vector.shape_cast %52 : vector<1x64x256xbf16> to vector<64x256xbf16>
    %cst_47 = arith.constant dense<0.000000e+00> : vector<64x8xf32>
    %54 = tpu.matmul %53, %10, %cst_47 {dimension_numbers = #tpu.dot_dimension_numbers<[1], [0], [0], [1], [0, 0, 1, 1], [], []>} : vector<64x256xbf16>, vector<256x8xbf16>, vector<64x8xf32> -> vector<64x8xf32>
    %55 = arith.truncf %54 : vector<64x8xf32> to vector<64x8xbf16>
    %c5_48 = arith.constant 5 : index
    %c0_49 = arith.constant 0 : index
    %c0_50 = arith.constant 0 : index
    %56 = vector.load %arg3[%c5_48, %c0_49, %c0_50] : memref<9x8x16xbf16, #tpu.memory_space<vmem>>, vector<1x8x16xbf16>
    %57 = vector.shape_cast %56 : vector<1x8x16xbf16> to vector<8x16xbf16>
    %cst_51 = arith.constant dense<0.000000e+00> : vector<64x16xf32>
    %58 = tpu.matmul %55, %57, %cst_51 {dimension_numbers = #tpu.dot_dimension_numbers<[1], [0], [0], [1], [0, 0, 1, 1], [], []>} : vector<64x8xbf16>, vector<8x16xbf16>, vector<64x16xf32> -> vector<64x16xf32>
    %59 = arith.addf %51, %58 : vector<64x16xf32>
    %c6 = arith.constant 6 : index
    %c0_52 = arith.constant 0 : index
    %c0_53 = arith.constant 0 : index
    %60 = vector.load %arg17[%c6, %c0_52, %c0_53] : memref<9x64x256xbf16, #tpu.memory_space<vmem>>, vector<1x64x256xbf16>
    %61 = vector.shape_cast %60 : vector<1x64x256xbf16> to vector<64x256xbf16>
    %cst_54 = arith.constant dense<0.000000e+00> : vector<64x8xf32>
    %62 = tpu.matmul %61, %10, %cst_54 {dimension_numbers = #tpu.dot_dimension_numbers<[1], [0], [0], [1], [0, 0, 1, 1], [], []>} : vector<64x256xbf16>, vector<256x8xbf16>, vector<64x8xf32> -> vector<64x8xf32>
    %63 = arith.truncf %62 : vector<64x8xf32> to vector<64x8xbf16>
    %c6_55 = arith.constant 6 : index
    %c0_56 = arith.constant 0 : index
    %c0_57 = arith.constant 0 : index
    %64 = vector.load %arg3[%c6_55, %c0_56, %c0_57] : memref<9x8x16xbf16, #tpu.memory_space<vmem>>, vector<1x8x16xbf16>
    %65 = vector.shape_cast %64 : vector<1x8x16xbf16> to vector<8x16xbf16>
    %cst_58 = arith.constant dense<0.000000e+00> : vector<64x16xf32>
    %66 = tpu.matmul %63, %65, %cst_58 {dimension_numbers = #tpu.dot_dimension_numbers<[1], [0], [0], [1], [0, 0, 1, 1], [], []>} : vector<64x8xbf16>, vector<8x16xbf16>, vector<64x16xf32> -> vector<64x16xf32>
    %67 = arith.addf %59, %66 : vector<64x16xf32>
    %c7 = arith.constant 7 : index
    %c0_59 = arith.constant 0 : index
    %c0_60 = arith.constant 0 : index
    %68 = vector.load %arg17[%c7, %c0_59, %c0_60] : memref<9x64x256xbf16, #tpu.memory_space<vmem>>, vector<1x64x256xbf16>
    %69 = vector.shape_cast %68 : vector<1x64x256xbf16> to vector<64x256xbf16>
    %cst_61 = arith.constant dense<0.000000e+00> : vector<64x8xf32>
    %70 = tpu.matmul %69, %10, %cst_61 {dimension_numbers = #tpu.dot_dimension_numbers<[1], [0], [0], [1], [0, 0, 1, 1], [], []>} : vector<64x256xbf16>, vector<256x8xbf16>, vector<64x8xf32> -> vector<64x8xf32>
    %71 = arith.truncf %70 : vector<64x8xf32> to vector<64x8xbf16>
    %c7_62 = arith.constant 7 : index
    %c0_63 = arith.constant 0 : index
    %c0_64 = arith.constant 0 : index
    %72 = vector.load %arg3[%c7_62, %c0_63, %c0_64] : memref<9x8x16xbf16, #tpu.memory_space<vmem>>, vector<1x8x16xbf16>
    %73 = vector.shape_cast %72 : vector<1x8x16xbf16> to vector<8x16xbf16>
    %cst_65 = arith.constant dense<0.000000e+00> : vector<64x16xf32>
    %74 = tpu.matmul %71, %73, %cst_65 {dimension_numbers = #tpu.dot_dimension_numbers<[1], [0], [0], [1], [0, 0, 1, 1], [], []>} : vector<64x8xbf16>, vector<8x16xbf16>, vector<64x16xf32> -> vector<64x16xf32>
    %75 = arith.addf %67, %74 : vector<64x16xf32>
    %c8 = arith.constant 8 : index
    %c0_66 = arith.constant 0 : index
    %c0_67 = arith.constant 0 : index
    %76 = vector.load %arg17[%c8, %c0_66, %c0_67] : memref<9x64x256xbf16, #tpu.memory_space<vmem>>, vector<1x64x256xbf16>
    %77 = vector.shape_cast %76 : vector<1x64x256xbf16> to vector<64x256xbf16>
    %cst_68 = arith.constant dense<0.000000e+00> : vector<64x8xf32>
    %78 = tpu.matmul %77, %10, %cst_68 {dimension_numbers = #tpu.dot_dimension_numbers<[1], [0], [0], [1], [0, 0, 1, 1], [], []>} : vector<64x256xbf16>, vector<256x8xbf16>, vector<64x8xf32> -> vector<64x8xf32>
    %79 = arith.truncf %78 : vector<64x8xf32> to vector<64x8xbf16>
    %c8_69 = arith.constant 8 : index
    %c0_70 = arith.constant 0 : index
    %c0_71 = arith.constant 0 : index
    %80 = vector.load %arg3[%c8_69, %c0_70, %c0_71] : memref<9x8x16xbf16, #tpu.memory_space<vmem>>, vector<1x8x16xbf16>
    %81 = vector.shape_cast %80 : vector<1x8x16xbf16> to vector<8x16xbf16>
    %cst_72 = arith.constant dense<0.000000e+00> : vector<64x16xf32>
    %82 = tpu.matmul %79, %81, %cst_72 {dimension_numbers = #tpu.dot_dimension_numbers<[1], [0], [0], [1], [0, 0, 1, 1], [], []>} : vector<64x8xbf16>, vector<8x16xbf16>, vector<64x16xf32> -> vector<64x16xf32>
    %83 = arith.addf %75, %82 : vector<64x16xf32>
    %cst_73 = arith.constant 0.000000e+00 : f32
    %84 = vector.broadcast %cst_73 : f32 to vector<64x16xf32>
    %85 = arith.maximumf %83, %84 : vector<64x16xf32>
    %c2_74 = arith.constant 2 : index
    %c0_75 = arith.constant 0 : index
    %86 = vector.load %arg16[%c2_74, %c0_75] : memref<16x128xf32, #tpu.memory_space<vmem>>, vector<1x32xf32>
    %87 = arith.truncf %85 : vector<64x16xf32> to vector<64x16xbf16>
    %c0_76 = arith.constant 0 : index
    %c0_77 = arith.constant 0 : index
    %c0_78 = arith.constant 0 : index
    %88 = vector.load %arg18[%c0_76, %c0_77, %c0_78] : memref<9x16x64xbf16, #tpu.memory_space<vmem>>, vector<1x16x64xbf16>
    %89 = vector.shape_cast %88 : vector<1x16x64xbf16> to vector<16x64xbf16>
    %cst_79 = arith.constant dense<0.000000e+00> : vector<16x16xf32>
    %90 = tpu.matmul %89, %87, %cst_79 {dimension_numbers = #tpu.dot_dimension_numbers<[1], [0], [0], [1], [0, 0, 1, 1], [], []>} : vector<16x64xbf16>, vector<64x16xbf16>, vector<16x16xf32> -> vector<16x16xf32>
    %91 = arith.truncf %90 : vector<16x16xf32> to vector<16x16xbf16>
    %c0_80 = arith.constant 0 : index
    %c0_81 = arith.constant 0 : index
    %c0_82 = arith.constant 0 : index
    %92 = vector.load %arg4[%c0_80, %c0_81, %c0_82] : memref<9x16x32xbf16, #tpu.memory_space<vmem>>, vector<1x16x32xbf16>
    %93 = vector.shape_cast %92 : vector<1x16x32xbf16> to vector<16x32xbf16>
    %cst_83 = arith.constant dense<0.000000e+00> : vector<16x32xf32>
    %94 = tpu.matmul %91, %93, %cst_83 {dimension_numbers = #tpu.dot_dimension_numbers<[1], [0], [0], [1], [0, 0, 1, 1], [], []>} : vector<16x16xbf16>, vector<16x32xbf16>, vector<16x32xf32> -> vector<16x32xf32>
    %95 = vector.broadcast %86 : vector<1x32xf32> to vector<16x32xf32>
    %96 = arith.addf %95, %94 : vector<16x32xf32>
    %c1_84 = arith.constant 1 : index
    %c0_85 = arith.constant 0 : index
    %c0_86 = arith.constant 0 : index
    %97 = vector.load %arg18[%c1_84, %c0_85, %c0_86] : memref<9x16x64xbf16, #tpu.memory_space<vmem>>, vector<1x16x64xbf16>
    %98 = vector.shape_cast %97 : vector<1x16x64xbf16> to vector<16x64xbf16>
    %cst_87 = arith.constant dense<0.000000e+00> : vector<16x16xf32>
    %99 = tpu.matmul %98, %87, %cst_87 {dimension_numbers = #tpu.dot_dimension_numbers<[1], [0], [0], [1], [0, 0, 1, 1], [], []>} : vector<16x64xbf16>, vector<64x16xbf16>, vector<16x16xf32> -> vector<16x16xf32>
    %100 = arith.truncf %99 : vector<16x16xf32> to vector<16x16xbf16>
    %c1_88 = arith.constant 1 : index
    %c0_89 = arith.constant 0 : index
    %c0_90 = arith.constant 0 : index
    %101 = vector.load %arg4[%c1_88, %c0_89, %c0_90] : memref<9x16x32xbf16, #tpu.memory_space<vmem>>, vector<1x16x32xbf16>
    %102 = vector.shape_cast %101 : vector<1x16x32xbf16> to vector<16x32xbf16>
    %cst_91 = arith.constant dense<0.000000e+00> : vector<16x32xf32>
    %103 = tpu.matmul %100, %102, %cst_91 {dimension_numbers = #tpu.dot_dimension_numbers<[1], [0], [0], [1], [0, 0, 1, 1], [], []>} : vector<16x16xbf16>, vector<16x32xbf16>, vector<16x32xf32> -> vector<16x32xf32>
    %104 = arith.addf %96, %103 : vector<16x32xf32>
    %c2_92 = arith.constant 2 : index
    %c0_93 = arith.constant 0 : index
    %c0_94 = arith.constant 0 : index
    %105 = vector.load %arg18[%c2_92, %c0_93, %c0_94] : memref<9x16x64xbf16, #tpu.memory_space<vmem>>, vector<1x16x64xbf16>
    %106 = vector.shape_cast %105 : vector<1x16x64xbf16> to vector<16x64xbf16>
    %cst_95 = arith.constant dense<0.000000e+00> : vector<16x16xf32>
    %107 = tpu.matmul %106, %87, %cst_95 {dimension_numbers = #tpu.dot_dimension_numbers<[1], [0], [0], [1], [0, 0, 1, 1], [], []>} : vector<16x64xbf16>, vector<64x16xbf16>, vector<16x16xf32> -> vector<16x16xf32>
    %108 = arith.truncf %107 : vector<16x16xf32> to vector<16x16xbf16>
    %c2_96 = arith.constant 2 : index
    %c0_97 = arith.constant 0 : index
    %c0_98 = arith.constant 0 : index
    %109 = vector.load %arg4[%c2_96, %c0_97, %c0_98] : memref<9x16x32xbf16, #tpu.memory_space<vmem>>, vector<1x16x32xbf16>
    %110 = vector.shape_cast %109 : vector<1x16x32xbf16> to vector<16x32xbf16>
    %cst_99 = arith.constant dense<0.000000e+00> : vector<16x32xf32>
    %111 = tpu.matmul %108, %110, %cst_99 {dimension_numbers = #tpu.dot_dimension_numbers<[1], [0], [0], [1], [0, 0, 1, 1], [], []>} : vector<16x16xbf16>, vector<16x32xbf16>, vector<16x32xf32> -> vector<16x32xf32>
    %112 = arith.addf %104, %111 : vector<16x32xf32>
    %c3_100 = arith.constant 3 : index
    %c0_101 = arith.constant 0 : index
    %c0_102 = arith.constant 0 : index
    %113 = vector.load %arg18[%c3_100, %c0_101, %c0_102] : memref<9x16x64xbf16, #tpu.memory_space<vmem>>, vector<1x16x64xbf16>
    %114 = vector.shape_cast %113 : vector<1x16x64xbf16> to vector<16x64xbf16>
    %cst_103 = arith.constant dense<0.000000e+00> : vector<16x16xf32>
    %115 = tpu.matmul %114, %87, %cst_103 {dimension_numbers = #tpu.dot_dimension_numbers<[1], [0], [0], [1], [0, 0, 1, 1], [], []>} : vector<16x64xbf16>, vector<64x16xbf16>, vector<16x16xf32> -> vector<16x16xf32>
    %116 = arith.truncf %115 : vector<16x16xf32> to vector<16x16xbf16>
    %c3_104 = arith.constant 3 : index
    %c0_105 = arith.constant 0 : index
    %c0_106 = arith.constant 0 : index
    %117 = vector.load %arg4[%c3_104, %c0_105, %c0_106] : memref<9x16x32xbf16, #tpu.memory_space<vmem>>, vector<1x16x32xbf16>
    %118 = vector.shape_cast %117 : vector<1x16x32xbf16> to vector<16x32xbf16>
    %cst_107 = arith.constant dense<0.000000e+00> : vector<16x32xf32>
    %119 = tpu.matmul %116, %118, %cst_107 {dimension_numbers = #tpu.dot_dimension_numbers<[1], [0], [0], [1], [0, 0, 1, 1], [], []>} : vector<16x16xbf16>, vector<16x32xbf16>, vector<16x32xf32> -> vector<16x32xf32>
    %120 = arith.addf %112, %119 : vector<16x32xf32>
    %c4_108 = arith.constant 4 : index
    %c0_109 = arith.constant 0 : index
    %c0_110 = arith.constant 0 : index
    %121 = vector.load %arg18[%c4_108, %c0_109, %c0_110] : memref<9x16x64xbf16, #tpu.memory_space<vmem>>, vector<1x16x64xbf16>
    %122 = vector.shape_cast %121 : vector<1x16x64xbf16> to vector<16x64xbf16>
    %cst_111 = arith.constant dense<0.000000e+00> : vector<16x16xf32>
    %123 = tpu.matmul %122, %87, %cst_111 {dimension_numbers = #tpu.dot_dimension_numbers<[1], [0], [0], [1], [0, 0, 1, 1], [], []>} : vector<16x64xbf16>, vector<64x16xbf16>, vector<16x16xf32> -> vector<16x16xf32>
    %124 = arith.truncf %123 : vector<16x16xf32> to vector<16x16xbf16>
    %c4_112 = arith.constant 4 : index
    %c0_113 = arith.constant 0 : index
    %c0_114 = arith.constant 0 : index
    %125 = vector.load %arg4[%c4_112, %c0_113, %c0_114] : memref<9x16x32xbf16, #tpu.memory_space<vmem>>, vector<1x16x32xbf16>
    %126 = vector.shape_cast %125 : vector<1x16x32xbf16> to vector<16x32xbf16>
    %cst_115 = arith.constant dense<0.000000e+00> : vector<16x32xf32>
    %127 = tpu.matmul %124, %126, %cst_115 {dimension_numbers = #tpu.dot_dimension_numbers<[1], [0], [0], [1], [0, 0, 1, 1], [], []>} : vector<16x16xbf16>, vector<16x32xbf16>, vector<16x32xf32> -> vector<16x32xf32>
    %128 = arith.addf %120, %127 : vector<16x32xf32>
    %c5_116 = arith.constant 5 : index
    %c0_117 = arith.constant 0 : index
    %c0_118 = arith.constant 0 : index
    %129 = vector.load %arg18[%c5_116, %c0_117, %c0_118] : memref<9x16x64xbf16, #tpu.memory_space<vmem>>, vector<1x16x64xbf16>
    %130 = vector.shape_cast %129 : vector<1x16x64xbf16> to vector<16x64xbf16>
    %cst_119 = arith.constant dense<0.000000e+00> : vector<16x16xf32>
    %131 = tpu.matmul %130, %87, %cst_119 {dimension_numbers = #tpu.dot_dimension_numbers<[1], [0], [0], [1], [0, 0, 1, 1], [], []>} : vector<16x64xbf16>, vector<64x16xbf16>, vector<16x16xf32> -> vector<16x16xf32>
    %132 = arith.truncf %131 : vector<16x16xf32> to vector<16x16xbf16>
    %c5_120 = arith.constant 5 : index
    %c0_121 = arith.constant 0 : index
    %c0_122 = arith.constant 0 : index
    %133 = vector.load %arg4[%c5_120, %c0_121, %c0_122] : memref<9x16x32xbf16, #tpu.memory_space<vmem>>, vector<1x16x32xbf16>
    %134 = vector.shape_cast %133 : vector<1x16x32xbf16> to vector<16x32xbf16>
    %cst_123 = arith.constant dense<0.000000e+00> : vector<16x32xf32>
    %135 = tpu.matmul %132, %134, %cst_123 {dimension_numbers = #tpu.dot_dimension_numbers<[1], [0], [0], [1], [0, 0, 1, 1], [], []>} : vector<16x16xbf16>, vector<16x32xbf16>, vector<16x32xf32> -> vector<16x32xf32>
    %136 = arith.addf %128, %135 : vector<16x32xf32>
    %c6_124 = arith.constant 6 : index
    %c0_125 = arith.constant 0 : index
    %c0_126 = arith.constant 0 : index
    %137 = vector.load %arg18[%c6_124, %c0_125, %c0_126] : memref<9x16x64xbf16, #tpu.memory_space<vmem>>, vector<1x16x64xbf16>
    %138 = vector.shape_cast %137 : vector<1x16x64xbf16> to vector<16x64xbf16>
    %cst_127 = arith.constant dense<0.000000e+00> : vector<16x16xf32>
    %139 = tpu.matmul %138, %87, %cst_127 {dimension_numbers = #tpu.dot_dimension_numbers<[1], [0], [0], [1], [0, 0, 1, 1], [], []>} : vector<16x64xbf16>, vector<64x16xbf16>, vector<16x16xf32> -> vector<16x16xf32>
    %140 = arith.truncf %139 : vector<16x16xf32> to vector<16x16xbf16>
    %c6_128 = arith.constant 6 : index
    %c0_129 = arith.constant 0 : index
    %c0_130 = arith.constant 0 : index
    %141 = vector.load %arg4[%c6_128, %c0_129, %c0_130] : memref<9x16x32xbf16, #tpu.memory_space<vmem>>, vector<1x16x32xbf16>
    %142 = vector.shape_cast %141 : vector<1x16x32xbf16> to vector<16x32xbf16>
    %cst_131 = arith.constant dense<0.000000e+00> : vector<16x32xf32>
    %143 = tpu.matmul %140, %142, %cst_131 {dimension_numbers = #tpu.dot_dimension_numbers<[1], [0], [0], [1], [0, 0, 1, 1], [], []>} : vector<16x16xbf16>, vector<16x32xbf16>, vector<16x32xf32> -> vector<16x32xf32>
    %144 = arith.addf %136, %143 : vector<16x32xf32>
    %c7_132 = arith.constant 7 : index
    %c0_133 = arith.constant 0 : index
    %c0_134 = arith.constant 0 : index
    %145 = vector.load %arg18[%c7_132, %c0_133, %c0_134] : memref<9x16x64xbf16, #tpu.memory_space<vmem>>, vector<1x16x64xbf16>
    %146 = vector.shape_cast %145 : vector<1x16x64xbf16> to vector<16x64xbf16>
    %cst_135 = arith.constant dense<0.000000e+00> : vector<16x16xf32>
    %147 = tpu.matmul %146, %87, %cst_135 {dimension_numbers = #tpu.dot_dimension_numbers<[1], [0], [0], [1], [0, 0, 1, 1], [], []>} : vector<16x64xbf16>, vector<64x16xbf16>, vector<16x16xf32> -> vector<16x16xf32>
    %148 = arith.truncf %147 : vector<16x16xf32> to vector<16x16xbf16>
    %c7_136 = arith.constant 7 : index
    %c0_137 = arith.constant 0 : index
    %c0_138 = arith.constant 0 : index
    %149 = vector.load %arg4[%c7_136, %c0_137, %c0_138] : memref<9x16x32xbf16, #tpu.memory_space<vmem>>, vector<1x16x32xbf16>
    %150 = vector.shape_cast %149 : vector<1x16x32xbf16> to vector<16x32xbf16>
    %cst_139 = arith.constant dense<0.000000e+00> : vector<16x32xf32>
    %151 = tpu.matmul %148, %150, %cst_139 {dimension_numbers = #tpu.dot_dimension_numbers<[1], [0], [0], [1], [0, 0, 1, 1], [], []>} : vector<16x16xbf16>, vector<16x32xbf16>, vector<16x32xf32> -> vector<16x32xf32>
    %152 = arith.addf %144, %151 : vector<16x32xf32>
    %c8_140 = arith.constant 8 : index
    %c0_141 = arith.constant 0 : index
    %c0_142 = arith.constant 0 : index
    %153 = vector.load %arg18[%c8_140, %c0_141, %c0_142] : memref<9x16x64xbf16, #tpu.memory_space<vmem>>, vector<1x16x64xbf16>
    %154 = vector.shape_cast %153 : vector<1x16x64xbf16> to vector<16x64xbf16>
    %cst_143 = arith.constant dense<0.000000e+00> : vector<16x16xf32>
    %155 = tpu.matmul %154, %87, %cst_143 {dimension_numbers = #tpu.dot_dimension_numbers<[1], [0], [0], [1], [0, 0, 1, 1], [], []>} : vector<16x64xbf16>, vector<64x16xbf16>, vector<16x16xf32> -> vector<16x16xf32>
    %156 = arith.truncf %155 : vector<16x16xf32> to vector<16x16xbf16>
    %c8_144 = arith.constant 8 : index
    %c0_145 = arith.constant 0 : index
    %c0_146 = arith.constant 0 : index
    %157 = vector.load %arg4[%c8_144, %c0_145, %c0_146] : memref<9x16x32xbf16, #tpu.memory_space<vmem>>, vector<1x16x32xbf16>
    %158 = vector.shape_cast %157 : vector<1x16x32xbf16> to vector<16x32xbf16>
    %cst_147 = arith.constant dense<0.000000e+00> : vector<16x32xf32>
    %159 = tpu.matmul %156, %158, %cst_147 {dimension_numbers = #tpu.dot_dimension_numbers<[1], [0], [0], [1], [0, 0, 1, 1], [], []>} : vector<16x16xbf16>, vector<16x32xbf16>, vector<16x32xf32> -> vector<16x32xf32>
    %160 = arith.addf %152, %159 : vector<16x32xf32>
    %cst_148 = arith.constant 0.000000e+00 : f32
    %161 = vector.broadcast %cst_148 : f32 to vector<16x32xf32>
    %162 = arith.maximumf %160, %161 : vector<16x32xf32>
    %c3_149 = arith.constant 3 : index
    %c0_150 = arith.constant 0 : index
    %163 = vector.load %arg16[%c3_149, %c0_150] : memref<16x128xf32, #tpu.memory_space<vmem>>, vector<1x64xf32>
    %164 = arith.truncf %162 : vector<16x32xf32> to vector<16x32xbf16>
    %c0_151 = arith.constant 0 : index
    %c0_152 = arith.constant 0 : index
    %c0_153 = arith.constant 0 : index
    %165 = vector.load %arg19[%c0_151, %c0_152, %c0_153] : memref<9x4x16xbf16, #tpu.memory_space<vmem>>, vector<1x4x16xbf16>
    %166 = vector.shape_cast %165 : vector<1x4x16xbf16> to vector<4x16xbf16>
    %cst_154 = arith.constant dense<0.000000e+00> : vector<4x32xf32>
    %167 = tpu.matmul %166, %164, %cst_154 {dimension_numbers = #tpu.dot_dimension_numbers<[1], [0], [0], [1], [0, 0, 1, 1], [], []>} : vector<4x16xbf16>, vector<16x32xbf16>, vector<4x32xf32> -> vector<4x32xf32>
    %168 = arith.truncf %167 : vector<4x32xf32> to vector<4x32xbf16>
    %c0_155 = arith.constant 0 : index
    %c0_156 = arith.constant 0 : index
    %c0_157 = arith.constant 0 : index
    %169 = vector.load %arg5[%c0_155, %c0_156, %c0_157] : memref<9x32x64xbf16, #tpu.memory_space<vmem>>, vector<1x32x64xbf16>
    %170 = vector.shape_cast %169 : vector<1x32x64xbf16> to vector<32x64xbf16>
    %cst_158 = arith.constant dense<0.000000e+00> : vector<4x64xf32>
    %171 = tpu.matmul %168, %170, %cst_158 {dimension_numbers = #tpu.dot_dimension_numbers<[1], [0], [0], [1], [0, 0, 1, 1], [], []>} : vector<4x32xbf16>, vector<32x64xbf16>, vector<4x64xf32> -> vector<4x64xf32>
    %172 = vector.broadcast %163 : vector<1x64xf32> to vector<4x64xf32>
    %173 = arith.addf %172, %171 : vector<4x64xf32>
    %c1_159 = arith.constant 1 : index
    %c0_160 = arith.constant 0 : index
    %c0_161 = arith.constant 0 : index
    %174 = vector.load %arg19[%c1_159, %c0_160, %c0_161] : memref<9x4x16xbf16, #tpu.memory_space<vmem>>, vector<1x4x16xbf16>
    %175 = vector.shape_cast %174 : vector<1x4x16xbf16> to vector<4x16xbf16>
    %cst_162 = arith.constant dense<0.000000e+00> : vector<4x32xf32>
    %176 = tpu.matmul %175, %164, %cst_162 {dimension_numbers = #tpu.dot_dimension_numbers<[1], [0], [0], [1], [0, 0, 1, 1], [], []>} : vector<4x16xbf16>, vector<16x32xbf16>, vector<4x32xf32> -> vector<4x32xf32>
    %177 = arith.truncf %176 : vector<4x32xf32> to vector<4x32xbf16>
    %c1_163 = arith.constant 1 : index
    %c0_164 = arith.constant 0 : index
    %c0_165 = arith.constant 0 : index
    %178 = vector.load %arg5[%c1_163, %c0_164, %c0_165] : memref<9x32x64xbf16, #tpu.memory_space<vmem>>, vector<1x32x64xbf16>
    %179 = vector.shape_cast %178 : vector<1x32x64xbf16> to vector<32x64xbf16>
    %cst_166 = arith.constant dense<0.000000e+00> : vector<4x64xf32>
    %180 = tpu.matmul %177, %179, %cst_166 {dimension_numbers = #tpu.dot_dimension_numbers<[1], [0], [0], [1], [0, 0, 1, 1], [], []>} : vector<4x32xbf16>, vector<32x64xbf16>, vector<4x64xf32> -> vector<4x64xf32>
    %181 = arith.addf %173, %180 : vector<4x64xf32>
    %c2_167 = arith.constant 2 : index
    %c0_168 = arith.constant 0 : index
    %c0_169 = arith.constant 0 : index
    %182 = vector.load %arg19[%c2_167, %c0_168, %c0_169] : memref<9x4x16xbf16, #tpu.memory_space<vmem>>, vector<1x4x16xbf16>
    %183 = vector.shape_cast %182 : vector<1x4x16xbf16> to vector<4x16xbf16>
    %cst_170 = arith.constant dense<0.000000e+00> : vector<4x32xf32>
    %184 = tpu.matmul %183, %164, %cst_170 {dimension_numbers = #tpu.dot_dimension_numbers<[1], [0], [0], [1], [0, 0, 1, 1], [], []>} : vector<4x16xbf16>, vector<16x32xbf16>, vector<4x32xf32> -> vector<4x32xf32>
    %185 = arith.truncf %184 : vector<4x32xf32> to vector<4x32xbf16>
    %c2_171 = arith.constant 2 : index
    %c0_172 = arith.constant 0 : index
    %c0_173 = arith.constant 0 : index
    %186 = vector.load %arg5[%c2_171, %c0_172, %c0_173] : memref<9x32x64xbf16, #tpu.memory_space<vmem>>, vector<1x32x64xbf16>
    %187 = vector.shape_cast %186 : vector<1x32x64xbf16> to vector<32x64xbf16>
    %cst_174 = arith.constant dense<0.000000e+00> : vector<4x64xf32>
    %188 = tpu.matmul %185, %187, %cst_174 {dimension_numbers = #tpu.dot_dimension_numbers<[1], [0], [0], [1], [0, 0, 1, 1], [], []>} : vector<4x32xbf16>, vector<32x64xbf16>, vector<4x64xf32> -> vector<4x64xf32>
    %189 = arith.addf %181, %188 : vector<4x64xf32>
    %c3_175 = arith.constant 3 : index
    %c0_176 = arith.constant 0 : index
    %c0_177 = arith.constant 0 : index
    %190 = vector.load %arg19[%c3_175, %c0_176, %c0_177] : memref<9x4x16xbf16, #tpu.memory_space<vmem>>, vector<1x4x16xbf16>
    %191 = vector.shape_cast %190 : vector<1x4x16xbf16> to vector<4x16xbf16>
    %cst_178 = arith.constant dense<0.000000e+00> : vector<4x32xf32>
    %192 = tpu.matmul %191, %164, %cst_178 {dimension_numbers = #tpu.dot_dimension_numbers<[1], [0], [0], [1], [0, 0, 1, 1], [], []>} : vector<4x16xbf16>, vector<16x32xbf16>, vector<4x32xf32> -> vector<4x32xf32>
    %193 = arith.truncf %192 : vector<4x32xf32> to vector<4x32xbf16>
    %c3_179 = arith.constant 3 : index
    %c0_180 = arith.constant 0 : index
    %c0_181 = arith.constant 0 : index
    %194 = vector.load %arg5[%c3_179, %c0_180, %c0_181] : memref<9x32x64xbf16, #tpu.memory_space<vmem>>, vector<1x32x64xbf16>
    %195 = vector.shape_cast %194 : vector<1x32x64xbf16> to vector<32x64xbf16>
    %cst_182 = arith.constant dense<0.000000e+00> : vector<4x64xf32>
    %196 = tpu.matmul %193, %195, %cst_182 {dimension_numbers = #tpu.dot_dimension_numbers<[1], [0], [0], [1], [0, 0, 1, 1], [], []>} : vector<4x32xbf16>, vector<32x64xbf16>, vector<4x64xf32> -> vector<4x64xf32>
    %197 = arith.addf %189, %196 : vector<4x64xf32>
    %c4_183 = arith.constant 4 : index
    %c0_184 = arith.constant 0 : index
    %c0_185 = arith.constant 0 : index
    %198 = vector.load %arg19[%c4_183, %c0_184, %c0_185] : memref<9x4x16xbf16, #tpu.memory_space<vmem>>, vector<1x4x16xbf16>
    %199 = vector.shape_cast %198 : vector<1x4x16xbf16> to vector<4x16xbf16>
    %cst_186 = arith.constant dense<0.000000e+00> : vector<4x32xf32>
    %200 = tpu.matmul %199, %164, %cst_186 {dimension_numbers = #tpu.dot_dimension_numbers<[1], [0], [0], [1], [0, 0, 1, 1], [], []>} : vector<4x16xbf16>, vector<16x32xbf16>, vector<4x32xf32> -> vector<4x32xf32>
    %201 = arith.truncf %200 : vector<4x32xf32> to vector<4x32xbf16>
    %c4_187 = arith.constant 4 : index
    %c0_188 = arith.constant 0 : index
    %c0_189 = arith.constant 0 : index
    %202 = vector.load %arg5[%c4_187, %c0_188, %c0_189] : memref<9x32x64xbf16, #tpu.memory_space<vmem>>, vector<1x32x64xbf16>
    %203 = vector.shape_cast %202 : vector<1x32x64xbf16> to vector<32x64xbf16>
    %cst_190 = arith.constant dense<0.000000e+00> : vector<4x64xf32>
    %204 = tpu.matmul %201, %203, %cst_190 {dimension_numbers = #tpu.dot_dimension_numbers<[1], [0], [0], [1], [0, 0, 1, 1], [], []>} : vector<4x32xbf16>, vector<32x64xbf16>, vector<4x64xf32> -> vector<4x64xf32>
    %205 = arith.addf %197, %204 : vector<4x64xf32>
    %c5_191 = arith.constant 5 : index
    %c0_192 = arith.constant 0 : index
    %c0_193 = arith.constant 0 : index
    %206 = vector.load %arg19[%c5_191, %c0_192, %c0_193] : memref<9x4x16xbf16, #tpu.memory_space<vmem>>, vector<1x4x16xbf16>
    %207 = vector.shape_cast %206 : vector<1x4x16xbf16> to vector<4x16xbf16>
    %cst_194 = arith.constant dense<0.000000e+00> : vector<4x32xf32>
    %208 = tpu.matmul %207, %164, %cst_194 {dimension_numbers = #tpu.dot_dimension_numbers<[1], [0], [0], [1], [0, 0, 1, 1], [], []>} : vector<4x16xbf16>, vector<16x32xbf16>, vector<4x32xf32> -> vector<4x32xf32>
    %209 = arith.truncf %208 : vector<4x32xf32> to vector<4x32xbf16>
    %c5_195 = arith.constant 5 : index
    %c0_196 = arith.constant 0 : index
    %c0_197 = arith.constant 0 : index
    %210 = vector.load %arg5[%c5_195, %c0_196, %c0_197] : memref<9x32x64xbf16, #tpu.memory_space<vmem>>, vector<1x32x64xbf16>
    %211 = vector.shape_cast %210 : vector<1x32x64xbf16> to vector<32x64xbf16>
    %cst_198 = arith.constant dense<0.000000e+00> : vector<4x64xf32>
    %212 = tpu.matmul %209, %211, %cst_198 {dimension_numbers = #tpu.dot_dimension_numbers<[1], [0], [0], [1], [0, 0, 1, 1], [], []>} : vector<4x32xbf16>, vector<32x64xbf16>, vector<4x64xf32> -> vector<4x64xf32>
    %213 = arith.addf %205, %212 : vector<4x64xf32>
    %c6_199 = arith.constant 6 : index
    %c0_200 = arith.constant 0 : index
    %c0_201 = arith.constant 0 : index
    %214 = vector.load %arg19[%c6_199, %c0_200, %c0_201] : memref<9x4x16xbf16, #tpu.memory_space<vmem>>, vector<1x4x16xbf16>
    %215 = vector.shape_cast %214 : vector<1x4x16xbf16> to vector<4x16xbf16>
    %cst_202 = arith.constant dense<0.000000e+00> : vector<4x32xf32>
    %216 = tpu.matmul %215, %164, %cst_202 {dimension_numbers = #tpu.dot_dimension_numbers<[1], [0], [0], [1], [0, 0, 1, 1], [], []>} : vector<4x16xbf16>, vector<16x32xbf16>, vector<4x32xf32> -> vector<4x32xf32>
    %217 = arith.truncf %216 : vector<4x32xf32> to vector<4x32xbf16>
    %c6_203 = arith.constant 6 : index
    %c0_204 = arith.constant 0 : index
    %c0_205 = arith.constant 0 : index
    %218 = vector.load %arg5[%c6_203, %c0_204, %c0_205] : memref<9x32x64xbf16, #tpu.memory_space<vmem>>, vector<1x32x64xbf16>
    %219 = vector.shape_cast %218 : vector<1x32x64xbf16> to vector<32x64xbf16>
    %cst_206 = arith.constant dense<0.000000e+00> : vector<4x64xf32>
    %220 = tpu.matmul %217, %219, %cst_206 {dimension_numbers = #tpu.dot_dimension_numbers<[1], [0], [0], [1], [0, 0, 1, 1], [], []>} : vector<4x32xbf16>, vector<32x64xbf16>, vector<4x64xf32> -> vector<4x64xf32>
    %221 = arith.addf %213, %220 : vector<4x64xf32>
    %c7_207 = arith.constant 7 : index
    %c0_208 = arith.constant 0 : index
    %c0_209 = arith.constant 0 : index
    %222 = vector.load %arg19[%c7_207, %c0_208, %c0_209] : memref<9x4x16xbf16, #tpu.memory_space<vmem>>, vector<1x4x16xbf16>
    %223 = vector.shape_cast %222 : vector<1x4x16xbf16> to vector<4x16xbf16>
    %cst_210 = arith.constant dense<0.000000e+00> : vector<4x32xf32>
    %224 = tpu.matmul %223, %164, %cst_210 {dimension_numbers = #tpu.dot_dimension_numbers<[1], [0], [0], [1], [0, 0, 1, 1], [], []>} : vector<4x16xbf16>, vector<16x32xbf16>, vector<4x32xf32> -> vector<4x32xf32>
    %225 = arith.truncf %224 : vector<4x32xf32> to vector<4x32xbf16>
    %c7_211 = arith.constant 7 : index
    %c0_212 = arith.constant 0 : index
    %c0_213 = arith.constant 0 : index
    %226 = vector.load %arg5[%c7_211, %c0_212, %c0_213] : memref<9x32x64xbf16, #tpu.memory_space<vmem>>, vector<1x32x64xbf16>
    %227 = vector.shape_cast %226 : vector<1x32x64xbf16> to vector<32x64xbf16>
    %cst_214 = arith.constant dense<0.000000e+00> : vector<4x64xf32>
    %228 = tpu.matmul %225, %227, %cst_214 {dimension_numbers = #tpu.dot_dimension_numbers<[1], [0], [0], [1], [0, 0, 1, 1], [], []>} : vector<4x32xbf16>, vector<32x64xbf16>, vector<4x64xf32> -> vector<4x64xf32>
    %229 = arith.addf %221, %228 : vector<4x64xf32>
    %c8_215 = arith.constant 8 : index
    %c0_216 = arith.constant 0 : index
    %c0_217 = arith.constant 0 : index
    %230 = vector.load %arg19[%c8_215, %c0_216, %c0_217] : memref<9x4x16xbf16, #tpu.memory_space<vmem>>, vector<1x4x16xbf16>
    %231 = vector.shape_cast %230 : vector<1x4x16xbf16> to vector<4x16xbf16>
    %cst_218 = arith.constant dense<0.000000e+00> : vector<4x32xf32>
    %232 = tpu.matmul %231, %164, %cst_218 {dimension_numbers = #tpu.dot_dimension_numbers<[1], [0], [0], [1], [0, 0, 1, 1], [], []>} : vector<4x16xbf16>, vector<16x32xbf16>, vector<4x32xf32> -> vector<4x32xf32>
    %233 = arith.truncf %232 : vector<4x32xf32> to vector<4x32xbf16>
    %c8_219 = arith.constant 8 : index
    %c0_220 = arith.constant 0 : index
    %c0_221 = arith.constant 0 : index
    %234 = vector.load %arg5[%c8_219, %c0_220, %c0_221] : memref<9x32x64xbf16, #tpu.memory_space<vmem>>, vector<1x32x64xbf16>
    %235 = vector.shape_cast %234 : vector<1x32x64xbf16> to vector<32x64xbf16>
    %cst_222 = arith.constant dense<0.000000e+00> : vector<4x64xf32>
    %236 = tpu.matmul %233, %235, %cst_222 {dimension_numbers = #tpu.dot_dimension_numbers<[1], [0], [0], [1], [0, 0, 1, 1], [], []>} : vector<4x32xbf16>, vector<32x64xbf16>, vector<4x64xf32> -> vector<4x64xf32>
    %237 = arith.addf %229, %236 : vector<4x64xf32>
    %cst_223 = arith.constant 0.000000e+00 : f32
    %238 = vector.broadcast %cst_223 : f32 to vector<4x64xf32>
    %239 = arith.maximumf %237, %238 : vector<4x64xf32>
    %c4_224 = arith.constant 4 : index
    %c0_225 = arith.constant 0 : index
    %240 = vector.load %arg16[%c4_224, %c0_225] : memref<16x128xf32, #tpu.memory_space<vmem>>, vector<1x32xf32>
    %241 = arith.truncf %85 : vector<64x16xf32> to vector<64x16xbf16>
    %c0_226 = arith.constant 0 : index
    %c0_227 = arith.constant 0 : index
    %c0_228 = arith.constant 0 : index
    %242 = vector.load %arg18[%c0_226, %c0_227, %c0_228] : memref<9x16x64xbf16, #tpu.memory_space<vmem>>, vector<1x16x64xbf16>
    %243 = vector.shape_cast %242 : vector<1x16x64xbf16> to vector<16x64xbf16>
    %cst_229 = arith.constant dense<0.000000e+00> : vector<16x16xf32>
    %244 = tpu.matmul %243, %241, %cst_229 {dimension_numbers = #tpu.dot_dimension_numbers<[1], [0], [0], [1], [0, 0, 1, 1], [], []>} : vector<16x64xbf16>, vector<64x16xbf16>, vector<16x16xf32> -> vector<16x16xf32>
    %245 = arith.truncf %244 : vector<16x16xf32> to vector<16x16xbf16>
    %c0_230 = arith.constant 0 : index
    %c0_231 = arith.constant 0 : index
    %c0_232 = arith.constant 0 : index
    %246 = vector.load %arg6[%c0_230, %c0_231, %c0_232] : memref<9x16x32xbf16, #tpu.memory_space<vmem>>, vector<1x16x32xbf16>
    %247 = vector.shape_cast %246 : vector<1x16x32xbf16> to vector<16x32xbf16>
    %cst_233 = arith.constant dense<0.000000e+00> : vector<16x32xf32>
    %248 = tpu.matmul %245, %247, %cst_233 {dimension_numbers = #tpu.dot_dimension_numbers<[1], [0], [0], [1], [0, 0, 1, 1], [], []>} : vector<16x16xbf16>, vector<16x32xbf16>, vector<16x32xf32> -> vector<16x32xf32>
    %249 = vector.broadcast %240 : vector<1x32xf32> to vector<16x32xf32>
    %250 = arith.addf %249, %248 : vector<16x32xf32>
    %c1_234 = arith.constant 1 : index
    %c0_235 = arith.constant 0 : index
    %c0_236 = arith.constant 0 : index
    %251 = vector.load %arg18[%c1_234, %c0_235, %c0_236] : memref<9x16x64xbf16, #tpu.memory_space<vmem>>, vector<1x16x64xbf16>
    %252 = vector.shape_cast %251 : vector<1x16x64xbf16> to vector<16x64xbf16>
    %cst_237 = arith.constant dense<0.000000e+00> : vector<16x16xf32>
    %253 = tpu.matmul %252, %241, %cst_237 {dimension_numbers = #tpu.dot_dimension_numbers<[1], [0], [0], [1], [0, 0, 1, 1], [], []>} : vector<16x64xbf16>, vector<64x16xbf16>, vector<16x16xf32> -> vector<16x16xf32>
    %254 = arith.truncf %253 : vector<16x16xf32> to vector<16x16xbf16>
    %c1_238 = arith.constant 1 : index
    %c0_239 = arith.constant 0 : index
    %c0_240 = arith.constant 0 : index
    %255 = vector.load %arg6[%c1_238, %c0_239, %c0_240] : memref<9x16x32xbf16, #tpu.memory_space<vmem>>, vector<1x16x32xbf16>
    %256 = vector.shape_cast %255 : vector<1x16x32xbf16> to vector<16x32xbf16>
    %cst_241 = arith.constant dense<0.000000e+00> : vector<16x32xf32>
    %257 = tpu.matmul %254, %256, %cst_241 {dimension_numbers = #tpu.dot_dimension_numbers<[1], [0], [0], [1], [0, 0, 1, 1], [], []>} : vector<16x16xbf16>, vector<16x32xbf16>, vector<16x32xf32> -> vector<16x32xf32>
    %258 = arith.addf %250, %257 : vector<16x32xf32>
    %c2_242 = arith.constant 2 : index
    %c0_243 = arith.constant 0 : index
    %c0_244 = arith.constant 0 : index
    %259 = vector.load %arg18[%c2_242, %c0_243, %c0_244] : memref<9x16x64xbf16, #tpu.memory_space<vmem>>, vector<1x16x64xbf16>
    %260 = vector.shape_cast %259 : vector<1x16x64xbf16> to vector<16x64xbf16>
    %cst_245 = arith.constant dense<0.000000e+00> : vector<16x16xf32>
    %261 = tpu.matmul %260, %241, %cst_245 {dimension_numbers = #tpu.dot_dimension_numbers<[1], [0], [0], [1], [0, 0, 1, 1], [], []>} : vector<16x64xbf16>, vector<64x16xbf16>, vector<16x16xf32> -> vector<16x16xf32>
    %262 = arith.truncf %261 : vector<16x16xf32> to vector<16x16xbf16>
    %c2_246 = arith.constant 2 : index
    %c0_247 = arith.constant 0 : index
    %c0_248 = arith.constant 0 : index
    %263 = vector.load %arg6[%c2_246, %c0_247, %c0_248] : memref<9x16x32xbf16, #tpu.memory_space<vmem>>, vector<1x16x32xbf16>
    %264 = vector.shape_cast %263 : vector<1x16x32xbf16> to vector<16x32xbf16>
    %cst_249 = arith.constant dense<0.000000e+00> : vector<16x32xf32>
    %265 = tpu.matmul %262, %264, %cst_249 {dimension_numbers = #tpu.dot_dimension_numbers<[1], [0], [0], [1], [0, 0, 1, 1], [], []>} : vector<16x16xbf16>, vector<16x32xbf16>, vector<16x32xf32> -> vector<16x32xf32>
    %266 = arith.addf %258, %265 : vector<16x32xf32>
    %c3_250 = arith.constant 3 : index
    %c0_251 = arith.constant 0 : index
    %c0_252 = arith.constant 0 : index
    %267 = vector.load %arg18[%c3_250, %c0_251, %c0_252] : memref<9x16x64xbf16, #tpu.memory_space<vmem>>, vector<1x16x64xbf16>
    %268 = vector.shape_cast %267 : vector<1x16x64xbf16> to vector<16x64xbf16>
    %cst_253 = arith.constant dense<0.000000e+00> : vector<16x16xf32>
    %269 = tpu.matmul %268, %241, %cst_253 {dimension_numbers = #tpu.dot_dimension_numbers<[1], [0], [0], [1], [0, 0, 1, 1], [], []>} : vector<16x64xbf16>, vector<64x16xbf16>, vector<16x16xf32> -> vector<16x16xf32>
    %270 = arith.truncf %269 : vector<16x16xf32> to vector<16x16xbf16>
    %c3_254 = arith.constant 3 : index
    %c0_255 = arith.constant 0 : index
    %c0_256 = arith.constant 0 : index
    %271 = vector.load %arg6[%c3_254, %c0_255, %c0_256] : memref<9x16x32xbf16, #tpu.memory_space<vmem>>, vector<1x16x32xbf16>
    %272 = vector.shape_cast %271 : vector<1x16x32xbf16> to vector<16x32xbf16>
    %cst_257 = arith.constant dense<0.000000e+00> : vector<16x32xf32>
    %273 = tpu.matmul %270, %272, %cst_257 {dimension_numbers = #tpu.dot_dimension_numbers<[1], [0], [0], [1], [0, 0, 1, 1], [], []>} : vector<16x16xbf16>, vector<16x32xbf16>, vector<16x32xf32> -> vector<16x32xf32>
    %274 = arith.addf %266, %273 : vector<16x32xf32>
    %c4_258 = arith.constant 4 : index
    %c0_259 = arith.constant 0 : index
    %c0_260 = arith.constant 0 : index
    %275 = vector.load %arg18[%c4_258, %c0_259, %c0_260] : memref<9x16x64xbf16, #tpu.memory_space<vmem>>, vector<1x16x64xbf16>
    %276 = vector.shape_cast %275 : vector<1x16x64xbf16> to vector<16x64xbf16>
    %cst_261 = arith.constant dense<0.000000e+00> : vector<16x16xf32>
    %277 = tpu.matmul %276, %241, %cst_261 {dimension_numbers = #tpu.dot_dimension_numbers<[1], [0], [0], [1], [0, 0, 1, 1], [], []>} : vector<16x64xbf16>, vector<64x16xbf16>, vector<16x16xf32> -> vector<16x16xf32>
    %278 = arith.truncf %277 : vector<16x16xf32> to vector<16x16xbf16>
    %c4_262 = arith.constant 4 : index
    %c0_263 = arith.constant 0 : index
    %c0_264 = arith.constant 0 : index
    %279 = vector.load %arg6[%c4_262, %c0_263, %c0_264] : memref<9x16x32xbf16, #tpu.memory_space<vmem>>, vector<1x16x32xbf16>
    %280 = vector.shape_cast %279 : vector<1x16x32xbf16> to vector<16x32xbf16>
    %cst_265 = arith.constant dense<0.000000e+00> : vector<16x32xf32>
    %281 = tpu.matmul %278, %280, %cst_265 {dimension_numbers = #tpu.dot_dimension_numbers<[1], [0], [0], [1], [0, 0, 1, 1], [], []>} : vector<16x16xbf16>, vector<16x32xbf16>, vector<16x32xf32> -> vector<16x32xf32>
    %282 = arith.addf %274, %281 : vector<16x32xf32>
    %c5_266 = arith.constant 5 : index
    %c0_267 = arith.constant 0 : index
    %c0_268 = arith.constant 0 : index
    %283 = vector.load %arg18[%c5_266, %c0_267, %c0_268] : memref<9x16x64xbf16, #tpu.memory_space<vmem>>, vector<1x16x64xbf16>
    %284 = vector.shape_cast %283 : vector<1x16x64xbf16> to vector<16x64xbf16>
    %cst_269 = arith.constant dense<0.000000e+00> : vector<16x16xf32>
    %285 = tpu.matmul %284, %241, %cst_269 {dimension_numbers = #tpu.dot_dimension_numbers<[1], [0], [0], [1], [0, 0, 1, 1], [], []>} : vector<16x64xbf16>, vector<64x16xbf16>, vector<16x16xf32> -> vector<16x16xf32>
    %286 = arith.truncf %285 : vector<16x16xf32> to vector<16x16xbf16>
    %c5_270 = arith.constant 5 : index
    %c0_271 = arith.constant 0 : index
    %c0_272 = arith.constant 0 : index
    %287 = vector.load %arg6[%c5_270, %c0_271, %c0_272] : memref<9x16x32xbf16, #tpu.memory_space<vmem>>, vector<1x16x32xbf16>
    %288 = vector.shape_cast %287 : vector<1x16x32xbf16> to vector<16x32xbf16>
    %cst_273 = arith.constant dense<0.000000e+00> : vector<16x32xf32>
    %289 = tpu.matmul %286, %288, %cst_273 {dimension_numbers = #tpu.dot_dimension_numbers<[1], [0], [0], [1], [0, 0, 1, 1], [], []>} : vector<16x16xbf16>, vector<16x32xbf16>, vector<16x32xf32> -> vector<16x32xf32>
    %290 = arith.addf %282, %289 : vector<16x32xf32>
    %c6_274 = arith.constant 6 : index
    %c0_275 = arith.constant 0 : index
    %c0_276 = arith.constant 0 : index
    %291 = vector.load %arg18[%c6_274, %c0_275, %c0_276] : memref<9x16x64xbf16, #tpu.memory_space<vmem>>, vector<1x16x64xbf16>
    %292 = vector.shape_cast %291 : vector<1x16x64xbf16> to vector<16x64xbf16>
    %cst_277 = arith.constant dense<0.000000e+00> : vector<16x16xf32>
    %293 = tpu.matmul %292, %241, %cst_277 {dimension_numbers = #tpu.dot_dimension_numbers<[1], [0], [0], [1], [0, 0, 1, 1], [], []>} : vector<16x64xbf16>, vector<64x16xbf16>, vector<16x16xf32> -> vector<16x16xf32>
    %294 = arith.truncf %293 : vector<16x16xf32> to vector<16x16xbf16>
    %c6_278 = arith.constant 6 : index
    %c0_279 = arith.constant 0 : index
    %c0_280 = arith.constant 0 : index
    %295 = vector.load %arg6[%c6_278, %c0_279, %c0_280] : memref<9x16x32xbf16, #tpu.memory_space<vmem>>, vector<1x16x32xbf16>
    %296 = vector.shape_cast %295 : vector<1x16x32xbf16> to vector<16x32xbf16>
    %cst_281 = arith.constant dense<0.000000e+00> : vector<16x32xf32>
    %297 = tpu.matmul %294, %296, %cst_281 {dimension_numbers = #tpu.dot_dimension_numbers<[1], [0], [0], [1], [0, 0, 1, 1], [], []>} : vector<16x16xbf16>, vector<16x32xbf16>, vector<16x32xf32> -> vector<16x32xf32>
    %298 = arith.addf %290, %297 : vector<16x32xf32>
    %c7_282 = arith.constant 7 : index
    %c0_283 = arith.constant 0 : index
    %c0_284 = arith.constant 0 : index
    %299 = vector.load %arg18[%c7_282, %c0_283, %c0_284] : memref<9x16x64xbf16, #tpu.memory_space<vmem>>, vector<1x16x64xbf16>
    %300 = vector.shape_cast %299 : vector<1x16x64xbf16> to vector<16x64xbf16>
    %cst_285 = arith.constant dense<0.000000e+00> : vector<16x16xf32>
    %301 = tpu.matmul %300, %241, %cst_285 {dimension_numbers = #tpu.dot_dimension_numbers<[1], [0], [0], [1], [0, 0, 1, 1], [], []>} : vector<16x64xbf16>, vector<64x16xbf16>, vector<16x16xf32> -> vector<16x16xf32>
    %302 = arith.truncf %301 : vector<16x16xf32> to vector<16x16xbf16>
    %c7_286 = arith.constant 7 : index
    %c0_287 = arith.constant 0 : index
    %c0_288 = arith.constant 0 : index
    %303 = vector.load %arg6[%c7_286, %c0_287, %c0_288] : memref<9x16x32xbf16, #tpu.memory_space<vmem>>, vector<1x16x32xbf16>
    %304 = vector.shape_cast %303 : vector<1x16x32xbf16> to vector<16x32xbf16>
    %cst_289 = arith.constant dense<0.000000e+00> : vector<16x32xf32>
    %305 = tpu.matmul %302, %304, %cst_289 {dimension_numbers = #tpu.dot_dimension_numbers<[1], [0], [0], [1], [0, 0, 1, 1], [], []>} : vector<16x16xbf16>, vector<16x32xbf16>, vector<16x32xf32> -> vector<16x32xf32>
    %306 = arith.addf %298, %305 : vector<16x32xf32>
    %c8_290 = arith.constant 8 : index
    %c0_291 = arith.constant 0 : index
    %c0_292 = arith.constant 0 : index
    %307 = vector.load %arg18[%c8_290, %c0_291, %c0_292] : memref<9x16x64xbf16, #tpu.memory_space<vmem>>, vector<1x16x64xbf16>
    %308 = vector.shape_cast %307 : vector<1x16x64xbf16> to vector<16x64xbf16>
    %cst_293 = arith.constant dense<0.000000e+00> : vector<16x16xf32>
    %309 = tpu.matmul %308, %241, %cst_293 {dimension_numbers = #tpu.dot_dimension_numbers<[1], [0], [0], [1], [0, 0, 1, 1], [], []>} : vector<16x64xbf16>, vector<64x16xbf16>, vector<16x16xf32> -> vector<16x16xf32>
    %310 = arith.truncf %309 : vector<16x16xf32> to vector<16x16xbf16>
    %c8_294 = arith.constant 8 : index
    %c0_295 = arith.constant 0 : index
    %c0_296 = arith.constant 0 : index
    %311 = vector.load %arg6[%c8_294, %c0_295, %c0_296] : memref<9x16x32xbf16, #tpu.memory_space<vmem>>, vector<1x16x32xbf16>
    %312 = vector.shape_cast %311 : vector<1x16x32xbf16> to vector<16x32xbf16>
    %cst_297 = arith.constant dense<0.000000e+00> : vector<16x32xf32>
    %313 = tpu.matmul %310, %312, %cst_297 {dimension_numbers = #tpu.dot_dimension_numbers<[1], [0], [0], [1], [0, 0, 1, 1], [], []>} : vector<16x16xbf16>, vector<16x32xbf16>, vector<16x32xf32> -> vector<16x32xf32>
    %314 = arith.addf %306, %313 : vector<16x32xf32>
    %cst_298 = arith.constant 0.000000e+00 : f32
    %315 = vector.broadcast %cst_298 : f32 to vector<16x32xf32>
    %316 = arith.maximumf %314, %315 : vector<16x32xf32>
    %c5_299 = arith.constant 5 : index
    %c0_300 = arith.constant 0 : index
    %317 = vector.load %arg16[%c5_299, %c0_300] : memref<16x128xf32, #tpu.memory_space<vmem>>, vector<1x64xf32>
    %318 = arith.truncf %316 : vector<16x32xf32> to vector<16x32xbf16>
    %c0_301 = arith.constant 0 : index
    %c0_302 = arith.constant 0 : index
    %c0_303 = arith.constant 0 : index
    %319 = vector.load %arg19[%c0_301, %c0_302, %c0_303] : memref<9x4x16xbf16, #tpu.memory_space<vmem>>, vector<1x4x16xbf16>
    %320 = vector.shape_cast %319 : vector<1x4x16xbf16> to vector<4x16xbf16>
    %cst_304 = arith.constant dense<0.000000e+00> : vector<4x32xf32>
    %321 = tpu.matmul %320, %318, %cst_304 {dimension_numbers = #tpu.dot_dimension_numbers<[1], [0], [0], [1], [0, 0, 1, 1], [], []>} : vector<4x16xbf16>, vector<16x32xbf16>, vector<4x32xf32> -> vector<4x32xf32>
    %322 = arith.truncf %321 : vector<4x32xf32> to vector<4x32xbf16>
    %c0_305 = arith.constant 0 : index
    %c0_306 = arith.constant 0 : index
    %c0_307 = arith.constant 0 : index
    %323 = vector.load %arg7[%c0_305, %c0_306, %c0_307] : memref<9x32x64xbf16, #tpu.memory_space<vmem>>, vector<1x32x64xbf16>
    %324 = vector.shape_cast %323 : vector<1x32x64xbf16> to vector<32x64xbf16>
    %cst_308 = arith.constant dense<0.000000e+00> : vector<4x64xf32>
    %325 = tpu.matmul %322, %324, %cst_308 {dimension_numbers = #tpu.dot_dimension_numbers<[1], [0], [0], [1], [0, 0, 1, 1], [], []>} : vector<4x32xbf16>, vector<32x64xbf16>, vector<4x64xf32> -> vector<4x64xf32>
    %326 = vector.broadcast %317 : vector<1x64xf32> to vector<4x64xf32>
    %327 = arith.addf %326, %325 : vector<4x64xf32>
    %c1_309 = arith.constant 1 : index
    %c0_310 = arith.constant 0 : index
    %c0_311 = arith.constant 0 : index
    %328 = vector.load %arg19[%c1_309, %c0_310, %c0_311] : memref<9x4x16xbf16, #tpu.memory_space<vmem>>, vector<1x4x16xbf16>
    %329 = vector.shape_cast %328 : vector<1x4x16xbf16> to vector<4x16xbf16>
    %cst_312 = arith.constant dense<0.000000e+00> : vector<4x32xf32>
    %330 = tpu.matmul %329, %318, %cst_312 {dimension_numbers = #tpu.dot_dimension_numbers<[1], [0], [0], [1], [0, 0, 1, 1], [], []>} : vector<4x16xbf16>, vector<16x32xbf16>, vector<4x32xf32> -> vector<4x32xf32>
    %331 = arith.truncf %330 : vector<4x32xf32> to vector<4x32xbf16>
    %c1_313 = arith.constant 1 : index
    %c0_314 = arith.constant 0 : index
    %c0_315 = arith.constant 0 : index
    %332 = vector.load %arg7[%c1_313, %c0_314, %c0_315] : memref<9x32x64xbf16, #tpu.memory_space<vmem>>, vector<1x32x64xbf16>
    %333 = vector.shape_cast %332 : vector<1x32x64xbf16> to vector<32x64xbf16>
    %cst_316 = arith.constant dense<0.000000e+00> : vector<4x64xf32>
    %334 = tpu.matmul %331, %333, %cst_316 {dimension_numbers = #tpu.dot_dimension_numbers<[1], [0], [0], [1], [0, 0, 1, 1], [], []>} : vector<4x32xbf16>, vector<32x64xbf16>, vector<4x64xf32> -> vector<4x64xf32>
    %335 = arith.addf %327, %334 : vector<4x64xf32>
    %c2_317 = arith.constant 2 : index
    %c0_318 = arith.constant 0 : index
    %c0_319 = arith.constant 0 : index
    %336 = vector.load %arg19[%c2_317, %c0_318, %c0_319] : memref<9x4x16xbf16, #tpu.memory_space<vmem>>, vector<1x4x16xbf16>
    %337 = vector.shape_cast %336 : vector<1x4x16xbf16> to vector<4x16xbf16>
    %cst_320 = arith.constant dense<0.000000e+00> : vector<4x32xf32>
    %338 = tpu.matmul %337, %318, %cst_320 {dimension_numbers = #tpu.dot_dimension_numbers<[1], [0], [0], [1], [0, 0, 1, 1], [], []>} : vector<4x16xbf16>, vector<16x32xbf16>, vector<4x32xf32> -> vector<4x32xf32>
    %339 = arith.truncf %338 : vector<4x32xf32> to vector<4x32xbf16>
    %c2_321 = arith.constant 2 : index
    %c0_322 = arith.constant 0 : index
    %c0_323 = arith.constant 0 : index
    %340 = vector.load %arg7[%c2_321, %c0_322, %c0_323] : memref<9x32x64xbf16, #tpu.memory_space<vmem>>, vector<1x32x64xbf16>
    %341 = vector.shape_cast %340 : vector<1x32x64xbf16> to vector<32x64xbf16>
    %cst_324 = arith.constant dense<0.000000e+00> : vector<4x64xf32>
    %342 = tpu.matmul %339, %341, %cst_324 {dimension_numbers = #tpu.dot_dimension_numbers<[1], [0], [0], [1], [0, 0, 1, 1], [], []>} : vector<4x32xbf16>, vector<32x64xbf16>, vector<4x64xf32> -> vector<4x64xf32>
    %343 = arith.addf %335, %342 : vector<4x64xf32>
    %c3_325 = arith.constant 3 : index
    %c0_326 = arith.constant 0 : index
    %c0_327 = arith.constant 0 : index
    %344 = vector.load %arg19[%c3_325, %c0_326, %c0_327] : memref<9x4x16xbf16, #tpu.memory_space<vmem>>, vector<1x4x16xbf16>
    %345 = vector.shape_cast %344 : vector<1x4x16xbf16> to vector<4x16xbf16>
    %cst_328 = arith.constant dense<0.000000e+00> : vector<4x32xf32>
    %346 = tpu.matmul %345, %318, %cst_328 {dimension_numbers = #tpu.dot_dimension_numbers<[1], [0], [0], [1], [0, 0, 1, 1], [], []>} : vector<4x16xbf16>, vector<16x32xbf16>, vector<4x32xf32> -> vector<4x32xf32>
    %347 = arith.truncf %346 : vector<4x32xf32> to vector<4x32xbf16>
    %c3_329 = arith.constant 3 : index
    %c0_330 = arith.constant 0 : index
    %c0_331 = arith.constant 0 : index
    %348 = vector.load %arg7[%c3_329, %c0_330, %c0_331] : memref<9x32x64xbf16, #tpu.memory_space<vmem>>, vector<1x32x64xbf16>
    %349 = vector.shape_cast %348 : vector<1x32x64xbf16> to vector<32x64xbf16>
    %cst_332 = arith.constant dense<0.000000e+00> : vector<4x64xf32>
    %350 = tpu.matmul %347, %349, %cst_332 {dimension_numbers = #tpu.dot_dimension_numbers<[1], [0], [0], [1], [0, 0, 1, 1], [], []>} : vector<4x32xbf16>, vector<32x64xbf16>, vector<4x64xf32> -> vector<4x64xf32>
    %351 = arith.addf %343, %350 : vector<4x64xf32>
    %c4_333 = arith.constant 4 : index
    %c0_334 = arith.constant 0 : index
    %c0_335 = arith.constant 0 : index
    %352 = vector.load %arg19[%c4_333, %c0_334, %c0_335] : memref<9x4x16xbf16, #tpu.memory_space<vmem>>, vector<1x4x16xbf16>
    %353 = vector.shape_cast %352 : vector<1x4x16xbf16> to vector<4x16xbf16>
    %cst_336 = arith.constant dense<0.000000e+00> : vector<4x32xf32>
    %354 = tpu.matmul %353, %318, %cst_336 {dimension_numbers = #tpu.dot_dimension_numbers<[1], [0], [0], [1], [0, 0, 1, 1], [], []>} : vector<4x16xbf16>, vector<16x32xbf16>, vector<4x32xf32> -> vector<4x32xf32>
    %355 = arith.truncf %354 : vector<4x32xf32> to vector<4x32xbf16>
    %c4_337 = arith.constant 4 : index
    %c0_338 = arith.constant 0 : index
    %c0_339 = arith.constant 0 : index
    %356 = vector.load %arg7[%c4_337, %c0_338, %c0_339] : memref<9x32x64xbf16, #tpu.memory_space<vmem>>, vector<1x32x64xbf16>
    %357 = vector.shape_cast %356 : vector<1x32x64xbf16> to vector<32x64xbf16>
    %cst_340 = arith.constant dense<0.000000e+00> : vector<4x64xf32>
    %358 = tpu.matmul %355, %357, %cst_340 {dimension_numbers = #tpu.dot_dimension_numbers<[1], [0], [0], [1], [0, 0, 1, 1], [], []>} : vector<4x32xbf16>, vector<32x64xbf16>, vector<4x64xf32> -> vector<4x64xf32>
    %359 = arith.addf %351, %358 : vector<4x64xf32>
    %c5_341 = arith.constant 5 : index
    %c0_342 = arith.constant 0 : index
    %c0_343 = arith.constant 0 : index
    %360 = vector.load %arg19[%c5_341, %c0_342, %c0_343] : memref<9x4x16xbf16, #tpu.memory_space<vmem>>, vector<1x4x16xbf16>
    %361 = vector.shape_cast %360 : vector<1x4x16xbf16> to vector<4x16xbf16>
    %cst_344 = arith.constant dense<0.000000e+00> : vector<4x32xf32>
    %362 = tpu.matmul %361, %318, %cst_344 {dimension_numbers = #tpu.dot_dimension_numbers<[1], [0], [0], [1], [0, 0, 1, 1], [], []>} : vector<4x16xbf16>, vector<16x32xbf16>, vector<4x32xf32> -> vector<4x32xf32>
    %363 = arith.truncf %362 : vector<4x32xf32> to vector<4x32xbf16>
    %c5_345 = arith.constant 5 : index
    %c0_346 = arith.constant 0 : index
    %c0_347 = arith.constant 0 : index
    %364 = vector.load %arg7[%c5_345, %c0_346, %c0_347] : memref<9x32x64xbf16, #tpu.memory_space<vmem>>, vector<1x32x64xbf16>
    %365 = vector.shape_cast %364 : vector<1x32x64xbf16> to vector<32x64xbf16>
    %cst_348 = arith.constant dense<0.000000e+00> : vector<4x64xf32>
    %366 = tpu.matmul %363, %365, %cst_348 {dimension_numbers = #tpu.dot_dimension_numbers<[1], [0], [0], [1], [0, 0, 1, 1], [], []>} : vector<4x32xbf16>, vector<32x64xbf16>, vector<4x64xf32> -> vector<4x64xf32>
    %367 = arith.addf %359, %366 : vector<4x64xf32>
    %c6_349 = arith.constant 6 : index
    %c0_350 = arith.constant 0 : index
    %c0_351 = arith.constant 0 : index
    %368 = vector.load %arg19[%c6_349, %c0_350, %c0_351] : memref<9x4x16xbf16, #tpu.memory_space<vmem>>, vector<1x4x16xbf16>
    %369 = vector.shape_cast %368 : vector<1x4x16xbf16> to vector<4x16xbf16>
    %cst_352 = arith.constant dense<0.000000e+00> : vector<4x32xf32>
    %370 = tpu.matmul %369, %318, %cst_352 {dimension_numbers = #tpu.dot_dimension_numbers<[1], [0], [0], [1], [0, 0, 1, 1], [], []>} : vector<4x16xbf16>, vector<16x32xbf16>, vector<4x32xf32> -> vector<4x32xf32>
    %371 = arith.truncf %370 : vector<4x32xf32> to vector<4x32xbf16>
    %c6_353 = arith.constant 6 : index
    %c0_354 = arith.constant 0 : index
    %c0_355 = arith.constant 0 : index
    %372 = vector.load %arg7[%c6_353, %c0_354, %c0_355] : memref<9x32x64xbf16, #tpu.memory_space<vmem>>, vector<1x32x64xbf16>
    %373 = vector.shape_cast %372 : vector<1x32x64xbf16> to vector<32x64xbf16>
    %cst_356 = arith.constant dense<0.000000e+00> : vector<4x64xf32>
    %374 = tpu.matmul %371, %373, %cst_356 {dimension_numbers = #tpu.dot_dimension_numbers<[1], [0], [0], [1], [0, 0, 1, 1], [], []>} : vector<4x32xbf16>, vector<32x64xbf16>, vector<4x64xf32> -> vector<4x64xf32>
    %375 = arith.addf %367, %374 : vector<4x64xf32>
    %c7_357 = arith.constant 7 : index
    %c0_358 = arith.constant 0 : index
    %c0_359 = arith.constant 0 : index
    %376 = vector.load %arg19[%c7_357, %c0_358, %c0_359] : memref<9x4x16xbf16, #tpu.memory_space<vmem>>, vector<1x4x16xbf16>
    %377 = vector.shape_cast %376 : vector<1x4x16xbf16> to vector<4x16xbf16>
    %cst_360 = arith.constant dense<0.000000e+00> : vector<4x32xf32>
    %378 = tpu.matmul %377, %318, %cst_360 {dimension_numbers = #tpu.dot_dimension_numbers<[1], [0], [0], [1], [0, 0, 1, 1], [], []>} : vector<4x16xbf16>, vector<16x32xbf16>, vector<4x32xf32> -> vector<4x32xf32>
    %379 = arith.truncf %378 : vector<4x32xf32> to vector<4x32xbf16>
    %c7_361 = arith.constant 7 : index
    %c0_362 = arith.constant 0 : index
    %c0_363 = arith.constant 0 : index
    %380 = vector.load %arg7[%c7_361, %c0_362, %c0_363] : memref<9x32x64xbf16, #tpu.memory_space<vmem>>, vector<1x32x64xbf16>
    %381 = vector.shape_cast %380 : vector<1x32x64xbf16> to vector<32x64xbf16>
    %cst_364 = arith.constant dense<0.000000e+00> : vector<4x64xf32>
    %382 = tpu.matmul %379, %381, %cst_364 {dimension_numbers = #tpu.dot_dimension_numbers<[1], [0], [0], [1], [0, 0, 1, 1], [], []>} : vector<4x32xbf16>, vector<32x64xbf16>, vector<4x64xf32> -> vector<4x64xf32>
    %383 = arith.addf %375, %382 : vector<4x64xf32>
    %c8_365 = arith.constant 8 : index
    %c0_366 = arith.constant 0 : index
    %c0_367 = arith.constant 0 : index
    %384 = vector.load %arg19[%c8_365, %c0_366, %c0_367] : memref<9x4x16xbf16, #tpu.memory_space<vmem>>, vector<1x4x16xbf16>
    %385 = vector.shape_cast %384 : vector<1x4x16xbf16> to vector<4x16xbf16>
    %cst_368 = arith.constant dense<0.000000e+00> : vector<4x32xf32>
    %386 = tpu.matmul %385, %318, %cst_368 {dimension_numbers = #tpu.dot_dimension_numbers<[1], [0], [0], [1], [0, 0, 1, 1], [], []>} : vector<4x16xbf16>, vector<16x32xbf16>, vector<4x32xf32> -> vector<4x32xf32>
    %387 = arith.truncf %386 : vector<4x32xf32> to vector<4x32xbf16>
    %c8_369 = arith.constant 8 : index
    %c0_370 = arith.constant 0 : index
    %c0_371 = arith.constant 0 : index
    %388 = vector.load %arg7[%c8_369, %c0_370, %c0_371] : memref<9x32x64xbf16, #tpu.memory_space<vmem>>, vector<1x32x64xbf16>
    %389 = vector.shape_cast %388 : vector<1x32x64xbf16> to vector<32x64xbf16>
    %cst_372 = arith.constant dense<0.000000e+00> : vector<4x64xf32>
    %390 = tpu.matmul %387, %389, %cst_372 {dimension_numbers = #tpu.dot_dimension_numbers<[1], [0], [0], [1], [0, 0, 1, 1], [], []>} : vector<4x32xbf16>, vector<32x64xbf16>, vector<4x64xf32> -> vector<4x64xf32>
    %391 = arith.addf %383, %390 : vector<4x64xf32>
    %cst_373 = arith.constant 0.000000e+00 : f32
    %392 = vector.broadcast %cst_373 : f32 to vector<4x64xf32>
    %393 = arith.maximumf %391, %392 : vector<4x64xf32>
    %c6_374 = arith.constant 6 : index
    %c0_375 = arith.constant 0 : index
    %394 = vector.load %arg16[%c6_374, %c0_375] : memref<16x128xf32, #tpu.memory_space<vmem>>, vector<1x64xf32>
    %395 = arith.truncf %162 : vector<16x32xf32> to vector<16x32xbf16>
    %c0_376 = arith.constant 0 : index
    %c0_377 = arith.constant 0 : index
    %c0_378 = arith.constant 0 : index
    %396 = vector.load %arg19[%c0_376, %c0_377, %c0_378] : memref<9x4x16xbf16, #tpu.memory_space<vmem>>, vector<1x4x16xbf16>
    %397 = vector.shape_cast %396 : vector<1x4x16xbf16> to vector<4x16xbf16>
    %cst_379 = arith.constant dense<0.000000e+00> : vector<4x32xf32>
    %398 = tpu.matmul %397, %395, %cst_379 {dimension_numbers = #tpu.dot_dimension_numbers<[1], [0], [0], [1], [0, 0, 1, 1], [], []>} : vector<4x16xbf16>, vector<16x32xbf16>, vector<4x32xf32> -> vector<4x32xf32>
    %399 = arith.truncf %398 : vector<4x32xf32> to vector<4x32xbf16>
    %c0_380 = arith.constant 0 : index
    %c0_381 = arith.constant 0 : index
    %c0_382 = arith.constant 0 : index
    %400 = vector.load %arg8[%c0_380, %c0_381, %c0_382] : memref<9x32x64xbf16, #tpu.memory_space<vmem>>, vector<1x32x64xbf16>
    %401 = vector.shape_cast %400 : vector<1x32x64xbf16> to vector<32x64xbf16>
    %cst_383 = arith.constant dense<0.000000e+00> : vector<4x64xf32>
    %402 = tpu.matmul %399, %401, %cst_383 {dimension_numbers = #tpu.dot_dimension_numbers<[1], [0], [0], [1], [0, 0, 1, 1], [], []>} : vector<4x32xbf16>, vector<32x64xbf16>, vector<4x64xf32> -> vector<4x64xf32>
    %403 = vector.broadcast %394 : vector<1x64xf32> to vector<4x64xf32>
    %404 = arith.addf %403, %402 : vector<4x64xf32>
    %c1_384 = arith.constant 1 : index
    %c0_385 = arith.constant 0 : index
    %c0_386 = arith.constant 0 : index
    %405 = vector.load %arg19[%c1_384, %c0_385, %c0_386] : memref<9x4x16xbf16, #tpu.memory_space<vmem>>, vector<1x4x16xbf16>
    %406 = vector.shape_cast %405 : vector<1x4x16xbf16> to vector<4x16xbf16>
    %cst_387 = arith.constant dense<0.000000e+00> : vector<4x32xf32>
    %407 = tpu.matmul %406, %395, %cst_387 {dimension_numbers = #tpu.dot_dimension_numbers<[1], [0], [0], [1], [0, 0, 1, 1], [], []>} : vector<4x16xbf16>, vector<16x32xbf16>, vector<4x32xf32> -> vector<4x32xf32>
    %408 = arith.truncf %407 : vector<4x32xf32> to vector<4x32xbf16>
    %c1_388 = arith.constant 1 : index
    %c0_389 = arith.constant 0 : index
    %c0_390 = arith.constant 0 : index
    %409 = vector.load %arg8[%c1_388, %c0_389, %c0_390] : memref<9x32x64xbf16, #tpu.memory_space<vmem>>, vector<1x32x64xbf16>
    %410 = vector.shape_cast %409 : vector<1x32x64xbf16> to vector<32x64xbf16>
    %cst_391 = arith.constant dense<0.000000e+00> : vector<4x64xf32>
    %411 = tpu.matmul %408, %410, %cst_391 {dimension_numbers = #tpu.dot_dimension_numbers<[1], [0], [0], [1], [0, 0, 1, 1], [], []>} : vector<4x32xbf16>, vector<32x64xbf16>, vector<4x64xf32> -> vector<4x64xf32>
    %412 = arith.addf %404, %411 : vector<4x64xf32>
    %c2_392 = arith.constant 2 : index
    %c0_393 = arith.constant 0 : index
    %c0_394 = arith.constant 0 : index
    %413 = vector.load %arg19[%c2_392, %c0_393, %c0_394] : memref<9x4x16xbf16, #tpu.memory_space<vmem>>, vector<1x4x16xbf16>
    %414 = vector.shape_cast %413 : vector<1x4x16xbf16> to vector<4x16xbf16>
    %cst_395 = arith.constant dense<0.000000e+00> : vector<4x32xf32>
    %415 = tpu.matmul %414, %395, %cst_395 {dimension_numbers = #tpu.dot_dimension_numbers<[1], [0], [0], [1], [0, 0, 1, 1], [], []>} : vector<4x16xbf16>, vector<16x32xbf16>, vector<4x32xf32> -> vector<4x32xf32>
    %416 = arith.truncf %415 : vector<4x32xf32> to vector<4x32xbf16>
    %c2_396 = arith.constant 2 : index
    %c0_397 = arith.constant 0 : index
    %c0_398 = arith.constant 0 : index
    %417 = vector.load %arg8[%c2_396, %c0_397, %c0_398] : memref<9x32x64xbf16, #tpu.memory_space<vmem>>, vector<1x32x64xbf16>
    %418 = vector.shape_cast %417 : vector<1x32x64xbf16> to vector<32x64xbf16>
    %cst_399 = arith.constant dense<0.000000e+00> : vector<4x64xf32>
    %419 = tpu.matmul %416, %418, %cst_399 {dimension_numbers = #tpu.dot_dimension_numbers<[1], [0], [0], [1], [0, 0, 1, 1], [], []>} : vector<4x32xbf16>, vector<32x64xbf16>, vector<4x64xf32> -> vector<4x64xf32>
    %420 = arith.addf %412, %419 : vector<4x64xf32>
    %c3_400 = arith.constant 3 : index
    %c0_401 = arith.constant 0 : index
    %c0_402 = arith.constant 0 : index
    %421 = vector.load %arg19[%c3_400, %c0_401, %c0_402] : memref<9x4x16xbf16, #tpu.memory_space<vmem>>, vector<1x4x16xbf16>
    %422 = vector.shape_cast %421 : vector<1x4x16xbf16> to vector<4x16xbf16>
    %cst_403 = arith.constant dense<0.000000e+00> : vector<4x32xf32>
    %423 = tpu.matmul %422, %395, %cst_403 {dimension_numbers = #tpu.dot_dimension_numbers<[1], [0], [0], [1], [0, 0, 1, 1], [], []>} : vector<4x16xbf16>, vector<16x32xbf16>, vector<4x32xf32> -> vector<4x32xf32>
    %424 = arith.truncf %423 : vector<4x32xf32> to vector<4x32xbf16>
    %c3_404 = arith.constant 3 : index
    %c0_405 = arith.constant 0 : index
    %c0_406 = arith.constant 0 : index
    %425 = vector.load %arg8[%c3_404, %c0_405, %c0_406] : memref<9x32x64xbf16, #tpu.memory_space<vmem>>, vector<1x32x64xbf16>
    %426 = vector.shape_cast %425 : vector<1x32x64xbf16> to vector<32x64xbf16>
    %cst_407 = arith.constant dense<0.000000e+00> : vector<4x64xf32>
    %427 = tpu.matmul %424, %426, %cst_407 {dimension_numbers = #tpu.dot_dimension_numbers<[1], [0], [0], [1], [0, 0, 1, 1], [], []>} : vector<4x32xbf16>, vector<32x64xbf16>, vector<4x64xf32> -> vector<4x64xf32>
    %428 = arith.addf %420, %427 : vector<4x64xf32>
    %c4_408 = arith.constant 4 : index
    %c0_409 = arith.constant 0 : index
    %c0_410 = arith.constant 0 : index
    %429 = vector.load %arg19[%c4_408, %c0_409, %c0_410] : memref<9x4x16xbf16, #tpu.memory_space<vmem>>, vector<1x4x16xbf16>
    %430 = vector.shape_cast %429 : vector<1x4x16xbf16> to vector<4x16xbf16>
    %cst_411 = arith.constant dense<0.000000e+00> : vector<4x32xf32>
    %431 = tpu.matmul %430, %395, %cst_411 {dimension_numbers = #tpu.dot_dimension_numbers<[1], [0], [0], [1], [0, 0, 1, 1], [], []>} : vector<4x16xbf16>, vector<16x32xbf16>, vector<4x32xf32> -> vector<4x32xf32>
    %432 = arith.truncf %431 : vector<4x32xf32> to vector<4x32xbf16>
    %c4_412 = arith.constant 4 : index
    %c0_413 = arith.constant 0 : index
    %c0_414 = arith.constant 0 : index
    %433 = vector.load %arg8[%c4_412, %c0_413, %c0_414] : memref<9x32x64xbf16, #tpu.memory_space<vmem>>, vector<1x32x64xbf16>
    %434 = vector.shape_cast %433 : vector<1x32x64xbf16> to vector<32x64xbf16>
    %cst_415 = arith.constant dense<0.000000e+00> : vector<4x64xf32>
    %435 = tpu.matmul %432, %434, %cst_415 {dimension_numbers = #tpu.dot_dimension_numbers<[1], [0], [0], [1], [0, 0, 1, 1], [], []>} : vector<4x32xbf16>, vector<32x64xbf16>, vector<4x64xf32> -> vector<4x64xf32>
    %436 = arith.addf %428, %435 : vector<4x64xf32>
    %c5_416 = arith.constant 5 : index
    %c0_417 = arith.constant 0 : index
    %c0_418 = arith.constant 0 : index
    %437 = vector.load %arg19[%c5_416, %c0_417, %c0_418] : memref<9x4x16xbf16, #tpu.memory_space<vmem>>, vector<1x4x16xbf16>
    %438 = vector.shape_cast %437 : vector<1x4x16xbf16> to vector<4x16xbf16>
    %cst_419 = arith.constant dense<0.000000e+00> : vector<4x32xf32>
    %439 = tpu.matmul %438, %395, %cst_419 {dimension_numbers = #tpu.dot_dimension_numbers<[1], [0], [0], [1], [0, 0, 1, 1], [], []>} : vector<4x16xbf16>, vector<16x32xbf16>, vector<4x32xf32> -> vector<4x32xf32>
    %440 = arith.truncf %439 : vector<4x32xf32> to vector<4x32xbf16>
    %c5_420 = arith.constant 5 : index
    %c0_421 = arith.constant 0 : index
    %c0_422 = arith.constant 0 : index
    %441 = vector.load %arg8[%c5_420, %c0_421, %c0_422] : memref<9x32x64xbf16, #tpu.memory_space<vmem>>, vector<1x32x64xbf16>
    %442 = vector.shape_cast %441 : vector<1x32x64xbf16> to vector<32x64xbf16>
    %cst_423 = arith.constant dense<0.000000e+00> : vector<4x64xf32>
    %443 = tpu.matmul %440, %442, %cst_423 {dimension_numbers = #tpu.dot_dimension_numbers<[1], [0], [0], [1], [0, 0, 1, 1], [], []>} : vector<4x32xbf16>, vector<32x64xbf16>, vector<4x64xf32> -> vector<4x64xf32>
    %444 = arith.addf %436, %443 : vector<4x64xf32>
    %c6_424 = arith.constant 6 : index
    %c0_425 = arith.constant 0 : index
    %c0_426 = arith.constant 0 : index
    %445 = vector.load %arg19[%c6_424, %c0_425, %c0_426] : memref<9x4x16xbf16, #tpu.memory_space<vmem>>, vector<1x4x16xbf16>
    %446 = vector.shape_cast %445 : vector<1x4x16xbf16> to vector<4x16xbf16>
    %cst_427 = arith.constant dense<0.000000e+00> : vector<4x32xf32>
    %447 = tpu.matmul %446, %395, %cst_427 {dimension_numbers = #tpu.dot_dimension_numbers<[1], [0], [0], [1], [0, 0, 1, 1], [], []>} : vector<4x16xbf16>, vector<16x32xbf16>, vector<4x32xf32> -> vector<4x32xf32>
    %448 = arith.truncf %447 : vector<4x32xf32> to vector<4x32xbf16>
    %c6_428 = arith.constant 6 : index
    %c0_429 = arith.constant 0 : index
    %c0_430 = arith.constant 0 : index
    %449 = vector.load %arg8[%c6_428, %c0_429, %c0_430] : memref<9x32x64xbf16, #tpu.memory_space<vmem>>, vector<1x32x64xbf16>
    %450 = vector.shape_cast %449 : vector<1x32x64xbf16> to vector<32x64xbf16>
    %cst_431 = arith.constant dense<0.000000e+00> : vector<4x64xf32>
    %451 = tpu.matmul %448, %450, %cst_431 {dimension_numbers = #tpu.dot_dimension_numbers<[1], [0], [0], [1], [0, 0, 1, 1], [], []>} : vector<4x32xbf16>, vector<32x64xbf16>, vector<4x64xf32> -> vector<4x64xf32>
    %452 = arith.addf %444, %451 : vector<4x64xf32>
    %c7_432 = arith.constant 7 : index
    %c0_433 = arith.constant 0 : index
    %c0_434 = arith.constant 0 : index
    %453 = vector.load %arg19[%c7_432, %c0_433, %c0_434] : memref<9x4x16xbf16, #tpu.memory_space<vmem>>, vector<1x4x16xbf16>
    %454 = vector.shape_cast %453 : vector<1x4x16xbf16> to vector<4x16xbf16>
    %cst_435 = arith.constant dense<0.000000e+00> : vector<4x32xf32>
    %455 = tpu.matmul %454, %395, %cst_435 {dimension_numbers = #tpu.dot_dimension_numbers<[1], [0], [0], [1], [0, 0, 1, 1], [], []>} : vector<4x16xbf16>, vector<16x32xbf16>, vector<4x32xf32> -> vector<4x32xf32>
    %456 = arith.truncf %455 : vector<4x32xf32> to vector<4x32xbf16>
    %c7_436 = arith.constant 7 : index
    %c0_437 = arith.constant 0 : index
    %c0_438 = arith.constant 0 : index
    %457 = vector.load %arg8[%c7_436, %c0_437, %c0_438] : memref<9x32x64xbf16, #tpu.memory_space<vmem>>, vector<1x32x64xbf16>
    %458 = vector.shape_cast %457 : vector<1x32x64xbf16> to vector<32x64xbf16>
    %cst_439 = arith.constant dense<0.000000e+00> : vector<4x64xf32>
    %459 = tpu.matmul %456, %458, %cst_439 {dimension_numbers = #tpu.dot_dimension_numbers<[1], [0], [0], [1], [0, 0, 1, 1], [], []>} : vector<4x32xbf16>, vector<32x64xbf16>, vector<4x64xf32> -> vector<4x64xf32>
    %460 = arith.addf %452, %459 : vector<4x64xf32>
    %c8_440 = arith.constant 8 : index
    %c0_441 = arith.constant 0 : index
    %c0_442 = arith.constant 0 : index
    %461 = vector.load %arg19[%c8_440, %c0_441, %c0_442] : memref<9x4x16xbf16, #tpu.memory_space<vmem>>, vector<1x4x16xbf16>
    %462 = vector.shape_cast %461 : vector<1x4x16xbf16> to vector<4x16xbf16>
    %cst_443 = arith.constant dense<0.000000e+00> : vector<4x32xf32>
    %463 = tpu.matmul %462, %395, %cst_443 {dimension_numbers = #tpu.dot_dimension_numbers<[1], [0], [0], [1], [0, 0, 1, 1], [], []>} : vector<4x16xbf16>, vector<16x32xbf16>, vector<4x32xf32> -> vector<4x32xf32>
    %464 = arith.truncf %463 : vector<4x32xf32> to vector<4x32xbf16>
    %c8_444 = arith.constant 8 : index
    %c0_445 = arith.constant 0 : index
    %c0_446 = arith.constant 0 : index
    %465 = vector.load %arg8[%c8_444, %c0_445, %c0_446] : memref<9x32x64xbf16, #tpu.memory_space<vmem>>, vector<1x32x64xbf16>
    %466 = vector.shape_cast %465 : vector<1x32x64xbf16> to vector<32x64xbf16>
    %cst_447 = arith.constant dense<0.000000e+00> : vector<4x64xf32>
    %467 = tpu.matmul %464, %466, %cst_447 {dimension_numbers = #tpu.dot_dimension_numbers<[1], [0], [0], [1], [0, 0, 1, 1], [], []>} : vector<4x32xbf16>, vector<32x64xbf16>, vector<4x64xf32> -> vector<4x64xf32>
    %468 = arith.addf %460, %467 : vector<4x64xf32>
    %cst_448 = arith.constant 0.000000e+00 : f32
    %469 = vector.broadcast %cst_448 : f32 to vector<4x64xf32>
    %470 = arith.maximumf %468, %469 : vector<4x64xf32>
    %471 = tpu.concatenate %393, %470, %239 in 1 : vector<4x64xf32>, vector<4x64xf32>, vector<4x64xf32> -> vector<4x192xf32>
    %c7_449 = arith.constant 7 : index
    %c0_450 = arith.constant 0 : index
    %472 = vector.load %arg16[%c7_449, %c0_450] : memref<16x128xf32, #tpu.memory_space<vmem>>, vector<1x64xf32>
    %473 = arith.truncf %471 : vector<4x192xf32> to vector<4x192xbf16>
    %c0_451 = arith.constant 0 : index
    %c0_452 = arith.constant 0 : index
    %474 = vector.load %arg9[%c0_451, %c0_452] : memref<192x64xbf16, #tpu.memory_space<vmem>>, vector<192x64xbf16>
    %cst_453 = arith.constant dense<0.000000e+00> : vector<4x64xf32>
    %475 = tpu.matmul %473, %474, %cst_453 {dimension_numbers = #tpu.dot_dimension_numbers<[1], [0], [0], [1], [0, 0, 1, 1], [], []>} : vector<4x192xbf16>, vector<192x64xbf16>, vector<4x64xf32> -> vector<4x64xf32>
    %476 = vector.broadcast %472 : vector<1x64xf32> to vector<4x64xf32>
    %477 = arith.addf %475, %476 : vector<4x64xf32>
    %cst_454 = arith.constant 0.000000e+00 : f32
    %478 = vector.broadcast %cst_454 : f32 to vector<4x64xf32>
    %479 = arith.maximumf %477, %478 : vector<4x64xf32>
    %c8_455 = arith.constant 8 : index
    %c0_456 = arith.constant 0 : index
    %480 = vector.load %arg16[%c8_455, %c0_456] : memref<16x128xf32, #tpu.memory_space<vmem>>, vector<1x64xf32>
    %481 = arith.truncf %479 : vector<4x64xf32> to vector<4x64xbf16>
    %c0_457 = arith.constant 0 : index
    %c0_458 = arith.constant 0 : index
    %c0_459 = arith.constant 0 : index
    %482 = vector.load %arg20[%c0_457, %c0_458, %c0_459] : memref<9x4x4xbf16, #tpu.memory_space<vmem>>, vector<1x4x4xbf16>
    %483 = vector.shape_cast %482 : vector<1x4x4xbf16> to vector<4x4xbf16>
    %cst_460 = arith.constant dense<0.000000e+00> : vector<4x64xf32>
    %484 = tpu.matmul %483, %481, %cst_460 {dimension_numbers = #tpu.dot_dimension_numbers<[1], [0], [0], [1], [0, 0, 1, 1], [], []>} : vector<4x4xbf16>, vector<4x64xbf16>, vector<4x64xf32> -> vector<4x64xf32>
    %485 = arith.truncf %484 : vector<4x64xf32> to vector<4x64xbf16>
    %c0_461 = arith.constant 0 : index
    %c0_462 = arith.constant 0 : index
    %c0_463 = arith.constant 0 : index
    %486 = vector.load %arg10[%c0_461, %c0_462, %c0_463] : memref<9x64x64xbf16, #tpu.memory_space<vmem>>, vector<1x64x64xbf16>
    %487 = vector.shape_cast %486 : vector<1x64x64xbf16> to vector<64x64xbf16>
    %cst_464 = arith.constant dense<0.000000e+00> : vector<4x64xf32>
    %488 = tpu.matmul %485, %487, %cst_464 {dimension_numbers = #tpu.dot_dimension_numbers<[1], [0], [0], [1], [0, 0, 1, 1], [], []>} : vector<4x64xbf16>, vector<64x64xbf16>, vector<4x64xf32> -> vector<4x64xf32>
    %489 = vector.broadcast %480 : vector<1x64xf32> to vector<4x64xf32>
    %490 = arith.addf %489, %488 : vector<4x64xf32>
    %c1_465 = arith.constant 1 : index
    %c0_466 = arith.constant 0 : index
    %c0_467 = arith.constant 0 : index
    %491 = vector.load %arg20[%c1_465, %c0_466, %c0_467] : memref<9x4x4xbf16, #tpu.memory_space<vmem>>, vector<1x4x4xbf16>
    %492 = vector.shape_cast %491 : vector<1x4x4xbf16> to vector<4x4xbf16>
    %cst_468 = arith.constant dense<0.000000e+00> : vector<4x64xf32>
    %493 = tpu.matmul %492, %481, %cst_468 {dimension_numbers = #tpu.dot_dimension_numbers<[1], [0], [0], [1], [0, 0, 1, 1], [], []>} : vector<4x4xbf16>, vector<4x64xbf16>, vector<4x64xf32> -> vector<4x64xf32>
    %494 = arith.truncf %493 : vector<4x64xf32> to vector<4x64xbf16>
    %c1_469 = arith.constant 1 : index
    %c0_470 = arith.constant 0 : index
    %c0_471 = arith.constant 0 : index
    %495 = vector.load %arg10[%c1_469, %c0_470, %c0_471] : memref<9x64x64xbf16, #tpu.memory_space<vmem>>, vector<1x64x64xbf16>
    %496 = vector.shape_cast %495 : vector<1x64x64xbf16> to vector<64x64xbf16>
    %cst_472 = arith.constant dense<0.000000e+00> : vector<4x64xf32>
    %497 = tpu.matmul %494, %496, %cst_472 {dimension_numbers = #tpu.dot_dimension_numbers<[1], [0], [0], [1], [0, 0, 1, 1], [], []>} : vector<4x64xbf16>, vector<64x64xbf16>, vector<4x64xf32> -> vector<4x64xf32>
    %498 = arith.addf %490, %497 : vector<4x64xf32>
    %c2_473 = arith.constant 2 : index
    %c0_474 = arith.constant 0 : index
    %c0_475 = arith.constant 0 : index
    %499 = vector.load %arg20[%c2_473, %c0_474, %c0_475] : memref<9x4x4xbf16, #tpu.memory_space<vmem>>, vector<1x4x4xbf16>
    %500 = vector.shape_cast %499 : vector<1x4x4xbf16> to vector<4x4xbf16>
    %cst_476 = arith.constant dense<0.000000e+00> : vector<4x64xf32>
    %501 = tpu.matmul %500, %481, %cst_476 {dimension_numbers = #tpu.dot_dimension_numbers<[1], [0], [0], [1], [0, 0, 1, 1], [], []>} : vector<4x4xbf16>, vector<4x64xbf16>, vector<4x64xf32> -> vector<4x64xf32>
    %502 = arith.truncf %501 : vector<4x64xf32> to vector<4x64xbf16>
    %c2_477 = arith.constant 2 : index
    %c0_478 = arith.constant 0 : index
    %c0_479 = arith.constant 0 : index
    %503 = vector.load %arg10[%c2_477, %c0_478, %c0_479] : memref<9x64x64xbf16, #tpu.memory_space<vmem>>, vector<1x64x64xbf16>
    %504 = vector.shape_cast %503 : vector<1x64x64xbf16> to vector<64x64xbf16>
    %cst_480 = arith.constant dense<0.000000e+00> : vector<4x64xf32>
    %505 = tpu.matmul %502, %504, %cst_480 {dimension_numbers = #tpu.dot_dimension_numbers<[1], [0], [0], [1], [0, 0, 1, 1], [], []>} : vector<4x64xbf16>, vector<64x64xbf16>, vector<4x64xf32> -> vector<4x64xf32>
    %506 = arith.addf %498, %505 : vector<4x64xf32>
    %c3_481 = arith.constant 3 : index
    %c0_482 = arith.constant 0 : index
    %c0_483 = arith.constant 0 : index
    %507 = vector.load %arg20[%c3_481, %c0_482, %c0_483] : memref<9x4x4xbf16, #tpu.memory_space<vmem>>, vector<1x4x4xbf16>
    %508 = vector.shape_cast %507 : vector<1x4x4xbf16> to vector<4x4xbf16>
    %cst_484 = arith.constant dense<0.000000e+00> : vector<4x64xf32>
    %509 = tpu.matmul %508, %481, %cst_484 {dimension_numbers = #tpu.dot_dimension_numbers<[1], [0], [0], [1], [0, 0, 1, 1], [], []>} : vector<4x4xbf16>, vector<4x64xbf16>, vector<4x64xf32> -> vector<4x64xf32>
    %510 = arith.truncf %509 : vector<4x64xf32> to vector<4x64xbf16>
    %c3_485 = arith.constant 3 : index
    %c0_486 = arith.constant 0 : index
    %c0_487 = arith.constant 0 : index
    %511 = vector.load %arg10[%c3_485, %c0_486, %c0_487] : memref<9x64x64xbf16, #tpu.memory_space<vmem>>, vector<1x64x64xbf16>
    %512 = vector.shape_cast %511 : vector<1x64x64xbf16> to vector<64x64xbf16>
    %cst_488 = arith.constant dense<0.000000e+00> : vector<4x64xf32>
    %513 = tpu.matmul %510, %512, %cst_488 {dimension_numbers = #tpu.dot_dimension_numbers<[1], [0], [0], [1], [0, 0, 1, 1], [], []>} : vector<4x64xbf16>, vector<64x64xbf16>, vector<4x64xf32> -> vector<4x64xf32>
    %514 = arith.addf %506, %513 : vector<4x64xf32>
    %c4_489 = arith.constant 4 : index
    %c0_490 = arith.constant 0 : index
    %c0_491 = arith.constant 0 : index
    %515 = vector.load %arg20[%c4_489, %c0_490, %c0_491] : memref<9x4x4xbf16, #tpu.memory_space<vmem>>, vector<1x4x4xbf16>
    %516 = vector.shape_cast %515 : vector<1x4x4xbf16> to vector<4x4xbf16>
    %cst_492 = arith.constant dense<0.000000e+00> : vector<4x64xf32>
    %517 = tpu.matmul %516, %481, %cst_492 {dimension_numbers = #tpu.dot_dimension_numbers<[1], [0], [0], [1], [0, 0, 1, 1], [], []>} : vector<4x4xbf16>, vector<4x64xbf16>, vector<4x64xf32> -> vector<4x64xf32>
    %518 = arith.truncf %517 : vector<4x64xf32> to vector<4x64xbf16>
    %c4_493 = arith.constant 4 : index
    %c0_494 = arith.constant 0 : index
    %c0_495 = arith.constant 0 : index
    %519 = vector.load %arg10[%c4_493, %c0_494, %c0_495] : memref<9x64x64xbf16, #tpu.memory_space<vmem>>, vector<1x64x64xbf16>
    %520 = vector.shape_cast %519 : vector<1x64x64xbf16> to vector<64x64xbf16>
    %cst_496 = arith.constant dense<0.000000e+00> : vector<4x64xf32>
    %521 = tpu.matmul %518, %520, %cst_496 {dimension_numbers = #tpu.dot_dimension_numbers<[1], [0], [0], [1], [0, 0, 1, 1], [], []>} : vector<4x64xbf16>, vector<64x64xbf16>, vector<4x64xf32> -> vector<4x64xf32>
    %522 = arith.addf %514, %521 : vector<4x64xf32>
    %c5_497 = arith.constant 5 : index
    %c0_498 = arith.constant 0 : index
    %c0_499 = arith.constant 0 : index
    %523 = vector.load %arg20[%c5_497, %c0_498, %c0_499] : memref<9x4x4xbf16, #tpu.memory_space<vmem>>, vector<1x4x4xbf16>
    %524 = vector.shape_cast %523 : vector<1x4x4xbf16> to vector<4x4xbf16>
    %cst_500 = arith.constant dense<0.000000e+00> : vector<4x64xf32>
    %525 = tpu.matmul %524, %481, %cst_500 {dimension_numbers = #tpu.dot_dimension_numbers<[1], [0], [0], [1], [0, 0, 1, 1], [], []>} : vector<4x4xbf16>, vector<4x64xbf16>, vector<4x64xf32> -> vector<4x64xf32>
    %526 = arith.truncf %525 : vector<4x64xf32> to vector<4x64xbf16>
    %c5_501 = arith.constant 5 : index
    %c0_502 = arith.constant 0 : index
    %c0_503 = arith.constant 0 : index
    %527 = vector.load %arg10[%c5_501, %c0_502, %c0_503] : memref<9x64x64xbf16, #tpu.memory_space<vmem>>, vector<1x64x64xbf16>
    %528 = vector.shape_cast %527 : vector<1x64x64xbf16> to vector<64x64xbf16>
    %cst_504 = arith.constant dense<0.000000e+00> : vector<4x64xf32>
    %529 = tpu.matmul %526, %528, %cst_504 {dimension_numbers = #tpu.dot_dimension_numbers<[1], [0], [0], [1], [0, 0, 1, 1], [], []>} : vector<4x64xbf16>, vector<64x64xbf16>, vector<4x64xf32> -> vector<4x64xf32>
    %530 = arith.addf %522, %529 : vector<4x64xf32>
    %c6_505 = arith.constant 6 : index
    %c0_506 = arith.constant 0 : index
    %c0_507 = arith.constant 0 : index
    %531 = vector.load %arg20[%c6_505, %c0_506, %c0_507] : memref<9x4x4xbf16, #tpu.memory_space<vmem>>, vector<1x4x4xbf16>
    %532 = vector.shape_cast %531 : vector<1x4x4xbf16> to vector<4x4xbf16>
    %cst_508 = arith.constant dense<0.000000e+00> : vector<4x64xf32>
    %533 = tpu.matmul %532, %481, %cst_508 {dimension_numbers = #tpu.dot_dimension_numbers<[1], [0], [0], [1], [0, 0, 1, 1], [], []>} : vector<4x4xbf16>, vector<4x64xbf16>, vector<4x64xf32> -> vector<4x64xf32>
    %534 = arith.truncf %533 : vector<4x64xf32> to vector<4x64xbf16>
    %c6_509 = arith.constant 6 : index
    %c0_510 = arith.constant 0 : index
    %c0_511 = arith.constant 0 : index
    %535 = vector.load %arg10[%c6_509, %c0_510, %c0_511] : memref<9x64x64xbf16, #tpu.memory_space<vmem>>, vector<1x64x64xbf16>
    %536 = vector.shape_cast %535 : vector<1x64x64xbf16> to vector<64x64xbf16>
    %cst_512 = arith.constant dense<0.000000e+00> : vector<4x64xf32>
    %537 = tpu.matmul %534, %536, %cst_512 {dimension_numbers = #tpu.dot_dimension_numbers<[1], [0], [0], [1], [0, 0, 1, 1], [], []>} : vector<4x64xbf16>, vector<64x64xbf16>, vector<4x64xf32> -> vector<4x64xf32>
    %538 = arith.addf %530, %537 : vector<4x64xf32>
    %c7_513 = arith.constant 7 : index
    %c0_514 = arith.constant 0 : index
    %c0_515 = arith.constant 0 : index
    %539 = vector.load %arg20[%c7_513, %c0_514, %c0_515] : memref<9x4x4xbf16, #tpu.memory_space<vmem>>, vector<1x4x4xbf16>
    %540 = vector.shape_cast %539 : vector<1x4x4xbf16> to vector<4x4xbf16>
    %cst_516 = arith.constant dense<0.000000e+00> : vector<4x64xf32>
    %541 = tpu.matmul %540, %481, %cst_516 {dimension_numbers = #tpu.dot_dimension_numbers<[1], [0], [0], [1], [0, 0, 1, 1], [], []>} : vector<4x4xbf16>, vector<4x64xbf16>, vector<4x64xf32> -> vector<4x64xf32>
    %542 = arith.truncf %541 : vector<4x64xf32> to vector<4x64xbf16>
    %c7_517 = arith.constant 7 : index
    %c0_518 = arith.constant 0 : index
    %c0_519 = arith.constant 0 : index
    %543 = vector.load %arg10[%c7_517, %c0_518, %c0_519] : memref<9x64x64xbf16, #tpu.memory_space<vmem>>, vector<1x64x64xbf16>
    %544 = vector.shape_cast %543 : vector<1x64x64xbf16> to vector<64x64xbf16>
    %cst_520 = arith.constant dense<0.000000e+00> : vector<4x64xf32>
    %545 = tpu.matmul %542, %544, %cst_520 {dimension_numbers = #tpu.dot_dimension_numbers<[1], [0], [0], [1], [0, 0, 1, 1], [], []>} : vector<4x64xbf16>, vector<64x64xbf16>, vector<4x64xf32> -> vector<4x64xf32>
    %546 = arith.addf %538, %545 : vector<4x64xf32>
    %c8_521 = arith.constant 8 : index
    %c0_522 = arith.constant 0 : index
    %c0_523 = arith.constant 0 : index
    %547 = vector.load %arg20[%c8_521, %c0_522, %c0_523] : memref<9x4x4xbf16, #tpu.memory_space<vmem>>, vector<1x4x4xbf16>
    %548 = vector.shape_cast %547 : vector<1x4x4xbf16> to vector<4x4xbf16>
    %cst_524 = arith.constant dense<0.000000e+00> : vector<4x64xf32>
    %549 = tpu.matmul %548, %481, %cst_524 {dimension_numbers = #tpu.dot_dimension_numbers<[1], [0], [0], [1], [0, 0, 1, 1], [], []>} : vector<4x4xbf16>, vector<4x64xbf16>, vector<4x64xf32> -> vector<4x64xf32>
    %550 = arith.truncf %549 : vector<4x64xf32> to vector<4x64xbf16>
    %c8_525 = arith.constant 8 : index
    %c0_526 = arith.constant 0 : index
    %c0_527 = arith.constant 0 : index
    %551 = vector.load %arg10[%c8_525, %c0_526, %c0_527] : memref<9x64x64xbf16, #tpu.memory_space<vmem>>, vector<1x64x64xbf16>
    %552 = vector.shape_cast %551 : vector<1x64x64xbf16> to vector<64x64xbf16>
    %cst_528 = arith.constant dense<0.000000e+00> : vector<4x64xf32>
    %553 = tpu.matmul %550, %552, %cst_528 {dimension_numbers = #tpu.dot_dimension_numbers<[1], [0], [0], [1], [0, 0, 1, 1], [], []>} : vector<4x64xbf16>, vector<64x64xbf16>, vector<4x64xf32> -> vector<4x64xf32>
    %554 = arith.addf %546, %553 : vector<4x64xf32>
    %cst_529 = arith.constant 0.000000e+00 : f32
    %555 = vector.broadcast %cst_529 : f32 to vector<4x64xf32>
    %556 = arith.maximumf %554, %555 : vector<4x64xf32>
    %c0_530 = arith.constant 0 : index
    %c0_531 = arith.constant 0 : index
    %557 = vector.load %arg23[%c0_530, %c0_531] : memref<16x4xbf16, #tpu.memory_space<vmem>>, vector<16x4xbf16>
    %558 = arith.truncf %556 : vector<4x64xf32> to vector<4x64xbf16>
    %cst_532 = arith.constant dense<0.000000e+00> : vector<16x64xf32>
    %559 = tpu.matmul %557, %558, %cst_532 {dimension_numbers = #tpu.dot_dimension_numbers<[1], [0], [0], [1], [0, 0, 1, 1], [], []>} : vector<16x4xbf16>, vector<4x64xbf16>, vector<16x64xf32> -> vector<16x64xf32>
    %c9 = arith.constant 9 : index
    %c0_533 = arith.constant 0 : index
    %560 = vector.load %arg16[%c9, %c0_533] : memref<16x128xf32, #tpu.memory_space<vmem>>, vector<1x32xf32>
    %561 = arith.truncf %559 : vector<16x64xf32> to vector<16x64xbf16>
    %c0_534 = arith.constant 0 : index
    %c0_535 = arith.constant 0 : index
    %c0_536 = arith.constant 0 : index
    %562 = vector.load %arg21[%c0_534, %c0_535, %c0_536] : memref<9x16x16xbf16, #tpu.memory_space<vmem>>, vector<1x16x16xbf16>
    %563 = vector.shape_cast %562 : vector<1x16x16xbf16> to vector<16x16xbf16>
    %cst_537 = arith.constant dense<0.000000e+00> : vector<16x64xf32>
    %564 = tpu.matmul %563, %561, %cst_537 {dimension_numbers = #tpu.dot_dimension_numbers<[1], [0], [0], [1], [0, 0, 1, 1], [], []>} : vector<16x16xbf16>, vector<16x64xbf16>, vector<16x64xf32> -> vector<16x64xf32>
    %565 = arith.truncf %564 : vector<16x64xf32> to vector<16x64xbf16>
    %c0_538 = arith.constant 0 : index
    %c0_539 = arith.constant 0 : index
    %c0_540 = arith.constant 0 : index
    %566 = vector.load %arg11[%c0_538, %c0_539, %c0_540] : memref<9x64x32xbf16, #tpu.memory_space<vmem>>, vector<1x64x32xbf16>
    %567 = vector.shape_cast %566 : vector<1x64x32xbf16> to vector<64x32xbf16>
    %cst_541 = arith.constant dense<0.000000e+00> : vector<16x32xf32>
    %568 = tpu.matmul %565, %567, %cst_541 {dimension_numbers = #tpu.dot_dimension_numbers<[1], [0], [0], [1], [0, 0, 1, 1], [], []>} : vector<16x64xbf16>, vector<64x32xbf16>, vector<16x32xf32> -> vector<16x32xf32>
    %569 = vector.broadcast %560 : vector<1x32xf32> to vector<16x32xf32>
    %570 = arith.addf %569, %568 : vector<16x32xf32>
    %c1_542 = arith.constant 1 : index
    %c0_543 = arith.constant 0 : index
    %c0_544 = arith.constant 0 : index
    %571 = vector.load %arg21[%c1_542, %c0_543, %c0_544] : memref<9x16x16xbf16, #tpu.memory_space<vmem>>, vector<1x16x16xbf16>
    %572 = vector.shape_cast %571 : vector<1x16x16xbf16> to vector<16x16xbf16>
    %cst_545 = arith.constant dense<0.000000e+00> : vector<16x64xf32>
    %573 = tpu.matmul %572, %561, %cst_545 {dimension_numbers = #tpu.dot_dimension_numbers<[1], [0], [0], [1], [0, 0, 1, 1], [], []>} : vector<16x16xbf16>, vector<16x64xbf16>, vector<16x64xf32> -> vector<16x64xf32>
    %574 = arith.truncf %573 : vector<16x64xf32> to vector<16x64xbf16>
    %c1_546 = arith.constant 1 : index
    %c0_547 = arith.constant 0 : index
    %c0_548 = arith.constant 0 : index
    %575 = vector.load %arg11[%c1_546, %c0_547, %c0_548] : memref<9x64x32xbf16, #tpu.memory_space<vmem>>, vector<1x64x32xbf16>
    %576 = vector.shape_cast %575 : vector<1x64x32xbf16> to vector<64x32xbf16>
    %cst_549 = arith.constant dense<0.000000e+00> : vector<16x32xf32>
    %577 = tpu.matmul %574, %576, %cst_549 {dimension_numbers = #tpu.dot_dimension_numbers<[1], [0], [0], [1], [0, 0, 1, 1], [], []>} : vector<16x64xbf16>, vector<64x32xbf16>, vector<16x32xf32> -> vector<16x32xf32>
    %578 = arith.addf %570, %577 : vector<16x32xf32>
    %c2_550 = arith.constant 2 : index
    %c0_551 = arith.constant 0 : index
    %c0_552 = arith.constant 0 : index
    %579 = vector.load %arg21[%c2_550, %c0_551, %c0_552] : memref<9x16x16xbf16, #tpu.memory_space<vmem>>, vector<1x16x16xbf16>
    %580 = vector.shape_cast %579 : vector<1x16x16xbf16> to vector<16x16xbf16>
    %cst_553 = arith.constant dense<0.000000e+00> : vector<16x64xf32>
    %581 = tpu.matmul %580, %561, %cst_553 {dimension_numbers = #tpu.dot_dimension_numbers<[1], [0], [0], [1], [0, 0, 1, 1], [], []>} : vector<16x16xbf16>, vector<16x64xbf16>, vector<16x64xf32> -> vector<16x64xf32>
    %582 = arith.truncf %581 : vector<16x64xf32> to vector<16x64xbf16>
    %c2_554 = arith.constant 2 : index
    %c0_555 = arith.constant 0 : index
    %c0_556 = arith.constant 0 : index
    %583 = vector.load %arg11[%c2_554, %c0_555, %c0_556] : memref<9x64x32xbf16, #tpu.memory_space<vmem>>, vector<1x64x32xbf16>
    %584 = vector.shape_cast %583 : vector<1x64x32xbf16> to vector<64x32xbf16>
    %cst_557 = arith.constant dense<0.000000e+00> : vector<16x32xf32>
    %585 = tpu.matmul %582, %584, %cst_557 {dimension_numbers = #tpu.dot_dimension_numbers<[1], [0], [0], [1], [0, 0, 1, 1], [], []>} : vector<16x64xbf16>, vector<64x32xbf16>, vector<16x32xf32> -> vector<16x32xf32>
    %586 = arith.addf %578, %585 : vector<16x32xf32>
    %c3_558 = arith.constant 3 : index
    %c0_559 = arith.constant 0 : index
    %c0_560 = arith.constant 0 : index
    %587 = vector.load %arg21[%c3_558, %c0_559, %c0_560] : memref<9x16x16xbf16, #tpu.memory_space<vmem>>, vector<1x16x16xbf16>
    %588 = vector.shape_cast %587 : vector<1x16x16xbf16> to vector<16x16xbf16>
    %cst_561 = arith.constant dense<0.000000e+00> : vector<16x64xf32>
    %589 = tpu.matmul %588, %561, %cst_561 {dimension_numbers = #tpu.dot_dimension_numbers<[1], [0], [0], [1], [0, 0, 1, 1], [], []>} : vector<16x16xbf16>, vector<16x64xbf16>, vector<16x64xf32> -> vector<16x64xf32>
    %590 = arith.truncf %589 : vector<16x64xf32> to vector<16x64xbf16>
    %c3_562 = arith.constant 3 : index
    %c0_563 = arith.constant 0 : index
    %c0_564 = arith.constant 0 : index
    %591 = vector.load %arg11[%c3_562, %c0_563, %c0_564] : memref<9x64x32xbf16, #tpu.memory_space<vmem>>, vector<1x64x32xbf16>
    %592 = vector.shape_cast %591 : vector<1x64x32xbf16> to vector<64x32xbf16>
    %cst_565 = arith.constant dense<0.000000e+00> : vector<16x32xf32>
    %593 = tpu.matmul %590, %592, %cst_565 {dimension_numbers = #tpu.dot_dimension_numbers<[1], [0], [0], [1], [0, 0, 1, 1], [], []>} : vector<16x64xbf16>, vector<64x32xbf16>, vector<16x32xf32> -> vector<16x32xf32>
    %594 = arith.addf %586, %593 : vector<16x32xf32>
    %c4_566 = arith.constant 4 : index
    %c0_567 = arith.constant 0 : index
    %c0_568 = arith.constant 0 : index
    %595 = vector.load %arg21[%c4_566, %c0_567, %c0_568] : memref<9x16x16xbf16, #tpu.memory_space<vmem>>, vector<1x16x16xbf16>
    %596 = vector.shape_cast %595 : vector<1x16x16xbf16> to vector<16x16xbf16>
    %cst_569 = arith.constant dense<0.000000e+00> : vector<16x64xf32>
    %597 = tpu.matmul %596, %561, %cst_569 {dimension_numbers = #tpu.dot_dimension_numbers<[1], [0], [0], [1], [0, 0, 1, 1], [], []>} : vector<16x16xbf16>, vector<16x64xbf16>, vector<16x64xf32> -> vector<16x64xf32>
    %598 = arith.truncf %597 : vector<16x64xf32> to vector<16x64xbf16>
    %c4_570 = arith.constant 4 : index
    %c0_571 = arith.constant 0 : index
    %c0_572 = arith.constant 0 : index
    %599 = vector.load %arg11[%c4_570, %c0_571, %c0_572] : memref<9x64x32xbf16, #tpu.memory_space<vmem>>, vector<1x64x32xbf16>
    %600 = vector.shape_cast %599 : vector<1x64x32xbf16> to vector<64x32xbf16>
    %cst_573 = arith.constant dense<0.000000e+00> : vector<16x32xf32>
    %601 = tpu.matmul %598, %600, %cst_573 {dimension_numbers = #tpu.dot_dimension_numbers<[1], [0], [0], [1], [0, 0, 1, 1], [], []>} : vector<16x64xbf16>, vector<64x32xbf16>, vector<16x32xf32> -> vector<16x32xf32>
    %602 = arith.addf %594, %601 : vector<16x32xf32>
    %c5_574 = arith.constant 5 : index
    %c0_575 = arith.constant 0 : index
    %c0_576 = arith.constant 0 : index
    %603 = vector.load %arg21[%c5_574, %c0_575, %c0_576] : memref<9x16x16xbf16, #tpu.memory_space<vmem>>, vector<1x16x16xbf16>
    %604 = vector.shape_cast %603 : vector<1x16x16xbf16> to vector<16x16xbf16>
    %cst_577 = arith.constant dense<0.000000e+00> : vector<16x64xf32>
    %605 = tpu.matmul %604, %561, %cst_577 {dimension_numbers = #tpu.dot_dimension_numbers<[1], [0], [0], [1], [0, 0, 1, 1], [], []>} : vector<16x16xbf16>, vector<16x64xbf16>, vector<16x64xf32> -> vector<16x64xf32>
    %606 = arith.truncf %605 : vector<16x64xf32> to vector<16x64xbf16>
    %c5_578 = arith.constant 5 : index
    %c0_579 = arith.constant 0 : index
    %c0_580 = arith.constant 0 : index
    %607 = vector.load %arg11[%c5_578, %c0_579, %c0_580] : memref<9x64x32xbf16, #tpu.memory_space<vmem>>, vector<1x64x32xbf16>
    %608 = vector.shape_cast %607 : vector<1x64x32xbf16> to vector<64x32xbf16>
    %cst_581 = arith.constant dense<0.000000e+00> : vector<16x32xf32>
    %609 = tpu.matmul %606, %608, %cst_581 {dimension_numbers = #tpu.dot_dimension_numbers<[1], [0], [0], [1], [0, 0, 1, 1], [], []>} : vector<16x64xbf16>, vector<64x32xbf16>, vector<16x32xf32> -> vector<16x32xf32>
    %610 = arith.addf %602, %609 : vector<16x32xf32>
    %c6_582 = arith.constant 6 : index
    %c0_583 = arith.constant 0 : index
    %c0_584 = arith.constant 0 : index
    %611 = vector.load %arg21[%c6_582, %c0_583, %c0_584] : memref<9x16x16xbf16, #tpu.memory_space<vmem>>, vector<1x16x16xbf16>
    %612 = vector.shape_cast %611 : vector<1x16x16xbf16> to vector<16x16xbf16>
    %cst_585 = arith.constant dense<0.000000e+00> : vector<16x64xf32>
    %613 = tpu.matmul %612, %561, %cst_585 {dimension_numbers = #tpu.dot_dimension_numbers<[1], [0], [0], [1], [0, 0, 1, 1], [], []>} : vector<16x16xbf16>, vector<16x64xbf16>, vector<16x64xf32> -> vector<16x64xf32>
    %614 = arith.truncf %613 : vector<16x64xf32> to vector<16x64xbf16>
    %c6_586 = arith.constant 6 : index
    %c0_587 = arith.constant 0 : index
    %c0_588 = arith.constant 0 : index
    %615 = vector.load %arg11[%c6_586, %c0_587, %c0_588] : memref<9x64x32xbf16, #tpu.memory_space<vmem>>, vector<1x64x32xbf16>
    %616 = vector.shape_cast %615 : vector<1x64x32xbf16> to vector<64x32xbf16>
    %cst_589 = arith.constant dense<0.000000e+00> : vector<16x32xf32>
    %617 = tpu.matmul %614, %616, %cst_589 {dimension_numbers = #tpu.dot_dimension_numbers<[1], [0], [0], [1], [0, 0, 1, 1], [], []>} : vector<16x64xbf16>, vector<64x32xbf16>, vector<16x32xf32> -> vector<16x32xf32>
    %618 = arith.addf %610, %617 : vector<16x32xf32>
    %c7_590 = arith.constant 7 : index
    %c0_591 = arith.constant 0 : index
    %c0_592 = arith.constant 0 : index
    %619 = vector.load %arg21[%c7_590, %c0_591, %c0_592] : memref<9x16x16xbf16, #tpu.memory_space<vmem>>, vector<1x16x16xbf16>
    %620 = vector.shape_cast %619 : vector<1x16x16xbf16> to vector<16x16xbf16>
    %cst_593 = arith.constant dense<0.000000e+00> : vector<16x64xf32>
    %621 = tpu.matmul %620, %561, %cst_593 {dimension_numbers = #tpu.dot_dimension_numbers<[1], [0], [0], [1], [0, 0, 1, 1], [], []>} : vector<16x16xbf16>, vector<16x64xbf16>, vector<16x64xf32> -> vector<16x64xf32>
    %622 = arith.truncf %621 : vector<16x64xf32> to vector<16x64xbf16>
    %c7_594 = arith.constant 7 : index
    %c0_595 = arith.constant 0 : index
    %c0_596 = arith.constant 0 : index
    %623 = vector.load %arg11[%c7_594, %c0_595, %c0_596] : memref<9x64x32xbf16, #tpu.memory_space<vmem>>, vector<1x64x32xbf16>
    %624 = vector.shape_cast %623 : vector<1x64x32xbf16> to vector<64x32xbf16>
    %cst_597 = arith.constant dense<0.000000e+00> : vector<16x32xf32>
    %625 = tpu.matmul %622, %624, %cst_597 {dimension_numbers = #tpu.dot_dimension_numbers<[1], [0], [0], [1], [0, 0, 1, 1], [], []>} : vector<16x64xbf16>, vector<64x32xbf16>, vector<16x32xf32> -> vector<16x32xf32>
    %626 = arith.addf %618, %625 : vector<16x32xf32>
    %c8_598 = arith.constant 8 : index
    %c0_599 = arith.constant 0 : index
    %c0_600 = arith.constant 0 : index
    %627 = vector.load %arg21[%c8_598, %c0_599, %c0_600] : memref<9x16x16xbf16, #tpu.memory_space<vmem>>, vector<1x16x16xbf16>
    %628 = vector.shape_cast %627 : vector<1x16x16xbf16> to vector<16x16xbf16>
    %cst_601 = arith.constant dense<0.000000e+00> : vector<16x64xf32>
    %629 = tpu.matmul %628, %561, %cst_601 {dimension_numbers = #tpu.dot_dimension_numbers<[1], [0], [0], [1], [0, 0, 1, 1], [], []>} : vector<16x16xbf16>, vector<16x64xbf16>, vector<16x64xf32> -> vector<16x64xf32>
    %630 = arith.truncf %629 : vector<16x64xf32> to vector<16x64xbf16>
    %c8_602 = arith.constant 8 : index
    %c0_603 = arith.constant 0 : index
    %c0_604 = arith.constant 0 : index
    %631 = vector.load %arg11[%c8_602, %c0_603, %c0_604] : memref<9x64x32xbf16, #tpu.memory_space<vmem>>, vector<1x64x32xbf16>
    %632 = vector.shape_cast %631 : vector<1x64x32xbf16> to vector<64x32xbf16>
    %cst_605 = arith.constant dense<0.000000e+00> : vector<16x32xf32>
    %633 = tpu.matmul %630, %632, %cst_605 {dimension_numbers = #tpu.dot_dimension_numbers<[1], [0], [0], [1], [0, 0, 1, 1], [], []>} : vector<16x64xbf16>, vector<64x32xbf16>, vector<16x32xf32> -> vector<16x32xf32>
    %634 = arith.addf %626, %633 : vector<16x32xf32>
    %cst_606 = arith.constant 0.000000e+00 : f32
    %635 = vector.broadcast %cst_606 : f32 to vector<16x32xf32>
    %636 = arith.maximumf %634, %635 : vector<16x32xf32>
    %c0_607 = arith.constant 0 : index
    %c0_608 = arith.constant 0 : index
    %637 = vector.load %arg24[%c0_607, %c0_608] : memref<64x16xbf16, #tpu.memory_space<vmem>>, vector<64x16xbf16>
    %638 = arith.truncf %636 : vector<16x32xf32> to vector<16x32xbf16>
    %cst_609 = arith.constant dense<0.000000e+00> : vector<64x32xf32>
    %639 = tpu.matmul %637, %638, %cst_609 {dimension_numbers = #tpu.dot_dimension_numbers<[1], [0], [0], [1], [0, 0, 1, 1], [], []>} : vector<64x16xbf16>, vector<16x32xbf16>, vector<64x32xf32> -> vector<64x32xf32>
    %c10 = arith.constant 10 : index
    %c0_610 = arith.constant 0 : index
    %640 = vector.load %arg16[%c10, %c0_610] : memref<16x128xf32, #tpu.memory_space<vmem>>, vector<1x16xf32>
    %641 = arith.truncf %639 : vector<64x32xf32> to vector<64x32xbf16>
    %c0_611 = arith.constant 0 : index
    %c0_612 = arith.constant 0 : index
    %c0_613 = arith.constant 0 : index
    %642 = vector.load %arg22[%c0_611, %c0_612, %c0_613] : memref<9x64x64xbf16, #tpu.memory_space<vmem>>, vector<1x64x64xbf16>
    %643 = vector.shape_cast %642 : vector<1x64x64xbf16> to vector<64x64xbf16>
    %cst_614 = arith.constant dense<0.000000e+00> : vector<64x32xf32>
    %644 = tpu.matmul %643, %641, %cst_614 {dimension_numbers = #tpu.dot_dimension_numbers<[1], [0], [0], [1], [0, 0, 1, 1], [], []>} : vector<64x64xbf16>, vector<64x32xbf16>, vector<64x32xf32> -> vector<64x32xf32>
    %645 = arith.truncf %644 : vector<64x32xf32> to vector<64x32xbf16>
    %c0_615 = arith.constant 0 : index
    %c0_616 = arith.constant 0 : index
    %c0_617 = arith.constant 0 : index
    %646 = vector.load %arg12[%c0_615, %c0_616, %c0_617] : memref<9x32x16xbf16, #tpu.memory_space<vmem>>, vector<1x32x16xbf16>
    %647 = vector.shape_cast %646 : vector<1x32x16xbf16> to vector<32x16xbf16>
    %cst_618 = arith.constant dense<0.000000e+00> : vector<64x16xf32>
    %648 = tpu.matmul %645, %647, %cst_618 {dimension_numbers = #tpu.dot_dimension_numbers<[1], [0], [0], [1], [0, 0, 1, 1], [], []>} : vector<64x32xbf16>, vector<32x16xbf16>, vector<64x16xf32> -> vector<64x16xf32>
    %649 = vector.broadcast %640 : vector<1x16xf32> to vector<64x16xf32>
    %650 = arith.addf %649, %648 : vector<64x16xf32>
    %c1_619 = arith.constant 1 : index
    %c0_620 = arith.constant 0 : index
    %c0_621 = arith.constant 0 : index
    %651 = vector.load %arg22[%c1_619, %c0_620, %c0_621] : memref<9x64x64xbf16, #tpu.memory_space<vmem>>, vector<1x64x64xbf16>
    %652 = vector.shape_cast %651 : vector<1x64x64xbf16> to vector<64x64xbf16>
    %cst_622 = arith.constant dense<0.000000e+00> : vector<64x32xf32>
    %653 = tpu.matmul %652, %641, %cst_622 {dimension_numbers = #tpu.dot_dimension_numbers<[1], [0], [0], [1], [0, 0, 1, 1], [], []>} : vector<64x64xbf16>, vector<64x32xbf16>, vector<64x32xf32> -> vector<64x32xf32>
    %654 = arith.truncf %653 : vector<64x32xf32> to vector<64x32xbf16>
    %c1_623 = arith.constant 1 : index
    %c0_624 = arith.constant 0 : index
    %c0_625 = arith.constant 0 : index
    %655 = vector.load %arg12[%c1_623, %c0_624, %c0_625] : memref<9x32x16xbf16, #tpu.memory_space<vmem>>, vector<1x32x16xbf16>
    %656 = vector.shape_cast %655 : vector<1x32x16xbf16> to vector<32x16xbf16>
    %cst_626 = arith.constant dense<0.000000e+00> : vector<64x16xf32>
    %657 = tpu.matmul %654, %656, %cst_626 {dimension_numbers = #tpu.dot_dimension_numbers<[1], [0], [0], [1], [0, 0, 1, 1], [], []>} : vector<64x32xbf16>, vector<32x16xbf16>, vector<64x16xf32> -> vector<64x16xf32>
    %658 = arith.addf %650, %657 : vector<64x16xf32>
    %c2_627 = arith.constant 2 : index
    %c0_628 = arith.constant 0 : index
    %c0_629 = arith.constant 0 : index
    %659 = vector.load %arg22[%c2_627, %c0_628, %c0_629] : memref<9x64x64xbf16, #tpu.memory_space<vmem>>, vector<1x64x64xbf16>
    %660 = vector.shape_cast %659 : vector<1x64x64xbf16> to vector<64x64xbf16>
    %cst_630 = arith.constant dense<0.000000e+00> : vector<64x32xf32>
    %661 = tpu.matmul %660, %641, %cst_630 {dimension_numbers = #tpu.dot_dimension_numbers<[1], [0], [0], [1], [0, 0, 1, 1], [], []>} : vector<64x64xbf16>, vector<64x32xbf16>, vector<64x32xf32> -> vector<64x32xf32>
    %662 = arith.truncf %661 : vector<64x32xf32> to vector<64x32xbf16>
    %c2_631 = arith.constant 2 : index
    %c0_632 = arith.constant 0 : index
    %c0_633 = arith.constant 0 : index
    %663 = vector.load %arg12[%c2_631, %c0_632, %c0_633] : memref<9x32x16xbf16, #tpu.memory_space<vmem>>, vector<1x32x16xbf16>
    %664 = vector.shape_cast %663 : vector<1x32x16xbf16> to vector<32x16xbf16>
    %cst_634 = arith.constant dense<0.000000e+00> : vector<64x16xf32>
    %665 = tpu.matmul %662, %664, %cst_634 {dimension_numbers = #tpu.dot_dimension_numbers<[1], [0], [0], [1], [0, 0, 1, 1], [], []>} : vector<64x32xbf16>, vector<32x16xbf16>, vector<64x16xf32> -> vector<64x16xf32>
    %666 = arith.addf %658, %665 : vector<64x16xf32>
    %c3_635 = arith.constant 3 : index
    %c0_636 = arith.constant 0 : index
    %c0_637 = arith.constant 0 : index
    %667 = vector.load %arg22[%c3_635, %c0_636, %c0_637] : memref<9x64x64xbf16, #tpu.memory_space<vmem>>, vector<1x64x64xbf16>
    %668 = vector.shape_cast %667 : vector<1x64x64xbf16> to vector<64x64xbf16>
    %cst_638 = arith.constant dense<0.000000e+00> : vector<64x32xf32>
    %669 = tpu.matmul %668, %641, %cst_638 {dimension_numbers = #tpu.dot_dimension_numbers<[1], [0], [0], [1], [0, 0, 1, 1], [], []>} : vector<64x64xbf16>, vector<64x32xbf16>, vector<64x32xf32> -> vector<64x32xf32>
    %670 = arith.truncf %669 : vector<64x32xf32> to vector<64x32xbf16>
    %c3_639 = arith.constant 3 : index
    %c0_640 = arith.constant 0 : index
    %c0_641 = arith.constant 0 : index
    %671 = vector.load %arg12[%c3_639, %c0_640, %c0_641] : memref<9x32x16xbf16, #tpu.memory_space<vmem>>, vector<1x32x16xbf16>
    %672 = vector.shape_cast %671 : vector<1x32x16xbf16> to vector<32x16xbf16>
    %cst_642 = arith.constant dense<0.000000e+00> : vector<64x16xf32>
    %673 = tpu.matmul %670, %672, %cst_642 {dimension_numbers = #tpu.dot_dimension_numbers<[1], [0], [0], [1], [0, 0, 1, 1], [], []>} : vector<64x32xbf16>, vector<32x16xbf16>, vector<64x16xf32> -> vector<64x16xf32>
    %674 = arith.addf %666, %673 : vector<64x16xf32>
    %c4_643 = arith.constant 4 : index
    %c0_644 = arith.constant 0 : index
    %c0_645 = arith.constant 0 : index
    %675 = vector.load %arg22[%c4_643, %c0_644, %c0_645] : memref<9x64x64xbf16, #tpu.memory_space<vmem>>, vector<1x64x64xbf16>
    %676 = vector.shape_cast %675 : vector<1x64x64xbf16> to vector<64x64xbf16>
    %cst_646 = arith.constant dense<0.000000e+00> : vector<64x32xf32>
    %677 = tpu.matmul %676, %641, %cst_646 {dimension_numbers = #tpu.dot_dimension_numbers<[1], [0], [0], [1], [0, 0, 1, 1], [], []>} : vector<64x64xbf16>, vector<64x32xbf16>, vector<64x32xf32> -> vector<64x32xf32>
    %678 = arith.truncf %677 : vector<64x32xf32> to vector<64x32xbf16>
    %c4_647 = arith.constant 4 : index
    %c0_648 = arith.constant 0 : index
    %c0_649 = arith.constant 0 : index
    %679 = vector.load %arg12[%c4_647, %c0_648, %c0_649] : memref<9x32x16xbf16, #tpu.memory_space<vmem>>, vector<1x32x16xbf16>
    %680 = vector.shape_cast %679 : vector<1x32x16xbf16> to vector<32x16xbf16>
    %cst_650 = arith.constant dense<0.000000e+00> : vector<64x16xf32>
    %681 = tpu.matmul %678, %680, %cst_650 {dimension_numbers = #tpu.dot_dimension_numbers<[1], [0], [0], [1], [0, 0, 1, 1], [], []>} : vector<64x32xbf16>, vector<32x16xbf16>, vector<64x16xf32> -> vector<64x16xf32>
    %682 = arith.addf %674, %681 : vector<64x16xf32>
    %c5_651 = arith.constant 5 : index
    %c0_652 = arith.constant 0 : index
    %c0_653 = arith.constant 0 : index
    %683 = vector.load %arg22[%c5_651, %c0_652, %c0_653] : memref<9x64x64xbf16, #tpu.memory_space<vmem>>, vector<1x64x64xbf16>
    %684 = vector.shape_cast %683 : vector<1x64x64xbf16> to vector<64x64xbf16>
    %cst_654 = arith.constant dense<0.000000e+00> : vector<64x32xf32>
    %685 = tpu.matmul %684, %641, %cst_654 {dimension_numbers = #tpu.dot_dimension_numbers<[1], [0], [0], [1], [0, 0, 1, 1], [], []>} : vector<64x64xbf16>, vector<64x32xbf16>, vector<64x32xf32> -> vector<64x32xf32>
    %686 = arith.truncf %685 : vector<64x32xf32> to vector<64x32xbf16>
    %c5_655 = arith.constant 5 : index
    %c0_656 = arith.constant 0 : index
    %c0_657 = arith.constant 0 : index
    %687 = vector.load %arg12[%c5_655, %c0_656, %c0_657] : memref<9x32x16xbf16, #tpu.memory_space<vmem>>, vector<1x32x16xbf16>
    %688 = vector.shape_cast %687 : vector<1x32x16xbf16> to vector<32x16xbf16>
    %cst_658 = arith.constant dense<0.000000e+00> : vector<64x16xf32>
    %689 = tpu.matmul %686, %688, %cst_658 {dimension_numbers = #tpu.dot_dimension_numbers<[1], [0], [0], [1], [0, 0, 1, 1], [], []>} : vector<64x32xbf16>, vector<32x16xbf16>, vector<64x16xf32> -> vector<64x16xf32>
    %690 = arith.addf %682, %689 : vector<64x16xf32>
    %c6_659 = arith.constant 6 : index
    %c0_660 = arith.constant 0 : index
    %c0_661 = arith.constant 0 : index
    %691 = vector.load %arg22[%c6_659, %c0_660, %c0_661] : memref<9x64x64xbf16, #tpu.memory_space<vmem>>, vector<1x64x64xbf16>
    %692 = vector.shape_cast %691 : vector<1x64x64xbf16> to vector<64x64xbf16>
    %cst_662 = arith.constant dense<0.000000e+00> : vector<64x32xf32>
    %693 = tpu.matmul %692, %641, %cst_662 {dimension_numbers = #tpu.dot_dimension_numbers<[1], [0], [0], [1], [0, 0, 1, 1], [], []>} : vector<64x64xbf16>, vector<64x32xbf16>, vector<64x32xf32> -> vector<64x32xf32>
    %694 = arith.truncf %693 : vector<64x32xf32> to vector<64x32xbf16>
    %c6_663 = arith.constant 6 : index
    %c0_664 = arith.constant 0 : index
    %c0_665 = arith.constant 0 : index
    %695 = vector.load %arg12[%c6_663, %c0_664, %c0_665] : memref<9x32x16xbf16, #tpu.memory_space<vmem>>, vector<1x32x16xbf16>
    %696 = vector.shape_cast %695 : vector<1x32x16xbf16> to vector<32x16xbf16>
    %cst_666 = arith.constant dense<0.000000e+00> : vector<64x16xf32>
    %697 = tpu.matmul %694, %696, %cst_666 {dimension_numbers = #tpu.dot_dimension_numbers<[1], [0], [0], [1], [0, 0, 1, 1], [], []>} : vector<64x32xbf16>, vector<32x16xbf16>, vector<64x16xf32> -> vector<64x16xf32>
    %698 = arith.addf %690, %697 : vector<64x16xf32>
    %c7_667 = arith.constant 7 : index
    %c0_668 = arith.constant 0 : index
    %c0_669 = arith.constant 0 : index
    %699 = vector.load %arg22[%c7_667, %c0_668, %c0_669] : memref<9x64x64xbf16, #tpu.memory_space<vmem>>, vector<1x64x64xbf16>
    %700 = vector.shape_cast %699 : vector<1x64x64xbf16> to vector<64x64xbf16>
    %cst_670 = arith.constant dense<0.000000e+00> : vector<64x32xf32>
    %701 = tpu.matmul %700, %641, %cst_670 {dimension_numbers = #tpu.dot_dimension_numbers<[1], [0], [0], [1], [0, 0, 1, 1], [], []>} : vector<64x64xbf16>, vector<64x32xbf16>, vector<64x32xf32> -> vector<64x32xf32>
    %702 = arith.truncf %701 : vector<64x32xf32> to vector<64x32xbf16>
    %c7_671 = arith.constant 7 : index
    %c0_672 = arith.constant 0 : index
    %c0_673 = arith.constant 0 : index
    %703 = vector.load %arg12[%c7_671, %c0_672, %c0_673] : memref<9x32x16xbf16, #tpu.memory_space<vmem>>, vector<1x32x16xbf16>
    %704 = vector.shape_cast %703 : vector<1x32x16xbf16> to vector<32x16xbf16>
    %cst_674 = arith.constant dense<0.000000e+00> : vector<64x16xf32>
    %705 = tpu.matmul %702, %704, %cst_674 {dimension_numbers = #tpu.dot_dimension_numbers<[1], [0], [0], [1], [0, 0, 1, 1], [], []>} : vector<64x32xbf16>, vector<32x16xbf16>, vector<64x16xf32> -> vector<64x16xf32>
    %706 = arith.addf %698, %705 : vector<64x16xf32>
    %c8_675 = arith.constant 8 : index
    %c0_676 = arith.constant 0 : index
    %c0_677 = arith.constant 0 : index
    %707 = vector.load %arg22[%c8_675, %c0_676, %c0_677] : memref<9x64x64xbf16, #tpu.memory_space<vmem>>, vector<1x64x64xbf16>
    %708 = vector.shape_cast %707 : vector<1x64x64xbf16> to vector<64x64xbf16>
    %cst_678 = arith.constant dense<0.000000e+00> : vector<64x32xf32>
    %709 = tpu.matmul %708, %641, %cst_678 {dimension_numbers = #tpu.dot_dimension_numbers<[1], [0], [0], [1], [0, 0, 1, 1], [], []>} : vector<64x64xbf16>, vector<64x32xbf16>, vector<64x32xf32> -> vector<64x32xf32>
    %710 = arith.truncf %709 : vector<64x32xf32> to vector<64x32xbf16>
    %c8_679 = arith.constant 8 : index
    %c0_680 = arith.constant 0 : index
    %c0_681 = arith.constant 0 : index
    %711 = vector.load %arg12[%c8_679, %c0_680, %c0_681] : memref<9x32x16xbf16, #tpu.memory_space<vmem>>, vector<1x32x16xbf16>
    %712 = vector.shape_cast %711 : vector<1x32x16xbf16> to vector<32x16xbf16>
    %cst_682 = arith.constant dense<0.000000e+00> : vector<64x16xf32>
    %713 = tpu.matmul %710, %712, %cst_682 {dimension_numbers = #tpu.dot_dimension_numbers<[1], [0], [0], [1], [0, 0, 1, 1], [], []>} : vector<64x32xbf16>, vector<32x16xbf16>, vector<64x16xf32> -> vector<64x16xf32>
    %714 = arith.addf %706, %713 : vector<64x16xf32>
    %cst_683 = arith.constant 0.000000e+00 : f32
    %715 = vector.broadcast %cst_683 : f32 to vector<64x16xf32>
    %716 = arith.maximumf %714, %715 : vector<64x16xf32>
    %c11 = arith.constant 11 : index
    %c0_684 = arith.constant 0 : index
    %717 = vector.load %arg16[%c11, %c0_684] : memref<16x128xf32, #tpu.memory_space<vmem>>, vector<1x64xf32>
    %718 = arith.truncf %556 : vector<4x64xf32> to vector<4x64xbf16>
    %c0_685 = arith.constant 0 : index
    %c0_686 = arith.constant 0 : index
    %719 = vector.load %arg13[%c0_685, %c0_686] : memref<64x64xbf16, #tpu.memory_space<vmem>>, vector<64x64xbf16>
    %cst_687 = arith.constant dense<0.000000e+00> : vector<4x64xf32>
    %720 = tpu.matmul %718, %719, %cst_687 {dimension_numbers = #tpu.dot_dimension_numbers<[1], [0], [0], [1], [0, 0, 1, 1], [], []>} : vector<4x64xbf16>, vector<64x64xbf16>, vector<4x64xf32> -> vector<4x64xf32>
    %721 = vector.broadcast %717 : vector<1x64xf32> to vector<4x64xf32>
    %722 = arith.addf %720, %721 : vector<4x64xf32>
    %c12 = arith.constant 12 : index
    %c0_688 = arith.constant 0 : index
    %723 = vector.load %arg16[%c12, %c0_688] : memref<16x128xf32, #tpu.memory_space<vmem>>, vector<1x32xf32>
    %724 = arith.truncf %636 : vector<16x32xf32> to vector<16x32xbf16>
    %c0_689 = arith.constant 0 : index
    %c0_690 = arith.constant 0 : index
    %725 = vector.load %arg14[%c0_689, %c0_690] : memref<32x32xbf16, #tpu.memory_space<vmem>>, vector<32x32xbf16>
    %cst_691 = arith.constant dense<0.000000e+00> : vector<16x32xf32>
    %726 = tpu.matmul %724, %725, %cst_691 {dimension_numbers = #tpu.dot_dimension_numbers<[1], [0], [0], [1], [0, 0, 1, 1], [], []>} : vector<16x32xbf16>, vector<32x32xbf16>, vector<16x32xf32> -> vector<16x32xf32>
    %727 = vector.broadcast %723 : vector<1x32xf32> to vector<16x32xf32>
    %728 = arith.addf %726, %727 : vector<16x32xf32>
    %c13 = arith.constant 13 : index
    %c0_692 = arith.constant 0 : index
    %729 = vector.load %arg16[%c13, %c0_692] : memref<16x128xf32, #tpu.memory_space<vmem>>, vector<1x16xf32>
    %730 = arith.truncf %716 : vector<64x16xf32> to vector<64x16xbf16>
    %c0_693 = arith.constant 0 : index
    %c0_694 = arith.constant 0 : index
    %731 = vector.load %arg15[%c0_693, %c0_694] : memref<16x16xbf16, #tpu.memory_space<vmem>>, vector<16x16xbf16>
    %cst_695 = arith.constant dense<0.000000e+00> : vector<64x16xf32>
    %732 = tpu.matmul %730, %731, %cst_695 {dimension_numbers = #tpu.dot_dimension_numbers<[1], [0], [0], [1], [0, 0, 1, 1], [], []>} : vector<64x16xbf16>, vector<16x16xbf16>, vector<64x16xf32> -> vector<64x16xf32>
    %733 = vector.broadcast %729 : vector<1x16xf32> to vector<64x16xf32>
    %734 = arith.addf %732, %733 : vector<64x16xf32>
    %735 = arith.mulf %85, %716 : vector<64x16xf32>
    %cst_696 = arith.constant dense<0.000000e+00> : vector<64xf32>
    %736 = vector.multi_reduction <add>, %735, %cst_696 [1] : vector<64x16xf32> to vector<64xf32>
    %737 = vector.shape_cast %736 : vector<64xf32> to vector<64x1xf32>
    %738 = arith.mulf %85, %85 : vector<64x16xf32>
    %cst_697 = arith.constant dense<0.000000e+00> : vector<64xf32>
    %739 = vector.multi_reduction <add>, %738, %cst_697 [1] : vector<64x16xf32> to vector<64xf32>
    %740 = vector.shape_cast %739 : vector<64xf32> to vector<64x1xf32>
    %741 = arith.mulf %716, %716 : vector<64x16xf32>
    %cst_698 = arith.constant dense<0.000000e+00> : vector<64xf32>
    %742 = vector.multi_reduction <add>, %741, %cst_698 [1] : vector<64x16xf32> to vector<64xf32>
    %743 = vector.shape_cast %742 : vector<64xf32> to vector<64x1xf32>
    %cst_699 = arith.constant 9.99999993E-9 : f32
    %744 = vector.broadcast %cst_699 : f32 to vector<64x1xf32>
    %745 = arith.addf %740, %744 : vector<64x1xf32>
    %746 = math.rsqrt %745 : vector<64x1xf32>
    %cst_700 = arith.constant 9.99999993E-9 : f32
    %747 = vector.broadcast %cst_700 : f32 to vector<64x1xf32>
    %748 = arith.addf %743, %747 : vector<64x1xf32>
    %749 = math.rsqrt %748 : vector<64x1xf32>
    %750 = arith.mulf %746, %749 : vector<64x1xf32>
    %751 = arith.mulf %737, %750 : vector<64x1xf32>
    %cst_701 = arith.constant 1.000000e+00 : f32
    %752 = vector.broadcast %cst_701 : f32 to vector<64x1xf32>
    %753 = arith.subf %752, %751 : vector<64x1xf32>
    %754 = arith.mulf %85, %734 : vector<64x16xf32>
    %cst_702 = arith.constant dense<0.000000e+00> : vector<64xf32>
    %755 = vector.multi_reduction <add>, %754, %cst_702 [1] : vector<64x16xf32> to vector<64xf32>
    %756 = vector.shape_cast %755 : vector<64xf32> to vector<64x1xf32>
    %757 = arith.mulf %85, %85 : vector<64x16xf32>
    %cst_703 = arith.constant dense<0.000000e+00> : vector<64xf32>
    %758 = vector.multi_reduction <add>, %757, %cst_703 [1] : vector<64x16xf32> to vector<64xf32>
    %759 = vector.shape_cast %758 : vector<64xf32> to vector<64x1xf32>
    %760 = arith.mulf %734, %734 : vector<64x16xf32>
    %cst_704 = arith.constant dense<0.000000e+00> : vector<64xf32>
    %761 = vector.multi_reduction <add>, %760, %cst_704 [1] : vector<64x16xf32> to vector<64xf32>
    %762 = vector.shape_cast %761 : vector<64xf32> to vector<64x1xf32>
    %cst_705 = arith.constant 9.99999993E-9 : f32
    %763 = vector.broadcast %cst_705 : f32 to vector<64x1xf32>
    %764 = arith.addf %759, %763 : vector<64x1xf32>
    %765 = math.rsqrt %764 : vector<64x1xf32>
    %cst_706 = arith.constant 9.99999993E-9 : f32
    %766 = vector.broadcast %cst_706 : f32 to vector<64x1xf32>
    %767 = arith.addf %762, %766 : vector<64x1xf32>
    %768 = math.rsqrt %767 : vector<64x1xf32>
    %769 = arith.mulf %765, %768 : vector<64x1xf32>
    %770 = arith.mulf %756, %769 : vector<64x1xf32>
    %cst_707 = arith.constant 1.000000e+00 : f32
    %771 = vector.broadcast %cst_707 : f32 to vector<64x1xf32>
    %772 = arith.subf %771, %770 : vector<64x1xf32>
    %773 = arith.addf %753, %772 : vector<64x1xf32>
    %774 = arith.mulf %162, %636 : vector<16x32xf32>
    %cst_708 = arith.constant dense<0.000000e+00> : vector<16xf32>
    %775 = vector.multi_reduction <add>, %774, %cst_708 [1] : vector<16x32xf32> to vector<16xf32>
    %776 = vector.shape_cast %775 : vector<16xf32> to vector<16x1xf32>
    %777 = arith.mulf %162, %162 : vector<16x32xf32>
    %cst_709 = arith.constant dense<0.000000e+00> : vector<16xf32>
    %778 = vector.multi_reduction <add>, %777, %cst_709 [1] : vector<16x32xf32> to vector<16xf32>
    %779 = vector.shape_cast %778 : vector<16xf32> to vector<16x1xf32>
    %780 = arith.mulf %636, %636 : vector<16x32xf32>
    %cst_710 = arith.constant dense<0.000000e+00> : vector<16xf32>
    %781 = vector.multi_reduction <add>, %780, %cst_710 [1] : vector<16x32xf32> to vector<16xf32>
    %782 = vector.shape_cast %781 : vector<16xf32> to vector<16x1xf32>
    %cst_711 = arith.constant 9.99999993E-9 : f32
    %783 = vector.broadcast %cst_711 : f32 to vector<16x1xf32>
    %784 = arith.addf %779, %783 : vector<16x1xf32>
    %785 = math.rsqrt %784 : vector<16x1xf32>
    %cst_712 = arith.constant 9.99999993E-9 : f32
    %786 = vector.broadcast %cst_712 : f32 to vector<16x1xf32>
    %787 = arith.addf %782, %786 : vector<16x1xf32>
    %788 = math.rsqrt %787 : vector<16x1xf32>
    %789 = arith.mulf %785, %788 : vector<16x1xf32>
    %790 = arith.mulf %776, %789 : vector<16x1xf32>
    %cst_713 = arith.constant 1.000000e+00 : f32
    %791 = vector.broadcast %cst_713 : f32 to vector<16x1xf32>
    %792 = arith.subf %791, %790 : vector<16x1xf32>
    %793 = arith.mulf %162, %728 : vector<16x32xf32>
    %cst_714 = arith.constant dense<0.000000e+00> : vector<16xf32>
    %794 = vector.multi_reduction <add>, %793, %cst_714 [1] : vector<16x32xf32> to vector<16xf32>
    %795 = vector.shape_cast %794 : vector<16xf32> to vector<16x1xf32>
    %796 = arith.mulf %162, %162 : vector<16x32xf32>
    %cst_715 = arith.constant dense<0.000000e+00> : vector<16xf32>
    %797 = vector.multi_reduction <add>, %796, %cst_715 [1] : vector<16x32xf32> to vector<16xf32>
    %798 = vector.shape_cast %797 : vector<16xf32> to vector<16x1xf32>
    %799 = arith.mulf %728, %728 : vector<16x32xf32>
    %cst_716 = arith.constant dense<0.000000e+00> : vector<16xf32>
    %800 = vector.multi_reduction <add>, %799, %cst_716 [1] : vector<16x32xf32> to vector<16xf32>
    %801 = vector.shape_cast %800 : vector<16xf32> to vector<16x1xf32>
    %cst_717 = arith.constant 9.99999993E-9 : f32
    %802 = vector.broadcast %cst_717 : f32 to vector<16x1xf32>
    %803 = arith.addf %798, %802 : vector<16x1xf32>
    %804 = math.rsqrt %803 : vector<16x1xf32>
    %cst_718 = arith.constant 9.99999993E-9 : f32
    %805 = vector.broadcast %cst_718 : f32 to vector<16x1xf32>
    %806 = arith.addf %801, %805 : vector<16x1xf32>
    %807 = math.rsqrt %806 : vector<16x1xf32>
    %808 = arith.mulf %804, %807 : vector<16x1xf32>
    %809 = arith.mulf %795, %808 : vector<16x1xf32>
    %cst_719 = arith.constant 1.000000e+00 : f32
    %810 = vector.broadcast %cst_719 : f32 to vector<16x1xf32>
    %811 = arith.subf %810, %809 : vector<16x1xf32>
    %812 = arith.addf %792, %811 : vector<16x1xf32>
    %813 = arith.mulf %239, %556 : vector<4x64xf32>
    %cst_720 = arith.constant dense<0.000000e+00> : vector<4xf32>
    %814 = vector.multi_reduction <add>, %813, %cst_720 [1] : vector<4x64xf32> to vector<4xf32>
    %815 = vector.shape_cast %814 : vector<4xf32> to vector<4x1xf32>
    %816 = arith.mulf %239, %239 : vector<4x64xf32>
    %cst_721 = arith.constant dense<0.000000e+00> : vector<4xf32>
    %817 = vector.multi_reduction <add>, %816, %cst_721 [1] : vector<4x64xf32> to vector<4xf32>
    %818 = vector.shape_cast %817 : vector<4xf32> to vector<4x1xf32>
    %819 = arith.mulf %556, %556 : vector<4x64xf32>
    %cst_722 = arith.constant dense<0.000000e+00> : vector<4xf32>
    %820 = vector.multi_reduction <add>, %819, %cst_722 [1] : vector<4x64xf32> to vector<4xf32>
    %821 = vector.shape_cast %820 : vector<4xf32> to vector<4x1xf32>
    %cst_723 = arith.constant 9.99999993E-9 : f32
    %822 = vector.broadcast %cst_723 : f32 to vector<4x1xf32>
    %823 = arith.addf %818, %822 : vector<4x1xf32>
    %824 = math.rsqrt %823 : vector<4x1xf32>
    %cst_724 = arith.constant 9.99999993E-9 : f32
    %825 = vector.broadcast %cst_724 : f32 to vector<4x1xf32>
    %826 = arith.addf %821, %825 : vector<4x1xf32>
    %827 = math.rsqrt %826 : vector<4x1xf32>
    %828 = arith.mulf %824, %827 : vector<4x1xf32>
    %829 = arith.mulf %815, %828 : vector<4x1xf32>
    %cst_725 = arith.constant 1.000000e+00 : f32
    %830 = vector.broadcast %cst_725 : f32 to vector<4x1xf32>
    %831 = arith.subf %830, %829 : vector<4x1xf32>
    %832 = arith.mulf %239, %722 : vector<4x64xf32>
    %cst_726 = arith.constant dense<0.000000e+00> : vector<4xf32>
    %833 = vector.multi_reduction <add>, %832, %cst_726 [1] : vector<4x64xf32> to vector<4xf32>
    %834 = vector.shape_cast %833 : vector<4xf32> to vector<4x1xf32>
    %835 = arith.mulf %239, %239 : vector<4x64xf32>
    %cst_727 = arith.constant dense<0.000000e+00> : vector<4xf32>
    %836 = vector.multi_reduction <add>, %835, %cst_727 [1] : vector<4x64xf32> to vector<4xf32>
    %837 = vector.shape_cast %836 : vector<4xf32> to vector<4x1xf32>
    %838 = arith.mulf %722, %722 : vector<4x64xf32>
    %cst_728 = arith.constant dense<0.000000e+00> : vector<4xf32>
    %839 = vector.multi_reduction <add>, %838, %cst_728 [1] : vector<4x64xf32> to vector<4xf32>
    %840 = vector.shape_cast %839 : vector<4xf32> to vector<4x1xf32>
    %cst_729 = arith.constant 9.99999993E-9 : f32
    %841 = vector.broadcast %cst_729 : f32 to vector<4x1xf32>
    %842 = arith.addf %837, %841 : vector<4x1xf32>
    %843 = math.rsqrt %842 : vector<4x1xf32>
    %cst_730 = arith.constant 9.99999993E-9 : f32
    %844 = vector.broadcast %cst_730 : f32 to vector<4x1xf32>
    %845 = arith.addf %840, %844 : vector<4x1xf32>
    %846 = math.rsqrt %845 : vector<4x1xf32>
    %847 = arith.mulf %843, %846 : vector<4x1xf32>
    %848 = arith.mulf %834, %847 : vector<4x1xf32>
    %cst_731 = arith.constant 1.000000e+00 : f32
    %849 = vector.broadcast %cst_731 : f32 to vector<4x1xf32>
    %850 = arith.subf %849, %848 : vector<4x1xf32>
    %851 = arith.addf %831, %850 : vector<4x1xf32>
    %cst_732 = arith.constant 0.000000e+00 : f32
    %852 = vector.broadcast %cst_732 : f32 to vector<1x256xf32>
    %c0_733 = arith.constant 0 : index
    %c0_734 = arith.constant 0 : index
    %853 = vector.load %arg25[%c0_733, %c0_734] : memref<64x1024xbf16, #tpu.memory_space<vmem>>, vector<64x256xbf16>
    %854 = arith.extf %853 : vector<64x256xbf16> to vector<64x256xf32>
    %855 = vector.broadcast %773 : vector<64x1xf32> to vector<64x256xf32>
    %856 = arith.mulf %855, %854 : vector<64x256xf32>
    %cst_735 = arith.constant dense<0.000000e+00> : vector<256xf32>
    %857 = vector.multi_reduction <add>, %856, %cst_735 [0] : vector<64x256xf32> to vector<256xf32>
    %858 = vector.shape_cast %857 : vector<256xf32> to vector<1x256xf32>
    %859 = arith.addf %852, %858 : vector<1x256xf32>
    %c0_736 = arith.constant 0 : index
    %c0_737 = arith.constant 0 : index
    %860 = vector.load %arg26[%c0_736, %c0_737] : memref<16x1024xbf16, #tpu.memory_space<vmem>>, vector<16x256xbf16>
    %861 = arith.extf %860 : vector<16x256xbf16> to vector<16x256xf32>
    %862 = vector.broadcast %812 : vector<16x1xf32> to vector<16x256xf32>
    %863 = arith.mulf %862, %861 : vector<16x256xf32>
    %cst_738 = arith.constant dense<0.000000e+00> : vector<256xf32>
    %864 = vector.multi_reduction <add>, %863, %cst_738 [0] : vector<16x256xf32> to vector<256xf32>
    %865 = vector.shape_cast %864 : vector<256xf32> to vector<1x256xf32>
    %866 = arith.addf %859, %865 : vector<1x256xf32>
    %c0_739 = arith.constant 0 : index
    %c0_740 = arith.constant 0 : index
    %867 = vector.load %arg27[%c0_739, %c0_740] : memref<4x1024xbf16, #tpu.memory_space<vmem>>, vector<4x256xbf16>
    %868 = arith.extf %867 : vector<4x256xbf16> to vector<4x256xf32>
    %869 = vector.broadcast %851 : vector<4x1xf32> to vector<4x256xf32>
    %870 = arith.mulf %869, %868 : vector<4x256xf32>
    %cst_741 = arith.constant dense<0.000000e+00> : vector<256xf32>
    %871 = vector.multi_reduction <add>, %870, %cst_741 [0] : vector<4x256xf32> to vector<256xf32>
    %872 = vector.shape_cast %871 : vector<256xf32> to vector<1x256xf32>
    %873 = arith.addf %866, %872 : vector<1x256xf32>
    %cst_742 = arith.constant 0.000000e+00 : f32
    %874 = vector.broadcast %cst_742 : f32 to vector<1x256xf32>
    %c0_743 = arith.constant 0 : index
    %c256 = arith.constant 256 : index
    %875 = vector.load %arg25[%c0_743, %c256] : memref<64x1024xbf16, #tpu.memory_space<vmem>>, vector<64x256xbf16>
    %876 = arith.extf %875 : vector<64x256xbf16> to vector<64x256xf32>
    %877 = vector.broadcast %773 : vector<64x1xf32> to vector<64x256xf32>
    %878 = arith.mulf %877, %876 : vector<64x256xf32>
    %cst_744 = arith.constant dense<0.000000e+00> : vector<256xf32>
    %879 = vector.multi_reduction <add>, %878, %cst_744 [0] : vector<64x256xf32> to vector<256xf32>
    %880 = vector.shape_cast %879 : vector<256xf32> to vector<1x256xf32>
    %881 = arith.addf %874, %880 : vector<1x256xf32>
    %c0_745 = arith.constant 0 : index
    %c256_746 = arith.constant 256 : index
    %882 = vector.load %arg26[%c0_745, %c256_746] : memref<16x1024xbf16, #tpu.memory_space<vmem>>, vector<16x256xbf16>
    %883 = arith.extf %882 : vector<16x256xbf16> to vector<16x256xf32>
    %884 = vector.broadcast %812 : vector<16x1xf32> to vector<16x256xf32>
    %885 = arith.mulf %884, %883 : vector<16x256xf32>
    %cst_747 = arith.constant dense<0.000000e+00> : vector<256xf32>
    %886 = vector.multi_reduction <add>, %885, %cst_747 [0] : vector<16x256xf32> to vector<256xf32>
    %887 = vector.shape_cast %886 : vector<256xf32> to vector<1x256xf32>
    %888 = arith.addf %881, %887 : vector<1x256xf32>
    %c0_748 = arith.constant 0 : index
    %c256_749 = arith.constant 256 : index
    %889 = vector.load %arg27[%c0_748, %c256_749] : memref<4x1024xbf16, #tpu.memory_space<vmem>>, vector<4x256xbf16>
    %890 = arith.extf %889 : vector<4x256xbf16> to vector<4x256xf32>
    %891 = vector.broadcast %851 : vector<4x1xf32> to vector<4x256xf32>
    %892 = arith.mulf %891, %890 : vector<4x256xf32>
    %cst_750 = arith.constant dense<0.000000e+00> : vector<256xf32>
    %893 = vector.multi_reduction <add>, %892, %cst_750 [0] : vector<4x256xf32> to vector<256xf32>
    %894 = vector.shape_cast %893 : vector<256xf32> to vector<1x256xf32>
    %895 = arith.addf %888, %894 : vector<1x256xf32>
    %cst_751 = arith.constant 0.000000e+00 : f32
    %896 = vector.broadcast %cst_751 : f32 to vector<1x256xf32>
    %c0_752 = arith.constant 0 : index
    %c512 = arith.constant 512 : index
    %897 = vector.load %arg25[%c0_752, %c512] : memref<64x1024xbf16, #tpu.memory_space<vmem>>, vector<64x256xbf16>
    %898 = arith.extf %897 : vector<64x256xbf16> to vector<64x256xf32>
    %899 = vector.broadcast %773 : vector<64x1xf32> to vector<64x256xf32>
    %900 = arith.mulf %899, %898 : vector<64x256xf32>
    %cst_753 = arith.constant dense<0.000000e+00> : vector<256xf32>
    %901 = vector.multi_reduction <add>, %900, %cst_753 [0] : vector<64x256xf32> to vector<256xf32>
    %902 = vector.shape_cast %901 : vector<256xf32> to vector<1x256xf32>
    %903 = arith.addf %896, %902 : vector<1x256xf32>
    %c0_754 = arith.constant 0 : index
    %c512_755 = arith.constant 512 : index
    %904 = vector.load %arg26[%c0_754, %c512_755] : memref<16x1024xbf16, #tpu.memory_space<vmem>>, vector<16x256xbf16>
    %905 = arith.extf %904 : vector<16x256xbf16> to vector<16x256xf32>
    %906 = vector.broadcast %812 : vector<16x1xf32> to vector<16x256xf32>
    %907 = arith.mulf %906, %905 : vector<16x256xf32>
    %cst_756 = arith.constant dense<0.000000e+00> : vector<256xf32>
    %908 = vector.multi_reduction <add>, %907, %cst_756 [0] : vector<16x256xf32> to vector<256xf32>
    %909 = vector.shape_cast %908 : vector<256xf32> to vector<1x256xf32>
    %910 = arith.addf %903, %909 : vector<1x256xf32>
    %c0_757 = arith.constant 0 : index
    %c512_758 = arith.constant 512 : index
    %911 = vector.load %arg27[%c0_757, %c512_758] : memref<4x1024xbf16, #tpu.memory_space<vmem>>, vector<4x256xbf16>
    %912 = arith.extf %911 : vector<4x256xbf16> to vector<4x256xf32>
    %913 = vector.broadcast %851 : vector<4x1xf32> to vector<4x256xf32>
    %914 = arith.mulf %913, %912 : vector<4x256xf32>
    %cst_759 = arith.constant dense<0.000000e+00> : vector<256xf32>
    %915 = vector.multi_reduction <add>, %914, %cst_759 [0] : vector<4x256xf32> to vector<256xf32>
    %916 = vector.shape_cast %915 : vector<256xf32> to vector<1x256xf32>
    %917 = arith.addf %910, %916 : vector<1x256xf32>
    %cst_760 = arith.constant 0.000000e+00 : f32
    %918 = vector.broadcast %cst_760 : f32 to vector<1x256xf32>
    %c0_761 = arith.constant 0 : index
    %c768 = arith.constant 768 : index
    %919 = vector.load %arg25[%c0_761, %c768] : memref<64x1024xbf16, #tpu.memory_space<vmem>>, vector<64x256xbf16>
    %920 = arith.extf %919 : vector<64x256xbf16> to vector<64x256xf32>
    %921 = vector.broadcast %773 : vector<64x1xf32> to vector<64x256xf32>
    %922 = arith.mulf %921, %920 : vector<64x256xf32>
    %cst_762 = arith.constant dense<0.000000e+00> : vector<256xf32>
    %923 = vector.multi_reduction <add>, %922, %cst_762 [0] : vector<64x256xf32> to vector<256xf32>
    %924 = vector.shape_cast %923 : vector<256xf32> to vector<1x256xf32>
    %925 = arith.addf %918, %924 : vector<1x256xf32>
    %c0_763 = arith.constant 0 : index
    %c768_764 = arith.constant 768 : index
    %926 = vector.load %arg26[%c0_763, %c768_764] : memref<16x1024xbf16, #tpu.memory_space<vmem>>, vector<16x256xbf16>
    %927 = arith.extf %926 : vector<16x256xbf16> to vector<16x256xf32>
    %928 = vector.broadcast %812 : vector<16x1xf32> to vector<16x256xf32>
    %929 = arith.mulf %928, %927 : vector<16x256xf32>
    %cst_765 = arith.constant dense<0.000000e+00> : vector<256xf32>
    %930 = vector.multi_reduction <add>, %929, %cst_765 [0] : vector<16x256xf32> to vector<256xf32>
    %931 = vector.shape_cast %930 : vector<256xf32> to vector<1x256xf32>
    %932 = arith.addf %925, %931 : vector<1x256xf32>
    %c0_766 = arith.constant 0 : index
    %c768_767 = arith.constant 768 : index
    %933 = vector.load %arg27[%c0_766, %c768_767] : memref<4x1024xbf16, #tpu.memory_space<vmem>>, vector<4x256xbf16>
    %934 = arith.extf %933 : vector<4x256xbf16> to vector<4x256xf32>
    %935 = vector.broadcast %851 : vector<4x1xf32> to vector<4x256xf32>
    %936 = arith.mulf %935, %934 : vector<4x256xf32>
    %cst_768 = arith.constant dense<0.000000e+00> : vector<256xf32>
    %937 = vector.multi_reduction <add>, %936, %cst_768 [0] : vector<4x256xf32> to vector<256xf32>
    %938 = vector.shape_cast %937 : vector<256xf32> to vector<1x256xf32>
    %939 = arith.addf %932, %938 : vector<1x256xf32>
    %940 = tpu.concatenate %873, %895, %917, %939 in 1 : vector<1x256xf32>, vector<1x256xf32>, vector<1x256xf32>, vector<1x256xf32> -> vector<1x1024xf32>
    %c0_769 = arith.constant 0 : index
    %c0_770 = arith.constant 0 : index
    %c0_771 = arith.constant 0 : index
    %941 = vector.load %arg28[%c0_769, %c0_770, %c0_771] : memref<1x1x1024xf32, #tpu.memory_space<vmem>>, vector<1x1x1024xf32>
    %942 = vector.shape_cast %941 : vector<1x1x1024xf32> to vector<1x1024xf32>
    %943 = vector.shape_cast %940 : vector<1x1024xf32> to vector<1x1x1024xf32>
    tpu.vector_store %arg28[%c0_769, %c0_770, %c0_771], %943 {strides = array<i32>} : memref<1x1x1024xf32, #tpu.memory_space<vmem>>, vector<1x1x1024xf32>,
    return
  }
  func.func @transform_0(%arg0: i32) -> (i32, i32, i32) {
    %c0_i32 = arith.constant 0 : i32
    %c0_i32_0 = arith.constant 0 : i32
    %c0_i32_1 = arith.constant 0 : i32
    return %arg0, %c0_i32, %c0_i32_0 : i32, i32, i32
  }
  func.func @transform_1(%arg0: i32) -> (i32, i32) {
    %c0_i32 = arith.constant 0 : i32
    %c0_i32_0 = arith.constant 0 : i32
    %c0_i32_1 = arith.constant 0 : i32
    return %c0_i32, %c0_i32_0 : i32, i32
  }
  func.func @transform_2(%arg0: i32) -> (i32, i32, i32) {
    %c0_i32 = arith.constant 0 : i32
    %c0_i32_0 = arith.constant 0 : i32
    %c0_i32_1 = arith.constant 0 : i32
    %c0_i32_2 = arith.constant 0 : i32
    return %c0_i32, %c0_i32_0, %c0_i32_1 : i32, i32, i32
  }
  func.func @transform_3(%arg0: i32) -> (i32, i32, i32) {
    %c0_i32 = arith.constant 0 : i32
    %c0_i32_0 = arith.constant 0 : i32
    %c0_i32_1 = arith.constant 0 : i32
    %c0_i32_2 = arith.constant 0 : i32
    return %c0_i32, %c0_i32_0, %c0_i32_1 : i32, i32, i32
  }
  func.func @transform_4(%arg0: i32) -> (i32, i32, i32) {
    %c0_i32 = arith.constant 0 : i32
    %c0_i32_0 = arith.constant 0 : i32
    %c0_i32_1 = arith.constant 0 : i32
    %c0_i32_2 = arith.constant 0 : i32
    return %c0_i32, %c0_i32_0, %c0_i32_1 : i32, i32, i32
  }
  func.func @transform_5(%arg0: i32) -> (i32, i32, i32) {
    %c0_i32 = arith.constant 0 : i32
    %c0_i32_0 = arith.constant 0 : i32
    %c0_i32_1 = arith.constant 0 : i32
    %c0_i32_2 = arith.constant 0 : i32
    return %c0_i32, %c0_i32_0, %c0_i32_1 : i32, i32, i32
  }
  func.func @transform_6(%arg0: i32) -> (i32, i32, i32) {
    %c0_i32 = arith.constant 0 : i32
    %c0_i32_0 = arith.constant 0 : i32
    %c0_i32_1 = arith.constant 0 : i32
    %c0_i32_2 = arith.constant 0 : i32
    return %c0_i32, %c0_i32_0, %c0_i32_1 : i32, i32, i32
  }
  func.func @transform_7(%arg0: i32) -> (i32, i32, i32) {
    %c0_i32 = arith.constant 0 : i32
    %c0_i32_0 = arith.constant 0 : i32
    %c0_i32_1 = arith.constant 0 : i32
    %c0_i32_2 = arith.constant 0 : i32
    return %c0_i32, %c0_i32_0, %c0_i32_1 : i32, i32, i32
  }
  func.func @transform_8(%arg0: i32) -> (i32, i32) {
    %c0_i32 = arith.constant 0 : i32
    %c0_i32_0 = arith.constant 0 : i32
    %c0_i32_1 = arith.constant 0 : i32
    return %c0_i32, %c0_i32_0 : i32, i32
  }
  func.func @transform_9(%arg0: i32) -> (i32, i32, i32) {
    %c0_i32 = arith.constant 0 : i32
    %c0_i32_0 = arith.constant 0 : i32
    %c0_i32_1 = arith.constant 0 : i32
    %c0_i32_2 = arith.constant 0 : i32
    return %c0_i32, %c0_i32_0, %c0_i32_1 : i32, i32, i32
  }
  func.func @transform_10(%arg0: i32) -> (i32, i32, i32) {
    %c0_i32 = arith.constant 0 : i32
    %c0_i32_0 = arith.constant 0 : i32
    %c0_i32_1 = arith.constant 0 : i32
    %c0_i32_2 = arith.constant 0 : i32
    return %c0_i32, %c0_i32_0, %c0_i32_1 : i32, i32, i32
  }
  func.func @transform_11(%arg0: i32) -> (i32, i32, i32) {
    %c0_i32 = arith.constant 0 : i32
    %c0_i32_0 = arith.constant 0 : i32
    %c0_i32_1 = arith.constant 0 : i32
    %c0_i32_2 = arith.constant 0 : i32
    return %c0_i32, %c0_i32_0, %c0_i32_1 : i32, i32, i32
  }
  func.func @transform_12(%arg0: i32) -> (i32, i32) {
    %c0_i32 = arith.constant 0 : i32
    %c0_i32_0 = arith.constant 0 : i32
    %c0_i32_1 = arith.constant 0 : i32
    return %c0_i32, %c0_i32_0 : i32, i32
  }
  func.func @transform_13(%arg0: i32) -> (i32, i32) {
    %c0_i32 = arith.constant 0 : i32
    %c0_i32_0 = arith.constant 0 : i32
    %c0_i32_1 = arith.constant 0 : i32
    return %c0_i32, %c0_i32_0 : i32, i32
  }
  func.func @transform_14(%arg0: i32) -> (i32, i32) {
    %c0_i32 = arith.constant 0 : i32
    %c0_i32_0 = arith.constant 0 : i32
    %c0_i32_1 = arith.constant 0 : i32
    return %c0_i32, %c0_i32_0 : i32, i32
  }
  func.func @transform_15(%arg0: i32) -> (i32, i32) {
    %c0_i32 = arith.constant 0 : i32
    %c0_i32_0 = arith.constant 0 : i32
    %c0_i32_1 = arith.constant 0 : i32
    return %c0_i32, %c0_i32_0 : i32, i32
  }
  func.func @transform_16(%arg0: i32) -> (i32, i32, i32) {
    %c0_i32 = arith.constant 0 : i32
    %c0_i32_0 = arith.constant 0 : i32
    %c0_i32_1 = arith.constant 0 : i32
    %c0_i32_2 = arith.constant 0 : i32
    return %c0_i32, %c0_i32_0, %c0_i32_1 : i32, i32, i32
  }
  func.func @transform_17(%arg0: i32) -> (i32, i32, i32) {
    %c0_i32 = arith.constant 0 : i32
    %c0_i32_0 = arith.constant 0 : i32
    %c0_i32_1 = arith.constant 0 : i32
    %c0_i32_2 = arith.constant 0 : i32
    return %c0_i32, %c0_i32_0, %c0_i32_1 : i32, i32, i32
  }
  func.func @transform_18(%arg0: i32) -> (i32, i32, i32) {
    %c0_i32 = arith.constant 0 : i32
    %c0_i32_0 = arith.constant 0 : i32
    %c0_i32_1 = arith.constant 0 : i32
    %c0_i32_2 = arith.constant 0 : i32
    return %c0_i32, %c0_i32_0, %c0_i32_1 : i32, i32, i32
  }
  func.func @transform_19(%arg0: i32) -> (i32, i32, i32) {
    %c0_i32 = arith.constant 0 : i32
    %c0_i32_0 = arith.constant 0 : i32
    %c0_i32_1 = arith.constant 0 : i32
    %c0_i32_2 = arith.constant 0 : i32
    return %c0_i32, %c0_i32_0, %c0_i32_1 : i32, i32, i32
  }
  func.func @transform_20(%arg0: i32) -> (i32, i32, i32) {
    %c0_i32 = arith.constant 0 : i32
    %c0_i32_0 = arith.constant 0 : i32
    %c0_i32_1 = arith.constant 0 : i32
    %c0_i32_2 = arith.constant 0 : i32
    return %c0_i32, %c0_i32_0, %c0_i32_1 : i32, i32, i32
  }
  func.func @transform_21(%arg0: i32) -> (i32, i32, i32) {
    %c0_i32 = arith.constant 0 : i32
    %c0_i32_0 = arith.constant 0 : i32
    %c0_i32_1 = arith.constant 0 : i32
    %c0_i32_2 = arith.constant 0 : i32
    return %c0_i32, %c0_i32_0, %c0_i32_1 : i32, i32, i32
  }
  func.func @transform_22(%arg0: i32) -> (i32, i32) {
    %c0_i32 = arith.constant 0 : i32
    %c0_i32_0 = arith.constant 0 : i32
    %c0_i32_1 = arith.constant 0 : i32
    return %c0_i32, %c0_i32_0 : i32, i32
  }
  func.func @transform_23(%arg0: i32) -> (i32, i32) {
    %c0_i32 = arith.constant 0 : i32
    %c0_i32_0 = arith.constant 0 : i32
    %c0_i32_1 = arith.constant 0 : i32
    return %c0_i32, %c0_i32_0 : i32, i32
  }
  func.func @transform_24(%arg0: i32) -> (i32, i32) {
    %c0_i32 = arith.constant 0 : i32
    %c0_i32_0 = arith.constant 0 : i32
    %c0_i32_1 = arith.constant 0 : i32
    return %c0_i32, %c0_i32_0 : i32, i32
  }
  func.func @transform_25(%arg0: i32) -> (i32, i32) {
    %c0_i32 = arith.constant 0 : i32
    %c0_i32_0 = arith.constant 0 : i32
    %c0_i32_1 = arith.constant 0 : i32
    return %c0_i32, %c0_i32_0 : i32, i32
  }
  func.func @transform_26(%arg0: i32) -> (i32, i32) {
    %c0_i32 = arith.constant 0 : i32
    %c0_i32_0 = arith.constant 0 : i32
    %c0_i32_1 = arith.constant 0 : i32
    return %c0_i32, %c0_i32_0 : i32, i32
  }
  func.func @transform_27(%arg0: i32) -> (i32, i32, i32) {
    %c0_i32 = arith.constant 0 : i32
    %c0_i32_0 = arith.constant 0 : i32
    %c0_i32_1 = arith.constant 0 : i32
    return %arg0, %c0_i32, %c0_i32_0 : i32, i32, i32
  }
}

</mosaic_0001>

<llo_original>
// kernel: recontrast_forward.1
$region0: #{recontrast_forward.1}
  #allocation0 [shape = 'u32[]', space=smem, size = 0x4, offset = 0x4, fixed_abs, tag = 'smem constant byte address 0x4 - core index']
  #allocation1 [shape = 'u32[72,128]{1,0:T(1,128)}', space=vmem, size = 0x9000, scoped, tag = 'internal scratch']
  %s0 = inlined_call_operand.vmem [shape: bf16[2,256,128], index: 0, kind: input, shape index: {}]
  %s1 = inlined_call_operand.vmem [shape: bf16[128,8], index: 1, kind: input, shape index: {}]
  %s2 = inlined_call_operand.vmem [shape: bf16[9,8,16], index: 2, kind: input, shape index: {}]
  %s3 = inlined_call_operand.vmem [shape: bf16[9,16,32], index: 3, kind: input, shape index: {}]
  %s4 = inlined_call_operand.vmem [shape: bf16[9,32,64], index: 4, kind: input, shape index: {}]
  %s5 = inlined_call_operand.vmem [shape: bf16[9,16,32], index: 5, kind: input, shape index: {}]
  %s6 = inlined_call_operand.vmem [shape: bf16[9,32,64], index: 6, kind: input, shape index: {}]
  %s7 = inlined_call_operand.vmem [shape: bf16[9,32,64], index: 7, kind: input, shape index: {}]
  %s8 = inlined_call_operand.vmem [shape: bf16[192,64], index: 8, kind: input, shape index: {}]
  %s9 = inlined_call_operand.vmem [shape: bf16[9,64,64], index: 9, kind: input, shape index: {}]
  %s10 = inlined_call_operand.vmem [shape: bf16[9,64,32], index: 10, kind: input, shape index: {}]
  %s11 = inlined_call_operand.vmem [shape: bf16[9,32,16], index: 11, kind: input, shape index: {}]
  %s12 = inlined_call_operand.vmem [shape: bf16[64,64], index: 12, kind: input, shape index: {}]
  %s13 = inlined_call_operand.vmem [shape: bf16[32,32], index: 13, kind: input, shape index: {}]
  %s14 = inlined_call_operand.vmem [shape: bf16[16,16], index: 14, kind: input, shape index: {}]
  %s15 = inlined_call_operand.vmem [shape: f32[16,128], index: 15, kind: input, shape index: {}]
  %s16 = inlined_call_operand.vmem [shape: bf16[9,64,256], index: 16, kind: input, shape index: {}]
  %s17 = inlined_call_operand.vmem [shape: bf16[9,16,64], index: 17, kind: input, shape index: {}]
  %s18 = inlined_call_operand.vmem [shape: bf16[9,4,16], index: 18, kind: input, shape index: {}]
  %s19 = inlined_call_operand.vmem [shape: bf16[9,4,4], index: 19, kind: input, shape index: {}]
  %s20 = inlined_call_operand.vmem [shape: bf16[9,16,16], index: 20, kind: input, shape index: {}]
  %s21 = inlined_call_operand.vmem [shape: bf16[9,64,64], index: 21, kind: input, shape index: {}]
  %s22 = inlined_call_operand.vmem [shape: bf16[16,4], index: 22, kind: input, shape index: {}]
  %s23 = inlined_call_operand.vmem [shape: bf16[64,16], index: 23, kind: input, shape index: {}]
  %s24 = inlined_call_operand.vmem [shape: bf16[64,1024], index: 24, kind: input, shape index: {}]
  %s25 = inlined_call_operand.vmem [shape: bf16[16,1024], index: 25, kind: input, shape index: {}]
  %s26 = inlined_call_operand.vmem [shape: bf16[4,1024], index: 26, kind: input, shape index: {}]
  %s27 = inlined_call_operand.vmem [shape: f32[2,1,1024], index: 27, kind: output, shape index: {}]
  %s28 = sld [smem:[#allocation0]]
  $region141: #{recontrast_forward.1} parent=0
    _
  %s30 = ssub.s32 1, %s28
  %s31 = scalar_select 0, %s30, %s28
  loop: start=0, step=1, limit=4
  $region2: #{recontrast_forward.1} parent=0 // loop_pre_header
    _
  $region3: #{recontrast_forward.1} parent=0 // loop_header
    %s33 = sphi 0, %s37
    %p34 = scmp.ge.s32.totalorder %s33, 4
    %s43 = sphi 0, %s45
    %s46 = sphi 0, %s43
    %s47 = sphi 0, %s46
    %s63 = sphi 0, %s47
    %s67 = sphi 0, %s67
    %s69 = sphi 0, %s67
    %s70 = sphi 0, %s69
    %s84 = sphi 0, %s70
    %s88 = sphi 0, %s88
    %s90 = sphi 0, %s88
    %s91 = sphi 0, %s90
    %s105 = sphi 0, %s91
    %s109 = sphi 0, %s109
    %s111 = sphi 0, %s109
    %s112 = sphi 0, %s111
    %s126 = sphi 0, %s112
    %s130 = sphi 0, %s130
    %s132 = sphi 0, %s130
    %s133 = sphi 0, %s132
    %s147 = sphi 0, %s133
    %s151 = sphi 0, %s151
    %s153 = sphi 0, %s151
    %s154 = sphi 0, %s153
    %s168 = sphi 0, %s154
    %s172 = sphi 0, %s172
    %s174 = sphi 0, %s172
    %s175 = sphi 0, %s174
    %s189 = sphi 0, %s175
    %s193 = sphi 0, %s193
    %s195 = sphi 0, %s193
    %s196 = sphi 0, %s195
    %s210 = sphi 0, %s196
    %s214 = sphi 0, %s214
    %s216 = sphi 0, %s214
    %s217 = sphi 0, %s216
    %s231 = sphi 0, %s217
    %s235 = sphi 0, %s235
    %s237 = sphi 0, %s235
    %s238 = sphi 0, %s237
    %s252 = sphi 0, %s238
    %s256 = sphi 0, %s256
    %s258 = sphi 0, %s256
    %s259 = sphi 0, %s258
    %s273 = sphi 0, %s259
    %s277 = sphi 0, %s277
    %s279 = sphi 0, %s277
    %s280 = sphi 0, %s279
    %s294 = sphi 0, %s280
    %s298 = sphi 0, %s298
    %s300 = sphi 0, %s298
    %s301 = sphi 0, %s300
    %s315 = sphi 0, %s301
    %s319 = sphi 0, %s319
    %s321 = sphi 0, %s319
    %s322 = sphi 0, %s321
    %s336 = sphi 0, %s322
    %s340 = sphi 0, %s340
    %s342 = sphi 0, %s340
    %s343 = sphi 0, %s342
    %s357 = sphi 0, %s343
    %s361 = sphi 0, %s361
    %s363 = sphi 0, %s361
    %s364 = sphi 0, %s363
    %s378 = sphi 0, %s364
    %s382 = sphi 0, %s382
    %s384 = sphi 0, %s382
    %s385 = sphi 0, %s384
    %s399 = sphi 0, %s385
    %s403 = sphi 0, %s403
    %s405 = sphi 0, %s403
    %s406 = sphi 0, %s405
    %s420 = sphi 0, %s406
    %s424 = sphi 0, %s424
    %s426 = sphi 0, %s424
    %s427 = sphi 0, %s426
    %s441 = sphi 0, %s427
    %s445 = sphi 0, %s445
    %s447 = sphi 0, %s445
    %s448 = sphi 0, %s447
    %s462 = sphi 0, %s448
    %s466 = sphi 0, %s466
    %s468 = sphi 0, %s466
    %s469 = sphi 0, %s468
    %s483 = sphi 0, %s469
    %s487 = sphi 0, %s487
    %s489 = sphi 0, %s487
    %s490 = sphi 0, %s489
    %s504 = sphi 0, %s490
    %s508 = sphi 0, %s508
    %s510 = sphi 0, %s508
    %s511 = sphi 0, %s510
    %s525 = sphi 0, %s511
    %s529 = sphi 0, %s529
    %s531 = sphi 0, %s529
    %s532 = sphi 0, %s531
    %s546 = sphi 0, %s532
    %s550 = sphi 0, %s550
    %s552 = sphi 0, %s550
    %s553 = sphi 0, %s552
    %s567 = sphi 0, %s553
    %s571 = sphi 0, %s571
    %s573 = sphi 0, %s571
    %s574 = sphi 0, %s573
    %s588 = sphi 0, %s574
    %s592 = sphi 0, %s592
    %s594 = sphi 0, %s592
    %s595 = sphi 0, %s594
    %s609 = sphi 0, %s595
    %s615 = sphi 0, %s617
    %s618 = sphi 0, %s615
    %s619 = sphi 0, %s618
    %s635 = sphi 0, %s619
  $region4: #{recontrast_forward.1} parent=0 // loop_header_branch
    %36 = sbr.rel (%p34) target = $region8
  $region5: #{recontrast_forward.1} parent=0 // loop_body
    %s38 = ssub.s32 %s33, 1
    %s39 = ssub.s32 %s33, 2
    %s40 = sadd.s32 %s33, 1
    %s41 = ssub.s32 %s33, %s40
    %p42 = scmp.eq.s32.totalorder %s41, 0
    %s44 = sadd.s32 %s43, 1
    %s45 = scalar_select %p42, %s43, %s44
    %p48 = pneg %p42
    %p49 = scmp.eq.s32.totalorder %s33, 1
    %p50 = por %p48, %p49
    %p51 = scmp.ne.s32.totalorder %s43, %s46
    %p52 = scmp.eq.s32.totalorder %s33, 0
    %p53 = por %p51, %p52
    %p54 = scmp.ne.s32.totalorder %s43, %s46
    %p55 = scmp.eq.s32.totalorder %s38, 1
    %p56 = por %p54, %p55
    %p57 = scmp.ne.s32.totalorder %s46, %s47
    %p58 = scmp.eq.s32.totalorder %s38, 0
    %p59 = por %p57, %p58
    %p60 = scmp.ne.s32.totalorder %s46, %s47
    %p61 = scmp.eq.s32.totalorder %s39, 1
    %p62 = por %p60, %p61
    %p64 = scmp.ne.s32.totalorder %s47, %s63
    %p65 = scmp.eq.s32.totalorder %s39, 0
    %p66 = por %p64, %p65
    %s68 = sadd.s32 %s67, 1
    %p71 = scmp.eq.s32.totalorder %s33, 1
    %p72 = scmp.ne.s32.totalorder %s67, %s69
    %p73 = scmp.eq.s32.totalorder %s33, 0
    %p74 = por %p72, %p73
    %p75 = scmp.ne.s32.totalorder %s67, %s69
    %p76 = scmp.eq.s32.totalorder %s38, 1
    %p77 = por %p75, %p76
    %p78 = scmp.ne.s32.totalorder %s69, %s70
    %p79 = scmp.eq.s32.totalorder %s38, 0
    %p80 = por %p78, %p79
    %p81 = scmp.ne.s32.totalorder %s69, %s70
    %p82 = scmp.eq.s32.totalorder %s39, 1
    %p83 = por %p81, %p82
    %p85 = scmp.ne.s32.totalorder %s70, %s84
    %p86 = scmp.eq.s32.totalorder %s39, 0
    %p87 = por %p85, %p86
    %s89 = sadd.s32 %s88, 1
    %p92 = scmp.eq.s32.totalorder %s33, 1
    %p93 = scmp.ne.s32.totalorder %s88, %s90
    %p94 = scmp.eq.s32.totalorder %s33, 0
    %p95 = por %p93, %p94
    %p96 = scmp.ne.s32.totalorder %s88, %s90
    %p97 = scmp.eq.s32.totalorder %s38, 1
    %p98 = por %p96, %p97
    %p99 = scmp.ne.s32.totalorder %s90, %s91
    %p100 = scmp.eq.s32.totalorder %s38, 0
    %p101 = por %p99, %p100
    %p102 = scmp.ne.s32.totalorder %s90, %s91
    %p103 = scmp.eq.s32.totalorder %s39, 1
    %p104 = por %p102, %p103
    %p106 = scmp.ne.s32.totalorder %s91, %s105
    %p107 = scmp.eq.s32.totalorder %s39, 0
    %p108 = por %p106, %p107
    %s110 = sadd.s32 %s109, 1
    %p113 = scmp.eq.s32.totalorder %s33, 1
    %p114 = scmp.ne.s32.totalorder %s109, %s111
    %p115 = scmp.eq.s32.totalorder %s33, 0
    %p116 = por %p114, %p115
    %p117 = scmp.ne.s32.totalorder %s109, %s111
    %p118 = scmp.eq.s32.totalorder %s38, 1
    %p119 = por %p117, %p118
    %p120 = scmp.ne.s32.totalorder %s111, %s112
    %p121 = scmp.eq.s32.totalorder %s38, 0
    %p122 = por %p120, %p121
    %p123 = scmp.ne.s32.totalorder %s111, %s112
    %p124 = scmp.eq.s32.totalorder %s39, 1
    %p125 = por %p123, %p124
    %p127 = scmp.ne.s32.totalorder %s112, %s126
    %p128 = scmp.eq.s32.totalorder %s39, 0
    %p129 = por %p127, %p128
    %s131 = sadd.s32 %s130, 1
    %p134 = scmp.eq.s32.totalorder %s33, 1
    %p135 = scmp.ne.s32.totalorder %s130, %s132
    %p136 = scmp.eq.s32.totalorder %s33, 0
    %p137 = por %p135, %p136
    %p138 = scmp.ne.s32.totalorder %s130, %s132
    %p139 = scmp.eq.s32.totalorder %s38, 1
    %p140 = por %p138, %p139
    %p141 = scmp.ne.s32.totalorder %s132, %s133
    %p142 = scmp.eq.s32.totalorder %s38, 0
    %p143 = por %p141, %p142
    %p144 = scmp.ne.s32.totalorder %s132, %s133
    %p145 = scmp.eq.s32.totalorder %s39, 1
    %p146 = por %p144, %p145
    %p148 = scmp.ne.s32.totalorder %s133, %s147
    %p149 = scmp.eq.s32.totalorder %s39, 0
    %p150 = por %p148, %p149
    %s152 = sadd.s32 %s151, 1
    %p155 = scmp.eq.s32.totalorder %s33, 1
    %p156 = scmp.ne.s32.totalorder %s151, %s153
    %p157 = scmp.eq.s32.totalorder %s33, 0
    %p158 = por %p156, %p157
    %p159 = scmp.ne.s32.totalorder %s151, %s153
    %p160 = scmp.eq.s32.totalorder %s38, 1
    %p161 = por %p159, %p160
    %p162 = scmp.ne.s32.totalorder %s153, %s154
    %p163 = scmp.eq.s32.totalorder %s38, 0
    %p164 = por %p162, %p163
    %p165 = scmp.ne.s32.totalorder %s153, %s154
    %p166 = scmp.eq.s32.totalorder %s39, 1
    %p167 = por %p165, %p166
    %p169 = scmp.ne.s32.totalorder %s154, %s168
    %p170 = scmp.eq.s32.totalorder %s39, 0
    %p171 = por %p169, %p170
    %s173 = sadd.s32 %s172, 1
    %p176 = scmp.eq.s32.totalorder %s33, 1
    %p177 = scmp.ne.s32.totalorder %s172, %s174
    %p178 = scmp.eq.s32.totalorder %s33, 0
    %p179 = por %p177, %p178
    %p180 = scmp.ne.s32.totalorder %s172, %s174
    %p181 = scmp.eq.s32.totalorder %s38, 1
    %p182 = por %p180, %p181
    %p183 = scmp.ne.s32.totalorder %s174, %s175
    %p184 = scmp.eq.s32.totalorder %s38, 0
    %p185 = por %p183, %p184
    %p186 = scmp.ne.s32.totalorder %s174, %s175
    %p187 = scmp.eq.s32.totalorder %s39, 1
    %p188 = por %p186, %p187
    %p190 = scmp.ne.s32.totalorder %s175, %s189
    %p191 = scmp.eq.s32.totalorder %s39, 0
    %p192 = por %p190, %p191
    %s194 = sadd.s32 %s193, 1
    %p197 = scmp.eq.s32.totalorder %s33, 1
    %p198 = scmp.ne.s32.totalorder %s193, %s195
    %p199 = scmp.eq.s32.totalorder %s33, 0
    %p200 = por %p198, %p199
    %p201 = scmp.ne.s32.totalorder %s193, %s195
    %p202 = scmp.eq.s32.totalorder %s38, 1
    %p203 = por %p201, %p202
    %p204 = scmp.ne.s32.totalorder %s195, %s196
    %p205 = scmp.eq.s32.totalorder %s38, 0
    %p206 = por %p204, %p205
    %p207 = scmp.ne.s32.totalorder %s195, %s196
    %p208 = scmp.eq.s32.totalorder %s39, 1
    %p209 = por %p207, %p208
    %p211 = scmp.ne.s32.totalorder %s196, %s210
    %p212 = scmp.eq.s32.totalorder %s39, 0
    %p213 = por %p211, %p212
    %s215 = sadd.s32 %s214, 1
    %p218 = scmp.eq.s32.totalorder %s33, 1
    %p219 = scmp.ne.s32.totalorder %s214, %s216
    %p220 = scmp.eq.s32.totalorder %s33, 0
    %p221 = por %p219, %p220
    %p222 = scmp.ne.s32.totalorder %s214, %s216
    %p223 = scmp.eq.s32.totalorder %s38, 1
    %p224 = por %p222, %p223
    %p225 = scmp.ne.s32.totalorder %s216, %s217
    %p226 = scmp.eq.s32.totalorder %s38, 0
    %p227 = por %p225, %p226
    %p228 = scmp.ne.s32.totalorder %s216, %s217
    %p229 = scmp.eq.s32.totalorder %s39, 1
    %p230 = por %p228, %p229
    %p232 = scmp.ne.s32.totalorder %s217, %s231
    %p233 = scmp.eq.s32.totalorder %s39, 0
    %p234 = por %p232, %p233
    %s236 = sadd.s32 %s235, 1
    %p239 = scmp.eq.s32.totalorder %s33, 1
    %p240 = scmp.ne.s32.totalorder %s235, %s237
    %p241 = scmp.eq.s32.totalorder %s33, 0
    %p242 = por %p240, %p241
    %p243 = scmp.ne.s32.totalorder %s235, %s237
    %p244 = scmp.eq.s32.totalorder %s38, 1
    %p245 = por %p243, %p244
    %p246 = scmp.ne.s32.totalorder %s237, %s238
    %p247 = scmp.eq.s32.totalorder %s38, 0
    %p248 = por %p246, %p247
    %p249 = scmp.ne.s32.totalorder %s237, %s238
    %p250 = scmp.eq.s32.totalorder %s39, 1
    %p251 = por %p249, %p250
    %p253 = scmp.ne.s32.totalorder %s238, %s252
    %p254 = scmp.eq.s32.totalorder %s39, 0
    %p255 = por %p253, %p254
    %s257 = sadd.s32 %s256, 1
    %p260 = scmp.eq.s32.totalorder %s33, 1
    %p261 = scmp.ne.s32.totalorder %s256, %s258
    %p262 = scmp.eq.s32.totalorder %s33, 0
    %p263 = por %p261, %p262
    %p264 = scmp.ne.s32.totalorder %s256, %s258
    %p265 = scmp.eq.s32.totalorder %s38, 1
    %p266 = por %p264, %p265
    %p267 = scmp.ne.s32.totalorder %s258, %s259
    %p268 = scmp.eq.s32.totalorder %s38, 0
    %p269 = por %p267, %p268
    %p270 = scmp.ne.s32.totalorder %s258, %s259
    %p271 = scmp.eq.s32.totalorder %s39, 1
    %p272 = por %p270, %p271
    %p274 = scmp.ne.s32.totalorder %s259, %s273
    %p275 = scmp.eq.s32.totalorder %s39, 0
    %p276 = por %p274, %p275
    %s278 = sadd.s32 %s277, 1
    %p281 = scmp.eq.s32.totalorder %s33, 1
    %p282 = scmp.ne.s32.totalorder %s277, %s279
    %p283 = scmp.eq.s32.totalorder %s33, 0
    %p284 = por %p282, %p283
    %p285 = scmp.ne.s32.totalorder %s277, %s279
    %p286 = scmp.eq.s32.totalorder %s38, 1
    %p287 = por %p285, %p286
    %p288 = scmp.ne.s32.totalorder %s279, %s280
    %p289 = scmp.eq.s32.totalorder %s38, 0
    %p290 = por %p288, %p289
    %p291 = scmp.ne.s32.totalorder %s279, %s280
    %p292 = scmp.eq.s32.totalorder %s39, 1
    %p293 = por %p291, %p292
    %p295 = scmp.ne.s32.totalorder %s280, %s294
    %p296 = scmp.eq.s32.totalorder %s39, 0
    %p297 = por %p295, %p296
    %s299 = sadd.s32 %s298, 1
    %p302 = scmp.eq.s32.totalorder %s33, 1
    %p303 = scmp.ne.s32.totalorder %s298, %s300
    %p304 = scmp.eq.s32.totalorder %s33, 0
    %p305 = por %p303, %p304
    %p306 = scmp.ne.s32.totalorder %s298, %s300
    %p307 = scmp.eq.s32.totalorder %s38, 1
    %p308 = por %p306, %p307
    %p309 = scmp.ne.s32.totalorder %s300, %s301
    %p310 = scmp.eq.s32.totalorder %s38, 0
    %p311 = por %p309, %p310
    %p312 = scmp.ne.s32.totalorder %s300, %s301
    %p313 = scmp.eq.s32.totalorder %s39, 1
    %p314 = por %p312, %p313
    %p316 = scmp.ne.s32.totalorder %s301, %s315
    %p317 = scmp.eq.s32.totalorder %s39, 0
    %p318 = por %p316, %p317
    %s320 = sadd.s32 %s319, 1
    %p323 = scmp.eq.s32.totalorder %s33, 1
    %p324 = scmp.ne.s32.totalorder %s319, %s321
    %p325 = scmp.eq.s32.totalorder %s33, 0
    %p326 = por %p324, %p325
    %p327 = scmp.ne.s32.totalorder %s319, %s321
    %p328 = scmp.eq.s32.totalorder %s38, 1
    %p329 = por %p327, %p328
    %p330 = scmp.ne.s32.totalorder %s321, %s322
    %p331 = scmp.eq.s32.totalorder %s38, 0
    %p332 = por %p330, %p331
    %p333 = scmp.ne.s32.totalorder %s321, %s322
    %p334 = scmp.eq.s32.totalorder %s39, 1
    %p335 = por %p333, %p334
    %p337 = scmp.ne.s32.totalorder %s322, %s336
    %p338 = scmp.eq.s32.totalorder %s39, 0
    %p339 = por %p337, %p338
    %s341 = sadd.s32 %s340, 1
    %p344 = scmp.eq.s32.totalorder %s33, 1
    %p345 = scmp.ne.s32.totalorder %s340, %s342
    %p346 = scmp.eq.s32.totalorder %s33, 0
    %p347 = por %p345, %p346
    %p348 = scmp.ne.s32.totalorder %s340, %s342
    %p349 = scmp.eq.s32.totalorder %s38, 1
    %p350 = por %p348, %p349
    %p351 = scmp.ne.s32.totalorder %s342, %s343
    %p352 = scmp.eq.s32.totalorder %s38, 0
    %p353 = por %p351, %p352
    %p354 = scmp.ne.s32.totalorder %s342, %s343
    %p355 = scmp.eq.s32.totalorder %s39, 1
    %p356 = por %p354, %p355
    %p358 = scmp.ne.s32.totalorder %s343, %s357
    %p359 = scmp.eq.s32.totalorder %s39, 0
    %p360 = por %p358, %p359
    %s362 = sadd.s32 %s361, 1
    %p365 = scmp.eq.s32.totalorder %s33, 1
    %p366 = scmp.ne.s32.totalorder %s361, %s363
    %p367 = scmp.eq.s32.totalorder %s33, 0
    %p368 = por %p366, %p367
    %p369 = scmp.ne.s32.totalorder %s361, %s363
    %p370 = scmp.eq.s32.totalorder %s38, 1
    %p371 = por %p369, %p370
    %p372 = scmp.ne.s32.totalorder %s363, %s364
    %p373 = scmp.eq.s32.totalorder %s38, 0
    %p374 = por %p372, %p373
    %p375 = scmp.ne.s32.totalorder %s363, %s364
    %p376 = scmp.eq.s32.totalorder %s39, 1
    %p377 = por %p375, %p376
    %p379 = scmp.ne.s32.totalorder %s364, %s378
    %p380 = scmp.eq.s32.totalorder %s39, 0
    %p381 = por %p379, %p380
    %s383 = sadd.s32 %s382, 1
    %p386 = scmp.eq.s32.totalorder %s33, 1
    %p387 = scmp.ne.s32.totalorder %s382, %s384
    %p388 = scmp.eq.s32.totalorder %s33, 0
    %p389 = por %p387, %p388
    %p390 = scmp.ne.s32.totalorder %s382, %s384
    %p391 = scmp.eq.s32.totalorder %s38, 1
    %p392 = por %p390, %p391
    %p393 = scmp.ne.s32.totalorder %s384, %s385
    %p394 = scmp.eq.s32.totalorder %s38, 0
    %p395 = por %p393, %p394
    %p396 = scmp.ne.s32.totalorder %s384, %s385
    %p397 = scmp.eq.s32.totalorder %s39, 1
    %p398 = por %p396, %p397
    %p400 = scmp.ne.s32.totalorder %s385, %s399
    %p401 = scmp.eq.s32.totalorder %s39, 0
    %p402 = por %p400, %p401
    %s404 = sadd.s32 %s403, 1
    %p407 = scmp.eq.s32.totalorder %s33, 1
    %p408 = scmp.ne.s32.totalorder %s403, %s405
    %p409 = scmp.eq.s32.totalorder %s33, 0
    %p410 = por %p408, %p409
    %p411 = scmp.ne.s32.totalorder %s403, %s405
    %p412 = scmp.eq.s32.totalorder %s38, 1
    %p413 = por %p411, %p412
    %p414 = scmp.ne.s32.totalorder %s405, %s406
    %p415 = scmp.eq.s32.totalorder %s38, 0
    %p416 = por %p414, %p415
    %p417 = scmp.ne.s32.totalorder %s405, %s406
    %p418 = scmp.eq.s32.totalorder %s39, 1
    %p419 = por %p417, %p418
    %p421 = scmp.ne.s32.totalorder %s406, %s420
    %p422 = scmp.eq.s32.totalorder %s39, 0
    %p423 = por %p421, %p422
    %s425 = sadd.s32 %s424, 1
    %p428 = scmp.eq.s32.totalorder %s33, 1
    %p429 = scmp.ne.s32.totalorder %s424, %s426
    %p430 = scmp.eq.s32.totalorder %s33, 0
    %p431 = por %p429, %p430
    %p432 = scmp.ne.s32.totalorder %s424, %s426
    %p433 = scmp.eq.s32.totalorder %s38, 1
    %p434 = por %p432, %p433
    %p435 = scmp.ne.s32.totalorder %s426, %s427
    %p436 = scmp.eq.s32.totalorder %s38, 0
    %p437 = por %p435, %p436
    %p438 = scmp.ne.s32.totalorder %s426, %s427
    %p439 = scmp.eq.s32.totalorder %s39, 1
    %p440 = por %p438, %p439
    %p442 = scmp.ne.s32.totalorder %s427, %s441
    %p443 = scmp.eq.s32.totalorder %s39, 0
    %p444 = por %p442, %p443
    %s446 = sadd.s32 %s445, 1
    %p449 = scmp.eq.s32.totalorder %s33, 1
    %p450 = scmp.ne.s32.totalorder %s445, %s447
    %p451 = scmp.eq.s32.totalorder %s33, 0
    %p452 = por %p450, %p451
    %p453 = scmp.ne.s32.totalorder %s445, %s447
    %p454 = scmp.eq.s32.totalorder %s38, 1
    %p455 = por %p453, %p454
    %p456 = scmp.ne.s32.totalorder %s447, %s448
    %p457 = scmp.eq.s32.totalorder %s38, 0
    %p458 = por %p456, %p457
    %p459 = scmp.ne.s32.totalorder %s447, %s448
    %p460 = scmp.eq.s32.totalorder %s39, 1
    %p461 = por %p459, %p460
    %p463 = scmp.ne.s32.totalorder %s448, %s462
    %p464 = scmp.eq.s32.totalorder %s39, 0
    %p465 = por %p463, %p464
    %s467 = sadd.s32 %s466, 1
    %p470 = scmp.eq.s32.totalorder %s33, 1
    %p471 = scmp.ne.s32.totalorder %s466, %s468
    %p472 = scmp.eq.s32.totalorder %s33, 0
    %p473 = por %p471, %p472
    %p474 = scmp.ne.s32.totalorder %s466, %s468
    %p475 = scmp.eq.s32.totalorder %s38, 1
    %p476 = por %p474, %p475
    %p477 = scmp.ne.s32.totalorder %s468, %s469
    %p478 = scmp.eq.s32.totalorder %s38, 0
    %p479 = por %p477, %p478
    %p480 = scmp.ne.s32.totalorder %s468, %s469
    %p481 = scmp.eq.s32.totalorder %s39, 1
    %p482 = por %p480, %p481
    %p484 = scmp.ne.s32.totalorder %s469, %s483
    %p485 = scmp.eq.s32.totalorder %s39, 0
    %p486 = por %p484, %p485
    %s488 = sadd.s32 %s487, 1
    %p491 = scmp.eq.s32.totalorder %s33, 1
    %p492 = scmp.ne.s32.totalorder %s487, %s489
    %p493 = scmp.eq.s32.totalorder %s33, 0
    %p494 = por %p492, %p493
    %p495 = scmp.ne.s32.totalorder %s487, %s489
    %p496 = scmp.eq.s32.totalorder %s38, 1
    %p497 = por %p495, %p496
    %p498 = scmp.ne.s32.totalorder %s489, %s490
    %p499 = scmp.eq.s32.totalorder %s38, 0
    %p500 = por %p498, %p499
    %p501 = scmp.ne.s32.totalorder %s489, %s490
    %p502 = scmp.eq.s32.totalorder %s39, 1
    %p503 = por %p501, %p502
    %p505 = scmp.ne.s32.totalorder %s490, %s504
    %p506 = scmp.eq.s32.totalorder %s39, 0
    %p507 = por %p505, %p506
    %s509 = sadd.s32 %s508, 1
    %p512 = scmp.eq.s32.totalorder %s33, 1
    %p513 = scmp.ne.s32.totalorder %s508, %s510
    %p514 = scmp.eq.s32.totalorder %s33, 0
    %p515 = por %p513, %p514
    %p516 = scmp.ne.s32.totalorder %s508, %s510
    %p517 = scmp.eq.s32.totalorder %s38, 1
    %p518 = por %p516, %p517
    %p519 = scmp.ne.s32.totalorder %s510, %s511
    %p520 = scmp.eq.s32.totalorder %s38, 0
    %p521 = por %p519, %p520
    %p522 = scmp.ne.s32.totalorder %s510, %s511
    %p523 = scmp.eq.s32.totalorder %s39, 1
    %p524 = por %p522, %p523
    %p526 = scmp.ne.s32.totalorder %s511, %s525
    %p527 = scmp.eq.s32.totalorder %s39, 0
    %p528 = por %p526, %p527
    %s530 = sadd.s32 %s529, 1
    %p533 = scmp.eq.s32.totalorder %s33, 1
    %p534 = scmp.ne.s32.totalorder %s529, %s531
    %p535 = scmp.eq.s32.totalorder %s33, 0
    %p536 = por %p534, %p535
    %p537 = scmp.ne.s32.totalorder %s529, %s531
    %p538 = scmp.eq.s32.totalorder %s38, 1
    %p539 = por %p537, %p538
    %p540 = scmp.ne.s32.totalorder %s531, %s532
    %p541 = scmp.eq.s32.totalorder %s38, 0
    %p542 = por %p540, %p541
    %p543 = scmp.ne.s32.totalorder %s531, %s532
    %p544 = scmp.eq.s32.totalorder %s39, 1
    %p545 = por %p543, %p544
    %p547 = scmp.ne.s32.totalorder %s532, %s546
    %p548 = scmp.eq.s32.totalorder %s39, 0
    %p549 = por %p547, %p548
    %s551 = sadd.s32 %s550, 1
    %p554 = scmp.eq.s32.totalorder %s33, 1
    %p555 = scmp.ne.s32.totalorder %s550, %s552
    %p556 = scmp.eq.s32.totalorder %s33, 0
    %p557 = por %p555, %p556
    %p558 = scmp.ne.s32.totalorder %s550, %s552
    %p559 = scmp.eq.s32.totalorder %s38, 1
    %p560 = por %p558, %p559
    %p561 = scmp.ne.s32.totalorder %s552, %s553
    %p562 = scmp.eq.s32.totalorder %s38, 0
    %p563 = por %p561, %p562
    %p564 = scmp.ne.s32.totalorder %s552, %s553
    %p565 = scmp.eq.s32.totalorder %s39, 1
    %p566 = por %p564, %p565
    %p568 = scmp.ne.s32.totalorder %s553, %s567
    %p569 = scmp.eq.s32.totalorder %s39, 0
    %p570 = por %p568, %p569
    %s572 = sadd.s32 %s571, 1
    %p575 = scmp.eq.s32.totalorder %s33, 1
    %p576 = scmp.ne.s32.totalorder %s571, %s573
    %p577 = scmp.eq.s32.totalorder %s33, 0
    %p578 = por %p576, %p577
    %p579 = scmp.ne.s32.totalorder %s571, %s573
    %p580 = scmp.eq.s32.totalorder %s38, 1
    %p581 = por %p579, %p580
    %p582 = scmp.ne.s32.totalorder %s573, %s574
    %p583 = scmp.eq.s32.totalorder %s38, 0
    %p584 = por %p582, %p583
    %p585 = scmp.ne.s32.totalorder %s573, %s574
    %p586 = scmp.eq.s32.totalorder %s39, 1
    %p587 = por %p585, %p586
    %p589 = scmp.ne.s32.totalorder %s574, %s588
    %p590 = scmp.eq.s32.totalorder %s39, 0
    %p591 = por %p589, %p590
    %s593 = sadd.s32 %s592, 1
    %p596 = scmp.eq.s32.totalorder %s33, 1
    %p597 = scmp.ne.s32.totalorder %s592, %s594
    %p598 = scmp.eq.s32.totalorder %s33, 0
    %p599 = por %p597, %p598
    %p600 = scmp.ne.s32.totalorder %s592, %s594
    %p601 = scmp.eq.s32.totalorder %s38, 1
    %p602 = por %p600, %p601
    %p603 = scmp.ne.s32.totalorder %s594, %s595
    %p604 = scmp.eq.s32.totalorder %s38, 0
    %p605 = por %p603, %p604
    %p606 = scmp.ne.s32.totalorder %s594, %s595
    %p607 = scmp.eq.s32.totalorder %s39, 1
    %p608 = por %p606, %p607
    %p610 = scmp.ne.s32.totalorder %s595, %s609
    %p611 = scmp.eq.s32.totalorder %s39, 0
    %p612 = por %p610, %p611
    %s613 = ssub.s32 %s33, %s40
    %p614 = scmp.eq.s32.totalorder %s613, 0
    %s616 = sadd.s32 %s615, 1
    %s617 = scalar_select %p614, %s615, %s616
    %p620 = pneg %p614
    %p621 = scmp.eq.s32.totalorder %s33, 1
    %p622 = por %p620, %p621
    %p623 = scmp.ne.s32.totalorder %s615, %s618
    %p624 = scmp.eq.s32.totalorder %s33, 0
    %p625 = por %p623, %p624
    %p626 = scmp.ne.s32.totalorder %s615, %s618
    %p627 = scmp.eq.s32.totalorder %s38, 1
    %p628 = por %p626, %p627
    %p629 = scmp.ne.s32.totalorder %s618, %s619
    %p630 = scmp.eq.s32.totalorder %s38, 0
    %p631 = por %p629, %p630
    %p632 = scmp.ne.s32.totalorder %s618, %s619
    %p633 = scmp.eq.s32.totalorder %s39, 1
    %p634 = por %p632, %p633
    %p636 = scmp.ne.s32.totalorder %s619, %s635
    %p637 = scmp.eq.s32.totalorder %s39, 0
    %p638 = por %p636, %p637
    %p639 = scmp.le.s32.totalorder 1, %s33
    %p640 = scmp.lt.s32.totalorder %s33, 3
    %p641 = pnand %p639, %p640
    %p642 = pneg %p641
    // Predicated region
    $region9: #{recontrast_forward.1} parent=5 // pred_check
      _
    $region10: #{recontrast_forward.1} parent=5 // pred_check_branch
      %644 = sbr.rel (%p641) target = $region12
    $region11: #{recontrast_forward.1} parent=5 // pred_region
      %s645 = ssub.s32 %s33, 1
      // Predicated region
      $region13: #{recontrast_forward.1} parent=11 // pred_check
        %p646 = pneg %p80
      $region14: #{recontrast_forward.1} parent=11 // pred_check_branch
        %648 = sbr.rel (%p646) target = $region16
      $region15: #{recontrast_forward.1} parent=11 // pred_region
        _
      $region16: #{recontrast_forward.1} parent=11 // pred_fallthru
        _
      // Predicated region
      $region17: #{recontrast_forward.1} parent=11 // pred_check
        %p649 = pneg %p101
      $region18: #{recontrast_forward.1} parent=11 // pred_check_branch
        %651 = sbr.rel (%p649) target = $region20
      $region19: #{recontrast_forward.1} parent=11 // pred_region
        _
      $region20: #{recontrast_forward.1} parent=11 // pred_fallthru
        _
      // Predicated region
      $region21: #{recontrast_forward.1} parent=11 // pred_check
        %p652 = pneg %p122
      $region22: #{recontrast_forward.1} parent=11 // pred_check_branch
        %654 = sbr.rel (%p652) target = $region24
      $region23: #{recontrast_forward.1} parent=11 // pred_region
        _
      $region24: #{recontrast_forward.1} parent=11 // pred_fallthru
        _
      // Predicated region
      $region25: #{recontrast_forward.1} parent=11 // pred_check
        %p655 = pneg %p143
      $region26: #{recontrast_forward.1} parent=11 // pred_check_branch
        %657 = sbr.rel (%p655) target = $region28
      $region27: #{recontrast_forward.1} parent=11 // pred_region
        _
      $region28: #{recontrast_forward.1} parent=11 // pred_fallthru
        _
      // Predicated region
      $region29: #{recontrast_forward.1} parent=11 // pred_check
        %p658 = pneg %p164
      $region30: #{recontrast_forward.1} parent=11 // pred_check_branch
        %660 = sbr.rel (%p658) target = $region32
      $region31: #{recontrast_forward.1} parent=11 // pred_region
        _
      $region32: #{recontrast_forward.1} parent=11 // pred_fallthru
        _
      // Predicated region
      $region33: #{recontrast_forward.1} parent=11 // pred_check
        %p661 = pneg %p185
      $region34: #{recontrast_forward.1} parent=11 // pred_check_branch
        %663 = sbr.rel (%p661) target = $region36
      $region35: #{recontrast_forward.1} parent=11 // pred_region
        _
      $region36: #{recontrast_forward.1} parent=11 // pred_fallthru
        _
      // Predicated region
      $region37: #{recontrast_forward.1} parent=11 // pred_check
        %p664 = pneg %p206
      $region38: #{recontrast_forward.1} parent=11 // pred_check_branch
        %666 = sbr.rel (%p664) target = $region40
      $region39: #{recontrast_forward.1} parent=11 // pred_region
        _
      $region40: #{recontrast_forward.1} parent=11 // pred_fallthru
        _
      // Predicated region
      $region41: #{recontrast_forward.1} parent=11 // pred_check
        %p667 = pneg %p227
      $region42: #{recontrast_forward.1} parent=11 // pred_check_branch
        %669 = sbr.rel (%p667) target = $region44
      $region43: #{recontrast_forward.1} parent=11 // pred_region
        _
      $region44: #{recontrast_forward.1} parent=11 // pred_fallthru
        _
      // Predicated region
      $region45: #{recontrast_forward.1} parent=11 // pred_check
        %p670 = pneg %p248
      $region46: #{recontrast_forward.1} parent=11 // pred_check_branch
        %672 = sbr.rel (%p670) target = $region48
      $region47: #{recontrast_forward.1} parent=11 // pred_region
        _
      $region48: #{recontrast_forward.1} parent=11 // pred_fallthru
        _
      // Predicated region
      $region49: #{recontrast_forward.1} parent=11 // pred_check
        %p673 = pneg %p269
      $region50: #{recontrast_forward.1} parent=11 // pred_check_branch
        %675 = sbr.rel (%p673) target = $region52
      $region51: #{recontrast_forward.1} parent=11 // pred_region
        _
      $region52: #{recontrast_forward.1} parent=11 // pred_fallthru
        _
      // Predicated region
      $region53: #{recontrast_forward.1} parent=11 // pred_check
        %p676 = pneg %p290
      $region54: #{recontrast_forward.1} parent=11 // pred_check_branch
        %678 = sbr.rel (%p676) target = $region56
      $region55: #{recontrast_forward.1} parent=11 // pred_region
        _
      $region56: #{recontrast_forward.1} parent=11 // pred_fallthru
        _
      // Predicated region
      $region57: #{recontrast_forward.1} parent=11 // pred_check
        %p679 = pneg %p311
      $region58: #{recontrast_forward.1} parent=11 // pred_check_branch
        %681 = sbr.rel (%p679) target = $region60
      $region59: #{recontrast_forward.1} parent=11 // pred_region
        _
      $region60: #{recontrast_forward.1} parent=11 // pred_fallthru
        _
      // Predicated region
      $region61: #{recontrast_forward.1} parent=11 // pred_check
        %p682 = pneg %p332
      $region62: #{recontrast_forward.1} parent=11 // pred_check_branch
        %684 = sbr.rel (%p682) target = $region64
      $region63: #{recontrast_forward.1} parent=11 // pred_region
        _
      $region64: #{recontrast_forward.1} parent=11 // pred_fallthru
        _
      // Predicated region
      $region65: #{recontrast_forward.1} parent=11 // pred_check
        %p685 = pneg %p353
      $region66: #{recontrast_forward.1} parent=11 // pred_check_branch
        %687 = sbr.rel (%p685) target = $region68
      $region67: #{recontrast_forward.1} parent=11 // pred_region
        _
      $region68: #{recontrast_forward.1} parent=11 // pred_fallthru
        _
      // Predicated region
      $region69: #{recontrast_forward.1} parent=11 // pred_check
        %p688 = pneg %p374
      $region70: #{recontrast_forward.1} parent=11 // pred_check_branch
        %690 = sbr.rel (%p688) target = $region72
      $region71: #{recontrast_forward.1} parent=11 // pred_region
        _
      $region72: #{recontrast_forward.1} parent=11 // pred_fallthru
        _
      // Predicated region
      $region73: #{recontrast_forward.1} parent=11 // pred_check
        %p691 = pneg %p395
      $region74: #{recontrast_forward.1} parent=11 // pred_check_branch
        %693 = sbr.rel (%p691) target = $region76
      $region75: #{recontrast_forward.1} parent=11 // pred_region
        _
      $region76: #{recontrast_forward.1} parent=11 // pred_fallthru
        _
      // Predicated region
      $region77: #{recontrast_forward.1} parent=11 // pred_check
        %p694 = pneg %p416
      $region78: #{recontrast_forward.1} parent=11 // pred_check_branch
        %696 = sbr.rel (%p694) target = $region80
      $region79: #{recontrast_forward.1} parent=11 // pred_region
        _
      $region80: #{recontrast_forward.1} parent=11 // pred_fallthru
        _
      // Predicated region
      $region81: #{recontrast_forward.1} parent=11 // pred_check
        %p697 = pneg %p437
      $region82: #{recontrast_forward.1} parent=11 // pred_check_branch
        %699 = sbr.rel (%p697) target = $region84
      $region83: #{recontrast_forward.1} parent=11 // pred_region
        _
      $region84: #{recontrast_forward.1} parent=11 // pred_fallthru
        _
      // Predicated region
      $region85: #{recontrast_forward.1} parent=11 // pred_check
        %p700 = pneg %p458
      $region86: #{recontrast_forward.1} parent=11 // pred_check_branch
        %702 = sbr.rel (%p700) target = $region88
      $region87: #{recontrast_forward.1} parent=11 // pred_region
        _
      $region88: #{recontrast_forward.1} parent=11 // pred_fallthru
        _
      // Predicated region
      $region89: #{recontrast_forward.1} parent=11 // pred_check
        %p703 = pneg %p479
      $region90: #{recontrast_forward.1} parent=11 // pred_check_branch
        %705 = sbr.rel (%p703) target = $region92
      $region91: #{recontrast_forward.1} parent=11 // pred_region
        _
      $region92: #{recontrast_forward.1} parent=11 // pred_fallthru
        _
      // Predicated region
      $region93: #{recontrast_forward.1} parent=11 // pred_check
        %p706 = pneg %p500
      $region94: #{recontrast_forward.1} parent=11 // pred_check_branch
        %708 = sbr.rel (%p706) target = $region96
      $region95: #{recontrast_forward.1} parent=11 // pred_region
        _
      $region96: #{recontrast_forward.1} parent=11 // pred_fallthru
        _
      // Predicated region
      $region97: #{recontrast_forward.1} parent=11 // pred_check
        %p709 = pneg %p521
      $region98: #{recontrast_forward.1} parent=11 // pred_check_branch
        %711 = sbr.rel (%p709) target = $region100
      $region99: #{recontrast_forward.1} parent=11 // pred_region
        _
      $region100: #{recontrast_forward.1} parent=11 // pred_fallthru
        _
      // Predicated region
      $region101: #{recontrast_forward.1} parent=11 // pred_check
        %p712 = pneg %p542
      $region102: #{recontrast_forward.1} parent=11 // pred_check_branch
        %714 = sbr.rel (%p712) target = $region104
      $region103: #{recontrast_forward.1} parent=11 // pred_region
        _
      $region104: #{recontrast_forward.1} parent=11 // pred_fallthru
        _
      // Predicated region
      $region105: #{recontrast_forward.1} parent=11 // pred_check
        %p715 = pneg %p563
      $region106: #{recontrast_forward.1} parent=11 // pred_check_branch
        %717 = sbr.rel (%p715) target = $region108
      $region107: #{recontrast_forward.1} parent=11 // pred_region
        _
      $region108: #{recontrast_forward.1} parent=11 // pred_fallthru
        _
      // Predicated region
      $region109: #{recontrast_forward.1} parent=11 // pred_check
        %p718 = pneg %p584
      $region110: #{recontrast_forward.1} parent=11 // pred_check_branch
        %720 = sbr.rel (%p718) target = $region112
      $region111: #{recontrast_forward.1} parent=11 // pred_region
        _
      $region112: #{recontrast_forward.1} parent=11 // pred_fallthru
        _
      // Predicated region
      $region113: #{recontrast_forward.1} parent=11 // pred_check
        %p721 = pneg %p605
      $region114: #{recontrast_forward.1} parent=11 // pred_check_branch
        %723 = sbr.rel (%p721) target = $region116
      $region115: #{recontrast_forward.1} parent=11 // pred_region
        _
      $region116: #{recontrast_forward.1} parent=11 // pred_fallthru
        _
    $region12: #{recontrast_forward.1} parent=5 // pred_fallthru
      _
    %p724 = scmp.lt.s32.totalorder %s33, 2
    // Predicated region
    $region117: #{recontrast_forward.1} parent=5 // pred_check
      %p725 = pneg %p724
    $region118: #{recontrast_forward.1} parent=5 // pred_check_branch
      %727 = sbr.rel (%p725) target = $region120
    $region119: #{recontrast_forward.1} parent=5 // pred_region
      // Predicated region
      $region121: #{recontrast_forward.1} parent=119 // pred_check
        %p728 = pneg %p53
      $region122: #{recontrast_forward.1} parent=119 // pred_check_branch
        %730 = sbr.rel (%p728) target = $region124
      $region123: #{recontrast_forward.1} parent=119 // pred_region
        %p731 = scmp.lt.s32.totalorder %s33, 1
        %s732 = scalar_select %p731, %s33, 1
        %s733 = smul.addr %s732, 32
        %s734 = smul.addr %s733, 4
        %s735 = scalar_lea.vmem %s0, %s734
      $region124: #{recontrast_forward.1} parent=119 // pred_fallthru
        _
    $region120: #{recontrast_forward.1} parent=5 // pred_fallthru
      _
    %p736 = scmp.le.s32.totalorder 1, %s33
    %p737 = scmp.lt.s32.totalorder %s33, 3
    %p738 = pnand %p736, %p737
    %p739 = pneg %p738
    // Predicated region
    $region125: #{recontrast_forward.1} parent=5 // pred_check
      _
    $region126: #{recontrast_forward.1} parent=5 // pred_check_branch
      %741 = sbr.rel (%p738) target = $region128
    $region127: #{recontrast_forward.1} parent=5 // pred_region
      %s742 = ssub.s32 %s33, 1
      %p743 = scmp.lt.s32.totalorder %s38, 1
      %s744 = scalar_select %p743, %s38, 1
      %s745 = smul.addr %s744, 32
      %s746 = smul.addr %s745, 4
      %s747 = scalar_lea.vmem %s0, %s746
      %p748 = pneg %p59
      %p749 = pneg %p56
      %p750 = pneg %p80
      %p751 = pneg %p77
      %p752 = pneg %p101
      %p753 = pneg %p98
      %p754 = pneg %p122
      %p755 = pneg %p119
      %p756 = pneg %p143
      %p757 = pneg %p140
      %p758 = pneg %p164
      %p759 = pneg %p161
      %p760 = pneg %p185
      %p761 = pneg %p182
      %p762 = pneg %p206
      %p763 = pneg %p203
      %p764 = pneg %p227
      %p765 = pneg %p224
      %p766 = pneg %p248
      %p767 = pneg %p245
      %p768 = pneg %p269
      %p769 = pneg %p266
      %p770 = pneg %p290
      %p771 = pneg %p287
      %p772 = pneg %p311
      %p773 = pneg %p308
      %p774 = pneg %p332
      %p775 = pneg %p329
      %p776 = pneg %p353
      %p777 = pneg %p350
      %p778 = pneg %p374
      %p779 = pneg %p371
      %p780 = pneg %p395
      %p781 = pneg %p392
      %p782 = pneg %p416
      %p783 = pneg %p413
      %p784 = pneg %p437
      %p785 = pneg %p434
      %p786 = pneg %p458
      %p787 = pneg %p455
      %p788 = pneg %p479
      %p789 = pneg %p476
      %p790 = pneg %p500
      %p791 = pneg %p497
      %p792 = pneg %p521
      %p793 = pneg %p518
      %p794 = pneg %p542
      %p795 = pneg %p539
      %p796 = pneg %p563
      %p797 = pneg %p560
      %p798 = pneg %p584
      %p799 = pneg %p581
      %p800 = pneg %p605
      %p801 = pneg %p602
      %p802 = pneg %p631
      %p803 = pneg %p628
      %p804 = scmp.lt.s32.totalorder %s38, 1
      %s805 = scalar_select %p804, %s38, 1
      %s806 = smul.addr %s805, 8
      %s807 = scalar_lea.vmem %s27, %s806
      %p808 = scmp.lt.s32.totalorder %s38, 1
      %s809 = scalar_select %p808, %s38, 1
      %s810 = smul.addr %s809, 32
      %s811 = smul.addr %s810, 4
      %s812 = scalar_lea.vmem %s0, %s811
      %p813 = scmp.lt.s32.totalorder %s38, 1
      %s814 = scalar_select %p813, %s38, 1
      %s815 = smul.addr %s814, 8
      %s816 = scalar_lea.vmem %s27, %s815
      %v818 = vld [vmem:[%s812] sm:$0xf]
      %v819 = vld [vmem:[%s812 + $0x4] sm:$0xf]
      %v820 = vld [vmem:[%s812 + $0x8] sm:$0xf]
      %v821 = vld [vmem:[%s812 + $0xc] sm:$0xf]
      %v822 = vld [vmem:[%s812 + $0x10] sm:$0xf]
      %v823 = vld [vmem:[%s812 + $0x14] sm:$0xf]
      %v824 = vld [vmem:[%s812 + $0x18] sm:$0xf]
      %v825 = vld [vmem:[%s812 + $0x1c] sm:$0xf]
      %v826 = vld [vmem:[%s812 + $0x20] sm:$0xf]
      %v827 = vld [vmem:[%s812 + $0x24] sm:$0xf]
      %v828 = vld [vmem:[%s812 + $0x28] sm:$0xf]
      %v829 = vld [vmem:[%s812 + $0x2c] sm:$0xf]
      %v830 = vld [vmem:[%s812 + $0x30] sm:$0xf]
      %v831 = vld [vmem:[%s812 + $0x34] sm:$0xf]
      %v832 = vld [vmem:[%s812 + $0x38] sm:$0xf]
      %v833 = vld [vmem:[%s812 + $0x3c] sm:$0xf]
      %v834 = vld [vmem:[%s812 + $0x40] sm:$0xf]
      %v835 = vld [vmem:[%s812 + $0x44] sm:$0xf]
      %v836 = vld [vmem:[%s812 + $0x48] sm:$0xf]
      %v837 = vld [vmem:[%s812 + $0x4c] sm:$0xf]
      %v838 = vld [vmem:[%s812 + $0x50] sm:$0xf]
      %v839 = vld [vmem:[%s812 + $0x54] sm:$0xf]
      %v840 = vld [vmem:[%s812 + $0x58] sm:$0xf]
      %v841 = vld [vmem:[%s812 + $0x5c] sm:$0xf]
      %v842 = vld [vmem:[%s812 + $0x60] sm:$0xf]
      %v843 = vld [vmem:[%s812 + $0x64] sm:$0xf]
      %v844 = vld [vmem:[%s812 + $0x68] sm:$0xf]
      %v845 = vld [vmem:[%s812 + $0x6c] sm:$0xf]
      %v846 = vld [vmem:[%s812 + $0x70] sm:$0xf]
      %v847 = vld [vmem:[%s812 + $0x74] sm:$0xf]
      %v848 = vld [vmem:[%s812 + $0x78] sm:$0xf]
      %v849 = vld [vmem:[%s812 + $0x7c] sm:$0xf]
      %v850 = vld [vmem:[%s15] sm:$0x1]
      %v851 = vld [vmem:[%s1] sm:$0xf]
      %v852 = vld [vmem:[%s1 + $0x4] sm:$0xf]
      %v853 = vld [vmem:[%s1 + $0x8] sm:$0xf]
      %v854 = vld [vmem:[%s1 + $0xc] sm:$0xf]
      %v855 = vld [vmem:[%s1 + $0x10] sm:$0xf]
      %v856 = vld [vmem:[%s1 + $0x14] sm:$0xf]
      %v857 = vld [vmem:[%s1 + $0x18] sm:$0xf]
      %v858 = vld [vmem:[%s1 + $0x1c] sm:$0xf]
      %v859 = vld [vmem:[%s1 + $0x20] sm:$0xf]
      %v860 = vld [vmem:[%s1 + $0x24] sm:$0xf]
      %v861 = vld [vmem:[%s1 + $0x28] sm:$0xf]
      %v862 = vld [vmem:[%s1 + $0x2c] sm:$0xf]
      %v863 = vld [vmem:[%s1 + $0x30] sm:$0xf]
      %v864 = vld [vmem:[%s1 + $0x34] sm:$0xf]
      %v865 = vld [vmem:[%s1 + $0x38] sm:$0xf]
      %v866 = vld [vmem:[%s1 + $0x3c] sm:$0xf]
      %v867 = vperm.slane %v850, 0
      %v900 = vunpack.c.l.b16 %v818
      %v901 = vunpack.c.l.b16 %v819
      %v902 = vunpack.c.l.b16 %v820
      %v903 = vunpack.c.l.b16 %v821
      %v904 = vunpack.c.l.b16 %v822
      %v905 = vunpack.c.l.b16 %v823
      %v906 = vunpack.c.l.b16 %v824
      %v907 = vunpack.c.l.b16 %v825
      %v908 = vunpack.c.l.b16 %v826
      %v909 = vunpack.c.l.b16 %v827
      %v910 = vunpack.c.l.b16 %v828
      %v911 = vunpack.c.l.b16 %v829
      %v912 = vunpack.c.l.b16 %v830
      %v913 = vunpack.c.l.b16 %v831
      %v914 = vunpack.c.l.b16 %v832
      %v915 = vunpack.c.l.b16 %v833
      %v916 = vunpack.c.l.b16 %v834
      %v917 = vunpack.c.l.b16 %v835
      %v918 = vunpack.c.l.b16 %v836
      %v919 = vunpack.c.l.b16 %v837
      %v920 = vunpack.c.l.b16 %v838
      %v921 = vunpack.c.l.b16 %v839
      %v922 = vunpack.c.l.b16 %v840
      %v923 = vunpack.c.l.b16 %v841
      %v924 = vunpack.c.l.b16 %v842
      %v925 = vunpack.c.l.b16 %v843
      %v926 = vunpack.c.l.b16 %v844
      %v927 = vunpack.c.l.b16 %v845
      %v928 = vunpack.c.l.b16 %v846
      %v929 = vunpack.c.l.b16 %v847
      %v930 = vunpack.c.l.b16 %v848
      %v931 = vunpack.c.l.b16 %v849
      %v932 = vpack.c.b16 %v901, %v900
      %v933 = vpack.c.b16 %v903, %v902
      %v934 = vpack.c.b16 %v905, %v904
      %v935 = vpack.c.b16 %v907, %v906
      %v936 = vpack.c.b16 %v909, %v908
      %v937 = vpack.c.b16 %v911, %v910
      %v938 = vpack.c.b16 %v913, %v912
      %v939 = vpack.c.b16 %v915, %v914
      %v940 = vpack.c.b16 %v917, %v916
      %v941 = vpack.c.b16 %v919, %v918
      %v942 = vpack.c.b16 %v921, %v920
      %v943 = vpack.c.b16 %v923, %v922
      %v944 = vpack.c.b16 %v925, %v924
      %v945 = vpack.c.b16 %v927, %v926
      %v946 = vpack.c.b16 %v929, %v928
      %v947 = vpack.c.b16 %v931, %v930
      %v980 = vunpack.c.l.b16 %v851
      %v981 = vunpack.c.l.b16 %v852
      %v982 = vunpack.c.l.b16 %v853
      %v983 = vunpack.c.l.b16 %v854
      %v984 = vunpack.c.l.b16 %v855
      %v985 = vunpack.c.l.b16 %v856
      %v986 = vunpack.c.l.b16 %v857
      %v987 = vunpack.c.l.b16 %v858
      %v988 = vunpack.c.l.b16 %v859
      %v989 = vunpack.c.l.b16 %v860
      %v990 = vunpack.c.l.b16 %v861
      %v991 = vunpack.c.l.b16 %v862
      %v992 = vunpack.c.l.b16 %v863
      %v993 = vunpack.c.l.b16 %v864
      %v994 = vunpack.c.l.b16 %v865
      %v995 = vunpack.c.l.b16 %v866
      %v996 = vpack.c.b16 %v981, %v980
      %v997 = vpack.c.b16 %v983, %v982
      %v998 = vpack.c.b16 %v985, %v984
      %v999 = vpack.c.b16 %v987, %v986
      %v1000 = vpack.c.b16 %v989, %v988
      %v1001 = vpack.c.b16 %v991, %v990
      %v1002 = vpack.c.b16 %v993, %v992
      %v1003 = vpack.c.b16 %v995, %v994
      %1012 = vmatpush.bf16.msra.mxu0 %v1003
      %1013 = vmatpush.bf16.msra.mxu0 %v1002
      %1014 = vmatpush.bf16.msra.mxu0 %v1001
      %1015 = vmatpush.bf16.msra.mxu0 %v1000
      %1016 = vmatpush.bf16.msra.mxu0 %v999
      %1017 = vmatpush.bf16.msra.mxu0 %v998
      %1018 = vmatpush.bf16.msra.mxu0 %v997
      %1019 = vmatpush.bf16.msra.mxu0 %v996
      %1020 = vmatmul.bf16.gmra.mxu0 %v932
      %v1021 = vpop.f32.mrf.mxu0
      %v1022 = vadd.f32 %v867, %v1021
      %v1023 = vpop.f32.mrf.mxu0
      %v1024 = vadd.f32 %v867, %v1023
      %1025 = vmatmul.bf16.gmra.mxu0 %v933
      %v1026 = vpop.f32.mrf.mxu0
      %v1027 = vadd.f32 %v867, %v1026
      %v1028 = vpop.f32.mrf.mxu0
      %v1029 = vadd.f32 %v867, %v1028
      %1030 = vmatmul.bf16.gmra.mxu0 %v934
      %v1031 = vpop.f32.mrf.mxu0
      %v1032 = vadd.f32 %v867, %v1031
      %v1033 = vpop.f32.mrf.mxu0
      %v1034 = vadd.f32 %v867, %v1033
      %1035 = vmatmul.bf16.gmra.mxu0 %v935
      %v1036 = vpop.f32.mrf.mxu0
      %v1037 = vadd.f32 %v867, %v1036
      %v1038 = vpop.f32.mrf.mxu0
      %v1039 = vadd.f32 %v867, %v1038
      %1040 = vmatmul.bf16.gmra.mxu0 %v936
      %v1041 = vpop.f32.mrf.mxu0
      %v1042 = vadd.f32 %v867, %v1041
      %v1043 = vpop.f32.mrf.mxu0
      %v1044 = vadd.f32 %v867, %v1043
      %1045 = vmatmul.bf16.gmra.mxu0 %v937
      %v1046 = vpop.f32.mrf.mxu0
      %v1047 = vadd.f32 %v867, %v1046
      %v1048 = vpop.f32.mrf.mxu0
      %v1049 = vadd.f32 %v867, %v1048
      %1050 = vmatmul.bf16.gmra.mxu0 %v938
      %v1051 = vpop.f32.mrf.mxu0
      %v1052 = vadd.f32 %v867, %v1051
      %v1053 = vpop.f32.mrf.mxu0
      %v1054 = vadd.f32 %v867, %v1053
      %1055 = vmatmul.bf16.gmra.mxu0 %v939
      %v1056 = vpop.f32.mrf.mxu0
      %v1057 = vadd.f32 %v867, %v1056
      %v1058 = vpop.f32.mrf.mxu0
      %v1059 = vadd.f32 %v867, %v1058
      %1060 = vmatmul.bf16.gmra.mxu0 %v940
      %v1061 = vpop.f32.mrf.mxu0
      %v1062 = vadd.f32 %v867, %v1061
      %v1063 = vpop.f32.mrf.mxu0
      %v1064 = vadd.f32 %v867, %v1063
      %1065 = vmatmul.bf16.gmra.mxu0 %v941
      %v1066 = vpop.f32.mrf.mxu0
      %v1067 = vadd.f32 %v867, %v1066
      %v1068 = vpop.f32.mrf.mxu0
      %v1069 = vadd.f32 %v867, %v1068
      %1070 = vmatmul.bf16.gmra.mxu0 %v942
      %v1071 = vpop.f32.mrf.mxu0
      %v1072 = vadd.f32 %v867, %v1071
      %v1073 = vpop.f32.mrf.mxu0
      %v1074 = vadd.f32 %v867, %v1073
      %1075 = vmatmul.bf16.gmra.mxu0 %v943
      %v1076 = vpop.f32.mrf.mxu0
      %v1077 = vadd.f32 %v867, %v1076
      %v1078 = vpop.f32.mrf.mxu0
      %v1079 = vadd.f32 %v867, %v1078
      %1080 = vmatmul.bf16.gmra.mxu0 %v944
      %v1081 = vpop.f32.mrf.mxu0
      %v1082 = vadd.f32 %v867, %v1081
      %v1083 = vpop.f32.mrf.mxu0
      %v1084 = vadd.f32 %v867, %v1083
      %1085 = vmatmul.bf16.gmra.mxu0 %v945
      %v1086 = vpop.f32.mrf.mxu0
      %v1087 = vadd.f32 %v867, %v1086
      %v1088 = vpop.f32.mrf.mxu0
      %v1089 = vadd.f32 %v867, %v1088
      %1090 = vmatmul.bf16.gmra.mxu0 %v946
      %v1091 = vpop.f32.mrf.mxu0
      %v1092 = vadd.f32 %v867, %v1091
      %v1093 = vpop.f32.mrf.mxu0
      %v1094 = vadd.f32 %v867, %v1093
      %1095 = vmatmul.bf16.gmra.mxu0 %v947
      %v1096 = vpop.f32.mrf.mxu0
      %v1097 = vadd.f32 %v867, %v1096
      %v1098 = vpop.f32.mrf.mxu0
      %v1099 = vadd.f32 %v867, %v1098
      %1100 = vdwg.mxu0
      %v1101 = vmax.f32 %v1022, 0.0
      %v1102 = vmax.f32 %v1024, 0.0
      %v1103 = vmax.f32 %v1027, 0.0
      %v1104 = vmax.f32 %v1029, 0.0
      %v1105 = vmax.f32 %v1032, 0.0
      %v1106 = vmax.f32 %v1034, 0.0
      %v1107 = vmax.f32 %v1037, 0.0
      %v1108 = vmax.f32 %v1039, 0.0
      %v1109 = vmax.f32 %v1042, 0.0
      %v1110 = vmax.f32 %v1044, 0.0
      %v1111 = vmax.f32 %v1047, 0.0
      %v1112 = vmax.f32 %v1049, 0.0
      %v1113 = vmax.f32 %v1052, 0.0
      %v1114 = vmax.f32 %v1054, 0.0
      %v1115 = vmax.f32 %v1057, 0.0
      %v1116 = vmax.f32 %v1059, 0.0
      %v1117 = vmax.f32 %v1062, 0.0
      %v1118 = vmax.f32 %v1064, 0.0
      %v1119 = vmax.f32 %v1067, 0.0
      %v1120 = vmax.f32 %v1069, 0.0
      %v1121 = vmax.f32 %v1072, 0.0
      %v1122 = vmax.f32 %v1074, 0.0
      %v1123 = vmax.f32 %v1077, 0.0
      %v1124 = vmax.f32 %v1079, 0.0
      %v1125 = vmax.f32 %v1082, 0.0
      %v1126 = vmax.f32 %v1084, 0.0
      %v1127 = vmax.f32 %v1087, 0.0
      %v1128 = vmax.f32 %v1089, 0.0
      %v1129 = vmax.f32 %v1092, 0.0
      %v1130 = vmax.f32 %v1094, 0.0
      %v1131 = vmax.f32 %v1097, 0.0
      %v1132 = vmax.f32 %v1099, 0.0
      %v1133 = vld [vmem:[%s15 + $0x1] sm:$0x1]
      %v1134 = vpack.c.bf16 %v1102, %v1101
      %v1135 = vpack.c.bf16 %v1104, %v1103
      %v1136 = vpack.c.bf16 %v1106, %v1105
      %v1137 = vpack.c.bf16 %v1108, %v1107
      %v1138 = vpack.c.bf16 %v1110, %v1109
      %v1139 = vpack.c.bf16 %v1112, %v1111
      %v1140 = vpack.c.bf16 %v1114, %v1113
      %v1141 = vpack.c.bf16 %v1116, %v1115
      %v1142 = vpack.c.bf16 %v1118, %v1117
      %v1143 = vpack.c.bf16 %v1120, %v1119
      %v1144 = vpack.c.bf16 %v1122, %v1121
      %v1145 = vpack.c.bf16 %v1124, %v1123
      %v1146 = vpack.c.bf16 %v1126, %v1125
      %v1147 = vpack.c.bf16 %v1128, %v1127
      %v1148 = vpack.c.bf16 %v1130, %v1129
      %v1149 = vpack.c.bf16 %v1132, %v1131
      %v1150 = vld [vmem:[%s16] sm:$0xff]
      %v1151 = vld [vmem:[%s16 + $0x8] sm:$0xff]
      %v1152 = vld [vmem:[%s16 + $0x10] sm:$0xff]
      %v1153 = vld [vmem:[%s16 + $0x18] sm:$0xff]
      %v1154 = vld [vmem:[%s16 + $0x20] sm:$0xff]
      %v1155 = vld [vmem:[%s16 + $0x28] sm:$0xff]
      %v1156 = vld [vmem:[%s16 + $0x30] sm:$0xff]
      %v1157 = vld [vmem:[%s16 + $0x38] sm:$0xff]
      %v1166 = vunpack.c.l.b16 %v1150
      %v1167 = vunpack.c.h.b16 %v1150
      %v1168 = vunpack.c.l.b16 %v1151
      %v1169 = vunpack.c.h.b16 %v1151
      %v1170 = vunpack.c.l.b16 %v1152
      %v1171 = vunpack.c.h.b16 %v1152
      %v1172 = vunpack.c.l.b16 %v1153
      %v1173 = vunpack.c.h.b16 %v1153
      %v1174 = vunpack.c.l.b16 %v1154
      %v1175 = vunpack.c.h.b16 %v1154
      %v1176 = vunpack.c.l.b16 %v1155
      %v1177 = vunpack.c.h.b16 %v1155
      %v1178 = vunpack.c.l.b16 %v1156
      %v1179 = vunpack.c.h.b16 %v1156
      %v1180 = vunpack.c.l.b16 %v1157
      %v1181 = vunpack.c.h.b16 %v1157
      %v1182 = vpack.c.b16 %v1168, %v1166
      %v1183 = vpack.c.b16 %v1169, %v1167
      %v1184 = vpack.c.b16 %v1172, %v1170
      %v1185 = vpack.c.b16 %v1173, %v1171
      %v1186 = vpack.c.b16 %v1176, %v1174
      %v1187 = vpack.c.b16 %v1177, %v1175
      %v1188 = vpack.c.b16 %v1180, %v1178
      %v1189 = vpack.c.b16 %v1181, %v1179
      %1198 = vmatpush.bf16.msra.mxu0 %v1141
      %1199 = vmatpush.bf16.msra.mxu0 %v1140
      %1200 = vmatpush.bf16.msra.mxu0 %v1139
      %1201 = vmatpush.bf16.msra.mxu0 %v1138
      %1202 = vmatpush.bf16.msra.mxu0 %v1137
      %1203 = vmatpush.bf16.msra.mxu0 %v1136
      %1204 = vmatpush.bf16.msra.mxu0 %v1135
      %1205 = vmatpush.bf16.msra.mxu0 %v1134
      %1206 = vmatmul.bf16.gmra.mxu0 %v1182
      %v1207 = vpop.f32.mrf.mxu0
      %v1208 = vadd.f32 0.0, %v1207
      %v1209 = vpop.f32.mrf.mxu0
      %v1210 = vadd.f32 0.0, %v1209
      %1211 = vmatmul.bf16.gmra.mxu0 %v1184
      %v1212 = vpop.f32.mrf.mxu0
      %v1213 = vadd.f32 0.0, %v1212
      %v1214 = vpop.f32.mrf.mxu0
      %v1215 = vadd.f32 0.0, %v1214
      %1216 = vmatmul.bf16.gmra.mxu0 %v1186
      %v1217 = vpop.f32.mrf.mxu0
      %v1218 = vadd.f32 0.0, %v1217
      %v1219 = vpop.f32.mrf.mxu0
      %v1220 = vadd.f32 0.0, %v1219
      %1221 = vmatmul.bf16.gmra.mxu0 %v1188
      %v1222 = vpop.f32.mrf.mxu0
      %v1223 = vadd.f32 0.0, %v1222
      %v1224 = vpop.f32.mrf.mxu0
      %v1225 = vadd.f32 0.0, %v1224
      %1226 = vdwg.mxu0
      %1227 = vmatpush.bf16.msra.mxu0 %v1149
      %1228 = vmatpush.bf16.msra.mxu0 %v1148
      %1229 = vmatpush.bf16.msra.mxu0 %v1147
      %1230 = vmatpush.bf16.msra.mxu0 %v1146
      %1231 = vmatpush.bf16.msra.mxu0 %v1145
      %1232 = vmatpush.bf16.msra.mxu0 %v1144
      %1233 = vmatpush.bf16.msra.mxu0 %v1143
      %1234 = vmatpush.bf16.msra.mxu0 %v1142
      %1235 = vmatmul.bf16.gmra.mxu0 %v1183
      %v1236 = vpop.f32.mrf.mxu0
      %v1237 = vadd.f32 %v1208, %v1236
      %v1238 = vpop.f32.mrf.mxu0
      %v1239 = vadd.f32 %v1210, %v1238
      %1240 = vmatmul.bf16.gmra.mxu0 %v1185
      %v1241 = vpop.f32.mrf.mxu0
      %v1242 = vadd.f32 %v1213, %v1241
      %v1243 = vpop.f32.mrf.mxu0
      %v1244 = vadd.f32 %v1215, %v1243
      %1245 = vmatmul.bf16.gmra.mxu0 %v1187
      %v1246 = vpop.f32.mrf.mxu0
      %v1247 = vadd.f32 %v1218, %v1246
      %v1248 = vpop.f32.mrf.mxu0
      %v1249 = vadd.f32 %v1220, %v1248
      %1250 = vmatmul.bf16.gmra.mxu0 %v1189
      %v1251 = vpop.f32.mrf.mxu0
      %v1252 = vadd.f32 %v1223, %v1251
      %v1253 = vpop.f32.mrf.mxu0
      %v1254 = vadd.f32 %v1225, %v1253
      %1255 = vdwg.mxu0
      %v1256 = vpack.c.bf16 %v1239, %v1237
      %v1257 = vpack.c.bf16 %v1244, %v1242
      %v1258 = vpack.c.bf16 %v1249, %v1247
      %v1259 = vpack.c.bf16 %v1254, %v1252
      %v1260 = vld [vmem:[%s2] sm:$0xf]
      %vm1261 = vcmask 64512
      %v1263 = vsel %vm1261, %v1256, 0
      %v1266 = vsel %vm1261, %v1257, 0
      %v1269 = vsel %vm1261, %v1258, 0
      %v1272 = vsel %vm1261, %v1259, 0
      %vm1274 = vcmask 1043456
      %v1276 = vsel %vm1274, %v1260, 0
      %1278 = vmatpush.bf16.msra.mxu0 0
      %1279 = vmatpush.bf16.msra.mxu0 0
      %1280 = vmatpush.bf16.msra.mxu0 0
      %1281 = vmatpush.bf16.msra.mxu0 0
      %1282 = vmatpush.bf16.msra.mxu0 0
      %1283 = vmatpush.bf16.msra.mxu0 0
      %1284 = vmatpush.bf16.msra.mxu0 0
      %1285 = vmatpush.bf16.msra.mxu0 %v1276
      %1286 = vmatmul.bf16.gmra.mxu0 %v1263
      %v1287 = vpop.f32.mrf.mxu0
      %v1288 = vadd.f32 0.0, %v1287
      %v1289 = vpop.f32.mrf.mxu0
      %v1290 = vadd.f32 0.0, %v1289
      %1291 = vmatmul.bf16.gmra.mxu0 %v1266
      %v1292 = vpop.f32.mrf.mxu0
      %v1293 = vadd.f32 0.0, %v1292
      %v1294 = vpop.f32.mrf.mxu0
      %v1295 = vadd.f32 0.0, %v1294
      %1296 = vmatmul.bf16.gmra.mxu0 %v1269
      %v1297 = vpop.f32.mrf.mxu0
      %v1298 = vadd.f32 0.0, %v1297
      %v1299 = vpop.f32.mrf.mxu0
      %v1300 = vadd.f32 0.0, %v1299
      %1301 = vmatmul.bf16.gmra.mxu0 %v1272
      %v1302 = vpop.f32.mrf.mxu0
      %v1303 = vadd.f32 0.0, %v1302
      %v1304 = vpop.f32.mrf.mxu0
      %v1305 = vadd.f32 0.0, %v1304
      %1306 = vdwg.mxu0
      %v1307 = vperm.slane %v1133, 0
      %v1308 = vadd.f32 %v1307, %v1288
      %v1309 = vadd.f32 %v1307, %v1290
      %v1310 = vadd.f32 %v1307, %v1293
      %v1311 = vadd.f32 %v1307, %v1295
      %v1312 = vadd.f32 %v1307, %v1298
      %v1313 = vadd.f32 %v1307, %v1300
      %v1314 = vadd.f32 %v1307, %v1303
      %v1315 = vadd.f32 %v1307, %v1305
      %s1316 = scalar_lea.vmem %s16, 64
      %v1317 = vld [vmem:[%s1316] sm:$0xff]
      %v1318 = vld [vmem:[%s1316 + $0x8] sm:$0xff]
      %v1319 = vld [vmem:[%s1316 + $0x10] sm:$0xff]
      %v1320 = vld [vmem:[%s1316 + $0x18] sm:$0xff]
      %v1321 = vld [vmem:[%s1316 + $0x20] sm:$0xff]
      %v1322 = vld [vmem:[%s1316 + $0x28] sm:$0xff]
      %v1323 = vld [vmem:[%s1316 + $0x30] sm:$0xff]
      %v1324 = vld [vmem:[%s1316 + $0x38] sm:$0xff]
      %v1333 = vunpack.c.l.b16 %v1317
      %v1334 = vunpack.c.h.b16 %v1317
      %v1335 = vunpack.c.l.b16 %v1318
      %v1336 = vunpack.c.h.b16 %v1318
      %v1337 = vunpack.c.l.b16 %v1319
      %v1338 = vunpack.c.h.b16 %v1319
      %v1339 = vunpack.c.l.b16 %v1320
      %v1340 = vunpack.c.h.b16 %v1320
      %v1341 = vunpack.c.l.b16 %v1321
      %v1342 = vunpack.c.h.b16 %v1321
      %v1343 = vunpack.c.l.b16 %v1322
      %v1344 = vunpack.c.h.b16 %v1322
      %v1345 = vunpack.c.l.b16 %v1323
      %v1346 = vunpack.c.h.b16 %v1323
      %v1347 = vunpack.c.l.b16 %v1324
      %v1348 = vunpack.c.h.b16 %v1324
      %v1349 = vpack.c.b16 %v1335, %v1333
      %v1350 = vpack.c.b16 %v1336, %v1334
      %v1351 = vpack.c.b16 %v1339, %v1337
      %v1352 = vpack.c.b16 %v1340, %v1338
      %v1353 = vpack.c.b16 %v1343, %v1341
      %v1354 = vpack.c.b16 %v1344, %v1342
      %v1355 = vpack.c.b16 %v1347, %v1345
      %v1356 = vpack.c.b16 %v1348, %v1346
      %1365 = vmatpush.bf16.msra.mxu0 %v1141
      %1366 = vmatpush.bf16.msra.mxu0 %v1140
      %1367 = vmatpush.bf16.msra.mxu0 %v1139
      %1368 = vmatpush.bf16.msra.mxu0 %v1138
      %1369 = vmatpush.bf16.msra.mxu0 %v1137
      %1370 = vmatpush.bf16.msra.mxu0 %v1136
      %1371 = vmatpush.bf16.msra.mxu0 %v1135
      %1372 = vmatpush.bf16.msra.mxu0 %v1134
      %1373 = vmatmul.bf16.gmra.mxu0 %v1349
      %v1374 = vpop.f32.mrf.mxu0
      %v1375 = vadd.f32 0.0, %v1374
      %v1376 = vpop.f32.mrf.mxu0
      %v1377 = vadd.f32 0.0, %v1376
      %1378 = vmatmul.bf16.gmra.mxu0 %v1351
      %v1379 = vpop.f32.mrf.mxu0
      %v1380 = vadd.f32 0.0, %v1379
      %v1381 = vpop.f32.mrf.mxu0
      %v1382 = vadd.f32 0.0, %v1381
      %1383 = vmatmul.bf16.gmra.mxu0 %v1353
      %v1384 = vpop.f32.mrf.mxu0
      %v1385 = vadd.f32 0.0, %v1384
      %v1386 = vpop.f32.mrf.mxu0
      %v1387 = vadd.f32 0.0, %v1386
      %1388 = vmatmul.bf16.gmra.mxu0 %v1355
      %v1389 = vpop.f32.mrf.mxu0
      %v1390 = vadd.f32 0.0, %v1389
      %v1391 = vpop.f32.mrf.mxu0
      %v1392 = vadd.f32 0.0, %v1391
      %1393 = vdwg.mxu0
      %1394 = vmatpush.bf16.msra.mxu0 %v1149
      %1395 = vmatpush.bf16.msra.mxu0 %v1148
      %1396 = vmatpush.bf16.msra.mxu0 %v1147
      %1397 = vmatpush.bf16.msra.mxu0 %v1146
      %1398 = vmatpush.bf16.msra.mxu0 %v1145
      %1399 = vmatpush.bf16.msra.mxu0 %v1144
      %1400 = vmatpush.bf16.msra.mxu0 %v1143
      %1401 = vmatpush.bf16.msra.mxu0 %v1142
      %1402 = vmatmul.bf16.gmra.mxu0 %v1350
      %v1403 = vpop.f32.mrf.mxu0
      %v1404 = vadd.f32 %v1375, %v1403
      %v1405 = vpop.f32.mrf.mxu0
      %v1406 = vadd.f32 %v1377, %v1405
      %1407 = vmatmul.bf16.gmra.mxu0 %v1352
      %v1408 = vpop.f32.mrf.mxu0
      %v1409 = vadd.f32 %v1380, %v1408
      %v1410 = vpop.f32.mrf.mxu0
      %v1411 = vadd.f32 %v1382, %v1410
      %1412 = vmatmul.bf16.gmra.mxu0 %v1354
      %v1413 = vpop.f32.mrf.mxu0
      %v1414 = vadd.f32 %v1385, %v1413
      %v1415 = vpop.f32.mrf.mxu0
      %v1416 = vadd.f32 %v1387, %v1415
      %1417 = vmatmul.bf16.gmra.mxu0 %v1356
      %v1418 = vpop.f32.mrf.mxu0
      %v1419 = vadd.f32 %v1390, %v1418
      %v1420 = vpop.f32.mrf.mxu0
      %v1421 = vadd.f32 %v1392, %v1420
      %1422 = vdwg.mxu0
      %v1423 = vpack.c.bf16 %v1406, %v1404
      %v1424 = vpack.c.bf16 %v1411, %v1409
      %v1425 = vpack.c.bf16 %v1416, %v1414
      %v1426 = vpack.c.bf16 %v1421, %v1419
      %s1427 = scalar_lea.vmem %s2, 4
      %v1428 = vld [vmem:[%s1427] sm:$0xf]
      %v1430 = vsel %vm1261, %v1423, 0
      %v1433 = vsel %vm1261, %v1424, 0
      %v1436 = vsel %vm1261, %v1425, 0
      %v1439 = vsel %vm1261, %v1426, 0
      %v1442 = vsel %vm1274, %v1428, 0
      %1444 = vmatpush.bf16.msra.mxu0 0
      %1445 = vmatpush.bf16.msra.mxu0 0
      %1446 = vmatpush.bf16.msra.mxu0 0
      %1447 = vmatpush.bf16.msra.mxu0 0
      %1448 = vmatpush.bf16.msra.mxu0 0
      %1449 = vmatpush.bf16.msra.mxu0 0
      %1450 = vmatpush.bf16.msra.mxu0 0
      %1451 = vmatpush.bf16.msra.mxu0 %v1442
      %1452 = vmatmul.bf16.gmra.mxu0 %v1430
      %v1453 = vpop.f32.mrf.mxu0
      %v1454 = vadd.f32 0.0, %v1453
      %v1455 = vpop.f32.mrf.mxu0
      %v1456 = vadd.f32 0.0, %v1455
      %1457 = vmatmul.bf16.gmra.mxu0 %v1433
      %v1458 = vpop.f32.mrf.mxu0
      %v1459 = vadd.f32 0.0, %v1458
      %v1460 = vpop.f32.mrf.mxu0
      %v1461 = vadd.f32 0.0, %v1460
      %1462 = vmatmul.bf16.gmra.mxu0 %v1436
      %v1463 = vpop.f32.mrf.mxu0
      %v1464 = vadd.f32 0.0, %v1463
      %v1465 = vpop.f32.mrf.mxu0
      %v1466 = vadd.f32 0.0, %v1465
      %1467 = vmatmul.bf16.gmra.mxu0 %v1439
      %v1468 = vpop.f32.mrf.mxu0
      %v1469 = vadd.f32 0.0, %v1468
      %v1470 = vpop.f32.mrf.mxu0
      %v1471 = vadd.f32 0.0, %v1470
      %1472 = vdwg.mxu0
      %v1473 = vadd.f32 %v1308, %v1454
      %v1474 = vadd.f32 %v1309, %v1456
      %v1475 = vadd.f32 %v1310, %v1459
      %v1476 = vadd.f32 %v1311, %v1461
      %v1477 = vadd.f32 %v1312, %v1464
      %v1478 = vadd.f32 %v1313, %v1466
      %v1479 = vadd.f32 %v1314, %v1469
      %v1480 = vadd.f32 %v1315, %v1471
      %s1481 = scalar_lea.vmem %s16, 128
      %v1482 = vld [vmem:[%s1481] sm:$0xff]
      %v1483 = vld [vmem:[%s1481 + $0x8] sm:$0xff]
      %v1484 = vld [vmem:[%s1481 + $0x10] sm:$0xff]
      %v1485 = vld [vmem:[%s1481 + $0x18] sm:$0xff]
      %v1486 = vld [vmem:[%s1481 + $0x20] sm:$0xff]
      %v1487 = vld [vmem:[%s1481 + $0x28] sm:$0xff]
      %v1488 = vld [vmem:[%s1481 + $0x30] sm:$0xff]
      %v1489 = vld [vmem:[%s1481 + $0x38] sm:$0xff]
      %v1498 = vunpack.c.l.b16 %v1482
      %v1499 = vunpack.c.h.b16 %v1482
      %v1500 = vunpack.c.l.b16 %v1483
      %v1501 = vunpack.c.h.b16 %v1483
      %v1502 = vunpack.c.l.b16 %v1484
      %v1503 = vunpack.c.h.b16 %v1484
      %v1504 = vunpack.c.l.b16 %v1485
      %v1505 = vunpack.c.h.b16 %v1485
      %v1506 = vunpack.c.l.b16 %v1486
      %v1507 = vunpack.c.h.b16 %v1486
      %v1508 = vunpack.c.l.b16 %v1487
      %v1509 = vunpack.c.h.b16 %v1487
      %v1510 = vunpack.c.l.b16 %v1488
      %v1511 = vunpack.c.h.b16 %v1488
      %v1512 = vunpack.c.l.b16 %v1489
      %v1513 = vunpack.c.h.b16 %v1489
      %v1514 = vpack.c.b16 %v1500, %v1498
      %v1515 = vpack.c.b16 %v1501, %v1499
      %v1516 = vpack.c.b16 %v1504, %v1502
      %v1517 = vpack.c.b16 %v1505, %v1503
      %v1518 = vpack.c.b16 %v1508, %v1506
      %v1519 = vpack.c.b16 %v1509, %v1507
      %v1520 = vpack.c.b16 %v1512, %v1510
      %v1521 = vpack.c.b16 %v1513, %v1511
      %1530 = vmatpush.bf16.msra.mxu0 %v1141
      %1531 = vmatpush.bf16.msra.mxu0 %v1140
      %1532 = vmatpush.bf16.msra.mxu0 %v1139
      %1533 = vmatpush.bf16.msra.mxu0 %v1138
      %1534 = vmatpush.bf16.msra.mxu0 %v1137
      %1535 = vmatpush.bf16.msra.mxu0 %v1136
      %1536 = vmatpush.bf16.msra.mxu0 %v1135
      %1537 = vmatpush.bf16.msra.mxu0 %v1134
      %1538 = vmatmul.bf16.gmra.mxu0 %v1514
      %v1539 = vpop.f32.mrf.mxu0
      %v1540 = vadd.f32 0.0, %v1539
      %v1541 = vpop.f32.mrf.mxu0
      %v1542 = vadd.f32 0.0, %v1541
      %1543 = vmatmul.bf16.gmra.mxu0 %v1516
      %v1544 = vpop.f32.mrf.mxu0
      %v1545 = vadd.f32 0.0, %v1544
      %v1546 = vpop.f32.mrf.mxu0
      %v1547 = vadd.f32 0.0, %v1546
      %1548 = vmatmul.bf16.gmra.mxu0 %v1518
      %v1549 = vpop.f32.mrf.mxu0
      %v1550 = vadd.f32 0.0, %v1549
      %v1551 = vpop.f32.mrf.mxu0
      %v1552 = vadd.f32 0.0, %v1551
      %1553 = vmatmul.bf16.gmra.mxu0 %v1520
      %v1554 = vpop.f32.mrf.mxu0
      %v1555 = vadd.f32 0.0, %v1554
      %v1556 = vpop.f32.mrf.mxu0
      %v1557 = vadd.f32 0.0, %v1556
      %1558 = vdwg.mxu0
      %1559 = vmatpush.bf16.msra.mxu0 %v1149
      %1560 = vmatpush.bf16.msra.mxu0 %v1148
      %1561 = vmatpush.bf16.msra.mxu0 %v1147
      %1562 = vmatpush.bf16.msra.mxu0 %v1146
      %1563 = vmatpush.bf16.msra.mxu0 %v1145
      %1564 = vmatpush.bf16.msra.mxu0 %v1144
      %1565 = vmatpush.bf16.msra.mxu0 %v1143
      %1566 = vmatpush.bf16.msra.mxu0 %v1142
      %1567 = vmatmul.bf16.gmra.mxu0 %v1515
      %v1568 = vpop.f32.mrf.mxu0
      %v1569 = vadd.f32 %v1540, %v1568
      %v1570 = vpop.f32.mrf.mxu0
      %v1571 = vadd.f32 %v1542, %v1570
      %1572 = vmatmul.bf16.gmra.mxu0 %v1517
      %v1573 = vpop.f32.mrf.mxu0
      %v1574 = vadd.f32 %v1545, %v1573
      %v1575 = vpop.f32.mrf.mxu0
      %v1576 = vadd.f32 %v1547, %v1575
      %1577 = vmatmul.bf16.gmra.mxu0 %v1519
      %v1578 = vpop.f32.mrf.mxu0
      %v1579 = vadd.f32 %v1550, %v1578
      %v1580 = vpop.f32.mrf.mxu0
      %v1581 = vadd.f32 %v1552, %v1580
      %1582 = vmatmul.bf16.gmra.mxu0 %v1521
      %v1583 = vpop.f32.mrf.mxu0
      %v1584 = vadd.f32 %v1555, %v1583
      %v1585 = vpop.f32.mrf.mxu0
      %v1586 = vadd.f32 %v1557, %v1585
      %1587 = vdwg.mxu0
      %v1588 = vpack.c.bf16 %v1571, %v1569
      %v1589 = vpack.c.bf16 %v1576, %v1574
      %v1590 = vpack.c.bf16 %v1581, %v1579
      %v1591 = vpack.c.bf16 %v1586, %v1584
      %s1592 = scalar_lea.vmem %s2, 8
      %v1593 = vld [vmem:[%s1592] sm:$0xf]
      %v1595 = vsel %vm1261, %v1588, 0
      %v1598 = vsel %vm1261, %v1589, 0
      %v1601 = vsel %vm1261, %v1590, 0
      %v1604 = vsel %vm1261, %v1591, 0
      %v1607 = vsel %vm1274, %v1593, 0
      %1609 = vmatpush.bf16.msra.mxu0 0
      %1610 = vmatpush.bf16.msra.mxu0 0
      %1611 = vmatpush.bf16.msra.mxu0 0
      %1612 = vmatpush.bf16.msra.mxu0 0
      %1613 = vmatpush.bf16.msra.mxu0 0
      %1614 = vmatpush.bf16.msra.mxu0 0
      %1615 = vmatpush.bf16.msra.mxu0 0
      %1616 = vmatpush.bf16.msra.mxu0 %v1607
      %1617 = vmatmul.bf16.gmra.mxu0 %v1595
      %v1618 = vpop.f32.mrf.mxu0
      %v1619 = vadd.f32 0.0, %v1618
      %v1620 = vpop.f32.mrf.mxu0
      %v1621 = vadd.f32 0.0, %v1620
      %1622 = vmatmul.bf16.gmra.mxu0 %v1598
      %v1623 = vpop.f32.mrf.mxu0
      %v1624 = vadd.f32 0.0, %v1623
      %v1625 = vpop.f32.mrf.mxu0
      %v1626 = vadd.f32 0.0, %v1625
      %1627 = vmatmul.bf16.gmra.mxu0 %v1601
      %v1628 = vpop.f32.mrf.mxu0
      %v1629 = vadd.f32 0.0, %v1628
      %v1630 = vpop.f32.mrf.mxu0
      %v1631 = vadd.f32 0.0, %v1630
      %1632 = vmatmul.bf16.gmra.mxu0 %v1604
      %v1633 = vpop.f32.mrf.mxu0
      %v1634 = vadd.f32 0.0, %v1633
      %v1635 = vpop.f32.mrf.mxu0
      %v1636 = vadd.f32 0.0, %v1635
      %1637 = vdwg.mxu0
      %v1638 = vadd.f32 %v1473, %v1619
      %v1639 = vadd.f32 %v1474, %v1621
      %v1640 = vadd.f32 %v1475, %v1624
      %v1641 = vadd.f32 %v1476, %v1626
      %v1642 = vadd.f32 %v1477, %v1629
      %v1643 = vadd.f32 %v1478, %v1631
      %v1644 = vadd.f32 %v1479, %v1634
      %v1645 = vadd.f32 %v1480, %v1636
      %s1646 = scalar_lea.vmem %s16, 192
      %v1647 = vld [vmem:[%s1646] sm:$0xff]
      %v1648 = vld [vmem:[%s1646 + $0x8] sm:$0xff]
      %v1649 = vld [vmem:[%s1646 + $0x10] sm:$0xff]
      %v1650 = vld [vmem:[%s1646 + $0x18] sm:$0xff]
      %v1651 = vld [vmem:[%s1646 + $0x20] sm:$0xff]
      %v1652 = vld [vmem:[%s1646 + $0x28] sm:$0xff]
      %v1653 = vld [vmem:[%s1646 + $0x30] sm:$0xff]
      %v1654 = vld [vmem:[%s1646 + $0x38] sm:$0xff]
      %v1663 = vunpack.c.l.b16 %v1647
      %v1664 = vunpack.c.h.b16 %v1647
      %v1665 = vunpack.c.l.b16 %v1648
      %v1666 = vunpack.c.h.b16 %v1648
      %v1667 = vunpack.c.l.b16 %v1649
      %v1668 = vunpack.c.h.b16 %v1649
      %v1669 = vunpack.c.l.b16 %v1650
      %v1670 = vunpack.c.h.b16 %v1650
      %v1671 = vunpack.c.l.b16 %v1651
      %v1672 = vunpack.c.h.b16 %v1651
      %v1673 = vunpack.c.l.b16 %v1652
      %v1674 = vunpack.c.h.b16 %v1652
      %v1675 = vunpack.c.l.b16 %v1653
      %v1676 = vunpack.c.h.b16 %v1653
      %v1677 = vunpack.c.l.b16 %v1654
      %v1678 = vunpack.c.h.b16 %v1654
      %v1679 = vpack.c.b16 %v1665, %v1663
      %v1680 = vpack.c.b16 %v1666, %v1664
      %v1681 = vpack.c.b16 %v1669, %v1667
      %v1682 = vpack.c.b16 %v1670, %v1668
      %v1683 = vpack.c.b16 %v1673, %v1671
      %v1684 = vpack.c.b16 %v1674, %v1672
      %v1685 = vpack.c.b16 %v1677, %v1675
      %v1686 = vpack.c.b16 %v1678, %v1676
      %1695 = vmatpush.bf16.msra.mxu0 %v1141
      %1696 = vmatpush.bf16.msra.mxu0 %v1140
      %1697 = vmatpush.bf16.msra.mxu0 %v1139
      %1698 = vmatpush.bf16.msra.mxu0 %v1138
      %1699 = vmatpush.bf16.msra.mxu0 %v1137
      %1700 = vmatpush.bf16.msra.mxu0 %v1136
      %1701 = vmatpush.bf16.msra.mxu0 %v1135
      %1702 = vmatpush.bf16.msra.mxu0 %v1134
      %1703 = vmatmul.bf16.gmra.mxu0 %v1679
      %v1704 = vpop.f32.mrf.mxu0
      %v1705 = vadd.f32 0.0, %v1704
      %v1706 = vpop.f32.mrf.mxu0
      %v1707 = vadd.f32 0.0, %v1706
      %1708 = vmatmul.bf16.gmra.mxu0 %v1681
      %v1709 = vpop.f32.mrf.mxu0
      %v1710 = vadd.f32 0.0, %v1709
      %v1711 = vpop.f32.mrf.mxu0
      %v1712 = vadd.f32 0.0, %v1711
      %1713 = vmatmul.bf16.gmra.mxu0 %v1683
      %v1714 = vpop.f32.mrf.mxu0
      %v1715 = vadd.f32 0.0, %v1714
      %v1716 = vpop.f32.mrf.mxu0
      %v1717 = vadd.f32 0.0, %v1716
      %1718 = vmatmul.bf16.gmra.mxu0 %v1685
      %v1719 = vpop.f32.mrf.mxu0
      %v1720 = vadd.f32 0.0, %v1719
      %v1721 = vpop.f32.mrf.mxu0
      %v1722 = vadd.f32 0.0, %v1721
      %1723 = vdwg.mxu0
      %1724 = vmatpush.bf16.msra.mxu0 %v1149
      %1725 = vmatpush.bf16.msra.mxu0 %v1148
      %1726 = vmatpush.bf16.msra.mxu0 %v1147
      %1727 = vmatpush.bf16.msra.mxu0 %v1146
      %1728 = vmatpush.bf16.msra.mxu0 %v1145
      %1729 = vmatpush.bf16.msra.mxu0 %v1144
      %1730 = vmatpush.bf16.msra.mxu0 %v1143
      %1731 = vmatpush.bf16.msra.mxu0 %v1142
      %1732 = vmatmul.bf16.gmra.mxu0 %v1680
      %v1733 = vpop.f32.mrf.mxu0
      %v1734 = vadd.f32 %v1705, %v1733
      %v1735 = vpop.f32.mrf.mxu0
      %v1736 = vadd.f32 %v1707, %v1735
      %1737 = vmatmul.bf16.gmra.mxu0 %v1682
      %v1738 = vpop.f32.mrf.mxu0
      %v1739 = vadd.f32 %v1710, %v1738
      %v1740 = vpop.f32.mrf.mxu0
      %v1741 = vadd.f32 %v1712, %v1740
      %1742 = vmatmul.bf16.gmra.mxu0 %v1684
      %v1743 = vpop.f32.mrf.mxu0
      %v1744 = vadd.f32 %v1715, %v1743
      %v1745 = vpop.f32.mrf.mxu0
      %v1746 = vadd.f32 %v1717, %v1745
      %1747 = vmatmul.bf16.gmra.mxu0 %v1686
      %v1748 = vpop.f32.mrf.mxu0
      %v1749 = vadd.f32 %v1720, %v1748
      %v1750 = vpop.f32.mrf.mxu0
      %v1751 = vadd.f32 %v1722, %v1750
      %1752 = vdwg.mxu0
      %v1753 = vpack.c.bf16 %v1736, %v1734
      %v1754 = vpack.c.bf16 %v1741, %v1739
      %v1755 = vpack.c.bf16 %v1746, %v1744
      %v1756 = vpack.c.bf16 %v1751, %v1749
      %s1757 = scalar_lea.vmem %s2, 12
      %v1758 = vld [vmem:[%s1757] sm:$0xf]
      %v1760 = vsel %vm1261, %v1753, 0
      %v1763 = vsel %vm1261, %v1754, 0
      %v1766 = vsel %vm1261, %v1755, 0
      %v1769 = vsel %vm1261, %v1756, 0
      %v1772 = vsel %vm1274, %v1758, 0
      %1774 = vmatpush.bf16.msra.mxu0 0
      %1775 = vmatpush.bf16.msra.mxu0 0
      %1776 = vmatpush.bf16.msra.mxu0 0
      %1777 = vmatpush.bf16.msra.mxu0 0
      %1778 = vmatpush.bf16.msra.mxu0 0
      %1779 = vmatpush.bf16.msra.mxu0 0
      %1780 = vmatpush.bf16.msra.mxu0 0
      %1781 = vmatpush.bf16.msra.mxu0 %v1772
      %1782 = vmatmul.bf16.gmra.mxu0 %v1760
      %v1783 = vpop.f32.mrf.mxu0
      %v1784 = vadd.f32 0.0, %v1783
      %v1785 = vpop.f32.mrf.mxu0
      %v1786 = vadd.f32 0.0, %v1785
      %1787 = vmatmul.bf16.gmra.mxu0 %v1763
      %v1788 = vpop.f32.mrf.mxu0
      %v1789 = vadd.f32 0.0, %v1788
      %v1790 = vpop.f32.mrf.mxu0
      %v1791 = vadd.f32 0.0, %v1790
      %1792 = vmatmul.bf16.gmra.mxu0 %v1766
      %v1793 = vpop.f32.mrf.mxu0
      %v1794 = vadd.f32 0.0, %v1793
      %v1795 = vpop.f32.mrf.mxu0
      %v1796 = vadd.f32 0.0, %v1795
      %1797 = vmatmul.bf16.gmra.mxu0 %v1769
      %v1798 = vpop.f32.mrf.mxu0
      %v1799 = vadd.f32 0.0, %v1798
      %v1800 = vpop.f32.mrf.mxu0
      %v1801 = vadd.f32 0.0, %v1800
      %1802 = vdwg.mxu0
      %v1803 = vadd.f32 %v1638, %v1784
      %v1804 = vadd.f32 %v1639, %v1786
      %v1805 = vadd.f32 %v1640, %v1789
      %v1806 = vadd.f32 %v1641, %v1791
      %v1807 = vadd.f32 %v1642, %v1794
      %v1808 = vadd.f32 %v1643, %v1796
      %v1809 = vadd.f32 %v1644, %v1799
      %v1810 = vadd.f32 %v1645, %v1801
      %s1811 = scalar_lea.vmem %s16, 256
      %v1812 = vld [vmem:[%s1811] sm:$0xff]
      %v1813 = vld [vmem:[%s1811 + $0x8] sm:$0xff]
      %v1814 = vld [vmem:[%s1811 + $0x10] sm:$0xff]
      %v1815 = vld [vmem:[%s1811 + $0x18] sm:$0xff]
      %v1816 = vld [vmem:[%s1811 + $0x20] sm:$0xff]
      %v1817 = vld [vmem:[%s1811 + $0x28] sm:$0xff]
      %v1818 = vld [vmem:[%s1811 + $0x30] sm:$0xff]
      %v1819 = vld [vmem:[%s1811 + $0x38] sm:$0xff]
      %v1828 = vunpack.c.l.b16 %v1812
      %v1829 = vunpack.c.h.b16 %v1812
      %v1830 = vunpack.c.l.b16 %v1813
      %v1831 = vunpack.c.h.b16 %v1813
      %v1832 = vunpack.c.l.b16 %v1814
      %v1833 = vunpack.c.h.b16 %v1814
      %v1834 = vunpack.c.l.b16 %v1815
      %v1835 = vunpack.c.h.b16 %v1815
      %v1836 = vunpack.c.l.b16 %v1816
      %v1837 = vunpack.c.h.b16 %v1816
      %v1838 = vunpack.c.l.b16 %v1817
      %v1839 = vunpack.c.h.b16 %v1817
      %v1840 = vunpack.c.l.b16 %v1818
      %v1841 = vunpack.c.h.b16 %v1818
      %v1842 = vunpack.c.l.b16 %v1819
      %v1843 = vunpack.c.h.b16 %v1819
      %v1844 = vpack.c.b16 %v1830, %v1828
      %v1845 = vpack.c.b16 %v1831, %v1829
      %v1846 = vpack.c.b16 %v1834, %v1832
      %v1847 = vpack.c.b16 %v1835, %v1833
      %v1848 = vpack.c.b16 %v1838, %v1836
      %v1849 = vpack.c.b16 %v1839, %v1837
      %v1850 = vpack.c.b16 %v1842, %v1840
      %v1851 = vpack.c.b16 %v1843, %v1841
      %1860 = vmatpush.bf16.msra.mxu0 %v1141
      %1861 = vmatpush.bf16.msra.mxu0 %v1140
      %1862 = vmatpush.bf16.msra.mxu0 %v1139
      %1863 = vmatpush.bf16.msra.mxu0 %v1138
      %1864 = vmatpush.bf16.msra.mxu0 %v1137
      %1865 = vmatpush.bf16.msra.mxu0 %v1136
      %1866 = vmatpush.bf16.msra.mxu0 %v1135
      %1867 = vmatpush.bf16.msra.mxu0 %v1134
      %1868 = vmatmul.bf16.gmra.mxu0 %v1844
      %v1869 = vpop.f32.mrf.mxu0
      %v1870 = vadd.f32 0.0, %v1869
      %v1871 = vpop.f32.mrf.mxu0
      %v1872 = vadd.f32 0.0, %v1871
      %1873 = vmatmul.bf16.gmra.mxu0 %v1846
      %v1874 = vpop.f32.mrf.mxu0
      %v1875 = vadd.f32 0.0, %v1874
      %v1876 = vpop.f32.mrf.mxu0
      %v1877 = vadd.f32 0.0, %v1876
      %1878 = vmatmul.bf16.gmra.mxu0 %v1848
      %v1879 = vpop.f32.mrf.mxu0
      %v1880 = vadd.f32 0.0, %v1879
      %v1881 = vpop.f32.mrf.mxu0
      %v1882 = vadd.f32 0.0, %v1881
      %1883 = vmatmul.bf16.gmra.mxu0 %v1850
      %v1884 = vpop.f32.mrf.mxu0
      %v1885 = vadd.f32 0.0, %v1884
      %v1886 = vpop.f32.mrf.mxu0
      %v1887 = vadd.f32 0.0, %v1886
      %1888 = vdwg.mxu0
      %1889 = vmatpush.bf16.msra.mxu0 %v1149
      %1890 = vmatpush.bf16.msra.mxu0 %v1148
      %1891 = vmatpush.bf16.msra.mxu0 %v1147
      %1892 = vmatpush.bf16.msra.mxu0 %v1146
      %1893 = vmatpush.bf16.msra.mxu0 %v1145
      %1894 = vmatpush.bf16.msra.mxu0 %v1144
      %1895 = vmatpush.bf16.msra.mxu0 %v1143
      %1896 = vmatpush.bf16.msra.mxu0 %v1142
      %1897 = vmatmul.bf16.gmra.mxu0 %v1845
      %v1898 = vpop.f32.mrf.mxu0
      %v1899 = vadd.f32 %v1870, %v1898
      %v1900 = vpop.f32.mrf.mxu0
      %v1901 = vadd.f32 %v1872, %v1900
      %1902 = vmatmul.bf16.gmra.mxu0 %v1847
      %v1903 = vpop.f32.mrf.mxu0
      %v1904 = vadd.f32 %v1875, %v1903
      %v1905 = vpop.f32.mrf.mxu0
      %v1906 = vadd.f32 %v1877, %v1905
      %1907 = vmatmul.bf16.gmra.mxu0 %v1849
      %v1908 = vpop.f32.mrf.mxu0
      %v1909 = vadd.f32 %v1880, %v1908
      %v1910 = vpop.f32.mrf.mxu0
      %v1911 = vadd.f32 %v1882, %v1910
      %1912 = vmatmul.bf16.gmra.mxu0 %v1851
      %v1913 = vpop.f32.mrf.mxu0
      %v1914 = vadd.f32 %v1885, %v1913
      %v1915 = vpop.f32.mrf.mxu0
      %v1916 = vadd.f32 %v1887, %v1915
      %1917 = vdwg.mxu0
      %v1918 = vpack.c.bf16 %v1901, %v1899
      %v1919 = vpack.c.bf16 %v1906, %v1904
      %v1920 = vpack.c.bf16 %v1911, %v1909
      %v1921 = vpack.c.bf16 %v1916, %v1914
      %s1922 = scalar_lea.vmem %s2, 16
      %v1923 = vld [vmem:[%s1922] sm:$0xf]
      %v1925 = vsel %vm1261, %v1918, 0
      %v1928 = vsel %vm1261, %v1919, 0
      %v1931 = vsel %vm1261, %v1920, 0
      %v1934 = vsel %vm1261, %v1921, 0
      %v1937 = vsel %vm1274, %v1923, 0
      %1939 = vmatpush.bf16.msra.mxu0 0
      %1940 = vmatpush.bf16.msra.mxu0 0
      %1941 = vmatpush.bf16.msra.mxu0 0
      %1942 = vmatpush.bf16.msra.mxu0 0
      %1943 = vmatpush.bf16.msra.mxu0 0
      %1944 = vmatpush.bf16.msra.mxu0 0
      %1945 = vmatpush.bf16.msra.mxu0 0
      %1946 = vmatpush.bf16.msra.mxu0 %v1937
      %1947 = vmatmul.bf16.gmra.mxu0 %v1925
      %v1948 = vpop.f32.mrf.mxu0
      %v1949 = vadd.f32 0.0, %v1948
      %v1950 = vpop.f32.mrf.mxu0
      %v1951 = vadd.f32 0.0, %v1950
      %1952 = vmatmul.bf16.gmra.mxu0 %v1928
      %v1953 = vpop.f32.mrf.mxu0
      %v1954 = vadd.f32 0.0, %v1953
      %v1955 = vpop.f32.mrf.mxu0
      %v1956 = vadd.f32 0.0, %v1955
      %1957 = vmatmul.bf16.gmra.mxu0 %v1931
      %v1958 = vpop.f32.mrf.mxu0
      %v1959 = vadd.f32 0.0, %v1958
      %v1960 = vpop.f32.mrf.mxu0
      %v1961 = vadd.f32 0.0, %v1960
      %1962 = vmatmul.bf16.gmra.mxu0 %v1934
      %v1963 = vpop.f32.mrf.mxu0
      %v1964 = vadd.f32 0.0, %v1963
      %v1965 = vpop.f32.mrf.mxu0
      %v1966 = vadd.f32 0.0, %v1965
      %1967 = vdwg.mxu0
      %v1968 = vadd.f32 %v1803, %v1949
      %v1969 = vadd.f32 %v1804, %v1951
      %v1970 = vadd.f32 %v1805, %v1954
      %v1971 = vadd.f32 %v1806, %v1956
      %v1972 = vadd.f32 %v1807, %v1959
      %v1973 = vadd.f32 %v1808, %v1961
      %v1974 = vadd.f32 %v1809, %v1964
      %v1975 = vadd.f32 %v1810, %v1966
      %s1976 = scalar_lea.vmem %s16, 320
      %v1977 = vld [vmem:[%s1976] sm:$0xff]
      %v1978 = vld [vmem:[%s1976 + $0x8] sm:$0xff]
      %v1979 = vld [vmem:[%s1976 + $0x10] sm:$0xff]
      %v1980 = vld [vmem:[%s1976 + $0x18] sm:$0xff]
      %v1981 = vld [vmem:[%s1976 + $0x20] sm:$0xff]
      %v1982 = vld [vmem:[%s1976 + $0x28] sm:$0xff]
      %v1983 = vld [vmem:[%s1976 + $0x30] sm:$0xff]
      %v1984 = vld [vmem:[%s1976 + $0x38] sm:$0xff]
      %v1993 = vunpack.c.l.b16 %v1977
      %v1994 = vunpack.c.h.b16 %v1977
      %v1995 = vunpack.c.l.b16 %v1978
      %v1996 = vunpack.c.h.b16 %v1978
      %v1997 = vunpack.c.l.b16 %v1979
      %v1998 = vunpack.c.h.b16 %v1979
      %v1999 = vunpack.c.l.b16 %v1980
      %v2000 = vunpack.c.h.b16 %v1980
      %v2001 = vunpack.c.l.b16 %v1981
      %v2002 = vunpack.c.h.b16 %v1981
      %v2003 = vunpack.c.l.b16 %v1982
      %v2004 = vunpack.c.h.b16 %v1982
      %v2005 = vunpack.c.l.b16 %v1983
      %v2006 = vunpack.c.h.b16 %v1983
      %v2007 = vunpack.c.l.b16 %v1984
      %v2008 = vunpack.c.h.b16 %v1984
      %v2009 = vpack.c.b16 %v1995, %v1993
      %v2010 = vpack.c.b16 %v1996, %v1994
      %v2011 = vpack.c.b16 %v1999, %v1997
      %v2012 = vpack.c.b16 %v2000, %v1998
      %v2013 = vpack.c.b16 %v2003, %v2001
      %v2014 = vpack.c.b16 %v2004, %v2002
      %v2015 = vpack.c.b16 %v2007, %v2005
      %v2016 = vpack.c.b16 %v2008, %v2006
      %2025 = vmatpush.bf16.msra.mxu0 %v1141
      %2026 = vmatpush.bf16.msra.mxu0 %v1140
      %2027 = vmatpush.bf16.msra.mxu0 %v1139
      %2028 = vmatpush.bf16.msra.mxu0 %v1138
      %2029 = vmatpush.bf16.msra.mxu0 %v1137
      %2030 = vmatpush.bf16.msra.mxu0 %v1136
      %2031 = vmatpush.bf16.msra.mxu0 %v1135
      %2032 = vmatpush.bf16.msra.mxu0 %v1134
      %2033 = vmatmul.bf16.gmra.mxu0 %v2009
      %v2034 = vpop.f32.mrf.mxu0
      %v2035 = vadd.f32 0.0, %v2034
      %v2036 = vpop.f32.mrf.mxu0
      %v2037 = vadd.f32 0.0, %v2036
      %2038 = vmatmul.bf16.gmra.mxu0 %v2011
      %v2039 = vpop.f32.mrf.mxu0
      %v2040 = vadd.f32 0.0, %v2039
      %v2041 = vpop.f32.mrf.mxu0
      %v2042 = vadd.f32 0.0, %v2041
      %2043 = vmatmul.bf16.gmra.mxu0 %v2013
      %v2044 = vpop.f32.mrf.mxu0
      %v2045 = vadd.f32 0.0, %v2044
      %v2046 = vpop.f32.mrf.mxu0
      %v2047 = vadd.f32 0.0, %v2046
      %2048 = vmatmul.bf16.gmra.mxu0 %v2015
      %v2049 = vpop.f32.mrf.mxu0
      %v2050 = vadd.f32 0.0, %v2049
      %v2051 = vpop.f32.mrf.mxu0
      %v2052 = vadd.f32 0.0, %v2051
      %2053 = vdwg.mxu0
      %2054 = vmatpush.bf16.msra.mxu0 %v1149
      %2055 = vmatpush.bf16.msra.mxu0 %v1148
      %2056 = vmatpush.bf16.msra.mxu0 %v1147
      %2057 = vmatpush.bf16.msra.mxu0 %v1146
      %2058 = vmatpush.bf16.msra.mxu0 %v1145
      %2059 = vmatpush.bf16.msra.mxu0 %v1144
      %2060 = vmatpush.bf16.msra.mxu0 %v1143
      %2061 = vmatpush.bf16.msra.mxu0 %v1142
      %2062 = vmatmul.bf16.gmra.mxu0 %v2010
      %v2063 = vpop.f32.mrf.mxu0
      %v2064 = vadd.f32 %v2035, %v2063
      %v2065 = vpop.f32.mrf.mxu0
      %v2066 = vadd.f32 %v2037, %v2065
      %2067 = vmatmul.bf16.gmra.mxu0 %v2012
      %v2068 = vpop.f32.mrf.mxu0
      %v2069 = vadd.f32 %v2040, %v2068
      %v2070 = vpop.f32.mrf.mxu0
      %v2071 = vadd.f32 %v2042, %v2070
      %2072 = vmatmul.bf16.gmra.mxu0 %v2014
      %v2073 = vpop.f32.mrf.mxu0
      %v2074 = vadd.f32 %v2045, %v2073
      %v2075 = vpop.f32.mrf.mxu0
      %v2076 = vadd.f32 %v2047, %v2075
      %2077 = vmatmul.bf16.gmra.mxu0 %v2016
      %v2078 = vpop.f32.mrf.mxu0
      %v2079 = vadd.f32 %v2050, %v2078
      %v2080 = vpop.f32.mrf.mxu0
      %v2081 = vadd.f32 %v2052, %v2080
      %2082 = vdwg.mxu0
      %v2083 = vpack.c.bf16 %v2066, %v2064
      %v2084 = vpack.c.bf16 %v2071, %v2069
      %v2085 = vpack.c.bf16 %v2076, %v2074
      %v2086 = vpack.c.bf16 %v2081, %v2079
      %s2087 = scalar_lea.vmem %s2, 20
      %v2088 = vld [vmem:[%s2087] sm:$0xf]
      %v2090 = vsel %vm1261, %v2083, 0
      %v2093 = vsel %vm1261, %v2084, 0
      %v2096 = vsel %vm1261, %v2085, 0
      %v2099 = vsel %vm1261, %v2086, 0
      %v2102 = vsel %vm1274, %v2088, 0
      %2104 = vmatpush.bf16.msra.mxu0 0
      %2105 = vmatpush.bf16.msra.mxu0 0
      %2106 = vmatpush.bf16.msra.mxu0 0
      %2107 = vmatpush.bf16.msra.mxu0 0
      %2108 = vmatpush.bf16.msra.mxu0 0
      %2109 = vmatpush.bf16.msra.mxu0 0
      %2110 = vmatpush.bf16.msra.mxu0 0
      %2111 = vmatpush.bf16.msra.mxu0 %v2102
      %2112 = vmatmul.bf16.gmra.mxu0 %v2090
      %v2113 = vpop.f32.mrf.mxu0
      %v2114 = vadd.f32 0.0, %v2113
      %v2115 = vpop.f32.mrf.mxu0
      %v2116 = vadd.f32 0.0, %v2115
      %2117 = vmatmul.bf16.gmra.mxu0 %v2093
      %v2118 = vpop.f32.mrf.mxu0
      %v2119 = vadd.f32 0.0, %v2118
      %v2120 = vpop.f32.mrf.mxu0
      %v2121 = vadd.f32 0.0, %v2120
      %2122 = vmatmul.bf16.gmra.mxu0 %v2096
      %v2123 = vpop.f32.mrf.mxu0
      %v2124 = vadd.f32 0.0, %v2123
      %v2125 = vpop.f32.mrf.mxu0
      %v2126 = vadd.f32 0.0, %v2125
      %2127 = vmatmul.bf16.gmra.mxu0 %v2099
      %v2128 = vpop.f32.mrf.mxu0
      %v2129 = vadd.f32 0.0, %v2128
      %v2130 = vpop.f32.mrf.mxu0
      %v2131 = vadd.f32 0.0, %v2130
      %2132 = vdwg.mxu0
      %v2133 = vadd.f32 %v1968, %v2114
      %v2134 = vadd.f32 %v1969, %v2116
      %v2135 = vadd.f32 %v1970, %v2119
      %v2136 = vadd.f32 %v1971, %v2121
      %v2137 = vadd.f32 %v1972, %v2124
      %v2138 = vadd.f32 %v1973, %v2126
      %v2139 = vadd.f32 %v1974, %v2129
      %v2140 = vadd.f32 %v1975, %v2131
      %s2141 = scalar_lea.vmem %s16, 384
      %v2142 = vld [vmem:[%s2141] sm:$0xff]
      %v2143 = vld [vmem:[%s2141 + $0x8] sm:$0xff]
      %v2144 = vld [vmem:[%s2141 + $0x10] sm:$0xff]
      %v2145 = vld [vmem:[%s2141 + $0x18] sm:$0xff]
      %v2146 = vld [vmem:[%s2141 + $0x20] sm:$0xff]
      %v2147 = vld [vmem:[%s2141 + $0x28] sm:$0xff]
      %v2148 = vld [vmem:[%s2141 + $0x30] sm:$0xff]
      %v2149 = vld [vmem:[%s2141 + $0x38] sm:$0xff]
      %v2158 = vunpack.c.l.b16 %v2142
      %v2159 = vunpack.c.h.b16 %v2142
      %v2160 = vunpack.c.l.b16 %v2143
      %v2161 = vunpack.c.h.b16 %v2143
      %v2162 = vunpack.c.l.b16 %v2144
      %v2163 = vunpack.c.h.b16 %v2144
      %v2164 = vunpack.c.l.b16 %v2145
      %v2165 = vunpack.c.h.b16 %v2145
      %v2166 = vunpack.c.l.b16 %v2146
      %v2167 = vunpack.c.h.b16 %v2146
      %v2168 = vunpack.c.l.b16 %v2147
      %v2169 = vunpack.c.h.b16 %v2147
      %v2170 = vunpack.c.l.b16 %v2148
      %v2171 = vunpack.c.h.b16 %v2148
      %v2172 = vunpack.c.l.b16 %v2149
      %v2173 = vunpack.c.h.b16 %v2149
      %v2174 = vpack.c.b16 %v2160, %v2158
      %v2175 = vpack.c.b16 %v2161, %v2159
      %v2176 = vpack.c.b16 %v2164, %v2162
      %v2177 = vpack.c.b16 %v2165, %v2163
      %v2178 = vpack.c.b16 %v2168, %v2166
      %v2179 = vpack.c.b16 %v2169, %v2167
      %v2180 = vpack.c.b16 %v2172, %v2170
      %v2181 = vpack.c.b16 %v2173, %v2171
      %2190 = vmatpush.bf16.msra.mxu0 %v1141
      %2191 = vmatpush.bf16.msra.mxu0 %v1140
      %2192 = vmatpush.bf16.msra.mxu0 %v1139
      %2193 = vmatpush.bf16.msra.mxu0 %v1138
      %2194 = vmatpush.bf16.msra.mxu0 %v1137
      %2195 = vmatpush.bf16.msra.mxu0 %v1136
      %2196 = vmatpush.bf16.msra.mxu0 %v1135
      %2197 = vmatpush.bf16.msra.mxu0 %v1134
      %2198 = vmatmul.bf16.gmra.mxu0 %v2174
      %v2199 = vpop.f32.mrf.mxu0
      %v2200 = vadd.f32 0.0, %v2199
      %v2201 = vpop.f32.mrf.mxu0
      %v2202 = vadd.f32 0.0, %v2201
      %2203 = vmatmul.bf16.gmra.mxu0 %v2176
      %v2204 = vpop.f32.mrf.mxu0
      %v2205 = vadd.f32 0.0, %v2204
      %v2206 = vpop.f32.mrf.mxu0
      %v2207 = vadd.f32 0.0, %v2206
      %2208 = vmatmul.bf16.gmra.mxu0 %v2178
      %v2209 = vpop.f32.mrf.mxu0
      %v2210 = vadd.f32 0.0, %v2209
      %v2211 = vpop.f32.mrf.mxu0
      %v2212 = vadd.f32 0.0, %v2211
      %2213 = vmatmul.bf16.gmra.mxu0 %v2180
      %v2214 = vpop.f32.mrf.mxu0
      %v2215 = vadd.f32 0.0, %v2214
      %v2216 = vpop.f32.mrf.mxu0
      %v2217 = vadd.f32 0.0, %v2216
      %2218 = vdwg.mxu0
      %2219 = vmatpush.bf16.msra.mxu0 %v1149
      %2220 = vmatpush.bf16.msra.mxu0 %v1148
      %2221 = vmatpush.bf16.msra.mxu0 %v1147
      %2222 = vmatpush.bf16.msra.mxu0 %v1146
      %2223 = vmatpush.bf16.msra.mxu0 %v1145
      %2224 = vmatpush.bf16.msra.mxu0 %v1144
      %2225 = vmatpush.bf16.msra.mxu0 %v1143
      %2226 = vmatpush.bf16.msra.mxu0 %v1142
      %2227 = vmatmul.bf16.gmra.mxu0 %v2175
      %v2228 = vpop.f32.mrf.mxu0
      %v2229 = vadd.f32 %v2200, %v2228
      %v2230 = vpop.f32.mrf.mxu0
      %v2231 = vadd.f32 %v2202, %v2230
      %2232 = vmatmul.bf16.gmra.mxu0 %v2177
      %v2233 = vpop.f32.mrf.mxu0
      %v2234 = vadd.f32 %v2205, %v2233
      %v2235 = vpop.f32.mrf.mxu0
      %v2236 = vadd.f32 %v2207, %v2235
      %2237 = vmatmul.bf16.gmra.mxu0 %v2179
      %v2238 = vpop.f32.mrf.mxu0
      %v2239 = vadd.f32 %v2210, %v2238
      %v2240 = vpop.f32.mrf.mxu0
      %v2241 = vadd.f32 %v2212, %v2240
      %2242 = vmatmul.bf16.gmra.mxu0 %v2181
      %v2243 = vpop.f32.mrf.mxu0
      %v2244 = vadd.f32 %v2215, %v2243
      %v2245 = vpop.f32.mrf.mxu0
      %v2246 = vadd.f32 %v2217, %v2245
      %2247 = vdwg.mxu0
      %v2248 = vpack.c.bf16 %v2231, %v2229
      %v2249 = vpack.c.bf16 %v2236, %v2234
      %v2250 = vpack.c.bf16 %v2241, %v2239
      %v2251 = vpack.c.bf16 %v2246, %v2244
      %s2252 = scalar_lea.vmem %s2, 24
      %v2253 = vld [vmem:[%s2252] sm:$0xf]
      %v2255 = vsel %vm1261, %v2248, 0
      %v2258 = vsel %vm1261, %v2249, 0
      %v2261 = vsel %vm1261, %v2250, 0
      %v2264 = vsel %vm1261, %v2251, 0
      %v2267 = vsel %vm1274, %v2253, 0
      %2269 = vmatpush.bf16.msra.mxu0 0
      %2270 = vmatpush.bf16.msra.mxu0 0
      %2271 = vmatpush.bf16.msra.mxu0 0
      %2272 = vmatpush.bf16.msra.mxu0 0
      %2273 = vmatpush.bf16.msra.mxu0 0
      %2274 = vmatpush.bf16.msra.mxu0 0
      %2275 = vmatpush.bf16.msra.mxu0 0
      %2276 = vmatpush.bf16.msra.mxu0 %v2267
      %2277 = vmatmul.bf16.gmra.mxu0 %v2255
      %v2278 = vpop.f32.mrf.mxu0
      %v2279 = vadd.f32 0.0, %v2278
      %v2280 = vpop.f32.mrf.mxu0
      %v2281 = vadd.f32 0.0, %v2280
      %2282 = vmatmul.bf16.gmra.mxu0 %v2258
      %v2283 = vpop.f32.mrf.mxu0
      %v2284 = vadd.f32 0.0, %v2283
      %v2285 = vpop.f32.mrf.mxu0
      %v2286 = vadd.f32 0.0, %v2285
      %2287 = vmatmul.bf16.gmra.mxu0 %v2261
      %v2288 = vpop.f32.mrf.mxu0
      %v2289 = vadd.f32 0.0, %v2288
      %v2290 = vpop.f32.mrf.mxu0
      %v2291 = vadd.f32 0.0, %v2290
      %2292 = vmatmul.bf16.gmra.mxu0 %v2264
      %v2293 = vpop.f32.mrf.mxu0
      %v2294 = vadd.f32 0.0, %v2293
      %v2295 = vpop.f32.mrf.mxu0
      %v2296 = vadd.f32 0.0, %v2295
      %2297 = vdwg.mxu0
      %v2298 = vadd.f32 %v2133, %v2279
      %v2299 = vadd.f32 %v2134, %v2281
      %v2300 = vadd.f32 %v2135, %v2284
      %v2301 = vadd.f32 %v2136, %v2286
      %v2302 = vadd.f32 %v2137, %v2289
      %v2303 = vadd.f32 %v2138, %v2291
      %v2304 = vadd.f32 %v2139, %v2294
      %v2305 = vadd.f32 %v2140, %v2296
      %s2306 = scalar_lea.vmem %s16, 448
      %v2307 = vld [vmem:[%s2306] sm:$0xff]
      %v2308 = vld [vmem:[%s2306 + $0x8] sm:$0xff]
      %v2309 = vld [vmem:[%s2306 + $0x10] sm:$0xff]
      %v2310 = vld [vmem:[%s2306 + $0x18] sm:$0xff]
      %v2311 = vld [vmem:[%s2306 + $0x20] sm:$0xff]
      %v2312 = vld [vmem:[%s2306 + $0x28] sm:$0xff]
      %v2313 = vld [vmem:[%s2306 + $0x30] sm:$0xff]
      %v2314 = vld [vmem:[%s2306 + $0x38] sm:$0xff]
      %v2323 = vunpack.c.l.b16 %v2307
      %v2324 = vunpack.c.h.b16 %v2307
      %v2325 = vunpack.c.l.b16 %v2308
      %v2326 = vunpack.c.h.b16 %v2308
      %v2327 = vunpack.c.l.b16 %v2309
      %v2328 = vunpack.c.h.b16 %v2309
      %v2329 = vunpack.c.l.b16 %v2310
      %v2330 = vunpack.c.h.b16 %v2310
      %v2331 = vunpack.c.l.b16 %v2311
      %v2332 = vunpack.c.h.b16 %v2311
      %v2333 = vunpack.c.l.b16 %v2312
      %v2334 = vunpack.c.h.b16 %v2312
      %v2335 = vunpack.c.l.b16 %v2313
      %v2336 = vunpack.c.h.b16 %v2313
      %v2337 = vunpack.c.l.b16 %v2314
      %v2338 = vunpack.c.h.b16 %v2314
      %v2339 = vpack.c.b16 %v2325, %v2323
      %v2340 = vpack.c.b16 %v2326, %v2324
      %v2341 = vpack.c.b16 %v2329, %v2327
      %v2342 = vpack.c.b16 %v2330, %v2328
      %v2343 = vpack.c.b16 %v2333, %v2331
      %v2344 = vpack.c.b16 %v2334, %v2332
      %v2345 = vpack.c.b16 %v2337, %v2335
      %v2346 = vpack.c.b16 %v2338, %v2336
      %2355 = vmatpush.bf16.msra.mxu0 %v1141
      %2356 = vmatpush.bf16.msra.mxu0 %v1140
      %2357 = vmatpush.bf16.msra.mxu0 %v1139
      %2358 = vmatpush.bf16.msra.mxu0 %v1138
      %2359 = vmatpush.bf16.msra.mxu0 %v1137
      %2360 = vmatpush.bf16.msra.mxu0 %v1136
      %2361 = vmatpush.bf16.msra.mxu0 %v1135
      %2362 = vmatpush.bf16.msra.mxu0 %v1134
      %2363 = vmatmul.bf16.gmra.mxu0 %v2339
      %v2364 = vpop.f32.mrf.mxu0
      %v2365 = vadd.f32 0.0, %v2364
      %v2366 = vpop.f32.mrf.mxu0
      %v2367 = vadd.f32 0.0, %v2366
      %2368 = vmatmul.bf16.gmra.mxu0 %v2341
      %v2369 = vpop.f32.mrf.mxu0
      %v2370 = vadd.f32 0.0, %v2369
      %v2371 = vpop.f32.mrf.mxu0
      %v2372 = vadd.f32 0.0, %v2371
      %2373 = vmatmul.bf16.gmra.mxu0 %v2343
      %v2374 = vpop.f32.mrf.mxu0
      %v2375 = vadd.f32 0.0, %v2374
      %v2376 = vpop.f32.mrf.mxu0
      %v2377 = vadd.f32 0.0, %v2376
      %2378 = vmatmul.bf16.gmra.mxu0 %v2345
      %v2379 = vpop.f32.mrf.mxu0
      %v2380 = vadd.f32 0.0, %v2379
      %v2381 = vpop.f32.mrf.mxu0
      %v2382 = vadd.f32 0.0, %v2381
      %2383 = vdwg.mxu0
      %2384 = vmatpush.bf16.msra.mxu0 %v1149
      %2385 = vmatpush.bf16.msra.mxu0 %v1148
      %2386 = vmatpush.bf16.msra.mxu0 %v1147
      %2387 = vmatpush.bf16.msra.mxu0 %v1146
      %2388 = vmatpush.bf16.msra.mxu0 %v1145
      %2389 = vmatpush.bf16.msra.mxu0 %v1144
      %2390 = vmatpush.bf16.msra.mxu0 %v1143
      %2391 = vmatpush.bf16.msra.mxu0 %v1142
      %2392 = vmatmul.bf16.gmra.mxu0 %v2340
      %v2393 = vpop.f32.mrf.mxu0
      %v2394 = vadd.f32 %v2365, %v2393
      %v2395 = vpop.f32.mrf.mxu0
      %v2396 = vadd.f32 %v2367, %v2395
      %2397 = vmatmul.bf16.gmra.mxu0 %v2342
      %v2398 = vpop.f32.mrf.mxu0
      %v2399 = vadd.f32 %v2370, %v2398
      %v2400 = vpop.f32.mrf.mxu0
      %v2401 = vadd.f32 %v2372, %v2400
      %2402 = vmatmul.bf16.gmra.mxu0 %v2344
      %v2403 = vpop.f32.mrf.mxu0
      %v2404 = vadd.f32 %v2375, %v2403
      %v2405 = vpop.f32.mrf.mxu0
      %v2406 = vadd.f32 %v2377, %v2405
      %2407 = vmatmul.bf16.gmra.mxu0 %v2346
      %v2408 = vpop.f32.mrf.mxu0
      %v2409 = vadd.f32 %v2380, %v2408
      %v2410 = vpop.f32.mrf.mxu0
      %v2411 = vadd.f32 %v2382, %v2410
      %2412 = vdwg.mxu0
      %v2413 = vpack.c.bf16 %v2396, %v2394
      %v2414 = vpack.c.bf16 %v2401, %v2399
      %v2415 = vpack.c.bf16 %v2406, %v2404
      %v2416 = vpack.c.bf16 %v2411, %v2409
      %s2417 = scalar_lea.vmem %s2, 28
      %v2418 = vld [vmem:[%s2417] sm:$0xf]
      %v2420 = vsel %vm1261, %v2413, 0
      %v2423 = vsel %vm1261, %v2414, 0
      %v2426 = vsel %vm1261, %v2415, 0
      %v2429 = vsel %vm1261, %v2416, 0
      %v2432 = vsel %vm1274, %v2418, 0
      %2434 = vmatpush.bf16.msra.mxu0 0
      %2435 = vmatpush.bf16.msra.mxu0 0
      %2436 = vmatpush.bf16.msra.mxu0 0
      %2437 = vmatpush.bf16.msra.mxu0 0
      %2438 = vmatpush.bf16.msra.mxu0 0
      %2439 = vmatpush.bf16.msra.mxu0 0
      %2440 = vmatpush.bf16.msra.mxu0 0
      %2441 = vmatpush.bf16.msra.mxu0 %v2432
      %2442 = vmatmul.bf16.gmra.mxu0 %v2420
      %v2443 = vpop.f32.mrf.mxu0
      %v2444 = vadd.f32 0.0, %v2443
      %v2445 = vpop.f32.mrf.mxu0
      %v2446 = vadd.f32 0.0, %v2445
      %2447 = vmatmul.bf16.gmra.mxu0 %v2423
      %v2448 = vpop.f32.mrf.mxu0
      %v2449 = vadd.f32 0.0, %v2448
      %v2450 = vpop.f32.mrf.mxu0
      %v2451 = vadd.f32 0.0, %v2450
      %2452 = vmatmul.bf16.gmra.mxu0 %v2426
      %v2453 = vpop.f32.mrf.mxu0
      %v2454 = vadd.f32 0.0, %v2453
      %v2455 = vpop.f32.mrf.mxu0
      %v2456 = vadd.f32 0.0, %v2455
      %2457 = vmatmul.bf16.gmra.mxu0 %v2429
      %v2458 = vpop.f32.mrf.mxu0
      %v2459 = vadd.f32 0.0, %v2458
      %v2460 = vpop.f32.mrf.mxu0
      %v2461 = vadd.f32 0.0, %v2460
      %2462 = vdwg.mxu0
      %v2463 = vadd.f32 %v2298, %v2444
      %v2464 = vadd.f32 %v2299, %v2446
      %v2465 = vadd.f32 %v2300, %v2449
      %v2466 = vadd.f32 %v2301, %v2451
      %v2467 = vadd.f32 %v2302, %v2454
      %v2468 = vadd.f32 %v2303, %v2456
      %v2469 = vadd.f32 %v2304, %v2459
      %v2470 = vadd.f32 %v2305, %v2461
      %s2471 = scalar_lea.vmem %s16, 512
      %v2472 = vld [vmem:[%s2471] sm:$0xff]
      %v2473 = vld [vmem:[%s2471 + $0x8] sm:$0xff]
      %v2474 = vld [vmem:[%s2471 + $0x10] sm:$0xff]
      %v2475 = vld [vmem:[%s2471 + $0x18] sm:$0xff]
      %v2476 = vld [vmem:[%s2471 + $0x20] sm:$0xff]
      %v2477 = vld [vmem:[%s2471 + $0x28] sm:$0xff]
      %v2478 = vld [vmem:[%s2471 + $0x30] sm:$0xff]
      %v2479 = vld [vmem:[%s2471 + $0x38] sm:$0xff]
      %v2488 = vunpack.c.l.b16 %v2472
      %v2489 = vunpack.c.h.b16 %v2472
      %v2490 = vunpack.c.l.b16 %v2473
      %v2491 = vunpack.c.h.b16 %v2473
      %v2492 = vunpack.c.l.b16 %v2474
      %v2493 = vunpack.c.h.b16 %v2474
      %v2494 = vunpack.c.l.b16 %v2475
      %v2495 = vunpack.c.h.b16 %v2475
      %v2496 = vunpack.c.l.b16 %v2476
      %v2497 = vunpack.c.h.b16 %v2476
      %v2498 = vunpack.c.l.b16 %v2477
      %v2499 = vunpack.c.h.b16 %v2477
      %v2500 = vunpack.c.l.b16 %v2478
      %v2501 = vunpack.c.h.b16 %v2478
      %v2502 = vunpack.c.l.b16 %v2479
      %v2503 = vunpack.c.h.b16 %v2479
      %v2504 = vpack.c.b16 %v2490, %v2488
      %v2505 = vpack.c.b16 %v2491, %v2489
      %v2506 = vpack.c.b16 %v2494, %v2492
      %v2507 = vpack.c.b16 %v2495, %v2493
      %v2508 = vpack.c.b16 %v2498, %v2496
      %v2509 = vpack.c.b16 %v2499, %v2497
      %v2510 = vpack.c.b16 %v2502, %v2500
      %v2511 = vpack.c.b16 %v2503, %v2501
      %2520 = vmatpush.bf16.msra.mxu0 %v1141
      %2521 = vmatpush.bf16.msra.mxu0 %v1140
      %2522 = vmatpush.bf16.msra.mxu0 %v1139
      %2523 = vmatpush.bf16.msra.mxu0 %v1138
      %2524 = vmatpush.bf16.msra.mxu0 %v1137
      %2525 = vmatpush.bf16.msra.mxu0 %v1136
      %2526 = vmatpush.bf16.msra.mxu0 %v1135
      %2527 = vmatpush.bf16.msra.mxu0 %v1134
      %2528 = vmatmul.bf16.gmra.mxu0 %v2504
      %v2529 = vpop.f32.mrf.mxu0
      %v2530 = vadd.f32 0.0, %v2529
      %v2531 = vpop.f32.mrf.mxu0
      %v2532 = vadd.f32 0.0, %v2531
      %2533 = vmatmul.bf16.gmra.mxu0 %v2506
      %v2534 = vpop.f32.mrf.mxu0
      %v2535 = vadd.f32 0.0, %v2534
      %v2536 = vpop.f32.mrf.mxu0
      %v2537 = vadd.f32 0.0, %v2536
      %2538 = vmatmul.bf16.gmra.mxu0 %v2508
      %v2539 = vpop.f32.mrf.mxu0
      %v2540 = vadd.f32 0.0, %v2539
      %v2541 = vpop.f32.mrf.mxu0
      %v2542 = vadd.f32 0.0, %v2541
      %2543 = vmatmul.bf16.gmra.mxu0 %v2510
      %v2544 = vpop.f32.mrf.mxu0
      %v2545 = vadd.f32 0.0, %v2544
      %v2546 = vpop.f32.mrf.mxu0
      %v2547 = vadd.f32 0.0, %v2546
      %2548 = vdwg.mxu0
      %2549 = vmatpush.bf16.msra.mxu0 %v1149
      %2550 = vmatpush.bf16.msra.mxu0 %v1148
      %2551 = vmatpush.bf16.msra.mxu0 %v1147
      %2552 = vmatpush.bf16.msra.mxu0 %v1146
      %2553 = vmatpush.bf16.msra.mxu0 %v1145
      %2554 = vmatpush.bf16.msra.mxu0 %v1144
      %2555 = vmatpush.bf16.msra.mxu0 %v1143
      %2556 = vmatpush.bf16.msra.mxu0 %v1142
      %2557 = vmatmul.bf16.gmra.mxu0 %v2505
      %v2558 = vpop.f32.mrf.mxu0
      %v2559 = vadd.f32 %v2530, %v2558
      %v2560 = vpop.f32.mrf.mxu0
      %v2561 = vadd.f32 %v2532, %v2560
      %2562 = vmatmul.bf16.gmra.mxu0 %v2507
      %v2563 = vpop.f32.mrf.mxu0
      %v2564 = vadd.f32 %v2535, %v2563
      %v2565 = vpop.f32.mrf.mxu0
      %v2566 = vadd.f32 %v2537, %v2565
      %2567 = vmatmul.bf16.gmra.mxu0 %v2509
      %v2568 = vpop.f32.mrf.mxu0
      %v2569 = vadd.f32 %v2540, %v2568
      %v2570 = vpop.f32.mrf.mxu0
      %v2571 = vadd.f32 %v2542, %v2570
      %2572 = vmatmul.bf16.gmra.mxu0 %v2511
      %v2573 = vpop.f32.mrf.mxu0
      %v2574 = vadd.f32 %v2545, %v2573
      %v2575 = vpop.f32.mrf.mxu0
      %v2576 = vadd.f32 %v2547, %v2575
      %2577 = vdwg.mxu0
      %v2578 = vpack.c.bf16 %v2561, %v2559
      %v2579 = vpack.c.bf16 %v2566, %v2564
      %v2580 = vpack.c.bf16 %v2571, %v2569
      %v2581 = vpack.c.bf16 %v2576, %v2574
      %s2582 = scalar_lea.vmem %s2, 32
      %v2583 = vld [vmem:[%s2582] sm:$0xf]
      %v2585 = vsel %vm1261, %v2578, 0
      %v2588 = vsel %vm1261, %v2579, 0
      %v2591 = vsel %vm1261, %v2580, 0
      %v2594 = vsel %vm1261, %v2581, 0
      %v2597 = vsel %vm1274, %v2583, 0
      %2599 = vmatpush.bf16.msra.mxu0 0
      %2600 = vmatpush.bf16.msra.mxu0 0
      %2601 = vmatpush.bf16.msra.mxu0 0
      %2602 = vmatpush.bf16.msra.mxu0 0
      %2603 = vmatpush.bf16.msra.mxu0 0
      %2604 = vmatpush.bf16.msra.mxu0 0
      %2605 = vmatpush.bf16.msra.mxu0 0
      %2606 = vmatpush.bf16.msra.mxu0 %v2597
      %2607 = vmatmul.bf16.gmra.mxu0 %v2585
      %v2608 = vpop.f32.mrf.mxu0
      %v2609 = vadd.f32 0.0, %v2608
      %v2610 = vpop.f32.mrf.mxu0
      %v2611 = vadd.f32 0.0, %v2610
      %2612 = vmatmul.bf16.gmra.mxu0 %v2588
      %v2613 = vpop.f32.mrf.mxu0
      %v2614 = vadd.f32 0.0, %v2613
      %v2615 = vpop.f32.mrf.mxu0
      %v2616 = vadd.f32 0.0, %v2615
      %2617 = vmatmul.bf16.gmra.mxu0 %v2591
      %v2618 = vpop.f32.mrf.mxu0
      %v2619 = vadd.f32 0.0, %v2618
      %v2620 = vpop.f32.mrf.mxu0
      %v2621 = vadd.f32 0.0, %v2620
      %2622 = vmatmul.bf16.gmra.mxu0 %v2594
      %v2623 = vpop.f32.mrf.mxu0
      %v2624 = vadd.f32 0.0, %v2623
      %v2625 = vpop.f32.mrf.mxu0
      %v2626 = vadd.f32 0.0, %v2625
      %2627 = vdwg.mxu0
      %v2628 = vadd.f32 %v2463, %v2609
      %v2629 = vadd.f32 %v2464, %v2611
      %v2630 = vadd.f32 %v2465, %v2614
      %v2631 = vadd.f32 %v2466, %v2616
      %v2632 = vadd.f32 %v2467, %v2619
      %v2633 = vadd.f32 %v2468, %v2621
      %v2634 = vadd.f32 %v2469, %v2624
      %v2635 = vadd.f32 %v2470, %v2626
      %v2636 = vmax.f32 %v2628, 0.0
      %v2637 = vmax.f32 %v2629, 0.0
      %v2638 = vmax.f32 %v2630, 0.0
      %v2639 = vmax.f32 %v2631, 0.0
      %v2640 = vmax.f32 %v2632, 0.0
      %v2641 = vmax.f32 %v2633, 0.0
      %v2642 = vmax.f32 %v2634, 0.0
      %v2643 = vmax.f32 %v2635, 0.0
      %v2644 = vld [vmem:[%s15 + $0x2] sm:$0x1]
      %v2645 = vpack.c.bf16 %v2637, %v2636
      %v2646 = vpack.c.bf16 %v2639, %v2638
      %v2647 = vpack.c.bf16 %v2641, %v2640
      %v2648 = vpack.c.bf16 %v2643, %v2642
      %v2649 = vld [vmem:[%s17] sm:$0xf]
      %v2650 = vld [vmem:[%s17 + $0x4] sm:$0xf]
      %v2653 = vunpack.c.l.b16 %v2649
      %v2654 = vunpack.c.l.b16 %v2650
      %v2655 = vpack.c.b16 %v2654, %v2653
      %vm2656 = vcmask 523264
      %v2658 = vsel %vm2656, %v2655, 0
      %2660 = vmatpush.bf16.msra.mxu0 0
      %2661 = vmatpush.bf16.msra.mxu0 0
      %2662 = vmatpush.bf16.msra.mxu0 0
      %2663 = vmatpush.bf16.msra.mxu0 0
      %2664 = vmatpush.bf16.msra.mxu0 %v2648
      %2665 = vmatpush.bf16.msra.mxu0 %v2647
      %2666 = vmatpush.bf16.msra.mxu0 %v2646
      %2667 = vmatpush.bf16.msra.mxu0 %v2645
      %2668 = vmatmul.bf16.gmra.mxu0 %v2658
      %v2669 = vpop.f32.mrf.mxu0
      %v2670 = vadd.f32 0.0, %v2669
      %v2671 = vpop.f32.mrf.mxu0
      %v2672 = vadd.f32 0.0, %v2671
      %2673 = vdwg.mxu0
      %v2674 = vpack.c.bf16 %v2672, %v2670
      %v2675 = vld [vmem:[%s3] sm:$0xf]
      %v2676 = vld [vmem:[%s3 + $0x4] sm:$0xf]
      %v2679 = vunpack.c.l.b16 %v2675
      %v2680 = vunpack.c.l.b16 %v2676
      %v2681 = vpack.c.b16 %v2680, %v2679
      %vm2683 = vcmask 130048
      %v2685 = vsel %vm2683, %v2674, 0
      %2687 = vmatpush.bf16.msra.mxu0 0
      %2688 = vmatpush.bf16.msra.mxu0 0
      %2689 = vmatpush.bf16.msra.mxu0 0
      %2690 = vmatpush.bf16.msra.mxu0 0
      %2691 = vmatpush.bf16.msra.mxu0 0
      %2692 = vmatpush.bf16.msra.mxu0 0
      %2693 = vmatpush.bf16.msra.mxu0 0
      %2694 = vmatpush.bf16.msra.mxu0 %v2681
      %2695 = vmatmul.bf16.gmra.mxu0 %v2685
      %v2696 = vpop.f32.mrf.mxu0
      %v2697 = vadd.f32 0.0, %v2696
      %v2698 = vpop.f32.mrf.mxu0
      %v2699 = vadd.f32 0.0, %v2698
      %2700 = vdwg.mxu0
      %v2701 = vperm.slane %v2644, 0
      %v2702 = vadd.f32 %v2701, %v2697
      %v2703 = vadd.f32 %v2701, %v2699
      %s2704 = scalar_lea.vmem %s17, 8
      %v2705 = vld [vmem:[%s2704] sm:$0xf]
      %v2706 = vld [vmem:[%s2704 + $0x4] sm:$0xf]
      %v2709 = vunpack.c.l.b16 %v2705
      %v2710 = vunpack.c.l.b16 %v2706
      %v2711 = vpack.c.b16 %v2710, %v2709
      %v2713 = vsel %vm2656, %v2711, 0
      %2715 = vmatpush.bf16.msra.mxu0 0
      %2716 = vmatpush.bf16.msra.mxu0 0
      %2717 = vmatpush.bf16.msra.mxu0 0
      %2718 = vmatpush.bf16.msra.mxu0 0
      %2719 = vmatpush.bf16.msra.mxu0 %v2648
      %2720 = vmatpush.bf16.msra.mxu0 %v2647
      %2721 = vmatpush.bf16.msra.mxu0 %v2646
      %2722 = vmatpush.bf16.msra.mxu0 %v2645
      %2723 = vmatmul.bf16.gmra.mxu0 %v2713
      %v2724 = vpop.f32.mrf.mxu0
      %v2725 = vadd.f32 0.0, %v2724
      %v2726 = vpop.f32.mrf.mxu0
      %v2727 = vadd.f32 0.0, %v2726
      %2728 = vdwg.mxu0
      %v2729 = vpack.c.bf16 %v2727, %v2725
      %s2730 = scalar_lea.vmem %s3, 8
      %v2731 = vld [vmem:[%s2730] sm:$0xf]
      %v2732 = vld [vmem:[%s2730 + $0x4] sm:$0xf]
      %v2735 = vunpack.c.l.b16 %v2731
      %v2736 = vunpack.c.l.b16 %v2732
      %v2737 = vpack.c.b16 %v2736, %v2735
      %v2740 = vsel %vm2683, %v2729, 0
      %2742 = vmatpush.bf16.msra.mxu0 0
      %2743 = vmatpush.bf16.msra.mxu0 0
      %2744 = vmatpush.bf16.msra.mxu0 0
      %2745 = vmatpush.bf16.msra.mxu0 0
      %2746 = vmatpush.bf16.msra.mxu0 0
      %2747 = vmatpush.bf16.msra.mxu0 0
      %2748 = vmatpush.bf16.msra.mxu0 0
      %2749 = vmatpush.bf16.msra.mxu0 %v2737
      %2750 = vmatmul.bf16.gmra.mxu0 %v2740
      %v2751 = vpop.f32.mrf.mxu0
      %v2752 = vadd.f32 0.0, %v2751
      %v2753 = vpop.f32.mrf.mxu0
      %v2754 = vadd.f32 0.0, %v2753
      %2755 = vdwg.mxu0
      %v2756 = vadd.f32 %v2702, %v2752
      %v2757 = vadd.f32 %v2703, %v2754
      %s2758 = scalar_lea.vmem %s17, 16
      %v2759 = vld [vmem:[%s2758] sm:$0xf]
      %v2760 = vld [vmem:[%s2758 + $0x4] sm:$0xf]
      %v2763 = vunpack.c.l.b16 %v2759
      %v2764 = vunpack.c.l.b16 %v2760
      %v2765 = vpack.c.b16 %v2764, %v2763
      %v2767 = vsel %vm2656, %v2765, 0
      %2769 = vmatpush.bf16.msra.mxu0 0
      %2770 = vmatpush.bf16.msra.mxu0 0
      %2771 = vmatpush.bf16.msra.mxu0 0
      %2772 = vmatpush.bf16.msra.mxu0 0
      %2773 = vmatpush.bf16.msra.mxu0 %v2648
      %2774 = vmatpush.bf16.msra.mxu0 %v2647
      %2775 = vmatpush.bf16.msra.mxu0 %v2646
      %2776 = vmatpush.bf16.msra.mxu0 %v2645
      %2777 = vmatmul.bf16.gmra.mxu0 %v2767
      %v2778 = vpop.f32.mrf.mxu0
      %v2779 = vadd.f32 0.0, %v2778
      %v2780 = vpop.f32.mrf.mxu0
      %v2781 = vadd.f32 0.0, %v2780
      %2782 = vdwg.mxu0
      %v2783 = vpack.c.bf16 %v2781, %v2779
      %s2784 = scalar_lea.vmem %s3, 16
      %v2785 = vld [vmem:[%s2784] sm:$0xf]
      %v2786 = vld [vmem:[%s2784 + $0x4] sm:$0xf]
      %v2789 = vunpack.c.l.b16 %v2785
      %v2790 = vunpack.c.l.b16 %v2786
      %v2791 = vpack.c.b16 %v2790, %v2789
      %v2794 = vsel %vm2683, %v2783, 0
      %2796 = vmatpush.bf16.msra.mxu0 0
      %2797 = vmatpush.bf16.msra.mxu0 0
      %2798 = vmatpush.bf16.msra.mxu0 0
      %2799 = vmatpush.bf16.msra.mxu0 0
      %2800 = vmatpush.bf16.msra.mxu0 0
      %2801 = vmatpush.bf16.msra.mxu0 0
      %2802 = vmatpush.bf16.msra.mxu0 0
      %2803 = vmatpush.bf16.msra.mxu0 %v2791
      %2804 = vmatmul.bf16.gmra.mxu0 %v2794
      %v2805 = vpop.f32.mrf.mxu0
      %v2806 = vadd.f32 0.0, %v2805
      %v2807 = vpop.f32.mrf.mxu0
      %v2808 = vadd.f32 0.0, %v2807
      %2809 = vdwg.mxu0
      %v2810 = vadd.f32 %v2756, %v2806
      %v2811 = vadd.f32 %v2757, %v2808
      %s2812 = scalar_lea.vmem %s17, 24
      %v2813 = vld [vmem:[%s2812] sm:$0xf]
      %v2814 = vld [vmem:[%s2812 + $0x4] sm:$0xf]
      %v2817 = vunpack.c.l.b16 %v2813
      %v2818 = vunpack.c.l.b16 %v2814
      %v2819 = vpack.c.b16 %v2818, %v2817
      %v2821 = vsel %vm2656, %v2819, 0
      %2823 = vmatpush.bf16.msra.mxu0 0
      %2824 = vmatpush.bf16.msra.mxu0 0
      %2825 = vmatpush.bf16.msra.mxu0 0
      %2826 = vmatpush.bf16.msra.mxu0 0
      %2827 = vmatpush.bf16.msra.mxu0 %v2648
      %2828 = vmatpush.bf16.msra.mxu0 %v2647
      %2829 = vmatpush.bf16.msra.mxu0 %v2646
      %2830 = vmatpush.bf16.msra.mxu0 %v2645
      %2831 = vmatmul.bf16.gmra.mxu0 %v2821
      %v2832 = vpop.f32.mrf.mxu0
      %v2833 = vadd.f32 0.0, %v2832
      %v2834 = vpop.f32.mrf.mxu0
      %v2835 = vadd.f32 0.0, %v2834
      %2836 = vdwg.mxu0
      %v2837 = vpack.c.bf16 %v2835, %v2833
      %s2838 = scalar_lea.vmem %s3, 24
      %v2839 = vld [vmem:[%s2838] sm:$0xf]
      %v2840 = vld [vmem:[%s2838 + $0x4] sm:$0xf]
      %v2843 = vunpack.c.l.b16 %v2839
      %v2844 = vunpack.c.l.b16 %v2840
      %v2845 = vpack.c.b16 %v2844, %v2843
      %v2848 = vsel %vm2683, %v2837, 0
      %2850 = vmatpush.bf16.msra.mxu0 0
      %2851 = vmatpush.bf16.msra.mxu0 0
      %2852 = vmatpush.bf16.msra.mxu0 0
      %2853 = vmatpush.bf16.msra.mxu0 0
      %2854 = vmatpush.bf16.msra.mxu0 0
      %2855 = vmatpush.bf16.msra.mxu0 0
      %2856 = vmatpush.bf16.msra.mxu0 0
      %2857 = vmatpush.bf16.msra.mxu0 %v2845
      %2858 = vmatmul.bf16.gmra.mxu0 %v2848
      %v2859 = vpop.f32.mrf.mxu0
      %v2860 = vadd.f32 0.0, %v2859
      %v2861 = vpop.f32.mrf.mxu0
      %v2862 = vadd.f32 0.0, %v2861
      %2863 = vdwg.mxu0
      %v2864 = vadd.f32 %v2810, %v2860
      %v2865 = vadd.f32 %v2811, %v2862
      %s2866 = scalar_lea.vmem %s17, 32
      %v2867 = vld [vmem:[%s2866] sm:$0xf]
      %v2868 = vld [vmem:[%s2866 + $0x4] sm:$0xf]
      %v2871 = vunpack.c.l.b16 %v2867
      %v2872 = vunpack.c.l.b16 %v2868
      %v2873 = vpack.c.b16 %v2872, %v2871
      %v2875 = vsel %vm2656, %v2873, 0
      %2877 = vmatpush.bf16.msra.mxu0 0
      %2878 = vmatpush.bf16.msra.mxu0 0
      %2879 = vmatpush.bf16.msra.mxu0 0
      %2880 = vmatpush.bf16.msra.mxu0 0
      %2881 = vmatpush.bf16.msra.mxu0 %v2648
      %2882 = vmatpush.bf16.msra.mxu0 %v2647
      %2883 = vmatpush.bf16.msra.mxu0 %v2646
      %2884 = vmatpush.bf16.msra.mxu0 %v2645
      %2885 = vmatmul.bf16.gmra.mxu0 %v2875
      %v2886 = vpop.f32.mrf.mxu0
      %v2887 = vadd.f32 0.0, %v2886
      %v2888 = vpop.f32.mrf.mxu0
      %v2889 = vadd.f32 0.0, %v2888
      %2890 = vdwg.mxu0
      %v2891 = vpack.c.bf16 %v2889, %v2887
      %s2892 = scalar_lea.vmem %s3, 32
      %v2893 = vld [vmem:[%s2892] sm:$0xf]
      %v2894 = vld [vmem:[%s2892 + $0x4] sm:$0xf]
      %v2897 = vunpack.c.l.b16 %v2893
      %v2898 = vunpack.c.l.b16 %v2894
      %v2899 = vpack.c.b16 %v2898, %v2897
      %v2902 = vsel %vm2683, %v2891, 0
      %2904 = vmatpush.bf16.msra.mxu0 0
      %2905 = vmatpush.bf16.msra.mxu0 0
      %2906 = vmatpush.bf16.msra.mxu0 0
      %2907 = vmatpush.bf16.msra.mxu0 0
      %2908 = vmatpush.bf16.msra.mxu0 0
      %2909 = vmatpush.bf16.msra.mxu0 0
      %2910 = vmatpush.bf16.msra.mxu0 0
      %2911 = vmatpush.bf16.msra.mxu0 %v2899
      %2912 = vmatmul.bf16.gmra.mxu0 %v2902
      %v2913 = vpop.f32.mrf.mxu0
      %v2914 = vadd.f32 0.0, %v2913
      %v2915 = vpop.f32.mrf.mxu0
      %v2916 = vadd.f32 0.0, %v2915
      %2917 = vdwg.mxu0
      %v2918 = vadd.f32 %v2864, %v2914
      %v2919 = vadd.f32 %v2865, %v2916
      %s2920 = scalar_lea.vmem %s17, 40
      %v2921 = vld [vmem:[%s2920] sm:$0xf]
      %v2922 = vld [vmem:[%s2920 + $0x4] sm:$0xf]
      %v2925 = vunpack.c.l.b16 %v2921
      %v2926 = vunpack.c.l.b16 %v2922
      %v2927 = vpack.c.b16 %v2926, %v2925
      %v2929 = vsel %vm2656, %v2927, 0
      %2931 = vmatpush.bf16.msra.mxu0 0
      %2932 = vmatpush.bf16.msra.mxu0 0
      %2933 = vmatpush.bf16.msra.mxu0 0
      %2934 = vmatpush.bf16.msra.mxu0 0
      %2935 = vmatpush.bf16.msra.mxu0 %v2648
      %2936 = vmatpush.bf16.msra.mxu0 %v2647
      %2937 = vmatpush.bf16.msra.mxu0 %v2646
      %2938 = vmatpush.bf16.msra.mxu0 %v2645
      %2939 = vmatmul.bf16.gmra.mxu0 %v2929
      %v2940 = vpop.f32.mrf.mxu0
      %v2941 = vadd.f32 0.0, %v2940
      %v2942 = vpop.f32.mrf.mxu0
      %v2943 = vadd.f32 0.0, %v2942
      %2944 = vdwg.mxu0
      %v2945 = vpack.c.bf16 %v2943, %v2941
      %s2946 = scalar_lea.vmem %s3, 40
      %v2947 = vld [vmem:[%s2946] sm:$0xf]
      %v2948 = vld [vmem:[%s2946 + $0x4] sm:$0xf]
      %v2951 = vunpack.c.l.b16 %v2947
      %v2952 = vunpack.c.l.b16 %v2948
      %v2953 = vpack.c.b16 %v2952, %v2951
      %v2956 = vsel %vm2683, %v2945, 0
      %2958 = vmatpush.bf16.msra.mxu0 0
      %2959 = vmatpush.bf16.msra.mxu0 0
      %2960 = vmatpush.bf16.msra.mxu0 0
      %2961 = vmatpush.bf16.msra.mxu0 0
      %2962 = vmatpush.bf16.msra.mxu0 0
      %2963 = vmatpush.bf16.msra.mxu0 0
      %2964 = vmatpush.bf16.msra.mxu0 0
      %2965 = vmatpush.bf16.msra.mxu0 %v2953
      %2966 = vmatmul.bf16.gmra.mxu0 %v2956
      %v2967 = vpop.f32.mrf.mxu0
      %v2968 = vadd.f32 0.0, %v2967
      %v2969 = vpop.f32.mrf.mxu0
      %v2970 = vadd.f32 0.0, %v2969
      %2971 = vdwg.mxu0
      %v2972 = vadd.f32 %v2918, %v2968
      %v2973 = vadd.f32 %v2919, %v2970
      %s2974 = scalar_lea.vmem %s17, 48
      %v2975 = vld [vmem:[%s2974] sm:$0xf]
      %v2976 = vld [vmem:[%s2974 + $0x4] sm:$0xf]
      %v2979 = vunpack.c.l.b16 %v2975
      %v2980 = vunpack.c.l.b16 %v2976
      %v2981 = vpack.c.b16 %v2980, %v2979
      %v2983 = vsel %vm2656, %v2981, 0
      %2985 = vmatpush.bf16.msra.mxu0 0
      %2986 = vmatpush.bf16.msra.mxu0 0
      %2987 = vmatpush.bf16.msra.mxu0 0
      %2988 = vmatpush.bf16.msra.mxu0 0
      %2989 = vmatpush.bf16.msra.mxu0 %v2648
      %2990 = vmatpush.bf16.msra.mxu0 %v2647
      %2991 = vmatpush.bf16.msra.mxu0 %v2646
      %2992 = vmatpush.bf16.msra.mxu0 %v2645
      %2993 = vmatmul.bf16.gmra.mxu0 %v2983
      %v2994 = vpop.f32.mrf.mxu0
      %v2995 = vadd.f32 0.0, %v2994
      %v2996 = vpop.f32.mrf.mxu0
      %v2997 = vadd.f32 0.0, %v2996
      %2998 = vdwg.mxu0
      %v2999 = vpack.c.bf16 %v2997, %v2995
      %s3000 = scalar_lea.vmem %s3, 48
      %v3001 = vld [vmem:[%s3000] sm:$0xf]
      %v3002 = vld [vmem:[%s3000 + $0x4] sm:$0xf]
      %v3005 = vunpack.c.l.b16 %v3001
      %v3006 = vunpack.c.l.b16 %v3002
      %v3007 = vpack.c.b16 %v3006, %v3005
      %v3010 = vsel %vm2683, %v2999, 0
      %3012 = vmatpush.bf16.msra.mxu0 0
      %3013 = vmatpush.bf16.msra.mxu0 0
      %3014 = vmatpush.bf16.msra.mxu0 0
      %3015 = vmatpush.bf16.msra.mxu0 0
      %3016 = vmatpush.bf16.msra.mxu0 0
      %3017 = vmatpush.bf16.msra.mxu0 0
      %3018 = vmatpush.bf16.msra.mxu0 0
      %3019 = vmatpush.bf16.msra.mxu0 %v3007
      %3020 = vmatmul.bf16.gmra.mxu0 %v3010
      %v3021 = vpop.f32.mrf.mxu0
      %v3022 = vadd.f32 0.0, %v3021
      %v3023 = vpop.f32.mrf.mxu0
      %v3024 = vadd.f32 0.0, %v3023
      %3025 = vdwg.mxu0
      %v3026 = vadd.f32 %v2972, %v3022
      %v3027 = vadd.f32 %v2973, %v3024
      %s3028 = scalar_lea.vmem %s17, 56
      %v3029 = vld [vmem:[%s3028] sm:$0xf]
      %v3030 = vld [vmem:[%s3028 + $0x4] sm:$0xf]
      %v3033 = vunpack.c.l.b16 %v3029
      %v3034 = vunpack.c.l.b16 %v3030
      %v3035 = vpack.c.b16 %v3034, %v3033
      %v3037 = vsel %vm2656, %v3035, 0
      %3039 = vmatpush.bf16.msra.mxu0 0
      %3040 = vmatpush.bf16.msra.mxu0 0
      %3041 = vmatpush.bf16.msra.mxu0 0
      %3042 = vmatpush.bf16.msra.mxu0 0
      %3043 = vmatpush.bf16.msra.mxu0 %v2648
      %3044 = vmatpush.bf16.msra.mxu0 %v2647
      %3045 = vmatpush.bf16.msra.mxu0 %v2646
      %3046 = vmatpush.bf16.msra.mxu0 %v2645
      %3047 = vmatmul.bf16.gmra.mxu0 %v3037
      %v3048 = vpop.f32.mrf.mxu0
      %v3049 = vadd.f32 0.0, %v3048
      %v3050 = vpop.f32.mrf.mxu0
      %v3051 = vadd.f32 0.0, %v3050
      %3052 = vdwg.mxu0
      %v3053 = vpack.c.bf16 %v3051, %v3049
      %s3054 = scalar_lea.vmem %s3, 56
      %v3055 = vld [vmem:[%s3054] sm:$0xf]
      %v3056 = vld [vmem:[%s3054 + $0x4] sm:$0xf]
      %v3059 = vunpack.c.l.b16 %v3055
      %v3060 = vunpack.c.l.b16 %v3056
      %v3061 = vpack.c.b16 %v3060, %v3059
      %v3064 = vsel %vm2683, %v3053, 0
      %3066 = vmatpush.bf16.msra.mxu0 0
      %3067 = vmatpush.bf16.msra.mxu0 0
      %3068 = vmatpush.bf16.msra.mxu0 0
      %3069 = vmatpush.bf16.msra.mxu0 0
      %3070 = vmatpush.bf16.msra.mxu0 0
      %3071 = vmatpush.bf16.msra.mxu0 0
      %3072 = vmatpush.bf16.msra.mxu0 0
      %3073 = vmatpush.bf16.msra.mxu0 %v3061
      %3074 = vmatmul.bf16.gmra.mxu0 %v3064
      %v3075 = vpop.f32.mrf.mxu0
      %v3076 = vadd.f32 0.0, %v3075
      %v3077 = vpop.f32.mrf.mxu0
      %v3078 = vadd.f32 0.0, %v3077
      %3079 = vdwg.mxu0
      %v3080 = vadd.f32 %v3026, %v3076
      %v3081 = vadd.f32 %v3027, %v3078
      %s3082 = scalar_lea.vmem %s17, 64
      %v3083 = vld [vmem:[%s3082] sm:$0xf]
      %v3084 = vld [vmem:[%s3082 + $0x4] sm:$0xf]
      %v3087 = vunpack.c.l.b16 %v3083
      %v3088 = vunpack.c.l.b16 %v3084
      %v3089 = vpack.c.b16 %v3088, %v3087
      %v3091 = vsel %vm2656, %v3089, 0
      %3093 = vmatpush.bf16.msra.mxu0 0
      %3094 = vmatpush.bf16.msra.mxu0 0
      %3095 = vmatpush.bf16.msra.mxu0 0
      %3096 = vmatpush.bf16.msra.mxu0 0
      %3097 = vmatpush.bf16.msra.mxu0 %v2648
      %3098 = vmatpush.bf16.msra.mxu0 %v2647
      %3099 = vmatpush.bf16.msra.mxu0 %v2646
      %3100 = vmatpush.bf16.msra.mxu0 %v2645
      %3101 = vmatmul.bf16.gmra.mxu0 %v3091
      %v3102 = vpop.f32.mrf.mxu0
      %v3103 = vadd.f32 0.0, %v3102
      %v3104 = vpop.f32.mrf.mxu0
      %v3105 = vadd.f32 0.0, %v3104
      %3106 = vdwg.mxu0
      %v3107 = vpack.c.bf16 %v3105, %v3103
      %s3108 = scalar_lea.vmem %s3, 64
      %v3109 = vld [vmem:[%s3108] sm:$0xf]
      %v3110 = vld [vmem:[%s3108 + $0x4] sm:$0xf]
      %v3113 = vunpack.c.l.b16 %v3109
      %v3114 = vunpack.c.l.b16 %v3110
      %v3115 = vpack.c.b16 %v3114, %v3113
      %v3118 = vsel %vm2683, %v3107, 0
      %3120 = vmatpush.bf16.msra.mxu0 0
      %3121 = vmatpush.bf16.msra.mxu0 0
      %3122 = vmatpush.bf16.msra.mxu0 0
      %3123 = vmatpush.bf16.msra.mxu0 0
      %3124 = vmatpush.bf16.msra.mxu0 0
      %3125 = vmatpush.bf16.msra.mxu0 0
      %3126 = vmatpush.bf16.msra.mxu0 0
      %3127 = vmatpush.bf16.msra.mxu0 %v3115
      %3128 = vmatmul.bf16.gmra.mxu0 %v3118
      %v3129 = vpop.f32.mrf.mxu0
      %v3130 = vadd.f32 0.0, %v3129
      %v3131 = vpop.f32.mrf.mxu0
      %v3132 = vadd.f32 0.0, %v3131
      %3133 = vdwg.mxu0
      %v3134 = vadd.f32 %v3080, %v3130
      %v3135 = vadd.f32 %v3081, %v3132
      %v3136 = vmax.f32 %v3134, 0.0
      %v3137 = vmax.f32 %v3135, 0.0
      %v3138 = vld [vmem:[%s15 + $0x3] sm:$0x1]
      %v3139 = vpack.c.bf16 %v3137, %v3136
      %v3140 = vld [vmem:[%s18] sm:$0x3]
      %v3142 = vsel %vm2683, %v3140, 0
      %3144 = vmatpush.bf16.msra.mxu0 0
      %3145 = vmatpush.bf16.msra.mxu0 0
      %3146 = vmatpush.bf16.msra.mxu0 0
      %3147 = vmatpush.bf16.msra.mxu0 0
      %3148 = vmatpush.bf16.msra.mxu0 0
      %3149 = vmatpush.bf16.msra.mxu0 0
      %3150 = vmatpush.bf16.msra.mxu0 0
      %3151 = vmatpush.bf16.msra.mxu0 %v3139
      %3152 = vmatmul.bf16.gmra.mxu0 %v3142
      %v3153 = vpop.f32.mrf.mxu0
      %v3154 = vadd.f32 0.0, %v3153
      %v3155 = vpop.f32.mrf.mxu0
      %3156 = vdwg.mxu0
      %v3157 = vpack.c.bf16 %v3154, %v3154
      %v3158 = vld [vmem:[%s4] sm:$0xf]
      %v3159 = vld [vmem:[%s4 + $0x4] sm:$0xf]
      %v3160 = vld [vmem:[%s4 + $0x8] sm:$0xf]
      %v3161 = vld [vmem:[%s4 + $0xc] sm:$0xf]
      %v3166 = vunpack.c.l.b16 %v3158
      %v3167 = vunpack.c.l.b16 %v3159
      %v3168 = vunpack.c.l.b16 %v3160
      %v3169 = vunpack.c.l.b16 %v3161
      %v3170 = vpack.c.b16 %v3167, %v3166
      %v3171 = vpack.c.b16 %v3169, %v3168
      %vm3174 = vcmask 261120
      %v3176 = vsel %vm3174, %v3157, 0
      %3178 = vmatpush.bf16.msra.mxu0 0
      %3179 = vmatpush.bf16.msra.mxu0 0
      %3180 = vmatpush.bf16.msra.mxu0 0
      %3181 = vmatpush.bf16.msra.mxu0 0
      %3182 = vmatpush.bf16.msra.mxu0 0
      %3183 = vmatpush.bf16.msra.mxu0 0
      %3184 = vmatpush.bf16.msra.mxu0 %v3171
      %3185 = vmatpush.bf16.msra.mxu0 %v3170
      %3186 = vmatmul.bf16.gmra.mxu0 %v3176
      %v3187 = vpop.f32.mrf.mxu0
      %v3188 = vadd.f32 0.0, %v3187
      %v3189 = vpop.f32.mrf.mxu0
      %3190 = vdwg.mxu0
      %v3191 = vperm.slane %v3138, 0
      %v3192 = vadd.f32 %v3191, %v3188
      %s3193 = scalar_lea.vmem %s18, 2
      %v3194 = vld [vmem:[%s3193] sm:$0x3]
      %v3196 = vsel %vm2683, %v3194, 0
      %3198 = vmatpush.bf16.msra.mxu0 0
      %3199 = vmatpush.bf16.msra.mxu0 0
      %3200 = vmatpush.bf16.msra.mxu0 0
      %3201 = vmatpush.bf16.msra.mxu0 0
      %3202 = vmatpush.bf16.msra.mxu0 0
      %3203 = vmatpush.bf16.msra.mxu0 0
      %3204 = vmatpush.bf16.msra.mxu0 0
      %3205 = vmatpush.bf16.msra.mxu0 %v3139
      %3206 = vmatmul.bf16.gmra.mxu0 %v3196
      %v3207 = vpop.f32.mrf.mxu0
      %v3208 = vadd.f32 0.0, %v3207
      %v3209 = vpop.f32.mrf.mxu0
      %3210 = vdwg.mxu0
      %v3211 = vpack.c.bf16 %v3208, %v3208
      %s3212 = scalar_lea.vmem %s4, 16
      %v3213 = vld [vmem:[%s3212] sm:$0xf]
      %v3214 = vld [vmem:[%s3212 + $0x4] sm:$0xf]
      %v3215 = vld [vmem:[%s3212 + $0x8] sm:$0xf]
      %v3216 = vld [vmem:[%s3212 + $0xc] sm:$0xf]
      %v3221 = vunpack.c.l.b16 %v3213
      %v3222 = vunpack.c.l.b16 %v3214
      %v3223 = vunpack.c.l.b16 %v3215
      %v3224 = vunpack.c.l.b16 %v3216
      %v3225 = vpack.c.b16 %v3222, %v3221
      %v3226 = vpack.c.b16 %v3224, %v3223
      %v3230 = vsel %vm3174, %v3211, 0
      %3232 = vmatpush.bf16.msra.mxu0 0
      %3233 = vmatpush.bf16.msra.mxu0 0
      %3234 = vmatpush.bf16.msra.mxu0 0
      %3235 = vmatpush.bf16.msra.mxu0 0
      %3236 = vmatpush.bf16.msra.mxu0 0
      %3237 = vmatpush.bf16.msra.mxu0 0
      %3238 = vmatpush.bf16.msra.mxu0 %v3226
      %3239 = vmatpush.bf16.msra.mxu0 %v3225
      %3240 = vmatmul.bf16.gmra.mxu0 %v3230
      %v3241 = vpop.f32.mrf.mxu0
      %v3242 = vadd.f32 0.0, %v3241
      %v3243 = vpop.f32.mrf.mxu0
      %3244 = vdwg.mxu0
      %v3245 = vadd.f32 %v3192, %v3242
      %s3246 = scalar_lea.vmem %s18, 4
      %v3247 = vld [vmem:[%s3246] sm:$0x3]
      %v3249 = vsel %vm2683, %v3247, 0
      %3251 = vmatpush.bf16.msra.mxu0 0
      %3252 = vmatpush.bf16.msra.mxu0 0
      %3253 = vmatpush.bf16.msra.mxu0 0
      %3254 = vmatpush.bf16.msra.mxu0 0
      %3255 = vmatpush.bf16.msra.mxu0 0
      %3256 = vmatpush.bf16.msra.mxu0 0
      %3257 = vmatpush.bf16.msra.mxu0 0
      %3258 = vmatpush.bf16.msra.mxu0 %v3139
      %3259 = vmatmul.bf16.gmra.mxu0 %v3249
      %v3260 = vpop.f32.mrf.mxu0
      %v3261 = vadd.f32 0.0, %v3260
      %v3262 = vpop.f32.mrf.mxu0
      %3263 = vdwg.mxu0
      %v3264 = vpack.c.bf16 %v3261, %v3261
      %s3265 = scalar_lea.vmem %s4, 32
      %v3266 = vld [vmem:[%s3265] sm:$0xf]
      %v3267 = vld [vmem:[%s3265 + $0x4] sm:$0xf]
      %v3268 = vld [vmem:[%s3265 + $0x8] sm:$0xf]
      %v3269 = vld [vmem:[%s3265 + $0xc] sm:$0xf]
      %v3274 = vunpack.c.l.b16 %v3266
      %v3275 = vunpack.c.l.b16 %v3267
      %v3276 = vunpack.c.l.b16 %v3268
      %v3277 = vunpack.c.l.b16 %v3269
      %v3278 = vpack.c.b16 %v3275, %v3274
      %v3279 = vpack.c.b16 %v3277, %v3276
      %v3283 = vsel %vm3174, %v3264, 0
      %3285 = vmatpush.bf16.msra.mxu0 0
      %3286 = vmatpush.bf16.msra.mxu0 0
      %3287 = vmatpush.bf16.msra.mxu0 0
      %3288 = vmatpush.bf16.msra.mxu0 0
      %3289 = vmatpush.bf16.msra.mxu0 0
      %3290 = vmatpush.bf16.msra.mxu0 0
      %3291 = vmatpush.bf16.msra.mxu0 %v3279
      %3292 = vmatpush.bf16.msra.mxu0 %v3278
      %3293 = vmatmul.bf16.gmra.mxu0 %v3283
      %v3294 = vpop.f32.mrf.mxu0
      %v3295 = vadd.f32 0.0, %v3294
      %v3296 = vpop.f32.mrf.mxu0
      %3297 = vdwg.mxu0
      %v3298 = vadd.f32 %v3245, %v3295
      %s3299 = scalar_lea.vmem %s18, 6
      %v3300 = vld [vmem:[%s3299] sm:$0x3]
      %v3302 = vsel %vm2683, %v3300, 0
      %3304 = vmatpush.bf16.msra.mxu0 0
      %3305 = vmatpush.bf16.msra.mxu0 0
      %3306 = vmatpush.bf16.msra.mxu0 0
      %3307 = vmatpush.bf16.msra.mxu0 0
      %3308 = vmatpush.bf16.msra.mxu0 0
      %3309 = vmatpush.bf16.msra.mxu0 0
      %3310 = vmatpush.bf16.msra.mxu0 0
      %3311 = vmatpush.bf16.msra.mxu0 %v3139
      %3312 = vmatmul.bf16.gmra.mxu0 %v3302
      %v3313 = vpop.f32.mrf.mxu0
      %v3314 = vadd.f32 0.0, %v3313
      %v3315 = vpop.f32.mrf.mxu0
      %3316 = vdwg.mxu0
      %v3317 = vpack.c.bf16 %v3314, %v3314
      %s3318 = scalar_lea.vmem %s4, 48
      %v3319 = vld [vmem:[%s3318] sm:$0xf]
      %v3320 = vld [vmem:[%s3318 + $0x4] sm:$0xf]
      %v3321 = vld [vmem:[%s3318 + $0x8] sm:$0xf]
      %v3322 = vld [vmem:[%s3318 + $0xc] sm:$0xf]
      %v3327 = vunpack.c.l.b16 %v3319
      %v3328 = vunpack.c.l.b16 %v3320
      %v3329 = vunpack.c.l.b16 %v3321
      %v3330 = vunpack.c.l.b16 %v3322
      %v3331 = vpack.c.b16 %v3328, %v3327
      %v3332 = vpack.c.b16 %v3330, %v3329
      %v3336 = vsel %vm3174, %v3317, 0
      %3338 = vmatpush.bf16.msra.mxu0 0
      %3339 = vmatpush.bf16.msra.mxu0 0
      %3340 = vmatpush.bf16.msra.mxu0 0
      %3341 = vmatpush.bf16.msra.mxu0 0
      %3342 = vmatpush.bf16.msra.mxu0 0
      %3343 = vmatpush.bf16.msra.mxu0 0
      %3344 = vmatpush.bf16.msra.mxu0 %v3332
      %3345 = vmatpush.bf16.msra.mxu0 %v3331
      %3346 = vmatmul.bf16.gmra.mxu0 %v3336
      %v3347 = vpop.f32.mrf.mxu0
      %v3348 = vadd.f32 0.0, %v3347
      %v3349 = vpop.f32.mrf.mxu0
      %3350 = vdwg.mxu0
      %v3351 = vadd.f32 %v3298, %v3348
      %s3352 = scalar_lea.vmem %s18, 8
      %v3353 = vld [vmem:[%s3352] sm:$0x3]
      %v3355 = vsel %vm2683, %v3353, 0
      %3357 = vmatpush.bf16.msra.mxu0 0
      %3358 = vmatpush.bf16.msra.mxu0 0
      %3359 = vmatpush.bf16.msra.mxu0 0
      %3360 = vmatpush.bf16.msra.mxu0 0
      %3361 = vmatpush.bf16.msra.mxu0 0
      %3362 = vmatpush.bf16.msra.mxu0 0
      %3363 = vmatpush.bf16.msra.mxu0 0
      %3364 = vmatpush.bf16.msra.mxu0 %v3139
      %3365 = vmatmul.bf16.gmra.mxu0 %v3355
      %v3366 = vpop.f32.mrf.mxu0
      %v3367 = vadd.f32 0.0, %v3366
      %v3368 = vpop.f32.mrf.mxu0
      %3369 = vdwg.mxu0
      %v3370 = vpack.c.bf16 %v3367, %v3367
      %s3371 = scalar_lea.vmem %s4, 64
      %v3372 = vld [vmem:[%s3371] sm:$0xf]
      %v3373 = vld [vmem:[%s3371 + $0x4] sm:$0xf]
      %v3374 = vld [vmem:[%s3371 + $0x8] sm:$0xf]
      %v3375 = vld [vmem:[%s3371 + $0xc] sm:$0xf]
      %v3380 = vunpack.c.l.b16 %v3372
      %v3381 = vunpack.c.l.b16 %v3373
      %v3382 = vunpack.c.l.b16 %v3374
      %v3383 = vunpack.c.l.b16 %v3375
      %v3384 = vpack.c.b16 %v3381, %v3380
      %v3385 = vpack.c.b16 %v3383, %v3382
      %v3389 = vsel %vm3174, %v3370, 0
      %3391 = vmatpush.bf16.msra.mxu0 0
      %3392 = vmatpush.bf16.msra.mxu0 0
      %3393 = vmatpush.bf16.msra.mxu0 0
      %3394 = vmatpush.bf16.msra.mxu0 0
      %3395 = vmatpush.bf16.msra.mxu0 0
      %3396 = vmatpush.bf16.msra.mxu0 0
      %3397 = vmatpush.bf16.msra.mxu0 %v3385
      %3398 = vmatpush.bf16.msra.mxu0 %v3384
      %3399 = vmatmul.bf16.gmra.mxu0 %v3389
      %v3400 = vpop.f32.mrf.mxu0
      %v3401 = vadd.f32 0.0, %v3400
      %v3402 = vpop.f32.mrf.mxu0
      %3403 = vdwg.mxu0
      %v3404 = vadd.f32 %v3351, %v3401
      %s3405 = scalar_lea.vmem %s18, 10
      %v3406 = vld [vmem:[%s3405] sm:$0x3]
      %v3408 = vsel %vm2683, %v3406, 0
      %3410 = vmatpush.bf16.msra.mxu0 0
      %3411 = vmatpush.bf16.msra.mxu0 0
      %3412 = vmatpush.bf16.msra.mxu0 0
      %3413 = vmatpush.bf16.msra.mxu0 0
      %3414 = vmatpush.bf16.msra.mxu0 0
      %3415 = vmatpush.bf16.msra.mxu0 0
      %3416 = vmatpush.bf16.msra.mxu0 0
      %3417 = vmatpush.bf16.msra.mxu0 %v3139
      %3418 = vmatmul.bf16.gmra.mxu0 %v3408
      %v3419 = vpop.f32.mrf.mxu0
      %v3420 = vadd.f32 0.0, %v3419
      %v3421 = vpop.f32.mrf.mxu0
      %3422 = vdwg.mxu0
      %v3423 = vpack.c.bf16 %v3420, %v3420
      %s3424 = scalar_lea.vmem %s4, 80
      %v3425 = vld [vmem:[%s3424] sm:$0xf]
      %v3426 = vld [vmem:[%s3424 + $0x4] sm:$0xf]
      %v3427 = vld [vmem:[%s3424 + $0x8] sm:$0xf]
      %v3428 = vld [vmem:[%s3424 + $0xc] sm:$0xf]
      %v3433 = vunpack.c.l.b16 %v3425
      %v3434 = vunpack.c.l.b16 %v3426
      %v3435 = vunpack.c.l.b16 %v3427
      %v3436 = vunpack.c.l.b16 %v3428
      %v3437 = vpack.c.b16 %v3434, %v3433
      %v3438 = vpack.c.b16 %v3436, %v3435
      %v3442 = vsel %vm3174, %v3423, 0
      %3444 = vmatpush.bf16.msra.mxu0 0
      %3445 = vmatpush.bf16.msra.mxu0 0
      %3446 = vmatpush.bf16.msra.mxu0 0
      %3447 = vmatpush.bf16.msra.mxu0 0
      %3448 = vmatpush.bf16.msra.mxu0 0
      %3449 = vmatpush.bf16.msra.mxu0 0
      %3450 = vmatpush.bf16.msra.mxu0 %v3438
      %3451 = vmatpush.bf16.msra.mxu0 %v3437
      %3452 = vmatmul.bf16.gmra.mxu0 %v3442
      %v3453 = vpop.f32.mrf.mxu0
      %v3454 = vadd.f32 0.0, %v3453
      %v3455 = vpop.f32.mrf.mxu0
      %3456 = vdwg.mxu0
      %v3457 = vadd.f32 %v3404, %v3454
      %s3458 = scalar_lea.vmem %s18, 12
      %v3459 = vld [vmem:[%s3458] sm:$0x3]
      %v3461 = vsel %vm2683, %v3459, 0
      %3463 = vmatpush.bf16.msra.mxu0 0
      %3464 = vmatpush.bf16.msra.mxu0 0
      %3465 = vmatpush.bf16.msra.mxu0 0
      %3466 = vmatpush.bf16.msra.mxu0 0
      %3467 = vmatpush.bf16.msra.mxu0 0
      %3468 = vmatpush.bf16.msra.mxu0 0
      %3469 = vmatpush.bf16.msra.mxu0 0
      %3470 = vmatpush.bf16.msra.mxu0 %v3139
      %3471 = vmatmul.bf16.gmra.mxu0 %v3461
      %v3472 = vpop.f32.mrf.mxu0
      %v3473 = vadd.f32 0.0, %v3472
      %v3474 = vpop.f32.mrf.mxu0
      %3475 = vdwg.mxu0
      %v3476 = vpack.c.bf16 %v3473, %v3473
      %s3477 = scalar_lea.vmem %s4, 96
      %v3478 = vld [vmem:[%s3477] sm:$0xf]
      %v3479 = vld [vmem:[%s3477 + $0x4] sm:$0xf]
      %v3480 = vld [vmem:[%s3477 + $0x8] sm:$0xf]
      %v3481 = vld [vmem:[%s3477 + $0xc] sm:$0xf]
      %v3486 = vunpack.c.l.b16 %v3478
      %v3487 = vunpack.c.l.b16 %v3479
      %v3488 = vunpack.c.l.b16 %v3480
      %v3489 = vunpack.c.l.b16 %v3481
      %v3490 = vpack.c.b16 %v3487, %v3486
      %v3491 = vpack.c.b16 %v3489, %v3488
      %v3495 = vsel %vm3174, %v3476, 0
      %3497 = vmatpush.bf16.msra.mxu0 0
      %3498 = vmatpush.bf16.msra.mxu0 0
      %3499 = vmatpush.bf16.msra.mxu0 0
      %3500 = vmatpush.bf16.msra.mxu0 0
      %3501 = vmatpush.bf16.msra.mxu0 0
      %3502 = vmatpush.bf16.msra.mxu0 0
      %3503 = vmatpush.bf16.msra.mxu0 %v3491
      %3504 = vmatpush.bf16.msra.mxu0 %v3490
      %3505 = vmatmul.bf16.gmra.mxu0 %v3495
      %v3506 = vpop.f32.mrf.mxu0
      %v3507 = vadd.f32 0.0, %v3506
      %v3508 = vpop.f32.mrf.mxu0
      %3509 = vdwg.mxu0
      %v3510 = vadd.f32 %v3457, %v3507
      %s3511 = scalar_lea.vmem %s18, 14
      %v3512 = vld [vmem:[%s3511] sm:$0x3]
      %v3514 = vsel %vm2683, %v3512, 0
      %3516 = vmatpush.bf16.msra.mxu0 0
      %3517 = vmatpush.bf16.msra.mxu0 0
      %3518 = vmatpush.bf16.msra.mxu0 0
      %3519 = vmatpush.bf16.msra.mxu0 0
      %3520 = vmatpush.bf16.msra.mxu0 0
      %3521 = vmatpush.bf16.msra.mxu0 0
      %3522 = vmatpush.bf16.msra.mxu0 0
      %3523 = vmatpush.bf16.msra.mxu0 %v3139
      %3524 = vmatmul.bf16.gmra.mxu0 %v3514
      %v3525 = vpop.f32.mrf.mxu0
      %v3526 = vadd.f32 0.0, %v3525
      %v3527 = vpop.f32.mrf.mxu0
      %3528 = vdwg.mxu0
      %v3529 = vpack.c.bf16 %v3526, %v3526
      %s3530 = scalar_lea.vmem %s4, 112
      %v3531 = vld [vmem:[%s3530] sm:$0xf]
      %v3532 = vld [vmem:[%s3530 + $0x4] sm:$0xf]
      %v3533 = vld [vmem:[%s3530 + $0x8] sm:$0xf]
      %v3534 = vld [vmem:[%s3530 + $0xc] sm:$0xf]
      %v3539 = vunpack.c.l.b16 %v3531
      %v3540 = vunpack.c.l.b16 %v3532
      %v3541 = vunpack.c.l.b16 %v3533
      %v3542 = vunpack.c.l.b16 %v3534
      %v3543 = vpack.c.b16 %v3540, %v3539
      %v3544 = vpack.c.b16 %v3542, %v3541
      %v3548 = vsel %vm3174, %v3529, 0
      %3550 = vmatpush.bf16.msra.mxu0 0
      %3551 = vmatpush.bf16.msra.mxu0 0
      %3552 = vmatpush.bf16.msra.mxu0 0
      %3553 = vmatpush.bf16.msra.mxu0 0
      %3554 = vmatpush.bf16.msra.mxu0 0
      %3555 = vmatpush.bf16.msra.mxu0 0
      %3556 = vmatpush.bf16.msra.mxu0 %v3544
      %3557 = vmatpush.bf16.msra.mxu0 %v3543
      %3558 = vmatmul.bf16.gmra.mxu0 %v3548
      %v3559 = vpop.f32.mrf.mxu0
      %v3560 = vadd.f32 0.0, %v3559
      %v3561 = vpop.f32.mrf.mxu0
      %3562 = vdwg.mxu0
      %v3563 = vadd.f32 %v3510, %v3560
      %s3564 = scalar_lea.vmem %s18, 16
      %v3565 = vld [vmem:[%s3564] sm:$0x3]
      %v3567 = vsel %vm2683, %v3565, 0
      %3569 = vmatpush.bf16.msra.mxu0 0
      %3570 = vmatpush.bf16.msra.mxu0 0
      %3571 = vmatpush.bf16.msra.mxu0 0
      %3572 = vmatpush.bf16.msra.mxu0 0
      %3573 = vmatpush.bf16.msra.mxu0 0
      %3574 = vmatpush.bf16.msra.mxu0 0
      %3575 = vmatpush.bf16.msra.mxu0 0
      %3576 = vmatpush.bf16.msra.mxu0 %v3139
      %3577 = vmatmul.bf16.gmra.mxu0 %v3567
      %v3578 = vpop.f32.mrf.mxu0
      %v3579 = vadd.f32 0.0, %v3578
      %v3580 = vpop.f32.mrf.mxu0
      %3581 = vdwg.mxu0
      %v3582 = vpack.c.bf16 %v3579, %v3579
      %s3583 = scalar_lea.vmem %s4, 128
      %v3584 = vld [vmem:[%s3583] sm:$0xf]
      %v3585 = vld [vmem:[%s3583 + $0x4] sm:$0xf]
      %v3586 = vld [vmem:[%s3583 + $0x8] sm:$0xf]
      %v3587 = vld [vmem:[%s3583 + $0xc] sm:$0xf]
      %v3592 = vunpack.c.l.b16 %v3584
      %v3593 = vunpack.c.l.b16 %v3585
      %v3594 = vunpack.c.l.b16 %v3586
      %v3595 = vunpack.c.l.b16 %v3587
      %v3596 = vpack.c.b16 %v3593, %v3592
      %v3597 = vpack.c.b16 %v3595, %v3594
      %v3601 = vsel %vm3174, %v3582, 0
      %3603 = vmatpush.bf16.msra.mxu0 0
      %3604 = vmatpush.bf16.msra.mxu0 0
      %3605 = vmatpush.bf16.msra.mxu0 0
      %3606 = vmatpush.bf16.msra.mxu0 0
      %3607 = vmatpush.bf16.msra.mxu0 0
      %3608 = vmatpush.bf16.msra.mxu0 0
      %3609 = vmatpush.bf16.msra.mxu0 %v3597
      %3610 = vmatpush.bf16.msra.mxu0 %v3596
      %3611 = vmatmul.bf16.gmra.mxu0 %v3601
      %v3612 = vpop.f32.mrf.mxu0
      %v3613 = vadd.f32 0.0, %v3612
      %v3614 = vpop.f32.mrf.mxu0
      %3615 = vdwg.mxu0
      %v3616 = vadd.f32 %v3563, %v3613
      %v3617 = vmax.f32 %v3616, 0.0
      %v3618 = vld [vmem:[%s15 + $0x4] sm:$0x1]
      %v3619 = vld [vmem:[%s5] sm:$0xf]
      %v3620 = vld [vmem:[%s5 + $0x4] sm:$0xf]
      %v3623 = vunpack.c.l.b16 %v3619
      %v3624 = vunpack.c.l.b16 %v3620
      %v3625 = vpack.c.b16 %v3624, %v3623
      %3627 = vmatpush.bf16.msra.mxu0 0
      %3628 = vmatpush.bf16.msra.mxu0 0
      %3629 = vmatpush.bf16.msra.mxu0 0
      %3630 = vmatpush.bf16.msra.mxu0 0
      %3631 = vmatpush.bf16.msra.mxu0 0
      %3632 = vmatpush.bf16.msra.mxu0 0
      %3633 = vmatpush.bf16.msra.mxu0 0
      %3634 = vmatpush.bf16.msra.mxu0 %v3625
      %3635 = vmatmul.bf16.gmra.mxu0 %v2685
      %v3636 = vpop.f32.mrf.mxu0
      %v3637 = vadd.f32 0.0, %v3636
      %v3638 = vpop.f32.mrf.mxu0
      %v3639 = vadd.f32 0.0, %v3638
      %3640 = vdwg.mxu0
      %v3641 = vperm.slane %v3618, 0
      %v3642 = vadd.f32 %v3641, %v3637
      %v3643 = vadd.f32 %v3641, %v3639
      %s3644 = scalar_lea.vmem %s5, 8
      %v3645 = vld [vmem:[%s3644] sm:$0xf]
      %v3646 = vld [vmem:[%s3644 + $0x4] sm:$0xf]
      %v3649 = vunpack.c.l.b16 %v3645
      %v3650 = vunpack.c.l.b16 %v3646
      %v3651 = vpack.c.b16 %v3650, %v3649
      %3653 = vmatpush.bf16.msra.mxu0 0
      %3654 = vmatpush.bf16.msra.mxu0 0
      %3655 = vmatpush.bf16.msra.mxu0 0
      %3656 = vmatpush.bf16.msra.mxu0 0
      %3657 = vmatpush.bf16.msra.mxu0 0
      %3658 = vmatpush.bf16.msra.mxu0 0
      %3659 = vmatpush.bf16.msra.mxu0 0
      %3660 = vmatpush.bf16.msra.mxu0 %v3651
      %3661 = vmatmul.bf16.gmra.mxu0 %v2740
      %v3662 = vpop.f32.mrf.mxu0
      %v3663 = vadd.f32 0.0, %v3662
      %v3664 = vpop.f32.mrf.mxu0
      %v3665 = vadd.f32 0.0, %v3664
      %3666 = vdwg.mxu0
      %v3667 = vadd.f32 %v3642, %v3663
      %v3668 = vadd.f32 %v3643, %v3665
      %s3669 = scalar_lea.vmem %s5, 16
      %v3670 = vld [vmem:[%s3669] sm:$0xf]
      %v3671 = vld [vmem:[%s3669 + $0x4] sm:$0xf]
      %v3674 = vunpack.c.l.b16 %v3670
      %v3675 = vunpack.c.l.b16 %v3671
      %v3676 = vpack.c.b16 %v3675, %v3674
      %3678 = vmatpush.bf16.msra.mxu0 0
      %3679 = vmatpush.bf16.msra.mxu0 0
      %3680 = vmatpush.bf16.msra.mxu0 0
      %3681 = vmatpush.bf16.msra.mxu0 0
      %3682 = vmatpush.bf16.msra.mxu0 0
      %3683 = vmatpush.bf16.msra.mxu0 0
      %3684 = vmatpush.bf16.msra.mxu0 0
      %3685 = vmatpush.bf16.msra.mxu0 %v3676
      %3686 = vmatmul.bf16.gmra.mxu0 %v2794
      %v3687 = vpop.f32.mrf.mxu0
      %v3688 = vadd.f32 0.0, %v3687
      %v3689 = vpop.f32.mrf.mxu0
      %v3690 = vadd.f32 0.0, %v3689
      %3691 = vdwg.mxu0
      %v3692 = vadd.f32 %v3667, %v3688
      %v3693 = vadd.f32 %v3668, %v3690
      %s3694 = scalar_lea.vmem %s5, 24
      %v3695 = vld [vmem:[%s3694] sm:$0xf]
      %v3696 = vld [vmem:[%s3694 + $0x4] sm:$0xf]
      %v3699 = vunpack.c.l.b16 %v3695
      %v3700 = vunpack.c.l.b16 %v3696
      %v3701 = vpack.c.b16 %v3700, %v3699
      %3703 = vmatpush.bf16.msra.mxu0 0
      %3704 = vmatpush.bf16.msra.mxu0 0
      %3705 = vmatpush.bf16.msra.mxu0 0
      %3706 = vmatpush.bf16.msra.mxu0 0
      %3707 = vmatpush.bf16.msra.mxu0 0
      %3708 = vmatpush.bf16.msra.mxu0 0
      %3709 = vmatpush.bf16.msra.mxu0 0
      %3710 = vmatpush.bf16.msra.mxu0 %v3701
      %3711 = vmatmul.bf16.gmra.mxu0 %v2848
      %v3712 = vpop.f32.mrf.mxu0
      %v3713 = vadd.f32 0.0, %v3712
      %v3714 = vpop.f32.mrf.mxu0
      %v3715 = vadd.f32 0.0, %v3714
      %3716 = vdwg.mxu0
      %v3717 = vadd.f32 %v3692, %v3713
      %v3718 = vadd.f32 %v3693, %v3715
      %s3719 = scalar_lea.vmem %s5, 32
      %v3720 = vld [vmem:[%s3719] sm:$0xf]
      %v3721 = vld [vmem:[%s3719 + $0x4] sm:$0xf]
      %v3724 = vunpack.c.l.b16 %v3720
      %v3725 = vunpack.c.l.b16 %v3721
      %v3726 = vpack.c.b16 %v3725, %v3724
      %3728 = vmatpush.bf16.msra.mxu0 0
      %3729 = vmatpush.bf16.msra.mxu0 0
      %3730 = vmatpush.bf16.msra.mxu0 0
      %3731 = vmatpush.bf16.msra.mxu0 0
      %3732 = vmatpush.bf16.msra.mxu0 0
      %3733 = vmatpush.bf16.msra.mxu0 0
      %3734 = vmatpush.bf16.msra.mxu0 0
      %3735 = vmatpush.bf16.msra.mxu0 %v3726
      %3736 = vmatmul.bf16.gmra.mxu0 %v2902
      %v3737 = vpop.f32.mrf.mxu0
      %v3738 = vadd.f32 0.0, %v3737
      %v3739 = vpop.f32.mrf.mxu0
      %v3740 = vadd.f32 0.0, %v3739
      %3741 = vdwg.mxu0
      %v3742 = vadd.f32 %v3717, %v3738
      %v3743 = vadd.f32 %v3718, %v3740
      %s3744 = scalar_lea.vmem %s5, 40
      %v3745 = vld [vmem:[%s3744] sm:$0xf]
      %v3746 = vld [vmem:[%s3744 + $0x4] sm:$0xf]
      %v3749 = vunpack.c.l.b16 %v3745
      %v3750 = vunpack.c.l.b16 %v3746
      %v3751 = vpack.c.b16 %v3750, %v3749
      %3753 = vmatpush.bf16.msra.mxu0 0
      %3754 = vmatpush.bf16.msra.mxu0 0
      %3755 = vmatpush.bf16.msra.mxu0 0
      %3756 = vmatpush.bf16.msra.mxu0 0
      %3757 = vmatpush.bf16.msra.mxu0 0
      %3758 = vmatpush.bf16.msra.mxu0 0
      %3759 = vmatpush.bf16.msra.mxu0 0
      %3760 = vmatpush.bf16.msra.mxu0 %v3751
      %3761 = vmatmul.bf16.gmra.mxu0 %v2956
      %v3762 = vpop.f32.mrf.mxu0
      %v3763 = vadd.f32 0.0, %v3762
      %v3764 = vpop.f32.mrf.mxu0
      %v3765 = vadd.f32 0.0, %v3764
      %3766 = vdwg.mxu0
      %v3767 = vadd.f32 %v3742, %v3763
      %v3768 = vadd.f32 %v3743, %v3765
      %s3769 = scalar_lea.vmem %s5, 48
      %v3770 = vld [vmem:[%s3769] sm:$0xf]
      %v3771 = vld [vmem:[%s3769 + $0x4] sm:$0xf]
      %v3774 = vunpack.c.l.b16 %v3770
      %v3775 = vunpack.c.l.b16 %v3771
      %v3776 = vpack.c.b16 %v3775, %v3774
      %3778 = vmatpush.bf16.msra.mxu0 0
      %3779 = vmatpush.bf16.msra.mxu0 0
      %3780 = vmatpush.bf16.msra.mxu0 0
      %3781 = vmatpush.bf16.msra.mxu0 0
      %3782 = vmatpush.bf16.msra.mxu0 0
      %3783 = vmatpush.bf16.msra.mxu0 0
      %3784 = vmatpush.bf16.msra.mxu0 0
      %3785 = vmatpush.bf16.msra.mxu0 %v3776
      %3786 = vmatmul.bf16.gmra.mxu0 %v3010
      %v3787 = vpop.f32.mrf.mxu0
      %v3788 = vadd.f32 0.0, %v3787
      %v3789 = vpop.f32.mrf.mxu0
      %v3790 = vadd.f32 0.0, %v3789
      %3791 = vdwg.mxu0
      %v3792 = vadd.f32 %v3767, %v3788
      %v3793 = vadd.f32 %v3768, %v3790
      %s3794 = scalar_lea.vmem %s5, 56
      %v3795 = vld [vmem:[%s3794] sm:$0xf]
      %v3796 = vld [vmem:[%s3794 + $0x4] sm:$0xf]
      %v3799 = vunpack.c.l.b16 %v3795
      %v3800 = vunpack.c.l.b16 %v3796
      %v3801 = vpack.c.b16 %v3800, %v3799
      %3803 = vmatpush.bf16.msra.mxu0 0
      %3804 = vmatpush.bf16.msra.mxu0 0
      %3805 = vmatpush.bf16.msra.mxu0 0
      %3806 = vmatpush.bf16.msra.mxu0 0
      %3807 = vmatpush.bf16.msra.mxu0 0
      %3808 = vmatpush.bf16.msra.mxu0 0
      %3809 = vmatpush.bf16.msra.mxu0 0
      %3810 = vmatpush.bf16.msra.mxu0 %v3801
      %3811 = vmatmul.bf16.gmra.mxu0 %v3064
      %v3812 = vpop.f32.mrf.mxu0
      %v3813 = vadd.f32 0.0, %v3812
      %v3814 = vpop.f32.mrf.mxu0
      %v3815 = vadd.f32 0.0, %v3814
      %3816 = vdwg.mxu0
      %v3817 = vadd.f32 %v3792, %v3813
      %v3818 = vadd.f32 %v3793, %v3815
      %s3819 = scalar_lea.vmem %s5, 64
      %v3820 = vld [vmem:[%s3819] sm:$0xf]
      %v3821 = vld [vmem:[%s3819 + $0x4] sm:$0xf]
      %v3824 = vunpack.c.l.b16 %v3820
      %v3825 = vunpack.c.l.b16 %v3821
      %v3826 = vpack.c.b16 %v3825, %v3824
      %3828 = vmatpush.bf16.msra.mxu0 0
      %3829 = vmatpush.bf16.msra.mxu0 0
      %3830 = vmatpush.bf16.msra.mxu0 0
      %3831 = vmatpush.bf16.msra.mxu0 0
      %3832 = vmatpush.bf16.msra.mxu0 0
      %3833 = vmatpush.bf16.msra.mxu0 0
      %3834 = vmatpush.bf16.msra.mxu0 0
      %3835 = vmatpush.bf16.msra.mxu0 %v3826
      %3836 = vmatmul.bf16.gmra.mxu0 %v3118
      %v3837 = vpop.f32.mrf.mxu0
      %v3838 = vadd.f32 0.0, %v3837
      %v3839 = vpop.f32.mrf.mxu0
      %v3840 = vadd.f32 0.0, %v3839
      %3841 = vdwg.mxu0
      %v3842 = vadd.f32 %v3817, %v3838
      %v3843 = vadd.f32 %v3818, %v3840
      %v3844 = vmax.f32 %v3842, 0.0
      %v3845 = vmax.f32 %v3843, 0.0
      %v3846 = vld [vmem:[%s15 + $0x5] sm:$0x1]
      %v3847 = vpack.c.bf16 %v3845, %v3844
      %3848 = vmatpush.bf16.msra.mxu0 0
      %3849 = vmatpush.bf16.msra.mxu0 0
      %3850 = vmatpush.bf16.msra.mxu0 0
      %3851 = vmatpush.bf16.msra.mxu0 0
      %3852 = vmatpush.bf16.msra.mxu0 0
      %3853 = vmatpush.bf16.msra.mxu0 0
      %3854 = vmatpush.bf16.msra.mxu0 0
      %3855 = vmatpush.bf16.msra.mxu0 %v3847
      %3856 = vmatmul.bf16.gmra.mxu0 %v3142
      %v3857 = vpop.f32.mrf.mxu0
      %v3858 = vadd.f32 0.0, %v3857
      %v3859 = vpop.f32.mrf.mxu0
      %3860 = vdwg.mxu0
      %v3861 = vpack.c.bf16 %v3858, %v3858
      %v3862 = vld [vmem:[%s6] sm:$0xf]
      %v3863 = vld [vmem:[%s6 + $0x4] sm:$0xf]
      %v3864 = vld [vmem:[%s6 + $0x8] sm:$0xf]
      %v3865 = vld [vmem:[%s6 + $0xc] sm:$0xf]
      %v3870 = vunpack.c.l.b16 %v3862
      %v3871 = vunpack.c.l.b16 %v3863
      %v3872 = vunpack.c.l.b16 %v3864
      %v3873 = vunpack.c.l.b16 %v3865
      %v3874 = vpack.c.b16 %v3871, %v3870
      %v3875 = vpack.c.b16 %v3873, %v3872
      %v3879 = vsel %vm3174, %v3861, 0
      %3881 = vmatpush.bf16.msra.mxu0 0
      %3882 = vmatpush.bf16.msra.mxu0 0
      %3883 = vmatpush.bf16.msra.mxu0 0
      %3884 = vmatpush.bf16.msra.mxu0 0
      %3885 = vmatpush.bf16.msra.mxu0 0
      %3886 = vmatpush.bf16.msra.mxu0 0
      %3887 = vmatpush.bf16.msra.mxu0 %v3875
      %3888 = vmatpush.bf16.msra.mxu0 %v3874
      %3889 = vmatmul.bf16.gmra.mxu0 %v3879
      %v3890 = vpop.f32.mrf.mxu0
      %v3891 = vadd.f32 0.0, %v3890
      %v3892 = vpop.f32.mrf.mxu0
      %3893 = vdwg.mxu0
      %v3894 = vperm.slane %v3846, 0
      %v3895 = vadd.f32 %v3894, %v3891
      %3896 = vmatpush.bf16.msra.mxu0 0
      %3897 = vmatpush.bf16.msra.mxu0 0
      %3898 = vmatpush.bf16.msra.mxu0 0
      %3899 = vmatpush.bf16.msra.mxu0 0
      %3900 = vmatpush.bf16.msra.mxu0 0
      %3901 = vmatpush.bf16.msra.mxu0 0
      %3902 = vmatpush.bf16.msra.mxu0 0
      %3903 = vmatpush.bf16.msra.mxu0 %v3847
      %3904 = vmatmul.bf16.gmra.mxu0 %v3196
      %v3905 = vpop.f32.mrf.mxu0
      %v3906 = vadd.f32 0.0, %v3905
      %v3907 = vpop.f32.mrf.mxu0
      %3908 = vdwg.mxu0
      %v3909 = vpack.c.bf16 %v3906, %v3906
      %s3910 = scalar_lea.vmem %s6, 16
      %v3911 = vld [vmem:[%s3910] sm:$0xf]
      %v3912 = vld [vmem:[%s3910 + $0x4] sm:$0xf]
      %v3913 = vld [vmem:[%s3910 + $0x8] sm:$0xf]
      %v3914 = vld [vmem:[%s3910 + $0xc] sm:$0xf]
      %v3919 = vunpack.c.l.b16 %v3911
      %v3920 = vunpack.c.l.b16 %v3912
      %v3921 = vunpack.c.l.b16 %v3913
      %v3922 = vunpack.c.l.b16 %v3914
      %v3923 = vpack.c.b16 %v3920, %v3919
      %v3924 = vpack.c.b16 %v3922, %v3921
      %v3928 = vsel %vm3174, %v3909, 0
      %3930 = vmatpush.bf16.msra.mxu0 0
      %3931 = vmatpush.bf16.msra.mxu0 0
      %3932 = vmatpush.bf16.msra.mxu0 0
      %3933 = vmatpush.bf16.msra.mxu0 0
      %3934 = vmatpush.bf16.msra.mxu0 0
      %3935 = vmatpush.bf16.msra.mxu0 0
      %3936 = vmatpush.bf16.msra.mxu0 %v3924
      %3937 = vmatpush.bf16.msra.mxu0 %v3923
      %3938 = vmatmul.bf16.gmra.mxu0 %v3928
      %v3939 = vpop.f32.mrf.mxu0
      %v3940 = vadd.f32 0.0, %v3939
      %v3941 = vpop.f32.mrf.mxu0
      %3942 = vdwg.mxu0
      %v3943 = vadd.f32 %v3895, %v3940
      %3944 = vmatpush.bf16.msra.mxu0 0
      %3945 = vmatpush.bf16.msra.mxu0 0
      %3946 = vmatpush.bf16.msra.mxu0 0
      %3947 = vmatpush.bf16.msra.mxu0 0
      %3948 = vmatpush.bf16.msra.mxu0 0
      %3949 = vmatpush.bf16.msra.mxu0 0
      %3950 = vmatpush.bf16.msra.mxu0 0
      %3951 = vmatpush.bf16.msra.mxu0 %v3847
      %3952 = vmatmul.bf16.gmra.mxu0 %v3249
      %v3953 = vpop.f32.mrf.mxu0
      %v3954 = vadd.f32 0.0, %v3953
      %v3955 = vpop.f32.mrf.mxu0
      %3956 = vdwg.mxu0
      %v3957 = vpack.c.bf16 %v3954, %v3954
      %s3958 = scalar_lea.vmem %s6, 32
      %v3959 = vld [vmem:[%s3958] sm:$0xf]
      %v3960 = vld [vmem:[%s3958 + $0x4] sm:$0xf]
      %v3961 = vld [vmem:[%s3958 + $0x8] sm:$0xf]
      %v3962 = vld [vmem:[%s3958 + $0xc] sm:$0xf]
      %v3967 = vunpack.c.l.b16 %v3959
      %v3968 = vunpack.c.l.b16 %v3960
      %v3969 = vunpack.c.l.b16 %v3961
      %v3970 = vunpack.c.l.b16 %v3962
      %v3971 = vpack.c.b16 %v3968, %v3967
      %v3972 = vpack.c.b16 %v3970, %v3969
      %v3976 = vsel %vm3174, %v3957, 0
      %3978 = vmatpush.bf16.msra.mxu0 0
      %3979 = vmatpush.bf16.msra.mxu0 0
      %3980 = vmatpush.bf16.msra.mxu0 0
      %3981 = vmatpush.bf16.msra.mxu0 0
      %3982 = vmatpush.bf16.msra.mxu0 0
      %3983 = vmatpush.bf16.msra.mxu0 0
      %3984 = vmatpush.bf16.msra.mxu0 %v3972
      %3985 = vmatpush.bf16.msra.mxu0 %v3971
      %3986 = vmatmul.bf16.gmra.mxu0 %v3976
      %v3987 = vpop.f32.mrf.mxu0
      %v3988 = vadd.f32 0.0, %v3987
      %v3989 = vpop.f32.mrf.mxu0
      %3990 = vdwg.mxu0
      %v3991 = vadd.f32 %v3943, %v3988
      %3992 = vmatpush.bf16.msra.mxu0 0
      %3993 = vmatpush.bf16.msra.mxu0 0
      %3994 = vmatpush.bf16.msra.mxu0 0
      %3995 = vmatpush.bf16.msra.mxu0 0
      %3996 = vmatpush.bf16.msra.mxu0 0
      %3997 = vmatpush.bf16.msra.mxu0 0
      %3998 = vmatpush.bf16.msra.mxu0 0
      %3999 = vmatpush.bf16.msra.mxu0 %v3847
      %4000 = vmatmul.bf16.gmra.mxu0 %v3302
      %v4001 = vpop.f32.mrf.mxu0
      %v4002 = vadd.f32 0.0, %v4001
      %v4003 = vpop.f32.mrf.mxu0
      %4004 = vdwg.mxu0
      %v4005 = vpack.c.bf16 %v4002, %v4002
      %s4006 = scalar_lea.vmem %s6, 48
      %v4007 = vld [vmem:[%s4006] sm:$0xf]
      %v4008 = vld [vmem:[%s4006 + $0x4] sm:$0xf]
      %v4009 = vld [vmem:[%s4006 + $0x8] sm:$0xf]
      %v4010 = vld [vmem:[%s4006 + $0xc] sm:$0xf]
      %v4015 = vunpack.c.l.b16 %v4007
      %v4016 = vunpack.c.l.b16 %v4008
      %v4017 = vunpack.c.l.b16 %v4009
      %v4018 = vunpack.c.l.b16 %v4010
      %v4019 = vpack.c.b16 %v4016, %v4015
      %v4020 = vpack.c.b16 %v4018, %v4017
      %v4024 = vsel %vm3174, %v4005, 0
      %4026 = vmatpush.bf16.msra.mxu0 0
      %4027 = vmatpush.bf16.msra.mxu0 0
      %4028 = vmatpush.bf16.msra.mxu0 0
      %4029 = vmatpush.bf16.msra.mxu0 0
      %4030 = vmatpush.bf16.msra.mxu0 0
      %4031 = vmatpush.bf16.msra.mxu0 0
      %4032 = vmatpush.bf16.msra.mxu0 %v4020
      %4033 = vmatpush.bf16.msra.mxu0 %v4019
      %4034 = vmatmul.bf16.gmra.mxu0 %v4024
      %v4035 = vpop.f32.mrf.mxu0
      %v4036 = vadd.f32 0.0, %v4035
      %v4037 = vpop.f32.mrf.mxu0
      %4038 = vdwg.mxu0
      %v4039 = vadd.f32 %v3991, %v4036
      %4040 = vmatpush.bf16.msra.mxu0 0
      %4041 = vmatpush.bf16.msra.mxu0 0
      %4042 = vmatpush.bf16.msra.mxu0 0
      %4043 = vmatpush.bf16.msra.mxu0 0
      %4044 = vmatpush.bf16.msra.mxu0 0
      %4045 = vmatpush.bf16.msra.mxu0 0
      %4046 = vmatpush.bf16.msra.mxu0 0
      %4047 = vmatpush.bf16.msra.mxu0 %v3847
      %4048 = vmatmul.bf16.gmra.mxu0 %v3355
      %v4049 = vpop.f32.mrf.mxu0
      %v4050 = vadd.f32 0.0, %v4049
      %v4051 = vpop.f32.mrf.mxu0
      %4052 = vdwg.mxu0
      %v4053 = vpack.c.bf16 %v4050, %v4050
      %s4054 = scalar_lea.vmem %s6, 64
      %v4055 = vld [vmem:[%s4054] sm:$0xf]
      %v4056 = vld [vmem:[%s4054 + $0x4] sm:$0xf]
      %v4057 = vld [vmem:[%s4054 + $0x8] sm:$0xf]
      %v4058 = vld [vmem:[%s4054 + $0xc] sm:$0xf]
      %v4063 = vunpack.c.l.b16 %v4055
      %v4064 = vunpack.c.l.b16 %v4056
      %v4065 = vunpack.c.l.b16 %v4057
      %v4066 = vunpack.c.l.b16 %v4058
      %v4067 = vpack.c.b16 %v4064, %v4063
      %v4068 = vpack.c.b16 %v4066, %v4065
      %v4072 = vsel %vm3174, %v4053, 0
      %4074 = vmatpush.bf16.msra.mxu0 0
      %4075 = vmatpush.bf16.msra.mxu0 0
      %4076 = vmatpush.bf16.msra.mxu0 0
      %4077 = vmatpush.bf16.msra.mxu0 0
      %4078 = vmatpush.bf16.msra.mxu0 0
      %4079 = vmatpush.bf16.msra.mxu0 0
      %4080 = vmatpush.bf16.msra.mxu0 %v4068
      %4081 = vmatpush.bf16.msra.mxu0 %v4067
      %4082 = vmatmul.bf16.gmra.mxu0 %v4072
      %v4083 = vpop.f32.mrf.mxu0
      %v4084 = vadd.f32 0.0, %v4083
      %v4085 = vpop.f32.mrf.mxu0
      %4086 = vdwg.mxu0
      %v4087 = vadd.f32 %v4039, %v4084
      %4088 = vmatpush.bf16.msra.mxu0 0
      %4089 = vmatpush.bf16.msra.mxu0 0
      %4090 = vmatpush.bf16.msra.mxu0 0
      %4091 = vmatpush.bf16.msra.mxu0 0
      %4092 = vmatpush.bf16.msra.mxu0 0
      %4093 = vmatpush.bf16.msra.mxu0 0
      %4094 = vmatpush.bf16.msra.mxu0 0
      %4095 = vmatpush.bf16.msra.mxu0 %v3847
      %4096 = vmatmul.bf16.gmra.mxu0 %v3408
      %v4097 = vpop.f32.mrf.mxu0
      %v4098 = vadd.f32 0.0, %v4097
      %v4099 = vpop.f32.mrf.mxu0
      %4100 = vdwg.mxu0
      %v4101 = vpack.c.bf16 %v4098, %v4098
      %s4102 = scalar_lea.vmem %s6, 80
      %v4103 = vld [vmem:[%s4102] sm:$0xf]
      %v4104 = vld [vmem:[%s4102 + $0x4] sm:$0xf]
      %v4105 = vld [vmem:[%s4102 + $0x8] sm:$0xf]
      %v4106 = vld [vmem:[%s4102 + $0xc] sm:$0xf]
      %v4111 = vunpack.c.l.b16 %v4103
      %v4112 = vunpack.c.l.b16 %v4104
      %v4113 = vunpack.c.l.b16 %v4105
      %v4114 = vunpack.c.l.b16 %v4106
      %v4115 = vpack.c.b16 %v4112, %v4111
      %v4116 = vpack.c.b16 %v4114, %v4113
      %v4120 = vsel %vm3174, %v4101, 0
      %4122 = vmatpush.bf16.msra.mxu0 0
      %4123 = vmatpush.bf16.msra.mxu0 0
      %4124 = vmatpush.bf16.msra.mxu0 0
      %4125 = vmatpush.bf16.msra.mxu0 0
      %4126 = vmatpush.bf16.msra.mxu0 0
      %4127 = vmatpush.bf16.msra.mxu0 0
      %4128 = vmatpush.bf16.msra.mxu0 %v4116
      %4129 = vmatpush.bf16.msra.mxu0 %v4115
      %4130 = vmatmul.bf16.gmra.mxu0 %v4120
      %v4131 = vpop.f32.mrf.mxu0
      %v4132 = vadd.f32 0.0, %v4131
      %v4133 = vpop.f32.mrf.mxu0
      %4134 = vdwg.mxu0
      %v4135 = vadd.f32 %v4087, %v4132
      %4136 = vmatpush.bf16.msra.mxu0 0
      %4137 = vmatpush.bf16.msra.mxu0 0
      %4138 = vmatpush.bf16.msra.mxu0 0
      %4139 = vmatpush.bf16.msra.mxu0 0
      %4140 = vmatpush.bf16.msra.mxu0 0
      %4141 = vmatpush.bf16.msra.mxu0 0
      %4142 = vmatpush.bf16.msra.mxu0 0
      %4143 = vmatpush.bf16.msra.mxu0 %v3847
      %4144 = vmatmul.bf16.gmra.mxu0 %v3461
      %v4145 = vpop.f32.mrf.mxu0
      %v4146 = vadd.f32 0.0, %v4145
      %v4147 = vpop.f32.mrf.mxu0
      %4148 = vdwg.mxu0
      %v4149 = vpack.c.bf16 %v4146, %v4146
      %s4150 = scalar_lea.vmem %s6, 96
      %v4151 = vld [vmem:[%s4150] sm:$0xf]
      %v4152 = vld [vmem:[%s4150 + $0x4] sm:$0xf]
      %v4153 = vld [vmem:[%s4150 + $0x8] sm:$0xf]
      %v4154 = vld [vmem:[%s4150 + $0xc] sm:$0xf]
      %v4159 = vunpack.c.l.b16 %v4151
      %v4160 = vunpack.c.l.b16 %v4152
      %v4161 = vunpack.c.l.b16 %v4153
      %v4162 = vunpack.c.l.b16 %v4154
      %v4163 = vpack.c.b16 %v4160, %v4159
      %v4164 = vpack.c.b16 %v4162, %v4161
      %v4168 = vsel %vm3174, %v4149, 0
      %4170 = vmatpush.bf16.msra.mxu0 0
      %4171 = vmatpush.bf16.msra.mxu0 0
      %4172 = vmatpush.bf16.msra.mxu0 0
      %4173 = vmatpush.bf16.msra.mxu0 0
      %4174 = vmatpush.bf16.msra.mxu0 0
      %4175 = vmatpush.bf16.msra.mxu0 0
      %4176 = vmatpush.bf16.msra.mxu0 %v4164
      %4177 = vmatpush.bf16.msra.mxu0 %v4163
      %4178 = vmatmul.bf16.gmra.mxu0 %v4168
      %v4179 = vpop.f32.mrf.mxu0
      %v4180 = vadd.f32 0.0, %v4179
      %v4181 = vpop.f32.mrf.mxu0
      %4182 = vdwg.mxu0
      %v4183 = vadd.f32 %v4135, %v4180
      %4184 = vmatpush.bf16.msra.mxu0 0
      %4185 = vmatpush.bf16.msra.mxu0 0
      %4186 = vmatpush.bf16.msra.mxu0 0
      %4187 = vmatpush.bf16.msra.mxu0 0
      %4188 = vmatpush.bf16.msra.mxu0 0
      %4189 = vmatpush.bf16.msra.mxu0 0
      %4190 = vmatpush.bf16.msra.mxu0 0
      %4191 = vmatpush.bf16.msra.mxu0 %v3847
      %4192 = vmatmul.bf16.gmra.mxu0 %v3514
      %v4193 = vpop.f32.mrf.mxu0
      %v4194 = vadd.f32 0.0, %v4193
      %v4195 = vpop.f32.mrf.mxu0
      %4196 = vdwg.mxu0
      %v4197 = vpack.c.bf16 %v4194, %v4194
      %s4198 = scalar_lea.vmem %s6, 112
      %v4199 = vld [vmem:[%s4198] sm:$0xf]
      %v4200 = vld [vmem:[%s4198 + $0x4] sm:$0xf]
      %v4201 = vld [vmem:[%s4198 + $0x8] sm:$0xf]
      %v4202 = vld [vmem:[%s4198 + $0xc] sm:$0xf]
      %v4207 = vunpack.c.l.b16 %v4199
      %v4208 = vunpack.c.l.b16 %v4200
      %v4209 = vunpack.c.l.b16 %v4201
      %v4210 = vunpack.c.l.b16 %v4202
      %v4211 = vpack.c.b16 %v4208, %v4207
      %v4212 = vpack.c.b16 %v4210, %v4209
      %v4216 = vsel %vm3174, %v4197, 0
      %4218 = vmatpush.bf16.msra.mxu0 0
      %4219 = vmatpush.bf16.msra.mxu0 0
      %4220 = vmatpush.bf16.msra.mxu0 0
      %4221 = vmatpush.bf16.msra.mxu0 0
      %4222 = vmatpush.bf16.msra.mxu0 0
      %4223 = vmatpush.bf16.msra.mxu0 0
      %4224 = vmatpush.bf16.msra.mxu0 %v4212
      %4225 = vmatpush.bf16.msra.mxu0 %v4211
      %4226 = vmatmul.bf16.gmra.mxu0 %v4216
      %v4227 = vpop.f32.mrf.mxu0
      %v4228 = vadd.f32 0.0, %v4227
      %v4229 = vpop.f32.mrf.mxu0
      %4230 = vdwg.mxu0
      %v4231 = vadd.f32 %v4183, %v4228
      %4232 = vmatpush.bf16.msra.mxu0 0
      %4233 = vmatpush.bf16.msra.mxu0 0
      %4234 = vmatpush.bf16.msra.mxu0 0
      %4235 = vmatpush.bf16.msra.mxu0 0
      %4236 = vmatpush.bf16.msra.mxu0 0
      %4237 = vmatpush.bf16.msra.mxu0 0
      %4238 = vmatpush.bf16.msra.mxu0 0
      %4239 = vmatpush.bf16.msra.mxu0 %v3847
      %4240 = vmatmul.bf16.gmra.mxu0 %v3567
      %v4241 = vpop.f32.mrf.mxu0
      %v4242 = vadd.f32 0.0, %v4241
      %v4243 = vpop.f32.mrf.mxu0
      %4244 = vdwg.mxu0
      %v4245 = vpack.c.bf16 %v4242, %v4242
      %s4246 = scalar_lea.vmem %s6, 128
      %v4247 = vld [vmem:[%s4246] sm:$0xf]
      %v4248 = vld [vmem:[%s4246 + $0x4] sm:$0xf]
      %v4249 = vld [vmem:[%s4246 + $0x8] sm:$0xf]
      %v4250 = vld [vmem:[%s4246 + $0xc] sm:$0xf]
      %v4255 = vunpack.c.l.b16 %v4247
      %v4256 = vunpack.c.l.b16 %v4248
      %v4257 = vunpack.c.l.b16 %v4249
      %v4258 = vunpack.c.l.b16 %v4250
      %v4259 = vpack.c.b16 %v4256, %v4255
      %v4260 = vpack.c.b16 %v4258, %v4257
      %v4264 = vsel %vm3174, %v4245, 0
      %4266 = vmatpush.bf16.msra.mxu0 0
      %4267 = vmatpush.bf16.msra.mxu0 0
      %4268 = vmatpush.bf16.msra.mxu0 0
      %4269 = vmatpush.bf16.msra.mxu0 0
      %4270 = vmatpush.bf16.msra.mxu0 0
      %4271 = vmatpush.bf16.msra.mxu0 0
      %4272 = vmatpush.bf16.msra.mxu0 %v4260
      %4273 = vmatpush.bf16.msra.mxu0 %v4259
      %4274 = vmatmul.bf16.gmra.mxu0 %v4264
      %v4275 = vpop.f32.mrf.mxu0
      %v4276 = vadd.f32 0.0, %v4275
      %v4277 = vpop.f32.mrf.mxu0
      %4278 = vdwg.mxu0
      %v4279 = vadd.f32 %v4231, %v4276
      %v4280 = vmax.f32 %v4279, 0.0
      %v4281 = vld [vmem:[%s15 + $0x6] sm:$0x1]
      %v4282 = vld [vmem:[%s7] sm:$0xf]
      %v4283 = vld [vmem:[%s7 + $0x4] sm:$0xf]
      %v4284 = vld [vmem:[%s7 + $0x8] sm:$0xf]
      %v4285 = vld [vmem:[%s7 + $0xc] sm:$0xf]
      %v4290 = vunpack.c.l.b16 %v4282
      %v4291 = vunpack.c.l.b16 %v4283
      %v4292 = vunpack.c.l.b16 %v4284
      %v4293 = vunpack.c.l.b16 %v4285
      %v4294 = vpack.c.b16 %v4291, %v4290
      %v4295 = vpack.c.b16 %v4293, %v4292
      %4298 = vmatpush.bf16.msra.mxu0 0
      %4299 = vmatpush.bf16.msra.mxu0 0
      %4300 = vmatpush.bf16.msra.mxu0 0
      %4301 = vmatpush.bf16.msra.mxu0 0
      %4302 = vmatpush.bf16.msra.mxu0 0
      %4303 = vmatpush.bf16.msra.mxu0 0
      %4304 = vmatpush.bf16.msra.mxu0 %v4295
      %4305 = vmatpush.bf16.msra.mxu0 %v4294
      %4306 = vmatmul.bf16.gmra.mxu0 %v3176
      %v4307 = vpop.f32.mrf.mxu0
      %v4308 = vadd.f32 0.0, %v4307
      %v4309 = vpop.f32.mrf.mxu0
      %4310 = vdwg.mxu0
      %v4311 = vperm.slane %v4281, 0
      %v4312 = vadd.f32 %v4311, %v4308
      %s4313 = scalar_lea.vmem %s7, 16
      %v4314 = vld [vmem:[%s4313] sm:$0xf]
      %v4315 = vld [vmem:[%s4313 + $0x4] sm:$0xf]
      %v4316 = vld [vmem:[%s4313 + $0x8] sm:$0xf]
      %v4317 = vld [vmem:[%s4313 + $0xc] sm:$0xf]
      %v4322 = vunpack.c.l.b16 %v4314
      %v4323 = vunpack.c.l.b16 %v4315
      %v4324 = vunpack.c.l.b16 %v4316
      %v4325 = vunpack.c.l.b16 %v4317
      %v4326 = vpack.c.b16 %v4323, %v4322
      %v4327 = vpack.c.b16 %v4325, %v4324
      %4330 = vmatpush.bf16.msra.mxu0 0
      %4331 = vmatpush.bf16.msra.mxu0 0
      %4332 = vmatpush.bf16.msra.mxu0 0
      %4333 = vmatpush.bf16.msra.mxu0 0
      %4334 = vmatpush.bf16.msra.mxu0 0
      %4335 = vmatpush.bf16.msra.mxu0 0
      %4336 = vmatpush.bf16.msra.mxu0 %v4327
      %4337 = vmatpush.bf16.msra.mxu0 %v4326
      %4338 = vmatmul.bf16.gmra.mxu0 %v3230
      %v4339 = vpop.f32.mrf.mxu0
      %v4340 = vadd.f32 0.0, %v4339
      %v4341 = vpop.f32.mrf.mxu0
      %4342 = vdwg.mxu0
      %v4343 = vadd.f32 %v4312, %v4340
      %s4344 = scalar_lea.vmem %s7, 32
      %v4345 = vld [vmem:[%s4344] sm:$0xf]
      %v4346 = vld [vmem:[%s4344 + $0x4] sm:$0xf]
      %v4347 = vld [vmem:[%s4344 + $0x8] sm:$0xf]
      %v4348 = vld [vmem:[%s4344 + $0xc] sm:$0xf]
      %v4353 = vunpack.c.l.b16 %v4345
      %v4354 = vunpack.c.l.b16 %v4346
      %v4355 = vunpack.c.l.b16 %v4347
      %v4356 = vunpack.c.l.b16 %v4348
      %v4357 = vpack.c.b16 %v4354, %v4353
      %v4358 = vpack.c.b16 %v4356, %v4355
      %4361 = vmatpush.bf16.msra.mxu0 0
      %4362 = vmatpush.bf16.msra.mxu0 0
      %4363 = vmatpush.bf16.msra.mxu0 0
      %4364 = vmatpush.bf16.msra.mxu0 0
      %4365 = vmatpush.bf16.msra.mxu0 0
      %4366 = vmatpush.bf16.msra.mxu0 0
      %4367 = vmatpush.bf16.msra.mxu0 %v4358
      %4368 = vmatpush.bf16.msra.mxu0 %v4357
      %4369 = vmatmul.bf16.gmra.mxu0 %v3283
      %v4370 = vpop.f32.mrf.mxu0
      %v4371 = vadd.f32 0.0, %v4370
      %v4372 = vpop.f32.mrf.mxu0
      %4373 = vdwg.mxu0
      %v4374 = vadd.f32 %v4343, %v4371
      %s4375 = scalar_lea.vmem %s7, 48
      %v4376 = vld [vmem:[%s4375] sm:$0xf]
      %v4377 = vld [vmem:[%s4375 + $0x4] sm:$0xf]
      %v4378 = vld [vmem:[%s4375 + $0x8] sm:$0xf]
      %v4379 = vld [vmem:[%s4375 + $0xc] sm:$0xf]
      %v4384 = vunpack.c.l.b16 %v4376
      %v4385 = vunpack.c.l.b16 %v4377
      %v4386 = vunpack.c.l.b16 %v4378
      %v4387 = vunpack.c.l.b16 %v4379
      %v4388 = vpack.c.b16 %v4385, %v4384
      %v4389 = vpack.c.b16 %v4387, %v4386
      %4392 = vmatpush.bf16.msra.mxu0 0
      %4393 = vmatpush.bf16.msra.mxu0 0
      %4394 = vmatpush.bf16.msra.mxu0 0
      %4395 = vmatpush.bf16.msra.mxu0 0
      %4396 = vmatpush.bf16.msra.mxu0 0
      %4397 = vmatpush.bf16.msra.mxu0 0
      %4398 = vmatpush.bf16.msra.mxu0 %v4389
      %4399 = vmatpush.bf16.msra.mxu0 %v4388
      %4400 = vmatmul.bf16.gmra.mxu0 %v3336
      %v4401 = vpop.f32.mrf.mxu0
      %v4402 = vadd.f32 0.0, %v4401
      %v4403 = vpop.f32.mrf.mxu0
      %4404 = vdwg.mxu0
      %v4405 = vadd.f32 %v4374, %v4402
      %s4406 = scalar_lea.vmem %s7, 64
      %v4407 = vld [vmem:[%s4406] sm:$0xf]
      %v4408 = vld [vmem:[%s4406 + $0x4] sm:$0xf]
      %v4409 = vld [vmem:[%s4406 + $0x8] sm:$0xf]
      %v4410 = vld [vmem:[%s4406 + $0xc] sm:$0xf]
      %v4415 = vunpack.c.l.b16 %v4407
      %v4416 = vunpack.c.l.b16 %v4408
      %v4417 = vunpack.c.l.b16 %v4409
      %v4418 = vunpack.c.l.b16 %v4410
      %v4419 = vpack.c.b16 %v4416, %v4415
      %v4420 = vpack.c.b16 %v4418, %v4417
      %4423 = vmatpush.bf16.msra.mxu0 0
      %4424 = vmatpush.bf16.msra.mxu0 0
      %4425 = vmatpush.bf16.msra.mxu0 0
      %4426 = vmatpush.bf16.msra.mxu0 0
      %4427 = vmatpush.bf16.msra.mxu0 0
      %4428 = vmatpush.bf16.msra.mxu0 0
      %4429 = vmatpush.bf16.msra.mxu0 %v4420
      %4430 = vmatpush.bf16.msra.mxu0 %v4419
      %4431 = vmatmul.bf16.gmra.mxu0 %v3389
      %v4432 = vpop.f32.mrf.mxu0
      %v4433 = vadd.f32 0.0, %v4432
      %v4434 = vpop.f32.mrf.mxu0
      %4435 = vdwg.mxu0
      %v4436 = vadd.f32 %v4405, %v4433
      %s4437 = scalar_lea.vmem %s7, 80
      %v4438 = vld [vmem:[%s4437] sm:$0xf]
      %v4439 = vld [vmem:[%s4437 + $0x4] sm:$0xf]
      %v4440 = vld [vmem:[%s4437 + $0x8] sm:$0xf]
      %v4441 = vld [vmem:[%s4437 + $0xc] sm:$0xf]
      %v4446 = vunpack.c.l.b16 %v4438
      %v4447 = vunpack.c.l.b16 %v4439
      %v4448 = vunpack.c.l.b16 %v4440
      %v4449 = vunpack.c.l.b16 %v4441
      %v4450 = vpack.c.b16 %v4447, %v4446
      %v4451 = vpack.c.b16 %v4449, %v4448
      %4454 = vmatpush.bf16.msra.mxu0 0
      %4455 = vmatpush.bf16.msra.mxu0 0
      %4456 = vmatpush.bf16.msra.mxu0 0
      %4457 = vmatpush.bf16.msra.mxu0 0
      %4458 = vmatpush.bf16.msra.mxu0 0
      %4459 = vmatpush.bf16.msra.mxu0 0
      %4460 = vmatpush.bf16.msra.mxu0 %v4451
      %4461 = vmatpush.bf16.msra.mxu0 %v4450
      %4462 = vmatmul.bf16.gmra.mxu0 %v3442
      %v4463 = vpop.f32.mrf.mxu0
      %v4464 = vadd.f32 0.0, %v4463
      %v4465 = vpop.f32.mrf.mxu0
      %4466 = vdwg.mxu0
      %v4467 = vadd.f32 %v4436, %v4464
      %s4468 = scalar_lea.vmem %s7, 96
      %v4469 = vld [vmem:[%s4468] sm:$0xf]
      %v4470 = vld [vmem:[%s4468 + $0x4] sm:$0xf]
      %v4471 = vld [vmem:[%s4468 + $0x8] sm:$0xf]
      %v4472 = vld [vmem:[%s4468 + $0xc] sm:$0xf]
      %v4477 = vunpack.c.l.b16 %v4469
      %v4478 = vunpack.c.l.b16 %v4470
      %v4479 = vunpack.c.l.b16 %v4471
      %v4480 = vunpack.c.l.b16 %v4472
      %v4481 = vpack.c.b16 %v4478, %v4477
      %v4482 = vpack.c.b16 %v4480, %v4479
      %4485 = vmatpush.bf16.msra.mxu0 0
      %4486 = vmatpush.bf16.msra.mxu0 0
      %4487 = vmatpush.bf16.msra.mxu0 0
      %4488 = vmatpush.bf16.msra.mxu0 0
      %4489 = vmatpush.bf16.msra.mxu0 0
      %4490 = vmatpush.bf16.msra.mxu0 0
      %4491 = vmatpush.bf16.msra.mxu0 %v4482
      %4492 = vmatpush.bf16.msra.mxu0 %v4481
      %4493 = vmatmul.bf16.gmra.mxu0 %v3495
      %v4494 = vpop.f32.mrf.mxu0
      %v4495 = vadd.f32 0.0, %v4494
      %v4496 = vpop.f32.mrf.mxu0
      %4497 = vdwg.mxu0
      %v4498 = vadd.f32 %v4467, %v4495
      %s4499 = scalar_lea.vmem %s7, 112
      %v4500 = vld [vmem:[%s4499] sm:$0xf]
      %v4501 = vld [vmem:[%s4499 + $0x4] sm:$0xf]
      %v4502 = vld [vmem:[%s4499 + $0x8] sm:$0xf]
      %v4503 = vld [vmem:[%s4499 + $0xc] sm:$0xf]
      %v4508 = vunpack.c.l.b16 %v4500
      %v4509 = vunpack.c.l.b16 %v4501
      %v4510 = vunpack.c.l.b16 %v4502
      %v4511 = vunpack.c.l.b16 %v4503
      %v4512 = vpack.c.b16 %v4509, %v4508
      %v4513 = vpack.c.b16 %v4511, %v4510
      %4516 = vmatpush.bf16.msra.mxu0 0
      %4517 = vmatpush.bf16.msra.mxu0 0
      %4518 = vmatpush.bf16.msra.mxu0 0
      %4519 = vmatpush.bf16.msra.mxu0 0
      %4520 = vmatpush.bf16.msra.mxu0 0
      %4521 = vmatpush.bf16.msra.mxu0 0
      %4522 = vmatpush.bf16.msra.mxu0 %v4513
      %4523 = vmatpush.bf16.msra.mxu0 %v4512
      %4524 = vmatmul.bf16.gmra.mxu0 %v3548
      %v4525 = vpop.f32.mrf.mxu0
      %v4526 = vadd.f32 0.0, %v4525
      %v4527 = vpop.f32.mrf.mxu0
      %4528 = vdwg.mxu0
      %v4529 = vadd.f32 %v4498, %v4526
      %s4530 = scalar_lea.vmem %s7, 128
      %v4531 = vld [vmem:[%s4530] sm:$0xf]
      %v4532 = vld [vmem:[%s4530 + $0x4] sm:$0xf]
      %v4533 = vld [vmem:[%s4530 + $0x8] sm:$0xf]
      %v4534 = vld [vmem:[%s4530 + $0xc] sm:$0xf]
      %v4539 = vunpack.c.l.b16 %v4531
      %v4540 = vunpack.c.l.b16 %v4532
      %v4541 = vunpack.c.l.b16 %v4533
      %v4542 = vunpack.c.l.b16 %v4534
      %v4543 = vpack.c.b16 %v4540, %v4539
      %v4544 = vpack.c.b16 %v4542, %v4541
      %4547 = vmatpush.bf16.msra.mxu0 0
      %4548 = vmatpush.bf16.msra.mxu0 0
      %4549 = vmatpush.bf16.msra.mxu0 0
      %4550 = vmatpush.bf16.msra.mxu0 0
      %4551 = vmatpush.bf16.msra.mxu0 0
      %4552 = vmatpush.bf16.msra.mxu0 0
      %4553 = vmatpush.bf16.msra.mxu0 %v4544
      %4554 = vmatpush.bf16.msra.mxu0 %v4543
      %4555 = vmatmul.bf16.gmra.mxu0 %v3601
      %v4556 = vpop.f32.mrf.mxu0
      %v4557 = vadd.f32 0.0, %v4556
      %v4558 = vpop.f32.mrf.mxu0
      %4559 = vdwg.mxu0
      %v4560 = vadd.f32 %v4529, %v4557
      %v4561 = vmax.f32 %v4560, 0.0
      %4563 = vrot.lane.b32.xlu0 %v4561, 64
      %v4564 = vpop.permute.xlu0 %4563
      %v4566 = vsel %vm2656, %v4280, %v4564
      %v4567 = vld [vmem:[%s15 + $0x7] sm:$0x1]
      %v4568 = vpack.c.bf16 %v4566, %v4566
      %v4569 = vpack.c.bf16 %v3617, %v3617
      %v4570 = vld [vmem:[%s8] sm:$0xf]
      %v4571 = vld [vmem:[%s8 + $0x4] sm:$0xf]
      %v4572 = vld [vmem:[%s8 + $0x8] sm:$0xf]
      %v4573 = vld [vmem:[%s8 + $0xc] sm:$0xf]
      %v4574 = vld [vmem:[%s8 + $0x10] sm:$0xf]
      %v4575 = vld [vmem:[%s8 + $0x14] sm:$0xf]
      %v4576 = vld [vmem:[%s8 + $0x18] sm:$0xf]
      %v4577 = vld [vmem:[%s8 + $0x1c] sm:$0xf]
      %v4578 = vld [vmem:[%s8 + $0x20] sm:$0xf]
      %v4579 = vld [vmem:[%s8 + $0x24] sm:$0xf]
      %v4580 = vld [vmem:[%s8 + $0x28] sm:$0xf]
      %v4581 = vld [vmem:[%s8 + $0x2c] sm:$0xf]
      %v4582 = vld [vmem:[%s8 + $0x30] sm:$0xf]
      %v4583 = vld [vmem:[%s8 + $0x34] sm:$0xf]
      %v4584 = vld [vmem:[%s8 + $0x38] sm:$0xf]
      %v4585 = vld [vmem:[%s8 + $0x3c] sm:$0xf]
      %v4586 = vld [vmem:[%s8 + $0x40] sm:$0xf]
      %v4587 = vld [vmem:[%s8 + $0x44] sm:$0xf]
      %v4588 = vld [vmem:[%s8 + $0x48] sm:$0xf]
      %v4589 = vld [vmem:[%s8 + $0x4c] sm:$0xf]
      %v4590 = vld [vmem:[%s8 + $0x50] sm:$0xf]
      %v4591 = vld [vmem:[%s8 + $0x54] sm:$0xf]
      %v4592 = vld [vmem:[%s8 + $0x58] sm:$0xf]
      %v4593 = vld [vmem:[%s8 + $0x5c] sm:$0xf]
      %v4594 = vperm.slane %v4567, 0
      %v4619 = vunpack.c.l.b16 %v4570
      %v4620 = vunpack.c.l.b16 %v4571
      %v4621 = vunpack.c.l.b16 %v4572
      %v4622 = vunpack.c.l.b16 %v4573
      %v4623 = vunpack.c.l.b16 %v4574
      %v4624 = vunpack.c.l.b16 %v4575
      %v4625 = vunpack.c.l.b16 %v4576
      %v4626 = vunpack.c.l.b16 %v4577
      %v4627 = vunpack.c.l.b16 %v4578
      %v4628 = vunpack.c.l.b16 %v4579
      %v4629 = vunpack.c.l.b16 %v4580
      %v4630 = vunpack.c.l.b16 %v4581
      %v4631 = vunpack.c.l.b16 %v4582
      %v4632 = vunpack.c.l.b16 %v4583
      %v4633 = vunpack.c.l.b16 %v4584
      %v4634 = vunpack.c.l.b16 %v4585
      %v4635 = vunpack.c.l.b16 %v4586
      %v4636 = vunpack.c.l.b16 %v4587
      %v4637 = vunpack.c.l.b16 %v4588
      %v4638 = vunpack.c.l.b16 %v4589
      %v4639 = vunpack.c.l.b16 %v4590
      %v4640 = vunpack.c.l.b16 %v4591
      %v4641 = vunpack.c.l.b16 %v4592
      %v4642 = vunpack.c.l.b16 %v4593
      %v4643 = vpack.c.b16 %v4620, %v4619
      %v4644 = vpack.c.b16 %v4622, %v4621
      %v4645 = vpack.c.b16 %v4624, %v4623
      %v4646 = vpack.c.b16 %v4626, %v4625
      %v4647 = vpack.c.b16 %v4628, %v4627
      %v4648 = vpack.c.b16 %v4630, %v4629
      %v4649 = vpack.c.b16 %v4632, %v4631
      %v4650 = vpack.c.b16 %v4634, %v4633
      %v4651 = vpack.c.b16 %v4636, %v4635
      %v4652 = vpack.c.b16 %v4638, %v4637
      %v4653 = vpack.c.b16 %v4640, %v4639
      %v4654 = vpack.c.b16 %v4642, %v4641
      %v4668 = vsel %vm2656, %v4569, 0
      %4670 = vmatpush.bf16.msra.mxu0 %v4650
      %4671 = vmatpush.bf16.msra.mxu0 %v4649
      %4672 = vmatpush.bf16.msra.mxu0 %v4648
      %4673 = vmatpush.bf16.msra.mxu0 %v4647
      %4674 = vmatpush.bf16.msra.mxu0 %v4646
      %4675 = vmatpush.bf16.msra.mxu0 %v4645
      %4676 = vmatpush.bf16.msra.mxu0 %v4644
      %4677 = vmatpush.bf16.msra.mxu0 %v4643
      %4678 = vmatmul.bf16.gmra.mxu0 %v4568
      %v4679 = vpop.f32.mrf.mxu0
      %v4680 = vadd.f32 %v4594, %v4679
      %v4681 = vpop.f32.mrf.mxu0
      %4682 = vdwg.mxu0
      %4683 = vmatpush.bf16.msra.mxu0 0
      %4684 = vmatpush.bf16.msra.mxu0 0
      %4685 = vmatpush.bf16.msra.mxu0 0
      %4686 = vmatpush.bf16.msra.mxu0 0
      %4687 = vmatpush.bf16.msra.mxu0 %v4654
      %4688 = vmatpush.bf16.msra.mxu0 %v4653
      %4689 = vmatpush.bf16.msra.mxu0 %v4652
      %4690 = vmatpush.bf16.msra.mxu0 %v4651
      %4691 = vmatmul.bf16.gmra.mxu0 %v4668
      %v4692 = vpop.f32.mrf.mxu0
      %v4693 = vadd.f32 %v4680, %v4692
      %v4694 = vpop.f32.mrf.mxu0
      %4695 = vdwg.mxu0
      %v4696 = vmax.f32 %v4693, 0.0
      %v4697 = vld [vmem:[%s15 + $0x8] sm:$0x1]
      %v4698 = vpack.c.bf16 %v4696, %v4696
      %v4699 = vld [vmem:[%s19] sm:$0x3]
      %vm4700 = vcmask 31744
      %v4702 = vsel %vm4700, %v4699, 0
      %vm4704 = vcmask 1041408
      %v4706 = vsel %vm4704, %v4698, 0
      %4708 = vmatpush.bf16.msra.mxu0 0
      %4709 = vmatpush.bf16.msra.mxu0 0
      %4710 = vmatpush.bf16.msra.mxu0 0
      %4711 = vmatpush.bf16.msra.mxu0 0
      %4712 = vmatpush.bf16.msra.mxu0 0
      %4713 = vmatpush.bf16.msra.mxu0 0
      %4714 = vmatpush.bf16.msra.mxu0 0
      %4715 = vmatpush.bf16.msra.mxu0 %v4706
      %4716 = vmatmul.bf16.gmra.mxu0 %v4702
      %v4717 = vpop.f32.mrf.mxu0
      %v4718 = vadd.f32 0.0, %v4717
      %v4719 = vpop.f32.mrf.mxu0
      %4720 = vdwg.mxu0
      %v4721 = vpack.c.bf16 %v4718, %v4718
      %v4722 = vld [vmem:[%s9] sm:$0xf]
      %v4723 = vld [vmem:[%s9 + $0x4] sm:$0xf]
      %v4724 = vld [vmem:[%s9 + $0x8] sm:$0xf]
      %v4725 = vld [vmem:[%s9 + $0xc] sm:$0xf]
      %v4726 = vld [vmem:[%s9 + $0x10] sm:$0xf]
      %v4727 = vld [vmem:[%s9 + $0x14] sm:$0xf]
      %v4728 = vld [vmem:[%s9 + $0x18] sm:$0xf]
      %v4729 = vld [vmem:[%s9 + $0x1c] sm:$0xf]
      %v4738 = vunpack.c.l.b16 %v4722
      %v4739 = vunpack.c.l.b16 %v4723
      %v4740 = vunpack.c.l.b16 %v4724
      %v4741 = vunpack.c.l.b16 %v4725
      %v4742 = vunpack.c.l.b16 %v4726
      %v4743 = vunpack.c.l.b16 %v4727
      %v4744 = vunpack.c.l.b16 %v4728
      %v4745 = vunpack.c.l.b16 %v4729
      %v4746 = vpack.c.b16 %v4739, %v4738
      %v4747 = vpack.c.b16 %v4741, %v4740
      %v4748 = vpack.c.b16 %v4743, %v4742
      %v4749 = vpack.c.b16 %v4745, %v4744
      %v4755 = vsel %vm2656, %v4721, 0
      %4757 = vmatpush.bf16.msra.mxu0 0
      %4758 = vmatpush.bf16.msra.mxu0 0
      %4759 = vmatpush.bf16.msra.mxu0 0
      %4760 = vmatpush.bf16.msra.mxu0 0
      %4761 = vmatpush.bf16.msra.mxu0 %v4749
      %4762 = vmatpush.bf16.msra.mxu0 %v4748
      %4763 = vmatpush.bf16.msra.mxu0 %v4747
      %4764 = vmatpush.bf16.msra.mxu0 %v4746
      %4765 = vmatmul.bf16.gmra.mxu0 %v4755
      %v4766 = vpop.f32.mrf.mxu0
      %v4767 = vadd.f32 0.0, %v4766
      %v4768 = vpop.f32.mrf.mxu0
      %4769 = vdwg.mxu0
      %v4770 = vperm.slane %v4697, 0
      %v4771 = vadd.f32 %v4770, %v4767
      %s4772 = scalar_lea.vmem %s19, 2
      %v4773 = vld [vmem:[%s4772] sm:$0x3]
      %v4775 = vsel %vm4700, %v4773, 0
      %4777 = vmatpush.bf16.msra.mxu0 0
      %4778 = vmatpush.bf16.msra.mxu0 0
      %4779 = vmatpush.bf16.msra.mxu0 0
      %4780 = vmatpush.bf16.msra.mxu0 0
      %4781 = vmatpush.bf16.msra.mxu0 0
      %4782 = vmatpush.bf16.msra.mxu0 0
      %4783 = vmatpush.bf16.msra.mxu0 0
      %4784 = vmatpush.bf16.msra.mxu0 %v4706
      %4785 = vmatmul.bf16.gmra.mxu0 %v4775
      %v4786 = vpop.f32.mrf.mxu0
      %v4787 = vadd.f32 0.0, %v4786
      %v4788 = vpop.f32.mrf.mxu0
      %4789 = vdwg.mxu0
      %v4790 = vpack.c.bf16 %v4787, %v4787
      %s4791 = scalar_lea.vmem %s9, 32
      %v4792 = vld [vmem:[%s4791] sm:$0xf]
      %v4793 = vld [vmem:[%s4791 + $0x4] sm:$0xf]
      %v4794 = vld [vmem:[%s4791 + $0x8] sm:$0xf]
      %v4795 = vld [vmem:[%s4791 + $0xc] sm:$0xf]
      %v4796 = vld [vmem:[%s4791 + $0x10] sm:$0xf]
      %v4797 = vld [vmem:[%s4791 + $0x14] sm:$0xf]
      %v4798 = vld [vmem:[%s4791 + $0x18] sm:$0xf]
      %v4799 = vld [vmem:[%s4791 + $0x1c] sm:$0xf]
      %v4808 = vunpack.c.l.b16 %v4792
      %v4809 = vunpack.c.l.b16 %v4793
      %v4810 = vunpack.c.l.b16 %v4794
      %v4811 = vunpack.c.l.b16 %v4795
      %v4812 = vunpack.c.l.b16 %v4796
      %v4813 = vunpack.c.l.b16 %v4797
      %v4814 = vunpack.c.l.b16 %v4798
      %v4815 = vunpack.c.l.b16 %v4799
      %v4816 = vpack.c.b16 %v4809, %v4808
      %v4817 = vpack.c.b16 %v4811, %v4810
      %v4818 = vpack.c.b16 %v4813, %v4812
      %v4819 = vpack.c.b16 %v4815, %v4814
      %v4825 = vsel %vm2656, %v4790, 0
      %4827 = vmatpush.bf16.msra.mxu0 0
      %4828 = vmatpush.bf16.msra.mxu0 0
      %4829 = vmatpush.bf16.msra.mxu0 0
      %4830 = vmatpush.bf16.msra.mxu0 0
      %4831 = vmatpush.bf16.msra.mxu0 %v4819
      %4832 = vmatpush.bf16.msra.mxu0 %v4818
      %4833 = vmatpush.bf16.msra.mxu0 %v4817
      %4834 = vmatpush.bf16.msra.mxu0 %v4816
      %4835 = vmatmul.bf16.gmra.mxu0 %v4825
      %v4836 = vpop.f32.mrf.mxu0
      %v4837 = vadd.f32 0.0, %v4836
      %v4838 = vpop.f32.mrf.mxu0
      %4839 = vdwg.mxu0
      %v4840 = vadd.f32 %v4771, %v4837
      %s4841 = scalar_lea.vmem %s19, 4
      %v4842 = vld [vmem:[%s4841] sm:$0x3]
      %v4844 = vsel %vm4700, %v4842, 0
      %4846 = vmatpush.bf16.msra.mxu0 0
      %4847 = vmatpush.bf16.msra.mxu0 0
      %4848 = vmatpush.bf16.msra.mxu0 0
      %4849 = vmatpush.bf16.msra.mxu0 0
      %4850 = vmatpush.bf16.msra.mxu0 0
      %4851 = vmatpush.bf16.msra.mxu0 0
      %4852 = vmatpush.bf16.msra.mxu0 0
      %4853 = vmatpush.bf16.msra.mxu0 %v4706
      %4854 = vmatmul.bf16.gmra.mxu0 %v4844
      %v4855 = vpop.f32.mrf.mxu0
      %v4856 = vadd.f32 0.0, %v4855
      %v4857 = vpop.f32.mrf.mxu0
      %4858 = vdwg.mxu0
      %v4859 = vpack.c.bf16 %v4856, %v4856
      %s4860 = scalar_lea.vmem %s9, 64
      %v4861 = vld [vmem:[%s4860] sm:$0xf]
      %v4862 = vld [vmem:[%s4860 + $0x4] sm:$0xf]
      %v4863 = vld [vmem:[%s4860 + $0x8] sm:$0xf]
      %v4864 = vld [vmem:[%s4860 + $0xc] sm:$0xf]
      %v4865 = vld [vmem:[%s4860 + $0x10] sm:$0xf]
      %v4866 = vld [vmem:[%s4860 + $0x14] sm:$0xf]
      %v4867 = vld [vmem:[%s4860 + $0x18] sm:$0xf]
      %v4868 = vld [vmem:[%s4860 + $0x1c] sm:$0xf]
      %v4877 = vunpack.c.l.b16 %v4861
      %v4878 = vunpack.c.l.b16 %v4862
      %v4879 = vunpack.c.l.b16 %v4863
      %v4880 = vunpack.c.l.b16 %v4864
      %v4881 = vunpack.c.l.b16 %v4865
      %v4882 = vunpack.c.l.b16 %v4866
      %v4883 = vunpack.c.l.b16 %v4867
      %v4884 = vunpack.c.l.b16 %v4868
      %v4885 = vpack.c.b16 %v4878, %v4877
      %v4886 = vpack.c.b16 %v4880, %v4879
      %v4887 = vpack.c.b16 %v4882, %v4881
      %v4888 = vpack.c.b16 %v4884, %v4883
      %v4894 = vsel %vm2656, %v4859, 0
      %4896 = vmatpush.bf16.msra.mxu0 0
      %4897 = vmatpush.bf16.msra.mxu0 0
      %4898 = vmatpush.bf16.msra.mxu0 0
      %4899 = vmatpush.bf16.msra.mxu0 0
      %4900 = vmatpush.bf16.msra.mxu0 %v4888
      %4901 = vmatpush.bf16.msra.mxu0 %v4887
      %4902 = vmatpush.bf16.msra.mxu0 %v4886
      %4903 = vmatpush.bf16.msra.mxu0 %v4885
      %4904 = vmatmul.bf16.gmra.mxu0 %v4894
      %v4905 = vpop.f32.mrf.mxu0
      %v4906 = vadd.f32 0.0, %v4905
      %v4907 = vpop.f32.mrf.mxu0
      %4908 = vdwg.mxu0
      %v4909 = vadd.f32 %v4840, %v4906
      %s4910 = scalar_lea.vmem %s19, 6
      %v4911 = vld [vmem:[%s4910] sm:$0x3]
      %v4913 = vsel %vm4700, %v4911, 0
      %4915 = vmatpush.bf16.msra.mxu0 0
      %4916 = vmatpush.bf16.msra.mxu0 0
      %4917 = vmatpush.bf16.msra.mxu0 0
      %4918 = vmatpush.bf16.msra.mxu0 0
      %4919 = vmatpush.bf16.msra.mxu0 0
      %4920 = vmatpush.bf16.msra.mxu0 0
      %4921 = vmatpush.bf16.msra.mxu0 0
      %4922 = vmatpush.bf16.msra.mxu0 %v4706
      %4923 = vmatmul.bf16.gmra.mxu0 %v4913
      %v4924 = vpop.f32.mrf.mxu0
      %v4925 = vadd.f32 0.0, %v4924
      %v4926 = vpop.f32.mrf.mxu0
      %4927 = vdwg.mxu0
      %v4928 = vpack.c.bf16 %v4925, %v4925
      %s4929 = scalar_lea.vmem %s9, 96
      %v4930 = vld [vmem:[%s4929] sm:$0xf]
      %v4931 = vld [vmem:[%s4929 + $0x4] sm:$0xf]
      %v4932 = vld [vmem:[%s4929 + $0x8] sm:$0xf]
      %v4933 = vld [vmem:[%s4929 + $0xc] sm:$0xf]
      %v4934 = vld [vmem:[%s4929 + $0x10] sm:$0xf]
      %v4935 = vld [vmem:[%s4929 + $0x14] sm:$0xf]
      %v4936 = vld [vmem:[%s4929 + $0x18] sm:$0xf]
      %v4937 = vld [vmem:[%s4929 + $0x1c] sm:$0xf]
      %v4946 = vunpack.c.l.b16 %v4930
      %v4947 = vunpack.c.l.b16 %v4931
      %v4948 = vunpack.c.l.b16 %v4932
      %v4949 = vunpack.c.l.b16 %v4933
      %v4950 = vunpack.c.l.b16 %v4934
      %v4951 = vunpack.c.l.b16 %v4935
      %v4952 = vunpack.c.l.b16 %v4936
      %v4953 = vunpack.c.l.b16 %v4937
      %v4954 = vpack.c.b16 %v4947, %v4946
      %v4955 = vpack.c.b16 %v4949, %v4948
      %v4956 = vpack.c.b16 %v4951, %v4950
      %v4957 = vpack.c.b16 %v4953, %v4952
      %v4963 = vsel %vm2656, %v4928, 0
      %4965 = vmatpush.bf16.msra.mxu0 0
      %4966 = vmatpush.bf16.msra.mxu0 0
      %4967 = vmatpush.bf16.msra.mxu0 0
      %4968 = vmatpush.bf16.msra.mxu0 0
      %4969 = vmatpush.bf16.msra.mxu0 %v4957
      %4970 = vmatpush.bf16.msra.mxu0 %v4956
      %4971 = vmatpush.bf16.msra.mxu0 %v4955
      %4972 = vmatpush.bf16.msra.mxu0 %v4954
      %4973 = vmatmul.bf16.gmra.mxu0 %v4963
      %v4974 = vpop.f32.mrf.mxu0
      %v4975 = vadd.f32 0.0, %v4974
      %v4976 = vpop.f32.mrf.mxu0
      %4977 = vdwg.mxu0
      %v4978 = vadd.f32 %v4909, %v4975
      %s4979 = scalar_lea.vmem %s19, 8
      %v4980 = vld [vmem:[%s4979] sm:$0x3]
      %v4982 = vsel %vm4700, %v4980, 0
      %4984 = vmatpush.bf16.msra.mxu0 0
      %4985 = vmatpush.bf16.msra.mxu0 0
      %4986 = vmatpush.bf16.msra.mxu0 0
      %4987 = vmatpush.bf16.msra.mxu0 0
      %4988 = vmatpush.bf16.msra.mxu0 0
      %4989 = vmatpush.bf16.msra.mxu0 0
      %4990 = vmatpush.bf16.msra.mxu0 0
      %4991 = vmatpush.bf16.msra.mxu0 %v4706
      %4992 = vmatmul.bf16.gmra.mxu0 %v4982
      %v4993 = vpop.f32.mrf.mxu0
      %v4994 = vadd.f32 0.0, %v4993
      %v4995 = vpop.f32.mrf.mxu0
      %4996 = vdwg.mxu0
      %v4997 = vpack.c.bf16 %v4994, %v4994
      %s4998 = scalar_lea.vmem %s9, 128
      %v4999 = vld [vmem:[%s4998] sm:$0xf]
      %v5000 = vld [vmem:[%s4998 + $0x4] sm:$0xf]
      %v5001 = vld [vmem:[%s4998 + $0x8] sm:$0xf]
      %v5002 = vld [vmem:[%s4998 + $0xc] sm:$0xf]
      %v5003 = vld [vmem:[%s4998 + $0x10] sm:$0xf]
      %v5004 = vld [vmem:[%s4998 + $0x14] sm:$0xf]
      %v5005 = vld [vmem:[%s4998 + $0x18] sm:$0xf]
      %v5006 = vld [vmem:[%s4998 + $0x1c] sm:$0xf]
      %v5015 = vunpack.c.l.b16 %v4999
      %v5016 = vunpack.c.l.b16 %v5000
      %v5017 = vunpack.c.l.b16 %v5001
      %v5018 = vunpack.c.l.b16 %v5002
      %v5019 = vunpack.c.l.b16 %v5003
      %v5020 = vunpack.c.l.b16 %v5004
      %v5021 = vunpack.c.l.b16 %v5005
      %v5022 = vunpack.c.l.b16 %v5006
      %v5023 = vpack.c.b16 %v5016, %v5015
      %v5024 = vpack.c.b16 %v5018, %v5017
      %v5025 = vpack.c.b16 %v5020, %v5019
      %v5026 = vpack.c.b16 %v5022, %v5021
      %v5032 = vsel %vm2656, %v4997, 0
      %5034 = vmatpush.bf16.msra.mxu0 0
      %5035 = vmatpush.bf16.msra.mxu0 0
      %5036 = vmatpush.bf16.msra.mxu0 0
      %5037 = vmatpush.bf16.msra.mxu0 0
      %5038 = vmatpush.bf16.msra.mxu0 %v5026
      %5039 = vmatpush.bf16.msra.mxu0 %v5025
      %5040 = vmatpush.bf16.msra.mxu0 %v5024
      %5041 = vmatpush.bf16.msra.mxu0 %v5023
      %5042 = vmatmul.bf16.gmra.mxu0 %v5032
      %v5043 = vpop.f32.mrf.mxu0
      %v5044 = vadd.f32 0.0, %v5043
      %v5045 = vpop.f32.mrf.mxu0
      %5046 = vdwg.mxu0
      %v5047 = vadd.f32 %v4978, %v5044
      %s5048 = scalar_lea.vmem %s19, 10
      %v5049 = vld [vmem:[%s5048] sm:$0x3]
      %v5051 = vsel %vm4700, %v5049, 0
      %5053 = vmatpush.bf16.msra.mxu0 0
      %5054 = vmatpush.bf16.msra.mxu0 0
      %5055 = vmatpush.bf16.msra.mxu0 0
      %5056 = vmatpush.bf16.msra.mxu0 0
      %5057 = vmatpush.bf16.msra.mxu0 0
      %5058 = vmatpush.bf16.msra.mxu0 0
      %5059 = vmatpush.bf16.msra.mxu0 0
      %5060 = vmatpush.bf16.msra.mxu0 %v4706
      %5061 = vmatmul.bf16.gmra.mxu0 %v5051
      %v5062 = vpop.f32.mrf.mxu0
      %v5063 = vadd.f32 0.0, %v5062
      %v5064 = vpop.f32.mrf.mxu0
      %5065 = vdwg.mxu0
      %v5066 = vpack.c.bf16 %v5063, %v5063
      %s5067 = scalar_lea.vmem %s9, 160
      %v5068 = vld [vmem:[%s5067] sm:$0xf]
      %v5069 = vld [vmem:[%s5067 + $0x4] sm:$0xf]
      %v5070 = vld [vmem:[%s5067 + $0x8] sm:$0xf]
      %v5071 = vld [vmem:[%s5067 + $0xc] sm:$0xf]
      %v5072 = vld [vmem:[%s5067 + $0x10] sm:$0xf]
      %v5073 = vld [vmem:[%s5067 + $0x14] sm:$0xf]
      %v5074 = vld [vmem:[%s5067 + $0x18] sm:$0xf]
      %v5075 = vld [vmem:[%s5067 + $0x1c] sm:$0xf]
      %v5084 = vunpack.c.l.b16 %v5068
      %v5085 = vunpack.c.l.b16 %v5069
      %v5086 = vunpack.c.l.b16 %v5070
      %v5087 = vunpack.c.l.b16 %v5071
      %v5088 = vunpack.c.l.b16 %v5072
      %v5089 = vunpack.c.l.b16 %v5073
      %v5090 = vunpack.c.l.b16 %v5074
      %v5091 = vunpack.c.l.b16 %v5075
      %v5092 = vpack.c.b16 %v5085, %v5084
      %v5093 = vpack.c.b16 %v5087, %v5086
      %v5094 = vpack.c.b16 %v5089, %v5088
      %v5095 = vpack.c.b16 %v5091, %v5090
      %v5101 = vsel %vm2656, %v5066, 0
      %5103 = vmatpush.bf16.msra.mxu0 0
      %5104 = vmatpush.bf16.msra.mxu0 0
      %5105 = vmatpush.bf16.msra.mxu0 0
      %5106 = vmatpush.bf16.msra.mxu0 0
      %5107 = vmatpush.bf16.msra.mxu0 %v5095
      %5108 = vmatpush.bf16.msra.mxu0 %v5094
      %5109 = vmatpush.bf16.msra.mxu0 %v5093
      %5110 = vmatpush.bf16.msra.mxu0 %v5092
      %5111 = vmatmul.bf16.gmra.mxu0 %v5101
      %v5112 = vpop.f32.mrf.mxu0
      %v5113 = vadd.f32 0.0, %v5112
      %v5114 = vpop.f32.mrf.mxu0
      %5115 = vdwg.mxu0
      %v5116 = vadd.f32 %v5047, %v5113
      %s5117 = scalar_lea.vmem %s19, 12
      %v5118 = vld [vmem:[%s5117] sm:$0x3]
      %v5120 = vsel %vm4700, %v5118, 0
      %5122 = vmatpush.bf16.msra.mxu0 0
      %5123 = vmatpush.bf16.msra.mxu0 0
      %5124 = vmatpush.bf16.msra.mxu0 0
      %5125 = vmatpush.bf16.msra.mxu0 0
      %5126 = vmatpush.bf16.msra.mxu0 0
      %5127 = vmatpush.bf16.msra.mxu0 0
      %5128 = vmatpush.bf16.msra.mxu0 0
      %5129 = vmatpush.bf16.msra.mxu0 %v4706
      %5130 = vmatmul.bf16.gmra.mxu0 %v5120
      %v5131 = vpop.f32.mrf.mxu0
      %v5132 = vadd.f32 0.0, %v5131
      %v5133 = vpop.f32.mrf.mxu0
      %5134 = vdwg.mxu0
      %v5135 = vpack.c.bf16 %v5132, %v5132
      %s5136 = scalar_lea.vmem %s9, 192
      %v5137 = vld [vmem:[%s5136] sm:$0xf]
      %v5138 = vld [vmem:[%s5136 + $0x4] sm:$0xf]
      %v5139 = vld [vmem:[%s5136 + $0x8] sm:$0xf]
      %v5140 = vld [vmem:[%s5136 + $0xc] sm:$0xf]
      %v5141 = vld [vmem:[%s5136 + $0x10] sm:$0xf]
      %v5142 = vld [vmem:[%s5136 + $0x14] sm:$0xf]
      %v5143 = vld [vmem:[%s5136 + $0x18] sm:$0xf]
      %v5144 = vld [vmem:[%s5136 + $0x1c] sm:$0xf]
      %v5153 = vunpack.c.l.b16 %v5137
      %v5154 = vunpack.c.l.b16 %v5138
      %v5155 = vunpack.c.l.b16 %v5139
      %v5156 = vunpack.c.l.b16 %v5140
      %v5157 = vunpack.c.l.b16 %v5141
      %v5158 = vunpack.c.l.b16 %v5142
      %v5159 = vunpack.c.l.b16 %v5143
      %v5160 = vunpack.c.l.b16 %v5144
      %v5161 = vpack.c.b16 %v5154, %v5153
      %v5162 = vpack.c.b16 %v5156, %v5155
      %v5163 = vpack.c.b16 %v5158, %v5157
      %v5164 = vpack.c.b16 %v5160, %v5159
      %v5170 = vsel %vm2656, %v5135, 0
      %5172 = vmatpush.bf16.msra.mxu0 0
      %5173 = vmatpush.bf16.msra.mxu0 0
      %5174 = vmatpush.bf16.msra.mxu0 0
      %5175 = vmatpush.bf16.msra.mxu0 0
      %5176 = vmatpush.bf16.msra.mxu0 %v5164
      %5177 = vmatpush.bf16.msra.mxu0 %v5163
      %5178 = vmatpush.bf16.msra.mxu0 %v5162
      %5179 = vmatpush.bf16.msra.mxu0 %v5161
      %5180 = vmatmul.bf16.gmra.mxu0 %v5170
      %v5181 = vpop.f32.mrf.mxu0
      %v5182 = vadd.f32 0.0, %v5181
      %v5183 = vpop.f32.mrf.mxu0
      %5184 = vdwg.mxu0
      %v5185 = vadd.f32 %v5116, %v5182
      %s5186 = scalar_lea.vmem %s19, 14
      %v5187 = vld [vmem:[%s5186] sm:$0x3]
      %v5189 = vsel %vm4700, %v5187, 0
      %5191 = vmatpush.bf16.msra.mxu0 0
      %5192 = vmatpush.bf16.msra.mxu0 0
      %5193 = vmatpush.bf16.msra.mxu0 0
      %5194 = vmatpush.bf16.msra.mxu0 0
      %5195 = vmatpush.bf16.msra.mxu0 0
      %5196 = vmatpush.bf16.msra.mxu0 0
      %5197 = vmatpush.bf16.msra.mxu0 0
      %5198 = vmatpush.bf16.msra.mxu0 %v4706
      %5199 = vmatmul.bf16.gmra.mxu0 %v5189
      %v5200 = vpop.f32.mrf.mxu0
      %v5201 = vadd.f32 0.0, %v5200
      %v5202 = vpop.f32.mrf.mxu0
      %5203 = vdwg.mxu0
      %v5204 = vpack.c.bf16 %v5201, %v5201
      %s5205 = scalar_lea.vmem %s9, 224
      %v5206 = vld [vmem:[%s5205] sm:$0xf]
      %v5207 = vld [vmem:[%s5205 + $0x4] sm:$0xf]
      %v5208 = vld [vmem:[%s5205 + $0x8] sm:$0xf]
      %v5209 = vld [vmem:[%s5205 + $0xc] sm:$0xf]
      %v5210 = vld [vmem:[%s5205 + $0x10] sm:$0xf]
      %v5211 = vld [vmem:[%s5205 + $0x14] sm:$0xf]
      %v5212 = vld [vmem:[%s5205 + $0x18] sm:$0xf]
      %v5213 = vld [vmem:[%s5205 + $0x1c] sm:$0xf]
      %v5222 = vunpack.c.l.b16 %v5206
      %v5223 = vunpack.c.l.b16 %v5207
      %v5224 = vunpack.c.l.b16 %v5208
      %v5225 = vunpack.c.l.b16 %v5209
      %v5226 = vunpack.c.l.b16 %v5210
      %v5227 = vunpack.c.l.b16 %v5211
      %v5228 = vunpack.c.l.b16 %v5212
      %v5229 = vunpack.c.l.b16 %v5213
      %v5230 = vpack.c.b16 %v5223, %v5222
      %v5231 = vpack.c.b16 %v5225, %v5224
      %v5232 = vpack.c.b16 %v5227, %v5226
      %v5233 = vpack.c.b16 %v5229, %v5228
      %v5239 = vsel %vm2656, %v5204, 0
      %5241 = vmatpush.bf16.msra.mxu0 0
      %5242 = vmatpush.bf16.msra.mxu0 0
      %5243 = vmatpush.bf16.msra.mxu0 0
      %5244 = vmatpush.bf16.msra.mxu0 0
      %5245 = vmatpush.bf16.msra.mxu0 %v5233
      %5246 = vmatpush.bf16.msra.mxu0 %v5232
      %5247 = vmatpush.bf16.msra.mxu0 %v5231
      %5248 = vmatpush.bf16.msra.mxu0 %v5230
      %5249 = vmatmul.bf16.gmra.mxu0 %v5239
      %v5250 = vpop.f32.mrf.mxu0
      %v5251 = vadd.f32 0.0, %v5250
      %v5252 = vpop.f32.mrf.mxu0
      %5253 = vdwg.mxu0
      %v5254 = vadd.f32 %v5185, %v5251
      %s5255 = scalar_lea.vmem %s19, 16
      %v5256 = vld [vmem:[%s5255] sm:$0x3]
      %v5258 = vsel %vm4700, %v5256, 0
      %5260 = vmatpush.bf16.msra.mxu0 0
      %5261 = vmatpush.bf16.msra.mxu0 0
      %5262 = vmatpush.bf16.msra.mxu0 0
      %5263 = vmatpush.bf16.msra.mxu0 0
      %5264 = vmatpush.bf16.msra.mxu0 0
      %5265 = vmatpush.bf16.msra.mxu0 0
      %5266 = vmatpush.bf16.msra.mxu0 0
      %5267 = vmatpush.bf16.msra.mxu0 %v4706
      %5268 = vmatmul.bf16.gmra.mxu0 %v5258
      %v5269 = vpop.f32.mrf.mxu0
      %v5270 = vadd.f32 0.0, %v5269
      %v5271 = vpop.f32.mrf.mxu0
      %5272 = vdwg.mxu0
      %v5273 = vpack.c.bf16 %v5270, %v5270
      %s5274 = scalar_lea.vmem %s9, 256
      %v5275 = vld [vmem:[%s5274] sm:$0xf]
      %v5276 = vld [vmem:[%s5274 + $0x4] sm:$0xf]
      %v5277 = vld [vmem:[%s5274 + $0x8] sm:$0xf]
      %v5278 = vld [vmem:[%s5274 + $0xc] sm:$0xf]
      %v5279 = vld [vmem:[%s5274 + $0x10] sm:$0xf]
      %v5280 = vld [vmem:[%s5274 + $0x14] sm:$0xf]
      %v5281 = vld [vmem:[%s5274 + $0x18] sm:$0xf]
      %v5282 = vld [vmem:[%s5274 + $0x1c] sm:$0xf]
      %v5291 = vunpack.c.l.b16 %v5275
      %v5292 = vunpack.c.l.b16 %v5276
      %v5293 = vunpack.c.l.b16 %v5277
      %v5294 = vunpack.c.l.b16 %v5278
      %v5295 = vunpack.c.l.b16 %v5279
      %v5296 = vunpack.c.l.b16 %v5280
      %v5297 = vunpack.c.l.b16 %v5281
      %v5298 = vunpack.c.l.b16 %v5282
      %v5299 = vpack.c.b16 %v5292, %v5291
      %v5300 = vpack.c.b16 %v5294, %v5293
      %v5301 = vpack.c.b16 %v5296, %v5295
      %v5302 = vpack.c.b16 %v5298, %v5297
      %v5308 = vsel %vm2656, %v5273, 0
      %5310 = vmatpush.bf16.msra.mxu0 0
      %5311 = vmatpush.bf16.msra.mxu0 0
      %5312 = vmatpush.bf16.msra.mxu0 0
      %5313 = vmatpush.bf16.msra.mxu0 0
      %5314 = vmatpush.bf16.msra.mxu0 %v5302
      %5315 = vmatpush.bf16.msra.mxu0 %v5301
      %5316 = vmatpush.bf16.msra.mxu0 %v5300
      %5317 = vmatpush.bf16.msra.mxu0 %v5299
      %5318 = vmatmul.bf16.gmra.mxu0 %v5308
      %v5319 = vpop.f32.mrf.mxu0
      %v5320 = vadd.f32 0.0, %v5319
      %v5321 = vpop.f32.mrf.mxu0
      %5322 = vdwg.mxu0
      %v5323 = vadd.f32 %v5254, %v5320
      %v5324 = vmax.f32 %v5323, 0.0
      %v5325 = vld [vmem:[%s22] sm:$0xf]
      %v5326 = vld [vmem:[%s22 + $0x4] sm:$0xf]
      %v5327 = vpack.c.bf16 %v5324, %v5324
      %v5330 = vunpack.c.l.b16 %v5325
      %v5331 = vunpack.c.l.b16 %v5326
      %v5332 = vpack.c.b16 %v5331, %v5330
      %v5334 = vsel %vm4700, %v5332, 0
      %v5337 = vsel %vm4704, %v5327, 0
      %5339 = vmatpush.bf16.msra.mxu0 0
      %5340 = vmatpush.bf16.msra.mxu0 0
      %5341 = vmatpush.bf16.msra.mxu0 0
      %5342 = vmatpush.bf16.msra.mxu0 0
      %5343 = vmatpush.bf16.msra.mxu0 0
      %5344 = vmatpush.bf16.msra.mxu0 0
      %5345 = vmatpush.bf16.msra.mxu0 0
      %5346 = vmatpush.bf16.msra.mxu0 %v5337
      %5347 = vmatmul.bf16.gmra.mxu0 %v5334
      %v5348 = vpop.f32.mrf.mxu0
      %v5349 = vadd.f32 0.0, %v5348
      %v5350 = vpop.f32.mrf.mxu0
      %v5351 = vadd.f32 0.0, %v5350
      %5352 = vdwg.mxu0
      %v5353 = vld [vmem:[%s15 + $0x9] sm:$0x1]
      %v5354 = vpack.c.bf16 %v5351, %v5349
      %v5355 = vld [vmem:[%s20] sm:$0xf]
      %v5356 = vld [vmem:[%s20 + $0x4] sm:$0xf]
      %v5359 = vunpack.c.l.b16 %v5355
      %v5360 = vunpack.c.l.b16 %v5356
      %v5361 = vpack.c.b16 %v5360, %v5359
      %v5363 = vsel %vm2683, %v5361, 0
      %5365 = vmatpush.bf16.msra.mxu0 0
      %5366 = vmatpush.bf16.msra.mxu0 0
      %5367 = vmatpush.bf16.msra.mxu0 0
      %5368 = vmatpush.bf16.msra.mxu0 0
      %5369 = vmatpush.bf16.msra.mxu0 0
      %5370 = vmatpush.bf16.msra.mxu0 0
      %5371 = vmatpush.bf16.msra.mxu0 0
      %5372 = vmatpush.bf16.msra.mxu0 %v5354
      %5373 = vmatmul.bf16.gmra.mxu0 %v5363
      %v5374 = vpop.f32.mrf.mxu0
      %v5375 = vadd.f32 0.0, %v5374
      %v5376 = vpop.f32.mrf.mxu0
      %v5377 = vadd.f32 0.0, %v5376
      %5378 = vdwg.mxu0
      %v5379 = vpack.c.bf16 %v5377, %v5375
      %v5380 = vld [vmem:[%s10] sm:$0xf]
      %v5381 = vld [vmem:[%s10 + $0x4] sm:$0xf]
      %v5382 = vld [vmem:[%s10 + $0x8] sm:$0xf]
      %v5383 = vld [vmem:[%s10 + $0xc] sm:$0xf]
      %v5384 = vld [vmem:[%s10 + $0x10] sm:$0xf]
      %v5385 = vld [vmem:[%s10 + $0x14] sm:$0xf]
      %v5386 = vld [vmem:[%s10 + $0x18] sm:$0xf]
      %v5387 = vld [vmem:[%s10 + $0x1c] sm:$0xf]
      %v5396 = vunpack.c.l.b16 %v5380
      %v5397 = vunpack.c.l.b16 %v5381
      %v5398 = vunpack.c.l.b16 %v5382
      %v5399 = vunpack.c.l.b16 %v5383
      %v5400 = vunpack.c.l.b16 %v5384
      %v5401 = vunpack.c.l.b16 %v5385
      %v5402 = vunpack.c.l.b16 %v5386
      %v5403 = vunpack.c.l.b16 %v5387
      %v5404 = vpack.c.b16 %v5397, %v5396
      %v5405 = vpack.c.b16 %v5399, %v5398
      %v5406 = vpack.c.b16 %v5401, %v5400
      %v5407 = vpack.c.b16 %v5403, %v5402
      %v5413 = vsel %vm2656, %v5379, 0
      %5415 = vmatpush.bf16.msra.mxu0 0
      %5416 = vmatpush.bf16.msra.mxu0 0
      %5417 = vmatpush.bf16.msra.mxu0 0
      %5418 = vmatpush.bf16.msra.mxu0 0
      %5419 = vmatpush.bf16.msra.mxu0 %v5407
      %5420 = vmatpush.bf16.msra.mxu0 %v5406
      %5421 = vmatpush.bf16.msra.mxu0 %v5405
      %5422 = vmatpush.bf16.msra.mxu0 %v5404
      %5423 = vmatmul.bf16.gmra.mxu0 %v5413
      %v5424 = vpop.f32.mrf.mxu0
      %v5425 = vadd.f32 0.0, %v5424
      %v5426 = vpop.f32.mrf.mxu0
      %v5427 = vadd.f32 0.0, %v5426
      %5428 = vdwg.mxu0
      %v5429 = vperm.slane %v5353, 0
      %v5430 = vadd.f32 %v5429, %v5425
      %v5431 = vadd.f32 %v5429, %v5427
      %s5432 = scalar_lea.vmem %s20, 8
      %v5433 = vld [vmem:[%s5432] sm:$0xf]
      %v5434 = vld [vmem:[%s5432 + $0x4] sm:$0xf]
      %v5437 = vunpack.c.l.b16 %v5433
      %v5438 = vunpack.c.l.b16 %v5434
      %v5439 = vpack.c.b16 %v5438, %v5437
      %v5441 = vsel %vm2683, %v5439, 0
      %5443 = vmatpush.bf16.msra.mxu0 0
      %5444 = vmatpush.bf16.msra.mxu0 0
      %5445 = vmatpush.bf16.msra.mxu0 0
      %5446 = vmatpush.bf16.msra.mxu0 0
      %5447 = vmatpush.bf16.msra.mxu0 0
      %5448 = vmatpush.bf16.msra.mxu0 0
      %5449 = vmatpush.bf16.msra.mxu0 0
      %5450 = vmatpush.bf16.msra.mxu0 %v5354
      %5451 = vmatmul.bf16.gmra.mxu0 %v5441
      %v5452 = vpop.f32.mrf.mxu0
      %v5453 = vadd.f32 0.0, %v5452
      %v5454 = vpop.f32.mrf.mxu0
      %v5455 = vadd.f32 0.0, %v5454
      %5456 = vdwg.mxu0
      %v5457 = vpack.c.bf16 %v5455, %v5453
      %s5458 = scalar_lea.vmem %s10, 32
      %v5459 = vld [vmem:[%s5458] sm:$0xf]
      %v5460 = vld [vmem:[%s5458 + $0x4] sm:$0xf]
      %v5461 = vld [vmem:[%s5458 + $0x8] sm:$0xf]
      %v5462 = vld [vmem:[%s5458 + $0xc] sm:$0xf]
      %v5463 = vld [vmem:[%s5458 + $0x10] sm:$0xf]
      %v5464 = vld [vmem:[%s5458 + $0x14] sm:$0xf]
      %v5465 = vld [vmem:[%s5458 + $0x18] sm:$0xf]
      %v5466 = vld [vmem:[%s5458 + $0x1c] sm:$0xf]
      %v5475 = vunpack.c.l.b16 %v5459
      %v5476 = vunpack.c.l.b16 %v5460
      %v5477 = vunpack.c.l.b16 %v5461
      %v5478 = vunpack.c.l.b16 %v5462
      %v5479 = vunpack.c.l.b16 %v5463
      %v5480 = vunpack.c.l.b16 %v5464
      %v5481 = vunpack.c.l.b16 %v5465
      %v5482 = vunpack.c.l.b16 %v5466
      %v5483 = vpack.c.b16 %v5476, %v5475
      %v5484 = vpack.c.b16 %v5478, %v5477
      %v5485 = vpack.c.b16 %v5480, %v5479
      %v5486 = vpack.c.b16 %v5482, %v5481
      %v5492 = vsel %vm2656, %v5457, 0
      %5494 = vmatpush.bf16.msra.mxu0 0
      %5495 = vmatpush.bf16.msra.mxu0 0
      %5496 = vmatpush.bf16.msra.mxu0 0
      %5497 = vmatpush.bf16.msra.mxu0 0
      %5498 = vmatpush.bf16.msra.mxu0 %v5486
      %5499 = vmatpush.bf16.msra.mxu0 %v5485
      %5500 = vmatpush.bf16.msra.mxu0 %v5484
      %5501 = vmatpush.bf16.msra.mxu0 %v5483
      %5502 = vmatmul.bf16.gmra.mxu0 %v5492
      %v5503 = vpop.f32.mrf.mxu0
      %v5504 = vadd.f32 0.0, %v5503
      %v5505 = vpop.f32.mrf.mxu0
      %v5506 = vadd.f32 0.0, %v5505
      %5507 = vdwg.mxu0
      %v5508 = vadd.f32 %v5430, %v5504
      %v5509 = vadd.f32 %v5431, %v5506
      %s5510 = scalar_lea.vmem %s20, 16
      %v5511 = vld [vmem:[%s5510] sm:$0xf]
      %v5512 = vld [vmem:[%s5510 + $0x4] sm:$0xf]
      %v5515 = vunpack.c.l.b16 %v5511
      %v5516 = vunpack.c.l.b16 %v5512
      %v5517 = vpack.c.b16 %v5516, %v5515
      %v5519 = vsel %vm2683, %v5517, 0
      %5521 = vmatpush.bf16.msra.mxu0 0
      %5522 = vmatpush.bf16.msra.mxu0 0
      %5523 = vmatpush.bf16.msra.mxu0 0
      %5524 = vmatpush.bf16.msra.mxu0 0
      %5525 = vmatpush.bf16.msra.mxu0 0
      %5526 = vmatpush.bf16.msra.mxu0 0
      %5527 = vmatpush.bf16.msra.mxu0 0
      %5528 = vmatpush.bf16.msra.mxu0 %v5354
      %5529 = vmatmul.bf16.gmra.mxu0 %v5519
      %v5530 = vpop.f32.mrf.mxu0
      %v5531 = vadd.f32 0.0, %v5530
      %v5532 = vpop.f32.mrf.mxu0
      %v5533 = vadd.f32 0.0, %v5532
      %5534 = vdwg.mxu0
      %v5535 = vpack.c.bf16 %v5533, %v5531
      %s5536 = scalar_lea.vmem %s10, 64
      %v5537 = vld [vmem:[%s5536] sm:$0xf]
      %v5538 = vld [vmem:[%s5536 + $0x4] sm:$0xf]
      %v5539 = vld [vmem:[%s5536 + $0x8] sm:$0xf]
      %v5540 = vld [vmem:[%s5536 + $0xc] sm:$0xf]
      %v5541 = vld [vmem:[%s5536 + $0x10] sm:$0xf]
      %v5542 = vld [vmem:[%s5536 + $0x14] sm:$0xf]
      %v5543 = vld [vmem:[%s5536 + $0x18] sm:$0xf]
      %v5544 = vld [vmem:[%s5536 + $0x1c] sm:$0xf]
      %v5553 = vunpack.c.l.b16 %v5537
      %v5554 = vunpack.c.l.b16 %v5538
      %v5555 = vunpack.c.l.b16 %v5539
      %v5556 = vunpack.c.l.b16 %v5540
      %v5557 = vunpack.c.l.b16 %v5541
      %v5558 = vunpack.c.l.b16 %v5542
      %v5559 = vunpack.c.l.b16 %v5543
      %v5560 = vunpack.c.l.b16 %v5544
      %v5561 = vpack.c.b16 %v5554, %v5553
      %v5562 = vpack.c.b16 %v5556, %v5555
      %v5563 = vpack.c.b16 %v5558, %v5557
      %v5564 = vpack.c.b16 %v5560, %v5559
      %v5570 = vsel %vm2656, %v5535, 0
      %5572 = vmatpush.bf16.msra.mxu0 0
      %5573 = vmatpush.bf16.msra.mxu0 0
      %5574 = vmatpush.bf16.msra.mxu0 0
      %5575 = vmatpush.bf16.msra.mxu0 0
      %5576 = vmatpush.bf16.msra.mxu0 %v5564
      %5577 = vmatpush.bf16.msra.mxu0 %v5563
      %5578 = vmatpush.bf16.msra.mxu0 %v5562
      %5579 = vmatpush.bf16.msra.mxu0 %v5561
      %5580 = vmatmul.bf16.gmra.mxu0 %v5570
      %v5581 = vpop.f32.mrf.mxu0
      %v5582 = vadd.f32 0.0, %v5581
      %v5583 = vpop.f32.mrf.mxu0
      %v5584 = vadd.f32 0.0, %v5583
      %5585 = vdwg.mxu0
      %v5586 = vadd.f32 %v5508, %v5582
      %v5587 = vadd.f32 %v5509, %v5584
      %s5588 = scalar_lea.vmem %s20, 24
      %v5589 = vld [vmem:[%s5588] sm:$0xf]
      %v5590 = vld [vmem:[%s5588 + $0x4] sm:$0xf]
      %v5593 = vunpack.c.l.b16 %v5589
      %v5594 = vunpack.c.l.b16 %v5590
      %v5595 = vpack.c.b16 %v5594, %v5593
      %v5597 = vsel %vm2683, %v5595, 0
      %5599 = vmatpush.bf16.msra.mxu0 0
      %5600 = vmatpush.bf16.msra.mxu0 0
      %5601 = vmatpush.bf16.msra.mxu0 0
      %5602 = vmatpush.bf16.msra.mxu0 0
      %5603 = vmatpush.bf16.msra.mxu0 0
      %5604 = vmatpush.bf16.msra.mxu0 0
      %5605 = vmatpush.bf16.msra.mxu0 0
      %5606 = vmatpush.bf16.msra.mxu0 %v5354
      %5607 = vmatmul.bf16.gmra.mxu0 %v5597
      %v5608 = vpop.f32.mrf.mxu0
      %v5609 = vadd.f32 0.0, %v5608
      %v5610 = vpop.f32.mrf.mxu0
      %v5611 = vadd.f32 0.0, %v5610
      %5612 = vdwg.mxu0
      %v5613 = vpack.c.bf16 %v5611, %v5609
      %s5614 = scalar_lea.vmem %s10, 96
      %v5615 = vld [vmem:[%s5614] sm:$0xf]
      %v5616 = vld [vmem:[%s5614 + $0x4] sm:$0xf]
      %v5617 = vld [vmem:[%s5614 + $0x8] sm:$0xf]
      %v5618 = vld [vmem:[%s5614 + $0xc] sm:$0xf]
      %v5619 = vld [vmem:[%s5614 + $0x10] sm:$0xf]
      %v5620 = vld [vmem:[%s5614 + $0x14] sm:$0xf]
      %v5621 = vld [vmem:[%s5614 + $0x18] sm:$0xf]
      %v5622 = vld [vmem:[%s5614 + $0x1c] sm:$0xf]
      %v5631 = vunpack.c.l.b16 %v5615
      %v5632 = vunpack.c.l.b16 %v5616
      %v5633 = vunpack.c.l.b16 %v5617
      %v5634 = vunpack.c.l.b16 %v5618
      %v5635 = vunpack.c.l.b16 %v5619
      %v5636 = vunpack.c.l.b16 %v5620
      %v5637 = vunpack.c.l.b16 %v5621
      %v5638 = vunpack.c.l.b16 %v5622
      %v5639 = vpack.c.b16 %v5632, %v5631
      %v5640 = vpack.c.b16 %v5634, %v5633
      %v5641 = vpack.c.b16 %v5636, %v5635
      %v5642 = vpack.c.b16 %v5638, %v5637
      %v5648 = vsel %vm2656, %v5613, 0
      %5650 = vmatpush.bf16.msra.mxu0 0
      %5651 = vmatpush.bf16.msra.mxu0 0
      %5652 = vmatpush.bf16.msra.mxu0 0
      %5653 = vmatpush.bf16.msra.mxu0 0
      %5654 = vmatpush.bf16.msra.mxu0 %v5642
      %5655 = vmatpush.bf16.msra.mxu0 %v5641
      %5656 = vmatpush.bf16.msra.mxu0 %v5640
      %5657 = vmatpush.bf16.msra.mxu0 %v5639
      %5658 = vmatmul.bf16.gmra.mxu0 %v5648
      %v5659 = vpop.f32.mrf.mxu0
      %v5660 = vadd.f32 0.0, %v5659
      %v5661 = vpop.f32.mrf.mxu0
      %v5662 = vadd.f32 0.0, %v5661
      %5663 = vdwg.mxu0
      %v5664 = vadd.f32 %v5586, %v5660
      %v5665 = vadd.f32 %v5587, %v5662
      %s5666 = scalar_lea.vmem %s20, 32
      %v5667 = vld [vmem:[%s5666] sm:$0xf]
      %v5668 = vld [vmem:[%s5666 + $0x4] sm:$0xf]
      %v5671 = vunpack.c.l.b16 %v5667
      %v5672 = vunpack.c.l.b16 %v5668
      %v5673 = vpack.c.b16 %v5672, %v5671
      %v5675 = vsel %vm2683, %v5673, 0
      %5677 = vmatpush.bf16.msra.mxu0 0
      %5678 = vmatpush.bf16.msra.mxu0 0
      %5679 = vmatpush.bf16.msra.mxu0 0
      %5680 = vmatpush.bf16.msra.mxu0 0
      %5681 = vmatpush.bf16.msra.mxu0 0
      %5682 = vmatpush.bf16.msra.mxu0 0
      %5683 = vmatpush.bf16.msra.mxu0 0
      %5684 = vmatpush.bf16.msra.mxu0 %v5354
      %5685 = vmatmul.bf16.gmra.mxu0 %v5675
      %v5686 = vpop.f32.mrf.mxu0
      %v5687 = vadd.f32 0.0, %v5686
      %v5688 = vpop.f32.mrf.mxu0
      %v5689 = vadd.f32 0.0, %v5688
      %5690 = vdwg.mxu0
      %v5691 = vpack.c.bf16 %v5689, %v5687
      %s5692 = scalar_lea.vmem %s10, 128
      %v5693 = vld [vmem:[%s5692] sm:$0xf]
      %v5694 = vld [vmem:[%s5692 + $0x4] sm:$0xf]
      %v5695 = vld [vmem:[%s5692 + $0x8] sm:$0xf]
      %v5696 = vld [vmem:[%s5692 + $0xc] sm:$0xf]
      %v5697 = vld [vmem:[%s5692 + $0x10] sm:$0xf]
      %v5698 = vld [vmem:[%s5692 + $0x14] sm:$0xf]
      %v5699 = vld [vmem:[%s5692 + $0x18] sm:$0xf]
      %v5700 = vld [vmem:[%s5692 + $0x1c] sm:$0xf]
      %v5709 = vunpack.c.l.b16 %v5693
      %v5710 = vunpack.c.l.b16 %v5694
      %v5711 = vunpack.c.l.b16 %v5695
      %v5712 = vunpack.c.l.b16 %v5696
      %v5713 = vunpack.c.l.b16 %v5697
      %v5714 = vunpack.c.l.b16 %v5698
      %v5715 = vunpack.c.l.b16 %v5699
      %v5716 = vunpack.c.l.b16 %v5700
      %v5717 = vpack.c.b16 %v5710, %v5709
      %v5718 = vpack.c.b16 %v5712, %v5711
      %v5719 = vpack.c.b16 %v5714, %v5713
      %v5720 = vpack.c.b16 %v5716, %v5715
      %v5726 = vsel %vm2656, %v5691, 0
      %5728 = vmatpush.bf16.msra.mxu0 0
      %5729 = vmatpush.bf16.msra.mxu0 0
      %5730 = vmatpush.bf16.msra.mxu0 0
      %5731 = vmatpush.bf16.msra.mxu0 0
      %5732 = vmatpush.bf16.msra.mxu0 %v5720
      %5733 = vmatpush.bf16.msra.mxu0 %v5719
      %5734 = vmatpush.bf16.msra.mxu0 %v5718
      %5735 = vmatpush.bf16.msra.mxu0 %v5717
      %5736 = vmatmul.bf16.gmra.mxu0 %v5726
      %v5737 = vpop.f32.mrf.mxu0
      %v5738 = vadd.f32 0.0, %v5737
      %v5739 = vpop.f32.mrf.mxu0
      %v5740 = vadd.f32 0.0, %v5739
      %5741 = vdwg.mxu0
      %v5742 = vadd.f32 %v5664, %v5738
      %v5743 = vadd.f32 %v5665, %v5740
      %s5744 = scalar_lea.vmem %s20, 40
      %v5745 = vld [vmem:[%s5744] sm:$0xf]
      %v5746 = vld [vmem:[%s5744 + $0x4] sm:$0xf]
      %v5749 = vunpack.c.l.b16 %v5745
      %v5750 = vunpack.c.l.b16 %v5746
      %v5751 = vpack.c.b16 %v5750, %v5749
      %v5753 = vsel %vm2683, %v5751, 0
      %5755 = vmatpush.bf16.msra.mxu0 0
      %5756 = vmatpush.bf16.msra.mxu0 0
      %5757 = vmatpush.bf16.msra.mxu0 0
      %5758 = vmatpush.bf16.msra.mxu0 0
      %5759 = vmatpush.bf16.msra.mxu0 0
      %5760 = vmatpush.bf16.msra.mxu0 0
      %5761 = vmatpush.bf16.msra.mxu0 0
      %5762 = vmatpush.bf16.msra.mxu0 %v5354
      %5763 = vmatmul.bf16.gmra.mxu0 %v5753
      %v5764 = vpop.f32.mrf.mxu0
      %v5765 = vadd.f32 0.0, %v5764
      %v5766 = vpop.f32.mrf.mxu0
      %v5767 = vadd.f32 0.0, %v5766
      %5768 = vdwg.mxu0
      %v5769 = vpack.c.bf16 %v5767, %v5765
      %s5770 = scalar_lea.vmem %s10, 160
      %v5771 = vld [vmem:[%s5770] sm:$0xf]
      %v5772 = vld [vmem:[%s5770 + $0x4] sm:$0xf]
      %v5773 = vld [vmem:[%s5770 + $0x8] sm:$0xf]
      %v5774 = vld [vmem:[%s5770 + $0xc] sm:$0xf]
      %v5775 = vld [vmem:[%s5770 + $0x10] sm:$0xf]
      %v5776 = vld [vmem:[%s5770 + $0x14] sm:$0xf]
      %v5777 = vld [vmem:[%s5770 + $0x18] sm:$0xf]
      %v5778 = vld [vmem:[%s5770 + $0x1c] sm:$0xf]
      %v5787 = vunpack.c.l.b16 %v5771
      %v5788 = vunpack.c.l.b16 %v5772
      %v5789 = vunpack.c.l.b16 %v5773
      %v5790 = vunpack.c.l.b16 %v5774
      %v5791 = vunpack.c.l.b16 %v5775
      %v5792 = vunpack.c.l.b16 %v5776
      %v5793 = vunpack.c.l.b16 %v5777
      %v5794 = vunpack.c.l.b16 %v5778
      %v5795 = vpack.c.b16 %v5788, %v5787
      %v5796 = vpack.c.b16 %v5790, %v5789
      %v5797 = vpack.c.b16 %v5792, %v5791
      %v5798 = vpack.c.b16 %v5794, %v5793
      %v5804 = vsel %vm2656, %v5769, 0
      %5806 = vmatpush.bf16.msra.mxu0 0
      %5807 = vmatpush.bf16.msra.mxu0 0
      %5808 = vmatpush.bf16.msra.mxu0 0
      %5809 = vmatpush.bf16.msra.mxu0 0
      %5810 = vmatpush.bf16.msra.mxu0 %v5798
      %5811 = vmatpush.bf16.msra.mxu0 %v5797
      %5812 = vmatpush.bf16.msra.mxu0 %v5796
      %5813 = vmatpush.bf16.msra.mxu0 %v5795
      %5814 = vmatmul.bf16.gmra.mxu0 %v5804
      %v5815 = vpop.f32.mrf.mxu0
      %v5816 = vadd.f32 0.0, %v5815
      %v5817 = vpop.f32.mrf.mxu0
      %v5818 = vadd.f32 0.0, %v5817
      %5819 = vdwg.mxu0
      %v5820 = vadd.f32 %v5742, %v5816
      %v5821 = vadd.f32 %v5743, %v5818
      %s5822 = scalar_lea.vmem %s20, 48
      %v5823 = vld [vmem:[%s5822] sm:$0xf]
      %v5824 = vld [vmem:[%s5822 + $0x4] sm:$0xf]
      %v5827 = vunpack.c.l.b16 %v5823
      %v5828 = vunpack.c.l.b16 %v5824
      %v5829 = vpack.c.b16 %v5828, %v5827
      %v5831 = vsel %vm2683, %v5829, 0
      %5833 = vmatpush.bf16.msra.mxu0 0
      %5834 = vmatpush.bf16.msra.mxu0 0
      %5835 = vmatpush.bf16.msra.mxu0 0
      %5836 = vmatpush.bf16.msra.mxu0 0
      %5837 = vmatpush.bf16.msra.mxu0 0
      %5838 = vmatpush.bf16.msra.mxu0 0
      %5839 = vmatpush.bf16.msra.mxu0 0
      %5840 = vmatpush.bf16.msra.mxu0 %v5354
      %5841 = vmatmul.bf16.gmra.mxu0 %v5831
      %v5842 = vpop.f32.mrf.mxu0
      %v5843 = vadd.f32 0.0, %v5842
      %v5844 = vpop.f32.mrf.mxu0
      %v5845 = vadd.f32 0.0, %v5844
      %5846 = vdwg.mxu0
      %v5847 = vpack.c.bf16 %v5845, %v5843
      %s5848 = scalar_lea.vmem %s10, 192
      %v5849 = vld [vmem:[%s5848] sm:$0xf]
      %v5850 = vld [vmem:[%s5848 + $0x4] sm:$0xf]
      %v5851 = vld [vmem:[%s5848 + $0x8] sm:$0xf]
      %v5852 = vld [vmem:[%s5848 + $0xc] sm:$0xf]
      %v5853 = vld [vmem:[%s5848 + $0x10] sm:$0xf]
      %v5854 = vld [vmem:[%s5848 + $0x14] sm:$0xf]
      %v5855 = vld [vmem:[%s5848 + $0x18] sm:$0xf]
      %v5856 = vld [vmem:[%s5848 + $0x1c] sm:$0xf]
      %v5865 = vunpack.c.l.b16 %v5849
      %v5866 = vunpack.c.l.b16 %v5850
      %v5867 = vunpack.c.l.b16 %v5851
      %v5868 = vunpack.c.l.b16 %v5852
      %v5869 = vunpack.c.l.b16 %v5853
      %v5870 = vunpack.c.l.b16 %v5854
      %v5871 = vunpack.c.l.b16 %v5855
      %v5872 = vunpack.c.l.b16 %v5856
      %v5873 = vpack.c.b16 %v5866, %v5865
      %v5874 = vpack.c.b16 %v5868, %v5867
      %v5875 = vpack.c.b16 %v5870, %v5869
      %v5876 = vpack.c.b16 %v5872, %v5871
      %v5882 = vsel %vm2656, %v5847, 0
      %5884 = vmatpush.bf16.msra.mxu0 0
      %5885 = vmatpush.bf16.msra.mxu0 0
      %5886 = vmatpush.bf16.msra.mxu0 0
      %5887 = vmatpush.bf16.msra.mxu0 0
      %5888 = vmatpush.bf16.msra.mxu0 %v5876
      %5889 = vmatpush.bf16.msra.mxu0 %v5875
      %5890 = vmatpush.bf16.msra.mxu0 %v5874
      %5891 = vmatpush.bf16.msra.mxu0 %v5873
      %5892 = vmatmul.bf16.gmra.mxu0 %v5882
      %v5893 = vpop.f32.mrf.mxu0
      %v5894 = vadd.f32 0.0, %v5893
      %v5895 = vpop.f32.mrf.mxu0
      %v5896 = vadd.f32 0.0, %v5895
      %5897 = vdwg.mxu0
      %v5898 = vadd.f32 %v5820, %v5894
      %v5899 = vadd.f32 %v5821, %v5896
      %s5900 = scalar_lea.vmem %s20, 56
      %v5901 = vld [vmem:[%s5900] sm:$0xf]
      %v5902 = vld [vmem:[%s5900 + $0x4] sm:$0xf]
      %v5905 = vunpack.c.l.b16 %v5901
      %v5906 = vunpack.c.l.b16 %v5902
      %v5907 = vpack.c.b16 %v5906, %v5905
      %v5909 = vsel %vm2683, %v5907, 0
      %5911 = vmatpush.bf16.msra.mxu0 0
      %5912 = vmatpush.bf16.msra.mxu0 0
      %5913 = vmatpush.bf16.msra.mxu0 0
      %5914 = vmatpush.bf16.msra.mxu0 0
      %5915 = vmatpush.bf16.msra.mxu0 0
      %5916 = vmatpush.bf16.msra.mxu0 0
      %5917 = vmatpush.bf16.msra.mxu0 0
      %5918 = vmatpush.bf16.msra.mxu0 %v5354
      %5919 = vmatmul.bf16.gmra.mxu0 %v5909
      %v5920 = vpop.f32.mrf.mxu0
      %v5921 = vadd.f32 0.0, %v5920
      %v5922 = vpop.f32.mrf.mxu0
      %v5923 = vadd.f32 0.0, %v5922
      %5924 = vdwg.mxu0
      %v5925 = vpack.c.bf16 %v5923, %v5921
      %s5926 = scalar_lea.vmem %s10, 224
      %v5927 = vld [vmem:[%s5926] sm:$0xf]
      %v5928 = vld [vmem:[%s5926 + $0x4] sm:$0xf]
      %v5929 = vld [vmem:[%s5926 + $0x8] sm:$0xf]
      %v5930 = vld [vmem:[%s5926 + $0xc] sm:$0xf]
      %v5931 = vld [vmem:[%s5926 + $0x10] sm:$0xf]
      %v5932 = vld [vmem:[%s5926 + $0x14] sm:$0xf]
      %v5933 = vld [vmem:[%s5926 + $0x18] sm:$0xf]
      %v5934 = vld [vmem:[%s5926 + $0x1c] sm:$0xf]
      %v5943 = vunpack.c.l.b16 %v5927
      %v5944 = vunpack.c.l.b16 %v5928
      %v5945 = vunpack.c.l.b16 %v5929
      %v5946 = vunpack.c.l.b16 %v5930
      %v5947 = vunpack.c.l.b16 %v5931
      %v5948 = vunpack.c.l.b16 %v5932
      %v5949 = vunpack.c.l.b16 %v5933
      %v5950 = vunpack.c.l.b16 %v5934
      %v5951 = vpack.c.b16 %v5944, %v5943
      %v5952 = vpack.c.b16 %v5946, %v5945
      %v5953 = vpack.c.b16 %v5948, %v5947
      %v5954 = vpack.c.b16 %v5950, %v5949
      %v5960 = vsel %vm2656, %v5925, 0
      %5962 = vmatpush.bf16.msra.mxu0 0
      %5963 = vmatpush.bf16.msra.mxu0 0
      %5964 = vmatpush.bf16.msra.mxu0 0
      %5965 = vmatpush.bf16.msra.mxu0 0
      %5966 = vmatpush.bf16.msra.mxu0 %v5954
      %5967 = vmatpush.bf16.msra.mxu0 %v5953
      %5968 = vmatpush.bf16.msra.mxu0 %v5952
      %5969 = vmatpush.bf16.msra.mxu0 %v5951
      %5970 = vmatmul.bf16.gmra.mxu0 %v5960
      %v5971 = vpop.f32.mrf.mxu0
      %v5972 = vadd.f32 0.0, %v5971
      %v5973 = vpop.f32.mrf.mxu0
      %v5974 = vadd.f32 0.0, %v5973
      %5975 = vdwg.mxu0
      %v5976 = vadd.f32 %v5898, %v5972
      %v5977 = vadd.f32 %v5899, %v5974
      %s5978 = scalar_lea.vmem %s20, 64
      %v5979 = vld [vmem:[%s5978] sm:$0xf]
      %v5980 = vld [vmem:[%s5978 + $0x4] sm:$0xf]
      %v5983 = vunpack.c.l.b16 %v5979
      %v5984 = vunpack.c.l.b16 %v5980
      %v5985 = vpack.c.b16 %v5984, %v5983
      %v5987 = vsel %vm2683, %v5985, 0
      %5989 = vmatpush.bf16.msra.mxu0 0
      %5990 = vmatpush.bf16.msra.mxu0 0
      %5991 = vmatpush.bf16.msra.mxu0 0
      %5992 = vmatpush.bf16.msra.mxu0 0
      %5993 = vmatpush.bf16.msra.mxu0 0
      %5994 = vmatpush.bf16.msra.mxu0 0
      %5995 = vmatpush.bf16.msra.mxu0 0
      %5996 = vmatpush.bf16.msra.mxu0 %v5354
      %5997 = vmatmul.bf16.gmra.mxu0 %v5987
      %v5998 = vpop.f32.mrf.mxu0
      %v5999 = vadd.f32 0.0, %v5998
      %v6000 = vpop.f32.mrf.mxu0
      %v6001 = vadd.f32 0.0, %v6000
      %6002 = vdwg.mxu0
      %v6003 = vpack.c.bf16 %v6001, %v5999
      %s6004 = scalar_lea.vmem %s10, 256
      %v6005 = vld [vmem:[%s6004] sm:$0xf]
      %v6006 = vld [vmem:[%s6004 + $0x4] sm:$0xf]
      %v6007 = vld [vmem:[%s6004 + $0x8] sm:$0xf]
      %v6008 = vld [vmem:[%s6004 + $0xc] sm:$0xf]
      %v6009 = vld [vmem:[%s6004 + $0x10] sm:$0xf]
      %v6010 = vld [vmem:[%s6004 + $0x14] sm:$0xf]
      %v6011 = vld [vmem:[%s6004 + $0x18] sm:$0xf]
      %v6012 = vld [vmem:[%s6004 + $0x1c] sm:$0xf]
      %v6021 = vunpack.c.l.b16 %v6005
      %v6022 = vunpack.c.l.b16 %v6006
      %v6023 = vunpack.c.l.b16 %v6007
      %v6024 = vunpack.c.l.b16 %v6008
      %v6025 = vunpack.c.l.b16 %v6009
      %v6026 = vunpack.c.l.b16 %v6010
      %v6027 = vunpack.c.l.b16 %v6011
      %v6028 = vunpack.c.l.b16 %v6012
      %v6029 = vpack.c.b16 %v6022, %v6021
      %v6030 = vpack.c.b16 %v6024, %v6023
      %v6031 = vpack.c.b16 %v6026, %v6025
      %v6032 = vpack.c.b16 %v6028, %v6027
      %v6038 = vsel %vm2656, %v6003, 0
      %6040 = vmatpush.bf16.msra.mxu0 0
      %6041 = vmatpush.bf16.msra.mxu0 0
      %6042 = vmatpush.bf16.msra.mxu0 0
      %6043 = vmatpush.bf16.msra.mxu0 0
      %6044 = vmatpush.bf16.msra.mxu0 %v6032
      %6045 = vmatpush.bf16.msra.mxu0 %v6031
      %6046 = vmatpush.bf16.msra.mxu0 %v6030
      %6047 = vmatpush.bf16.msra.mxu0 %v6029
      %6048 = vmatmul.bf16.gmra.mxu0 %v6038
      %v6049 = vpop.f32.mrf.mxu0
      %v6050 = vadd.f32 0.0, %v6049
      %v6051 = vpop.f32.mrf.mxu0
      %v6052 = vadd.f32 0.0, %v6051
      %6053 = vdwg.mxu0
      %v6054 = vadd.f32 %v5976, %v6050
      %v6055 = vadd.f32 %v5977, %v6052
      %v6056 = vmax.f32 %v6054, 0.0
      %v6057 = vmax.f32 %v6055, 0.0
      %v6058 = vld [vmem:[%s23] sm:$0xf]
      %v6059 = vld [vmem:[%s23 + $0x4] sm:$0xf]
      %v6060 = vld [vmem:[%s23 + $0x8] sm:$0xf]
      %v6061 = vld [vmem:[%s23 + $0xc] sm:$0xf]
      %v6062 = vld [vmem:[%s23 + $0x10] sm:$0xf]
      %v6063 = vld [vmem:[%s23 + $0x14] sm:$0xf]
      %v6064 = vld [vmem:[%s23 + $0x18] sm:$0xf]
      %v6065 = vld [vmem:[%s23 + $0x1c] sm:$0xf]
      %v6066 = vpack.c.bf16 %v6057, %v6056
      %v6075 = vunpack.c.l.b16 %v6058
      %v6076 = vunpack.c.l.b16 %v6059
      %v6077 = vunpack.c.l.b16 %v6060
      %v6078 = vunpack.c.l.b16 %v6061
      %v6079 = vunpack.c.l.b16 %v6062
      %v6080 = vunpack.c.l.b16 %v6063
      %v6081 = vunpack.c.l.b16 %v6064
      %v6082 = vunpack.c.l.b16 %v6065
      %v6083 = vpack.c.b16 %v6076, %v6075
      %v6084 = vpack.c.b16 %v6078, %v6077
      %v6085 = vpack.c.b16 %v6080, %v6079
      %v6086 = vpack.c.b16 %v6082, %v6081
      %v6088 = vsel %vm2683, %v6083, 0
      %v6091 = vsel %vm2683, %v6084, 0
      %v6094 = vsel %vm2683, %v6085, 0
      %v6097 = vsel %vm2683, %v6086, 0
      %6099 = vmatpush.bf16.msra.mxu0 0
      %6100 = vmatpush.bf16.msra.mxu0 0
      %6101 = vmatpush.bf16.msra.mxu0 0
      %6102 = vmatpush.bf16.msra.mxu0 0
      %6103 = vmatpush.bf16.msra.mxu0 0
      %6104 = vmatpush.bf16.msra.mxu0 0
      %6105 = vmatpush.bf16.msra.mxu0 0
      %6106 = vmatpush.bf16.msra.mxu0 %v6066
      %6107 = vmatmul.bf16.gmra.mxu0 %v6088
      %v6108 = vpop.f32.mrf.mxu0
      %v6109 = vadd.f32 0.0, %v6108
      %v6110 = vpop.f32.mrf.mxu0
      %v6111 = vadd.f32 0.0, %v6110
      %6112 = vmatmul.bf16.gmra.mxu0 %v6091
      %v6113 = vpop.f32.mrf.mxu0
      %v6114 = vadd.f32 0.0, %v6113
      %v6115 = vpop.f32.mrf.mxu0
      %v6116 = vadd.f32 0.0, %v6115
      %6117 = vmatmul.bf16.gmra.mxu0 %v6094
      %v6118 = vpop.f32.mrf.mxu0
      %v6119 = vadd.f32 0.0, %v6118
      %v6120 = vpop.f32.mrf.mxu0
      %v6121 = vadd.f32 0.0, %v6120
      %6122 = vmatmul.bf16.gmra.mxu0 %v6097
      %v6123 = vpop.f32.mrf.mxu0
      %v6124 = vadd.f32 0.0, %v6123
      %v6125 = vpop.f32.mrf.mxu0
      %v6126 = vadd.f32 0.0, %v6125
      %6127 = vdwg.mxu0
      %v6128 = vld [vmem:[%s15 + $0xa] sm:$0x1]
      %v6129 = vpack.c.bf16 %v6111, %v6109
      %v6130 = vpack.c.bf16 %v6116, %v6114
      %v6131 = vpack.c.bf16 %v6121, %v6119
      %v6132 = vpack.c.bf16 %v6126, %v6124
      %v6133 = vld [vmem:[%s21] sm:$0xf]
      %v6134 = vld [vmem:[%s21 + $0x4] sm:$0xf]
      %v6135 = vld [vmem:[%s21 + $0x8] sm:$0xf]
      %v6136 = vld [vmem:[%s21 + $0xc] sm:$0xf]
      %v6137 = vld [vmem:[%s21 + $0x10] sm:$0xf]
      %v6138 = vld [vmem:[%s21 + $0x14] sm:$0xf]
      %v6139 = vld [vmem:[%s21 + $0x18] sm:$0xf]
      %v6140 = vld [vmem:[%s21 + $0x1c] sm:$0xf]
      %v6149 = vunpack.c.l.b16 %v6133
      %v6150 = vunpack.c.l.b16 %v6134
      %v6151 = vunpack.c.l.b16 %v6135
      %v6152 = vunpack.c.l.b16 %v6136
      %v6153 = vunpack.c.l.b16 %v6137
      %v6154 = vunpack.c.l.b16 %v6138
      %v6155 = vunpack.c.l.b16 %v6139
      %v6156 = vunpack.c.l.b16 %v6140
      %v6157 = vpack.c.b16 %v6150, %v6149
      %v6158 = vpack.c.b16 %v6152, %v6151
      %v6159 = vpack.c.b16 %v6154, %v6153
      %v6160 = vpack.c.b16 %v6156, %v6155
      %v6162 = vsel %vm2656, %v6157, 0
      %v6165 = vsel %vm2656, %v6158, 0
      %v6168 = vsel %vm2656, %v6159, 0
      %v6171 = vsel %vm2656, %v6160, 0
      %6173 = vmatpush.bf16.msra.mxu0 0
      %6174 = vmatpush.bf16.msra.mxu0 0
      %6175 = vmatpush.bf16.msra.mxu0 0
      %6176 = vmatpush.bf16.msra.mxu0 0
      %6177 = vmatpush.bf16.msra.mxu0 %v6132
      %6178 = vmatpush.bf16.msra.mxu0 %v6131
      %6179 = vmatpush.bf16.msra.mxu0 %v6130
      %6180 = vmatpush.bf16.msra.mxu0 %v6129
      %6181 = vmatmul.bf16.gmra.mxu0 %v6162
      %v6182 = vpop.f32.mrf.mxu0
      %v6183 = vadd.f32 0.0, %v6182
      %v6184 = vpop.f32.mrf.mxu0
      %v6185 = vadd.f32 0.0, %v6184
      %6186 = vmatmul.bf16.gmra.mxu0 %v6165
      %v6187 = vpop.f32.mrf.mxu0
      %v6188 = vadd.f32 0.0, %v6187
      %v6189 = vpop.f32.mrf.mxu0
      %v6190 = vadd.f32 0.0, %v6189
      %6191 = vmatmul.bf16.gmra.mxu0 %v6168
      %v6192 = vpop.f32.mrf.mxu0
      %v6193 = vadd.f32 0.0, %v6192
      %v6194 = vpop.f32.mrf.mxu0
      %v6195 = vadd.f32 0.0, %v6194
      %6196 = vmatmul.bf16.gmra.mxu0 %v6171
      %v6197 = vpop.f32.mrf.mxu0
      %v6198 = vadd.f32 0.0, %v6197
      %v6199 = vpop.f32.mrf.mxu0
      %v6200 = vadd.f32 0.0, %v6199
      %6201 = vdwg.mxu0
      %v6202 = vpack.c.bf16 %v6185, %v6183
      %v6203 = vpack.c.bf16 %v6190, %v6188
      %v6204 = vpack.c.bf16 %v6195, %v6193
      %v6205 = vpack.c.bf16 %v6200, %v6198
      %v6206 = vld [vmem:[%s11] sm:$0xf]
      %v6207 = vld [vmem:[%s11 + $0x4] sm:$0xf]
      %v6208 = vld [vmem:[%s11 + $0x8] sm:$0xf]
      %v6209 = vld [vmem:[%s11 + $0xc] sm:$0xf]
      %v6214 = vunpack.c.l.b16 %v6206
      %v6215 = vunpack.c.l.b16 %v6207
      %v6216 = vunpack.c.l.b16 %v6208
      %v6217 = vunpack.c.l.b16 %v6209
      %v6218 = vpack.c.b16 %v6215, %v6214
      %v6219 = vpack.c.b16 %v6217, %v6216
      %v6223 = vsel %vm3174, %v6202, 0
      %v6226 = vsel %vm3174, %v6203, 0
      %v6229 = vsel %vm3174, %v6204, 0
      %v6232 = vsel %vm3174, %v6205, 0
      %6234 = vmatpush.bf16.msra.mxu0 0
      %6235 = vmatpush.bf16.msra.mxu0 0
      %6236 = vmatpush.bf16.msra.mxu0 0
      %6237 = vmatpush.bf16.msra.mxu0 0
      %6238 = vmatpush.bf16.msra.mxu0 0
      %6239 = vmatpush.bf16.msra.mxu0 0
      %6240 = vmatpush.bf16.msra.mxu0 %v6219
      %6241 = vmatpush.bf16.msra.mxu0 %v6218
      %6242 = vmatmul.bf16.gmra.mxu0 %v6223
      %v6243 = vpop.f32.mrf.mxu0
      %v6244 = vadd.f32 0.0, %v6243
      %v6245 = vpop.f32.mrf.mxu0
      %v6246 = vadd.f32 0.0, %v6245
      %6247 = vmatmul.bf16.gmra.mxu0 %v6226
      %v6248 = vpop.f32.mrf.mxu0
      %v6249 = vadd.f32 0.0, %v6248
      %v6250 = vpop.f32.mrf.mxu0
      %v6251 = vadd.f32 0.0, %v6250
      %6252 = vmatmul.bf16.gmra.mxu0 %v6229
      %v6253 = vpop.f32.mrf.mxu0
      %v6254 = vadd.f32 0.0, %v6253
      %v6255 = vpop.f32.mrf.mxu0
      %v6256 = vadd.f32 0.0, %v6255
      %6257 = vmatmul.bf16.gmra.mxu0 %v6232
      %v6258 = vpop.f32.mrf.mxu0
      %v6259 = vadd.f32 0.0, %v6258
      %v6260 = vpop.f32.mrf.mxu0
      %v6261 = vadd.f32 0.0, %v6260
      %6262 = vdwg.mxu0
      %v6263 = vperm.slane %v6128, 0
      %v6264 = vadd.f32 %v6263, %v6244
      %v6265 = vadd.f32 %v6263, %v6246
      %v6266 = vadd.f32 %v6263, %v6249
      %v6267 = vadd.f32 %v6263, %v6251
      %v6268 = vadd.f32 %v6263, %v6254
      %v6269 = vadd.f32 %v6263, %v6256
      %v6270 = vadd.f32 %v6263, %v6259
      %v6271 = vadd.f32 %v6263, %v6261
      %s6272 = scalar_lea.vmem %s21, 32
      %v6273 = vld [vmem:[%s6272] sm:$0xf]
      %v6274 = vld [vmem:[%s6272 + $0x4] sm:$0xf]
      %v6275 = vld [vmem:[%s6272 + $0x8] sm:$0xf]
      %v6276 = vld [vmem:[%s6272 + $0xc] sm:$0xf]
      %v6277 = vld [vmem:[%s6272 + $0x10] sm:$0xf]
      %v6278 = vld [vmem:[%s6272 + $0x14] sm:$0xf]
      %v6279 = vld [vmem:[%s6272 + $0x18] sm:$0xf]
      %v6280 = vld [vmem:[%s6272 + $0x1c] sm:$0xf]
      %v6289 = vunpack.c.l.b16 %v6273
      %v6290 = vunpack.c.l.b16 %v6274
      %v6291 = vunpack.c.l.b16 %v6275
      %v6292 = vunpack.c.l.b16 %v6276
      %v6293 = vunpack.c.l.b16 %v6277
      %v6294 = vunpack.c.l.b16 %v6278
      %v6295 = vunpack.c.l.b16 %v6279
      %v6296 = vunpack.c.l.b16 %v6280
      %v6297 = vpack.c.b16 %v6290, %v6289
      %v6298 = vpack.c.b16 %v6292, %v6291
      %v6299 = vpack.c.b16 %v6294, %v6293
      %v6300 = vpack.c.b16 %v6296, %v6295
      %v6302 = vsel %vm2656, %v6297, 0
      %v6305 = vsel %vm2656, %v6298, 0
      %v6308 = vsel %vm2656, %v6299, 0
      %v6311 = vsel %vm2656, %v6300, 0
      %6313 = vmatpush.bf16.msra.mxu0 0
      %6314 = vmatpush.bf16.msra.mxu0 0
      %6315 = vmatpush.bf16.msra.mxu0 0
      %6316 = vmatpush.bf16.msra.mxu0 0
      %6317 = vmatpush.bf16.msra.mxu0 %v6132
      %6318 = vmatpush.bf16.msra.mxu0 %v6131
      %6319 = vmatpush.bf16.msra.mxu0 %v6130
      %6320 = vmatpush.bf16.msra.mxu0 %v6129
      %6321 = vmatmul.bf16.gmra.mxu0 %v6302
      %v6322 = vpop.f32.mrf.mxu0
      %v6323 = vadd.f32 0.0, %v6322
      %v6324 = vpop.f32.mrf.mxu0
      %v6325 = vadd.f32 0.0, %v6324
      %6326 = vmatmul.bf16.gmra.mxu0 %v6305
      %v6327 = vpop.f32.mrf.mxu0
      %v6328 = vadd.f32 0.0, %v6327
      %v6329 = vpop.f32.mrf.mxu0
      %v6330 = vadd.f32 0.0, %v6329
      %6331 = vmatmul.bf16.gmra.mxu0 %v6308
      %v6332 = vpop.f32.mrf.mxu0
      %v6333 = vadd.f32 0.0, %v6332
      %v6334 = vpop.f32.mrf.mxu0
      %v6335 = vadd.f32 0.0, %v6334
      %6336 = vmatmul.bf16.gmra.mxu0 %v6311
      %v6337 = vpop.f32.mrf.mxu0
      %v6338 = vadd.f32 0.0, %v6337
      %v6339 = vpop.f32.mrf.mxu0
      %v6340 = vadd.f32 0.0, %v6339
      %6341 = vdwg.mxu0
      %v6342 = vpack.c.bf16 %v6325, %v6323
      %v6343 = vpack.c.bf16 %v6330, %v6328
      %v6344 = vpack.c.bf16 %v6335, %v6333
      %v6345 = vpack.c.bf16 %v6340, %v6338
      %s6346 = scalar_lea.vmem %s11, 16
      %v6347 = vld [vmem:[%s6346] sm:$0xf]
      %v6348 = vld [vmem:[%s6346 + $0x4] sm:$0xf]
      %v6349 = vld [vmem:[%s6346 + $0x8] sm:$0xf]
      %v6350 = vld [vmem:[%s6346 + $0xc] sm:$0xf]
      %v6355 = vunpack.c.l.b16 %v6347
      %v6356 = vunpack.c.l.b16 %v6348
      %v6357 = vunpack.c.l.b16 %v6349
      %v6358 = vunpack.c.l.b16 %v6350
      %v6359 = vpack.c.b16 %v6356, %v6355
      %v6360 = vpack.c.b16 %v6358, %v6357
      %v6364 = vsel %vm3174, %v6342, 0
      %v6367 = vsel %vm3174, %v6343, 0
      %v6370 = vsel %vm3174, %v6344, 0
      %v6373 = vsel %vm3174, %v6345, 0
      %6375 = vmatpush.bf16.msra.mxu0 0
      %6376 = vmatpush.bf16.msra.mxu0 0
      %6377 = vmatpush.bf16.msra.mxu0 0
      %6378 = vmatpush.bf16.msra.mxu0 0
      %6379 = vmatpush.bf16.msra.mxu0 0
      %6380 = vmatpush.bf16.msra.mxu0 0
      %6381 = vmatpush.bf16.msra.mxu0 %v6360
      %6382 = vmatpush.bf16.msra.mxu0 %v6359
      %6383 = vmatmul.bf16.gmra.mxu0 %v6364
      %v6384 = vpop.f32.mrf.mxu0
      %v6385 = vadd.f32 0.0, %v6384
      %v6386 = vpop.f32.mrf.mxu0
      %v6387 = vadd.f32 0.0, %v6386
      %6388 = vmatmul.bf16.gmra.mxu0 %v6367
      %v6389 = vpop.f32.mrf.mxu0
      %v6390 = vadd.f32 0.0, %v6389
      %v6391 = vpop.f32.mrf.mxu0
      %v6392 = vadd.f32 0.0, %v6391
      %6393 = vmatmul.bf16.gmra.mxu0 %v6370
      %v6394 = vpop.f32.mrf.mxu0
      %v6395 = vadd.f32 0.0, %v6394
      %v6396 = vpop.f32.mrf.mxu0
      %v6397 = vadd.f32 0.0, %v6396
      %6398 = vmatmul.bf16.gmra.mxu0 %v6373
      %v6399 = vpop.f32.mrf.mxu0
      %v6400 = vadd.f32 0.0, %v6399
      %v6401 = vpop.f32.mrf.mxu0
      %v6402 = vadd.f32 0.0, %v6401
      %6403 = vdwg.mxu0
      %v6404 = vadd.f32 %v6264, %v6385
      %v6405 = vadd.f32 %v6265, %v6387
      %v6406 = vadd.f32 %v6266, %v6390
      %v6407 = vadd.f32 %v6267, %v6392
      %v6408 = vadd.f32 %v6268, %v6395
      %v6409 = vadd.f32 %v6269, %v6397
      %v6410 = vadd.f32 %v6270, %v6400
      %v6411 = vadd.f32 %v6271, %v6402
      %s6412 = scalar_lea.vmem %s21, 64
      %v6413 = vld [vmem:[%s6412] sm:$0xf]
      %v6414 = vld [vmem:[%s6412 + $0x4] sm:$0xf]
      %v6415 = vld [vmem:[%s6412 + $0x8] sm:$0xf]
      %v6416 = vld [vmem:[%s6412 + $0xc] sm:$0xf]
      %v6417 = vld [vmem:[%s6412 + $0x10] sm:$0xf]
      %v6418 = vld [vmem:[%s6412 + $0x14] sm:$0xf]
      %v6419 = vld [vmem:[%s6412 + $0x18] sm:$0xf]
      %v6420 = vld [vmem:[%s6412 + $0x1c] sm:$0xf]
      %v6429 = vunpack.c.l.b16 %v6413
      %v6430 = vunpack.c.l.b16 %v6414
      %v6431 = vunpack.c.l.b16 %v6415
      %v6432 = vunpack.c.l.b16 %v6416
      %v6433 = vunpack.c.l.b16 %v6417
      %v6434 = vunpack.c.l.b16 %v6418
      %v6435 = vunpack.c.l.b16 %v6419
      %v6436 = vunpack.c.l.b16 %v6420
      %v6437 = vpack.c.b16 %v6430, %v6429
      %v6438 = vpack.c.b16 %v6432, %v6431
      %v6439 = vpack.c.b16 %v6434, %v6433
      %v6440 = vpack.c.b16 %v6436, %v6435
      %v6442 = vsel %vm2656, %v6437, 0
      %v6445 = vsel %vm2656, %v6438, 0
      %v6448 = vsel %vm2656, %v6439, 0
      %v6451 = vsel %vm2656, %v6440, 0
      %6453 = vmatpush.bf16.msra.mxu0 0
      %6454 = vmatpush.bf16.msra.mxu0 0
      %6455 = vmatpush.bf16.msra.mxu0 0
      %6456 = vmatpush.bf16.msra.mxu0 0
      %6457 = vmatpush.bf16.msra.mxu0 %v6132
      %6458 = vmatpush.bf16.msra.mxu0 %v6131
      %6459 = vmatpush.bf16.msra.mxu0 %v6130
      %6460 = vmatpush.bf16.msra.mxu0 %v6129
      %6461 = vmatmul.bf16.gmra.mxu0 %v6442
      %v6462 = vpop.f32.mrf.mxu0
      %v6463 = vadd.f32 0.0, %v6462
      %v6464 = vpop.f32.mrf.mxu0
      %v6465 = vadd.f32 0.0, %v6464
      %6466 = vmatmul.bf16.gmra.mxu0 %v6445
      %v6467 = vpop.f32.mrf.mxu0
      %v6468 = vadd.f32 0.0, %v6467
      %v6469 = vpop.f32.mrf.mxu0
      %v6470 = vadd.f32 0.0, %v6469
      %6471 = vmatmul.bf16.gmra.mxu0 %v6448
      %v6472 = vpop.f32.mrf.mxu0
      %v6473 = vadd.f32 0.0, %v6472
      %v6474 = vpop.f32.mrf.mxu0
      %v6475 = vadd.f32 0.0, %v6474
      %6476 = vmatmul.bf16.gmra.mxu0 %v6451
      %v6477 = vpop.f32.mrf.mxu0
      %v6478 = vadd.f32 0.0, %v6477
      %v6479 = vpop.f32.mrf.mxu0
      %v6480 = vadd.f32 0.0, %v6479
      %6481 = vdwg.mxu0
      %v6482 = vpack.c.bf16 %v6465, %v6463
      %v6483 = vpack.c.bf16 %v6470, %v6468
      %v6484 = vpack.c.bf16 %v6475, %v6473
      %v6485 = vpack.c.bf16 %v6480, %v6478
      %s6486 = scalar_lea.vmem %s11, 32
      %v6487 = vld [vmem:[%s6486] sm:$0xf]
      %v6488 = vld [vmem:[%s6486 + $0x4] sm:$0xf]
      %v6489 = vld [vmem:[%s6486 + $0x8] sm:$0xf]
      %v6490 = vld [vmem:[%s6486 + $0xc] sm:$0xf]
      %v6495 = vunpack.c.l.b16 %v6487
      %v6496 = vunpack.c.l.b16 %v6488
      %v6497 = vunpack.c.l.b16 %v6489
      %v6498 = vunpack.c.l.b16 %v6490
      %v6499 = vpack.c.b16 %v6496, %v6495
      %v6500 = vpack.c.b16 %v6498, %v6497
      %v6504 = vsel %vm3174, %v6482, 0
      %v6507 = vsel %vm3174, %v6483, 0
      %v6510 = vsel %vm3174, %v6484, 0
      %v6513 = vsel %vm3174, %v6485, 0
      %6515 = vmatpush.bf16.msra.mxu0 0
      %6516 = vmatpush.bf16.msra.mxu0 0
      %6517 = vmatpush.bf16.msra.mxu0 0
      %6518 = vmatpush.bf16.msra.mxu0 0
      %6519 = vmatpush.bf16.msra.mxu0 0
      %6520 = vmatpush.bf16.msra.mxu0 0
      %6521 = vmatpush.bf16.msra.mxu0 %v6500
      %6522 = vmatpush.bf16.msra.mxu0 %v6499
      %6523 = vmatmul.bf16.gmra.mxu0 %v6504
      %v6524 = vpop.f32.mrf.mxu0
      %v6525 = vadd.f32 0.0, %v6524
      %v6526 = vpop.f32.mrf.mxu0
      %v6527 = vadd.f32 0.0, %v6526
      %6528 = vmatmul.bf16.gmra.mxu0 %v6507
      %v6529 = vpop.f32.mrf.mxu0
      %v6530 = vadd.f32 0.0, %v6529
      %v6531 = vpop.f32.mrf.mxu0
      %v6532 = vadd.f32 0.0, %v6531
      %6533 = vmatmul.bf16.gmra.mxu0 %v6510
      %v6534 = vpop.f32.mrf.mxu0
      %v6535 = vadd.f32 0.0, %v6534
      %v6536 = vpop.f32.mrf.mxu0
      %v6537 = vadd.f32 0.0, %v6536
      %6538 = vmatmul.bf16.gmra.mxu0 %v6513
      %v6539 = vpop.f32.mrf.mxu0
      %v6540 = vadd.f32 0.0, %v6539
      %v6541 = vpop.f32.mrf.mxu0
      %v6542 = vadd.f32 0.0, %v6541
      %6543 = vdwg.mxu0
      %v6544 = vadd.f32 %v6404, %v6525
      %v6545 = vadd.f32 %v6405, %v6527
      %v6546 = vadd.f32 %v6406, %v6530
      %v6547 = vadd.f32 %v6407, %v6532
      %v6548 = vadd.f32 %v6408, %v6535
      %v6549 = vadd.f32 %v6409, %v6537
      %v6550 = vadd.f32 %v6410, %v6540
      %v6551 = vadd.f32 %v6411, %v6542
      %s6552 = scalar_lea.vmem %s21, 96
      %v6553 = vld [vmem:[%s6552] sm:$0xf]
      %v6554 = vld [vmem:[%s6552 + $0x4] sm:$0xf]
      %v6555 = vld [vmem:[%s6552 + $0x8] sm:$0xf]
      %v6556 = vld [vmem:[%s6552 + $0xc] sm:$0xf]
      %v6557 = vld [vmem:[%s6552 + $0x10] sm:$0xf]
      %v6558 = vld [vmem:[%s6552 + $0x14] sm:$0xf]
      %v6559 = vld [vmem:[%s6552 + $0x18] sm:$0xf]
      %v6560 = vld [vmem:[%s6552 + $0x1c] sm:$0xf]
      %v6569 = vunpack.c.l.b16 %v6553
      %v6570 = vunpack.c.l.b16 %v6554
      %v6571 = vunpack.c.l.b16 %v6555
      %v6572 = vunpack.c.l.b16 %v6556
      %v6573 = vunpack.c.l.b16 %v6557
      %v6574 = vunpack.c.l.b16 %v6558
      %v6575 = vunpack.c.l.b16 %v6559
      %v6576 = vunpack.c.l.b16 %v6560
      %v6577 = vpack.c.b16 %v6570, %v6569
      %v6578 = vpack.c.b16 %v6572, %v6571
      %v6579 = vpack.c.b16 %v6574, %v6573
      %v6580 = vpack.c.b16 %v6576, %v6575
      %v6582 = vsel %vm2656, %v6577, 0
      %v6585 = vsel %vm2656, %v6578, 0
      %v6588 = vsel %vm2656, %v6579, 0
      %v6591 = vsel %vm2656, %v6580, 0
      %6593 = vmatpush.bf16.msra.mxu0 0
      %6594 = vmatpush.bf16.msra.mxu0 0
      %6595 = vmatpush.bf16.msra.mxu0 0
      %6596 = vmatpush.bf16.msra.mxu0 0
      %6597 = vmatpush.bf16.msra.mxu0 %v6132
      %6598 = vmatpush.bf16.msra.mxu0 %v6131
      %6599 = vmatpush.bf16.msra.mxu0 %v6130
      %6600 = vmatpush.bf16.msra.mxu0 %v6129
      %6601 = vmatmul.bf16.gmra.mxu0 %v6582
      %v6602 = vpop.f32.mrf.mxu0
      %v6603 = vadd.f32 0.0, %v6602
      %v6604 = vpop.f32.mrf.mxu0
      %v6605 = vadd.f32 0.0, %v6604
      %6606 = vmatmul.bf16.gmra.mxu0 %v6585
      %v6607 = vpop.f32.mrf.mxu0
      %v6608 = vadd.f32 0.0, %v6607
      %v6609 = vpop.f32.mrf.mxu0
      %v6610 = vadd.f32 0.0, %v6609
      %6611 = vmatmul.bf16.gmra.mxu0 %v6588
      %v6612 = vpop.f32.mrf.mxu0
      %v6613 = vadd.f32 0.0, %v6612
      %v6614 = vpop.f32.mrf.mxu0
      %v6615 = vadd.f32 0.0, %v6614
      %6616 = vmatmul.bf16.gmra.mxu0 %v6591
      %v6617 = vpop.f32.mrf.mxu0
      %v6618 = vadd.f32 0.0, %v6617
      %v6619 = vpop.f32.mrf.mxu0
      %v6620 = vadd.f32 0.0, %v6619
      %6621 = vdwg.mxu0
      %v6622 = vpack.c.bf16 %v6605, %v6603
      %v6623 = vpack.c.bf16 %v6610, %v6608
      %v6624 = vpack.c.bf16 %v6615, %v6613
      %v6625 = vpack.c.bf16 %v6620, %v6618
      %s6626 = scalar_lea.vmem %s11, 48
      %v6627 = vld [vmem:[%s6626] sm:$0xf]
      %v6628 = vld [vmem:[%s6626 + $0x4] sm:$0xf]
      %v6629 = vld [vmem:[%s6626 + $0x8] sm:$0xf]
      %v6630 = vld [vmem:[%s6626 + $0xc] sm:$0xf]
      %v6635 = vunpack.c.l.b16 %v6627
      %v6636 = vunpack.c.l.b16 %v6628
      %v6637 = vunpack.c.l.b16 %v6629
      %v6638 = vunpack.c.l.b16 %v6630
      %v6639 = vpack.c.b16 %v6636, %v6635
      %v6640 = vpack.c.b16 %v6638, %v6637
      %v6644 = vsel %vm3174, %v6622, 0
      %v6647 = vsel %vm3174, %v6623, 0
      %v6650 = vsel %vm3174, %v6624, 0
      %v6653 = vsel %vm3174, %v6625, 0
      %6655 = vmatpush.bf16.msra.mxu0 0
      %6656 = vmatpush.bf16.msra.mxu0 0
      %6657 = vmatpush.bf16.msra.mxu0 0
      %6658 = vmatpush.bf16.msra.mxu0 0
      %6659 = vmatpush.bf16.msra.mxu0 0
      %6660 = vmatpush.bf16.msra.mxu0 0
      %6661 = vmatpush.bf16.msra.mxu0 %v6640
      %6662 = vmatpush.bf16.msra.mxu0 %v6639
      %6663 = vmatmul.bf16.gmra.mxu0 %v6644
      %v6664 = vpop.f32.mrf.mxu0
      %v6665 = vadd.f32 0.0, %v6664
      %v6666 = vpop.f32.mrf.mxu0
      %v6667 = vadd.f32 0.0, %v6666
      %6668 = vmatmul.bf16.gmra.mxu0 %v6647
      %v6669 = vpop.f32.mrf.mxu0
      %v6670 = vadd.f32 0.0, %v6669
      %v6671 = vpop.f32.mrf.mxu0
      %v6672 = vadd.f32 0.0, %v6671
      %6673 = vmatmul.bf16.gmra.mxu0 %v6650
      %v6674 = vpop.f32.mrf.mxu0
      %v6675 = vadd.f32 0.0, %v6674
      %v6676 = vpop.f32.mrf.mxu0
      %v6677 = vadd.f32 0.0, %v6676
      %6678 = vmatmul.bf16.gmra.mxu0 %v6653
      %v6679 = vpop.f32.mrf.mxu0
      %v6680 = vadd.f32 0.0, %v6679
      %v6681 = vpop.f32.mrf.mxu0
      %v6682 = vadd.f32 0.0, %v6681
      %6683 = vdwg.mxu0
      %v6684 = vadd.f32 %v6544, %v6665
      %v6685 = vadd.f32 %v6545, %v6667
      %v6686 = vadd.f32 %v6546, %v6670
      %v6687 = vadd.f32 %v6547, %v6672
      %v6688 = vadd.f32 %v6548, %v6675
      %v6689 = vadd.f32 %v6549, %v6677
      %v6690 = vadd.f32 %v6550, %v6680
      %v6691 = vadd.f32 %v6551, %v6682
      %s6692 = scalar_lea.vmem %s21, 128
      %v6693 = vld [vmem:[%s6692] sm:$0xf]
      %v6694 = vld [vmem:[%s6692 + $0x4] sm:$0xf]
      %v6695 = vld [vmem:[%s6692 + $0x8] sm:$0xf]
      %v6696 = vld [vmem:[%s6692 + $0xc] sm:$0xf]
      %v6697 = vld [vmem:[%s6692 + $0x10] sm:$0xf]
      %v6698 = vld [vmem:[%s6692 + $0x14] sm:$0xf]
      %v6699 = vld [vmem:[%s6692 + $0x18] sm:$0xf]
      %v6700 = vld [vmem:[%s6692 + $0x1c] sm:$0xf]
      %v6709 = vunpack.c.l.b16 %v6693
      %v6710 = vunpack.c.l.b16 %v6694
      %v6711 = vunpack.c.l.b16 %v6695
      %v6712 = vunpack.c.l.b16 %v6696
      %v6713 = vunpack.c.l.b16 %v6697
      %v6714 = vunpack.c.l.b16 %v6698
      %v6715 = vunpack.c.l.b16 %v6699
      %v6716 = vunpack.c.l.b16 %v6700
      %v6717 = vpack.c.b16 %v6710, %v6709
      %v6718 = vpack.c.b16 %v6712, %v6711
      %v6719 = vpack.c.b16 %v6714, %v6713
      %v6720 = vpack.c.b16 %v6716, %v6715
      %v6722 = vsel %vm2656, %v6717, 0
      %v6725 = vsel %vm2656, %v6718, 0
      %v6728 = vsel %vm2656, %v6719, 0
      %v6731 = vsel %vm2656, %v6720, 0
      %6733 = vmatpush.bf16.msra.mxu0 0
      %6734 = vmatpush.bf16.msra.mxu0 0
      %6735 = vmatpush.bf16.msra.mxu0 0
      %6736 = vmatpush.bf16.msra.mxu0 0
      %6737 = vmatpush.bf16.msra.mxu0 %v6132
      %6738 = vmatpush.bf16.msra.mxu0 %v6131
      %6739 = vmatpush.bf16.msra.mxu0 %v6130
      %6740 = vmatpush.bf16.msra.mxu0 %v6129
      %6741 = vmatmul.bf16.gmra.mxu0 %v6722
      %v6742 = vpop.f32.mrf.mxu0
      %v6743 = vadd.f32 0.0, %v6742
      %v6744 = vpop.f32.mrf.mxu0
      %v6745 = vadd.f32 0.0, %v6744
      %6746 = vmatmul.bf16.gmra.mxu0 %v6725
      %v6747 = vpop.f32.mrf.mxu0
      %v6748 = vadd.f32 0.0, %v6747
      %v6749 = vpop.f32.mrf.mxu0
      %v6750 = vadd.f32 0.0, %v6749
      %6751 = vmatmul.bf16.gmra.mxu0 %v6728
      %v6752 = vpop.f32.mrf.mxu0
      %v6753 = vadd.f32 0.0, %v6752
      %v6754 = vpop.f32.mrf.mxu0
      %v6755 = vadd.f32 0.0, %v6754
      %6756 = vmatmul.bf16.gmra.mxu0 %v6731
      %v6757 = vpop.f32.mrf.mxu0
      %v6758 = vadd.f32 0.0, %v6757
      %v6759 = vpop.f32.mrf.mxu0
      %v6760 = vadd.f32 0.0, %v6759
      %6761 = vdwg.mxu0
      %v6762 = vpack.c.bf16 %v6745, %v6743
      %v6763 = vpack.c.bf16 %v6750, %v6748
      %v6764 = vpack.c.bf16 %v6755, %v6753
      %v6765 = vpack.c.bf16 %v6760, %v6758
      %s6766 = scalar_lea.vmem %s11, 64
      %v6767 = vld [vmem:[%s6766] sm:$0xf]
      %v6768 = vld [vmem:[%s6766 + $0x4] sm:$0xf]
      %v6769 = vld [vmem:[%s6766 + $0x8] sm:$0xf]
      %v6770 = vld [vmem:[%s6766 + $0xc] sm:$0xf]
      %v6775 = vunpack.c.l.b16 %v6767
      %v6776 = vunpack.c.l.b16 %v6768
      %v6777 = vunpack.c.l.b16 %v6769
      %v6778 = vunpack.c.l.b16 %v6770
      %v6779 = vpack.c.b16 %v6776, %v6775
      %v6780 = vpack.c.b16 %v6778, %v6777
      %v6784 = vsel %vm3174, %v6762, 0
      %v6787 = vsel %vm3174, %v6763, 0
      %v6790 = vsel %vm3174, %v6764, 0
      %v6793 = vsel %vm3174, %v6765, 0
      %6795 = vmatpush.bf16.msra.mxu0 0
      %6796 = vmatpush.bf16.msra.mxu0 0
      %6797 = vmatpush.bf16.msra.mxu0 0
      %6798 = vmatpush.bf16.msra.mxu0 0
      %6799 = vmatpush.bf16.msra.mxu0 0
      %6800 = vmatpush.bf16.msra.mxu0 0
      %6801 = vmatpush.bf16.msra.mxu0 %v6780
      %6802 = vmatpush.bf16.msra.mxu0 %v6779
      %6803 = vmatmul.bf16.gmra.mxu0 %v6784
      %v6804 = vpop.f32.mrf.mxu0
      %v6805 = vadd.f32 0.0, %v6804
      %v6806 = vpop.f32.mrf.mxu0
      %v6807 = vadd.f32 0.0, %v6806
      %6808 = vmatmul.bf16.gmra.mxu0 %v6787
      %v6809 = vpop.f32.mrf.mxu0
      %v6810 = vadd.f32 0.0, %v6809
      %v6811 = vpop.f32.mrf.mxu0
      %v6812 = vadd.f32 0.0, %v6811
      %6813 = vmatmul.bf16.gmra.mxu0 %v6790
      %v6814 = vpop.f32.mrf.mxu0
      %v6815 = vadd.f32 0.0, %v6814
      %v6816 = vpop.f32.mrf.mxu0
      %v6817 = vadd.f32 0.0, %v6816
      %6818 = vmatmul.bf16.gmra.mxu0 %v6793
      %v6819 = vpop.f32.mrf.mxu0
      %v6820 = vadd.f32 0.0, %v6819
      %v6821 = vpop.f32.mrf.mxu0
      %v6822 = vadd.f32 0.0, %v6821
      %6823 = vdwg.mxu0
      %v6824 = vadd.f32 %v6684, %v6805
      %v6825 = vadd.f32 %v6685, %v6807
      %v6826 = vadd.f32 %v6686, %v6810
      %v6827 = vadd.f32 %v6687, %v6812
      %v6828 = vadd.f32 %v6688, %v6815
      %v6829 = vadd.f32 %v6689, %v6817
      %v6830 = vadd.f32 %v6690, %v6820
      %v6831 = vadd.f32 %v6691, %v6822
      %s6832 = scalar_lea.vmem %s21, 160
      %v6833 = vld [vmem:[%s6832] sm:$0xf]
      %v6834 = vld [vmem:[%s6832 + $0x4] sm:$0xf]
      %v6835 = vld [vmem:[%s6832 + $0x8] sm:$0xf]
      %v6836 = vld [vmem:[%s6832 + $0xc] sm:$0xf]
      %v6837 = vld [vmem:[%s6832 + $0x10] sm:$0xf]
      %v6838 = vld [vmem:[%s6832 + $0x14] sm:$0xf]
      %v6839 = vld [vmem:[%s6832 + $0x18] sm:$0xf]
      %v6840 = vld [vmem:[%s6832 + $0x1c] sm:$0xf]
      %v6849 = vunpack.c.l.b16 %v6833
      %v6850 = vunpack.c.l.b16 %v6834
      %v6851 = vunpack.c.l.b16 %v6835
      %v6852 = vunpack.c.l.b16 %v6836
      %v6853 = vunpack.c.l.b16 %v6837
      %v6854 = vunpack.c.l.b16 %v6838
      %v6855 = vunpack.c.l.b16 %v6839
      %v6856 = vunpack.c.l.b16 %v6840
      %v6857 = vpack.c.b16 %v6850, %v6849
      %v6858 = vpack.c.b16 %v6852, %v6851
      %v6859 = vpack.c.b16 %v6854, %v6853
      %v6860 = vpack.c.b16 %v6856, %v6855
      %v6862 = vsel %vm2656, %v6857, 0
      %v6865 = vsel %vm2656, %v6858, 0
      %v6868 = vsel %vm2656, %v6859, 0
      %v6871 = vsel %vm2656, %v6860, 0
      %6873 = vmatpush.bf16.msra.mxu0 0
      %6874 = vmatpush.bf16.msra.mxu0 0
      %6875 = vmatpush.bf16.msra.mxu0 0
      %6876 = vmatpush.bf16.msra.mxu0 0
      %6877 = vmatpush.bf16.msra.mxu0 %v6132
      %6878 = vmatpush.bf16.msra.mxu0 %v6131
      %6879 = vmatpush.bf16.msra.mxu0 %v6130
      %6880 = vmatpush.bf16.msra.mxu0 %v6129
      %6881 = vmatmul.bf16.gmra.mxu0 %v6862
      %v6882 = vpop.f32.mrf.mxu0
      %v6883 = vadd.f32 0.0, %v6882
      %v6884 = vpop.f32.mrf.mxu0
      %v6885 = vadd.f32 0.0, %v6884
      %6886 = vmatmul.bf16.gmra.mxu0 %v6865
      %v6887 = vpop.f32.mrf.mxu0
      %v6888 = vadd.f32 0.0, %v6887
      %v6889 = vpop.f32.mrf.mxu0
      %v6890 = vadd.f32 0.0, %v6889
      %6891 = vmatmul.bf16.gmra.mxu0 %v6868
      %v6892 = vpop.f32.mrf.mxu0
      %v6893 = vadd.f32 0.0, %v6892
      %v6894 = vpop.f32.mrf.mxu0
      %v6895 = vadd.f32 0.0, %v6894
      %6896 = vmatmul.bf16.gmra.mxu0 %v6871
      %v6897 = vpop.f32.mrf.mxu0
      %v6898 = vadd.f32 0.0, %v6897
      %v6899 = vpop.f32.mrf.mxu0
      %v6900 = vadd.f32 0.0, %v6899
      %6901 = vdwg.mxu0
      %v6902 = vpack.c.bf16 %v6885, %v6883
      %v6903 = vpack.c.bf16 %v6890, %v6888
      %v6904 = vpack.c.bf16 %v6895, %v6893
      %v6905 = vpack.c.bf16 %v6900, %v6898
      %s6906 = scalar_lea.vmem %s11, 80
      %v6907 = vld [vmem:[%s6906] sm:$0xf]
      %v6908 = vld [vmem:[%s6906 + $0x4] sm:$0xf]
      %v6909 = vld [vmem:[%s6906 + $0x8] sm:$0xf]
      %v6910 = vld [vmem:[%s6906 + $0xc] sm:$0xf]
      %v6915 = vunpack.c.l.b16 %v6907
      %v6916 = vunpack.c.l.b16 %v6908
      %v6917 = vunpack.c.l.b16 %v6909
      %v6918 = vunpack.c.l.b16 %v6910
      %v6919 = vpack.c.b16 %v6916, %v6915
      %v6920 = vpack.c.b16 %v6918, %v6917
      %v6924 = vsel %vm3174, %v6902, 0
      %v6927 = vsel %vm3174, %v6903, 0
      %v6930 = vsel %vm3174, %v6904, 0
      %v6933 = vsel %vm3174, %v6905, 0
      %6935 = vmatpush.bf16.msra.mxu0 0
      %6936 = vmatpush.bf16.msra.mxu0 0
      %6937 = vmatpush.bf16.msra.mxu0 0
      %6938 = vmatpush.bf16.msra.mxu0 0
      %6939 = vmatpush.bf16.msra.mxu0 0
      %6940 = vmatpush.bf16.msra.mxu0 0
      %6941 = vmatpush.bf16.msra.mxu0 %v6920
      %6942 = vmatpush.bf16.msra.mxu0 %v6919
      %6943 = vmatmul.bf16.gmra.mxu0 %v6924
      %v6944 = vpop.f32.mrf.mxu0
      %v6945 = vadd.f32 0.0, %v6944
      %v6946 = vpop.f32.mrf.mxu0
      %v6947 = vadd.f32 0.0, %v6946
      %6948 = vmatmul.bf16.gmra.mxu0 %v6927
      %v6949 = vpop.f32.mrf.mxu0
      %v6950 = vadd.f32 0.0, %v6949
      %v6951 = vpop.f32.mrf.mxu0
      %v6952 = vadd.f32 0.0, %v6951
      %6953 = vmatmul.bf16.gmra.mxu0 %v6930
      %v6954 = vpop.f32.mrf.mxu0
      %v6955 = vadd.f32 0.0, %v6954
      %v6956 = vpop.f32.mrf.mxu0
      %v6957 = vadd.f32 0.0, %v6956
      %6958 = vmatmul.bf16.gmra.mxu0 %v6933
      %v6959 = vpop.f32.mrf.mxu0
      %v6960 = vadd.f32 0.0, %v6959
      %v6961 = vpop.f32.mrf.mxu0
      %v6962 = vadd.f32 0.0, %v6961
      %6963 = vdwg.mxu0
      %v6964 = vadd.f32 %v6824, %v6945
      %v6965 = vadd.f32 %v6825, %v6947
      %v6966 = vadd.f32 %v6826, %v6950
      %v6967 = vadd.f32 %v6827, %v6952
      %v6968 = vadd.f32 %v6828, %v6955
      %v6969 = vadd.f32 %v6829, %v6957
      %v6970 = vadd.f32 %v6830, %v6960
      %v6971 = vadd.f32 %v6831, %v6962
      %s6972 = scalar_lea.vmem %s21, 192
      %v6973 = vld [vmem:[%s6972] sm:$0xf]
      %v6974 = vld [vmem:[%s6972 + $0x4] sm:$0xf]
      %v6975 = vld [vmem:[%s6972 + $0x8] sm:$0xf]
      %v6976 = vld [vmem:[%s6972 + $0xc] sm:$0xf]
      %v6977 = vld [vmem:[%s6972 + $0x10] sm:$0xf]
      %v6978 = vld [vmem:[%s6972 + $0x14] sm:$0xf]
      %v6979 = vld [vmem:[%s6972 + $0x18] sm:$0xf]
      %v6980 = vld [vmem:[%s6972 + $0x1c] sm:$0xf]
      %v6989 = vunpack.c.l.b16 %v6973
      %v6990 = vunpack.c.l.b16 %v6974
      %v6991 = vunpack.c.l.b16 %v6975
      %v6992 = vunpack.c.l.b16 %v6976
      %v6993 = vunpack.c.l.b16 %v6977
      %v6994 = vunpack.c.l.b16 %v6978
      %v6995 = vunpack.c.l.b16 %v6979
      %v6996 = vunpack.c.l.b16 %v6980
      %v6997 = vpack.c.b16 %v6990, %v6989
      %v6998 = vpack.c.b16 %v6992, %v6991
      %v6999 = vpack.c.b16 %v6994, %v6993
      %v7000 = vpack.c.b16 %v6996, %v6995
      %v7002 = vsel %vm2656, %v6997, 0
      %v7005 = vsel %vm2656, %v6998, 0
      %v7008 = vsel %vm2656, %v6999, 0
      %v7011 = vsel %vm2656, %v7000, 0
      %7013 = vmatpush.bf16.msra.mxu0 0
      %7014 = vmatpush.bf16.msra.mxu0 0
      %7015 = vmatpush.bf16.msra.mxu0 0
      %7016 = vmatpush.bf16.msra.mxu0 0
      %7017 = vmatpush.bf16.msra.mxu0 %v6132
      %7018 = vmatpush.bf16.msra.mxu0 %v6131
      %7019 = vmatpush.bf16.msra.mxu0 %v6130
      %7020 = vmatpush.bf16.msra.mxu0 %v6129
      %7021 = vmatmul.bf16.gmra.mxu0 %v7002
      %v7022 = vpop.f32.mrf.mxu0
      %v7023 = vadd.f32 0.0, %v7022
      %v7024 = vpop.f32.mrf.mxu0
      %v7025 = vadd.f32 0.0, %v7024
      %7026 = vmatmul.bf16.gmra.mxu0 %v7005
      %v7027 = vpop.f32.mrf.mxu0
      %v7028 = vadd.f32 0.0, %v7027
      %v7029 = vpop.f32.mrf.mxu0
      %v7030 = vadd.f32 0.0, %v7029
      %7031 = vmatmul.bf16.gmra.mxu0 %v7008
      %v7032 = vpop.f32.mrf.mxu0
      %v7033 = vadd.f32 0.0, %v7032
      %v7034 = vpop.f32.mrf.mxu0
      %v7035 = vadd.f32 0.0, %v7034
      %7036 = vmatmul.bf16.gmra.mxu0 %v7011
      %v7037 = vpop.f32.mrf.mxu0
      %v7038 = vadd.f32 0.0, %v7037
      %v7039 = vpop.f32.mrf.mxu0
      %v7040 = vadd.f32 0.0, %v7039
      %7041 = vdwg.mxu0
      %v7042 = vpack.c.bf16 %v7025, %v7023
      %v7043 = vpack.c.bf16 %v7030, %v7028
      %v7044 = vpack.c.bf16 %v7035, %v7033
      %v7045 = vpack.c.bf16 %v7040, %v7038
      %s7046 = scalar_lea.vmem %s11, 96
      %v7047 = vld [vmem:[%s7046] sm:$0xf]
      %v7048 = vld [vmem:[%s7046 + $0x4] sm:$0xf]
      %v7049 = vld [vmem:[%s7046 + $0x8] sm:$0xf]
      %v7050 = vld [vmem:[%s7046 + $0xc] sm:$0xf]
      %v7055 = vunpack.c.l.b16 %v7047
      %v7056 = vunpack.c.l.b16 %v7048
      %v7057 = vunpack.c.l.b16 %v7049
      %v7058 = vunpack.c.l.b16 %v7050
      %v7059 = vpack.c.b16 %v7056, %v7055
      %v7060 = vpack.c.b16 %v7058, %v7057
      %v7064 = vsel %vm3174, %v7042, 0
      %v7067 = vsel %vm3174, %v7043, 0
      %v7070 = vsel %vm3174, %v7044, 0
      %v7073 = vsel %vm3174, %v7045, 0
      %7075 = vmatpush.bf16.msra.mxu0 0
      %7076 = vmatpush.bf16.msra.mxu0 0
      %7077 = vmatpush.bf16.msra.mxu0 0
      %7078 = vmatpush.bf16.msra.mxu0 0
      %7079 = vmatpush.bf16.msra.mxu0 0
      %7080 = vmatpush.bf16.msra.mxu0 0
      %7081 = vmatpush.bf16.msra.mxu0 %v7060
      %7082 = vmatpush.bf16.msra.mxu0 %v7059
      %7083 = vmatmul.bf16.gmra.mxu0 %v7064
      %v7084 = vpop.f32.mrf.mxu0
      %v7085 = vadd.f32 0.0, %v7084
      %v7086 = vpop.f32.mrf.mxu0
      %v7087 = vadd.f32 0.0, %v7086
      %7088 = vmatmul.bf16.gmra.mxu0 %v7067
      %v7089 = vpop.f32.mrf.mxu0
      %v7090 = vadd.f32 0.0, %v7089
      %v7091 = vpop.f32.mrf.mxu0
      %v7092 = vadd.f32 0.0, %v7091
      %7093 = vmatmul.bf16.gmra.mxu0 %v7070
      %v7094 = vpop.f32.mrf.mxu0
      %v7095 = vadd.f32 0.0, %v7094
      %v7096 = vpop.f32.mrf.mxu0
      %v7097 = vadd.f32 0.0, %v7096
      %7098 = vmatmul.bf16.gmra.mxu0 %v7073
      %v7099 = vpop.f32.mrf.mxu0
      %v7100 = vadd.f32 0.0, %v7099
      %v7101 = vpop.f32.mrf.mxu0
      %v7102 = vadd.f32 0.0, %v7101
      %7103 = vdwg.mxu0
      %v7104 = vadd.f32 %v6964, %v7085
      %v7105 = vadd.f32 %v6965, %v7087
      %v7106 = vadd.f32 %v6966, %v7090
      %v7107 = vadd.f32 %v6967, %v7092
      %v7108 = vadd.f32 %v6968, %v7095
      %v7109 = vadd.f32 %v6969, %v7097
      %v7110 = vadd.f32 %v6970, %v7100
      %v7111 = vadd.f32 %v6971, %v7102
      %s7112 = scalar_lea.vmem %s21, 224
      %v7113 = vld [vmem:[%s7112] sm:$0xf]
      %v7114 = vld [vmem:[%s7112 + $0x4] sm:$0xf]
      %v7115 = vld [vmem:[%s7112 + $0x8] sm:$0xf]
      %v7116 = vld [vmem:[%s7112 + $0xc] sm:$0xf]
      %v7117 = vld [vmem:[%s7112 + $0x10] sm:$0xf]
      %v7118 = vld [vmem:[%s7112 + $0x14] sm:$0xf]
      %v7119 = vld [vmem:[%s7112 + $0x18] sm:$0xf]
      %v7120 = vld [vmem:[%s7112 + $0x1c] sm:$0xf]
      %v7129 = vunpack.c.l.b16 %v7113
      %v7130 = vunpack.c.l.b16 %v7114
      %v7131 = vunpack.c.l.b16 %v7115
      %v7132 = vunpack.c.l.b16 %v7116
      %v7133 = vunpack.c.l.b16 %v7117
      %v7134 = vunpack.c.l.b16 %v7118
      %v7135 = vunpack.c.l.b16 %v7119
      %v7136 = vunpack.c.l.b16 %v7120
      %v7137 = vpack.c.b16 %v7130, %v7129
      %v7138 = vpack.c.b16 %v7132, %v7131
      %v7139 = vpack.c.b16 %v7134, %v7133
      %v7140 = vpack.c.b16 %v7136, %v7135
      %v7142 = vsel %vm2656, %v7137, 0
      %v7145 = vsel %vm2656, %v7138, 0
      %v7148 = vsel %vm2656, %v7139, 0
      %v7151 = vsel %vm2656, %v7140, 0
      %7153 = vmatpush.bf16.msra.mxu0 0
      %7154 = vmatpush.bf16.msra.mxu0 0
      %7155 = vmatpush.bf16.msra.mxu0 0
      %7156 = vmatpush.bf16.msra.mxu0 0
      %7157 = vmatpush.bf16.msra.mxu0 %v6132
      %7158 = vmatpush.bf16.msra.mxu0 %v6131
      %7159 = vmatpush.bf16.msra.mxu0 %v6130
      %7160 = vmatpush.bf16.msra.mxu0 %v6129
      %7161 = vmatmul.bf16.gmra.mxu0 %v7142
      %v7162 = vpop.f32.mrf.mxu0
      %v7163 = vadd.f32 0.0, %v7162
      %v7164 = vpop.f32.mrf.mxu0
      %v7165 = vadd.f32 0.0, %v7164
      %7166 = vmatmul.bf16.gmra.mxu0 %v7145
      %v7167 = vpop.f32.mrf.mxu0
      %v7168 = vadd.f32 0.0, %v7167
      %v7169 = vpop.f32.mrf.mxu0
      %v7170 = vadd.f32 0.0, %v7169
      %7171 = vmatmul.bf16.gmra.mxu0 %v7148
      %v7172 = vpop.f32.mrf.mxu0
      %v7173 = vadd.f32 0.0, %v7172
      %v7174 = vpop.f32.mrf.mxu0
      %v7175 = vadd.f32 0.0, %v7174
      %7176 = vmatmul.bf16.gmra.mxu0 %v7151
      %v7177 = vpop.f32.mrf.mxu0
      %v7178 = vadd.f32 0.0, %v7177
      %v7179 = vpop.f32.mrf.mxu0
      %v7180 = vadd.f32 0.0, %v7179
      %7181 = vdwg.mxu0
      %v7182 = vpack.c.bf16 %v7165, %v7163
      %v7183 = vpack.c.bf16 %v7170, %v7168
      %v7184 = vpack.c.bf16 %v7175, %v7173
      %v7185 = vpack.c.bf16 %v7180, %v7178
      %s7186 = scalar_lea.vmem %s11, 112
      %v7187 = vld [vmem:[%s7186] sm:$0xf]
      %v7188 = vld [vmem:[%s7186 + $0x4] sm:$0xf]
      %v7189 = vld [vmem:[%s7186 + $0x8] sm:$0xf]
      %v7190 = vld [vmem:[%s7186 + $0xc] sm:$0xf]
      %v7195 = vunpack.c.l.b16 %v7187
      %v7196 = vunpack.c.l.b16 %v7188
      %v7197 = vunpack.c.l.b16 %v7189
      %v7198 = vunpack.c.l.b16 %v7190
      %v7199 = vpack.c.b16 %v7196, %v7195
      %v7200 = vpack.c.b16 %v7198, %v7197
      %v7204 = vsel %vm3174, %v7182, 0
      %v7207 = vsel %vm3174, %v7183, 0
      %v7210 = vsel %vm3174, %v7184, 0
      %v7213 = vsel %vm3174, %v7185, 0
      %7215 = vmatpush.bf16.msra.mxu0 0
      %7216 = vmatpush.bf16.msra.mxu0 0
      %7217 = vmatpush.bf16.msra.mxu0 0
      %7218 = vmatpush.bf16.msra.mxu0 0
      %7219 = vmatpush.bf16.msra.mxu0 0
      %7220 = vmatpush.bf16.msra.mxu0 0
      %7221 = vmatpush.bf16.msra.mxu0 %v7200
      %7222 = vmatpush.bf16.msra.mxu0 %v7199
      %7223 = vmatmul.bf16.gmra.mxu0 %v7204
      %v7224 = vpop.f32.mrf.mxu0
      %v7225 = vadd.f32 0.0, %v7224
      %v7226 = vpop.f32.mrf.mxu0
      %v7227 = vadd.f32 0.0, %v7226
      %7228 = vmatmul.bf16.gmra.mxu0 %v7207
      %v7229 = vpop.f32.mrf.mxu0
      %v7230 = vadd.f32 0.0, %v7229
      %v7231 = vpop.f32.mrf.mxu0
      %v7232 = vadd.f32 0.0, %v7231
      %7233 = vmatmul.bf16.gmra.mxu0 %v7210
      %v7234 = vpop.f32.mrf.mxu0
      %v7235 = vadd.f32 0.0, %v7234
      %v7236 = vpop.f32.mrf.mxu0
      %v7237 = vadd.f32 0.0, %v7236
      %7238 = vmatmul.bf16.gmra.mxu0 %v7213
      %v7239 = vpop.f32.mrf.mxu0
      %v7240 = vadd.f32 0.0, %v7239
      %v7241 = vpop.f32.mrf.mxu0
      %v7242 = vadd.f32 0.0, %v7241
      %7243 = vdwg.mxu0
      %v7244 = vadd.f32 %v7104, %v7225
      %v7245 = vadd.f32 %v7105, %v7227
      %v7246 = vadd.f32 %v7106, %v7230
      %v7247 = vadd.f32 %v7107, %v7232
      %v7248 = vadd.f32 %v7108, %v7235
      %v7249 = vadd.f32 %v7109, %v7237
      %v7250 = vadd.f32 %v7110, %v7240
      %v7251 = vadd.f32 %v7111, %v7242
      %s7252 = scalar_lea.vmem %s21, 256
      %v7253 = vld [vmem:[%s7252] sm:$0xf]
      %v7254 = vld [vmem:[%s7252 + $0x4] sm:$0xf]
      %v7255 = vld [vmem:[%s7252 + $0x8] sm:$0xf]
      %v7256 = vld [vmem:[%s7252 + $0xc] sm:$0xf]
      %v7257 = vld [vmem:[%s7252 + $0x10] sm:$0xf]
      %v7258 = vld [vmem:[%s7252 + $0x14] sm:$0xf]
      %v7259 = vld [vmem:[%s7252 + $0x18] sm:$0xf]
      %v7260 = vld [vmem:[%s7252 + $0x1c] sm:$0xf]
      %v7269 = vunpack.c.l.b16 %v7253
      %v7270 = vunpack.c.l.b16 %v7254
      %v7271 = vunpack.c.l.b16 %v7255
      %v7272 = vunpack.c.l.b16 %v7256
      %v7273 = vunpack.c.l.b16 %v7257
      %v7274 = vunpack.c.l.b16 %v7258
      %v7275 = vunpack.c.l.b16 %v7259
      %v7276 = vunpack.c.l.b16 %v7260
      %v7277 = vpack.c.b16 %v7270, %v7269
      %v7278 = vpack.c.b16 %v7272, %v7271
      %v7279 = vpack.c.b16 %v7274, %v7273
      %v7280 = vpack.c.b16 %v7276, %v7275
      %v7282 = vsel %vm2656, %v7277, 0
      %v7285 = vsel %vm2656, %v7278, 0
      %v7288 = vsel %vm2656, %v7279, 0
      %v7291 = vsel %vm2656, %v7280, 0
      %7293 = vmatpush.bf16.msra.mxu0 0
      %7294 = vmatpush.bf16.msra.mxu0 0
      %7295 = vmatpush.bf16.msra.mxu0 0
      %7296 = vmatpush.bf16.msra.mxu0 0
      %7297 = vmatpush.bf16.msra.mxu0 %v6132
      %7298 = vmatpush.bf16.msra.mxu0 %v6131
      %7299 = vmatpush.bf16.msra.mxu0 %v6130
      %7300 = vmatpush.bf16.msra.mxu0 %v6129
      %7301 = vmatmul.bf16.gmra.mxu0 %v7282
      %v7302 = vpop.f32.mrf.mxu0
      %v7303 = vadd.f32 0.0, %v7302
      %v7304 = vpop.f32.mrf.mxu0
      %v7305 = vadd.f32 0.0, %v7304
      %7306 = vmatmul.bf16.gmra.mxu0 %v7285
      %v7307 = vpop.f32.mrf.mxu0
      %v7308 = vadd.f32 0.0, %v7307
      %v7309 = vpop.f32.mrf.mxu0
      %v7310 = vadd.f32 0.0, %v7309
      %7311 = vmatmul.bf16.gmra.mxu0 %v7288
      %v7312 = vpop.f32.mrf.mxu0
      %v7313 = vadd.f32 0.0, %v7312
      %v7314 = vpop.f32.mrf.mxu0
      %v7315 = vadd.f32 0.0, %v7314
      %7316 = vmatmul.bf16.gmra.mxu0 %v7291
      %v7317 = vpop.f32.mrf.mxu0
      %v7318 = vadd.f32 0.0, %v7317
      %v7319 = vpop.f32.mrf.mxu0
      %v7320 = vadd.f32 0.0, %v7319
      %7321 = vdwg.mxu0
      %v7322 = vpack.c.bf16 %v7305, %v7303
      %v7323 = vpack.c.bf16 %v7310, %v7308
      %v7324 = vpack.c.bf16 %v7315, %v7313
      %v7325 = vpack.c.bf16 %v7320, %v7318
      %s7326 = scalar_lea.vmem %s11, 128
      %v7327 = vld [vmem:[%s7326] sm:$0xf]
      %v7328 = vld [vmem:[%s7326 + $0x4] sm:$0xf]
      %v7329 = vld [vmem:[%s7326 + $0x8] sm:$0xf]
      %v7330 = vld [vmem:[%s7326 + $0xc] sm:$0xf]
      %v7335 = vunpack.c.l.b16 %v7327
      %v7336 = vunpack.c.l.b16 %v7328
      %v7337 = vunpack.c.l.b16 %v7329
      %v7338 = vunpack.c.l.b16 %v7330
      %v7339 = vpack.c.b16 %v7336, %v7335
      %v7340 = vpack.c.b16 %v7338, %v7337
      %v7344 = vsel %vm3174, %v7322, 0
      %v7347 = vsel %vm3174, %v7323, 0
      %v7350 = vsel %vm3174, %v7324, 0
      %v7353 = vsel %vm3174, %v7325, 0
      %7355 = vmatpush.bf16.msra.mxu0 0
      %7356 = vmatpush.bf16.msra.mxu0 0
      %7357 = vmatpush.bf16.msra.mxu0 0
      %7358 = vmatpush.bf16.msra.mxu0 0
      %7359 = vmatpush.bf16.msra.mxu0 0
      %7360 = vmatpush.bf16.msra.mxu0 0
      %7361 = vmatpush.bf16.msra.mxu0 %v7340
      %7362 = vmatpush.bf16.msra.mxu0 %v7339
      %7363 = vmatmul.bf16.gmra.mxu0 %v7344
      %v7364 = vpop.f32.mrf.mxu0
      %v7365 = vadd.f32 0.0, %v7364
      %v7366 = vpop.f32.mrf.mxu0
      %v7367 = vadd.f32 0.0, %v7366
      %7368 = vmatmul.bf16.gmra.mxu0 %v7347
      %v7369 = vpop.f32.mrf.mxu0
      %v7370 = vadd.f32 0.0, %v7369
      %v7371 = vpop.f32.mrf.mxu0
      %v7372 = vadd.f32 0.0, %v7371
      %7373 = vmatmul.bf16.gmra.mxu0 %v7350
      %v7374 = vpop.f32.mrf.mxu0
      %v7375 = vadd.f32 0.0, %v7374
      %v7376 = vpop.f32.mrf.mxu0
      %v7377 = vadd.f32 0.0, %v7376
      %7378 = vmatmul.bf16.gmra.mxu0 %v7353
      %v7379 = vpop.f32.mrf.mxu0
      %v7380 = vadd.f32 0.0, %v7379
      %v7381 = vpop.f32.mrf.mxu0
      %v7382 = vadd.f32 0.0, %v7381
      %7383 = vdwg.mxu0
      %v7384 = vadd.f32 %v7244, %v7365
      %v7385 = vadd.f32 %v7245, %v7367
      %v7386 = vadd.f32 %v7246, %v7370
      %v7387 = vadd.f32 %v7247, %v7372
      %v7388 = vadd.f32 %v7248, %v7375
      %v7389 = vadd.f32 %v7249, %v7377
      %v7390 = vadd.f32 %v7250, %v7380
      %v7391 = vadd.f32 %v7251, %v7382
      %v7392 = vmax.f32 %v7384, 0.0
      %v7393 = vmax.f32 %v7385, 0.0
      %v7394 = vmax.f32 %v7386, 0.0
      %v7395 = vmax.f32 %v7387, 0.0
      %v7396 = vmax.f32 %v7388, 0.0
      %v7397 = vmax.f32 %v7389, 0.0
      %v7398 = vmax.f32 %v7390, 0.0
      %v7399 = vmax.f32 %v7391, 0.0
      %v7400 = vld [vmem:[%s15 + $0xb] sm:$0x1]
      %v7401 = vld [vmem:[%s12] sm:$0xf]
      %v7402 = vld [vmem:[%s12 + $0x4] sm:$0xf]
      %v7403 = vld [vmem:[%s12 + $0x8] sm:$0xf]
      %v7404 = vld [vmem:[%s12 + $0xc] sm:$0xf]
      %v7405 = vld [vmem:[%s12 + $0x10] sm:$0xf]
      %v7406 = vld [vmem:[%s12 + $0x14] sm:$0xf]
      %v7407 = vld [vmem:[%s12 + $0x18] sm:$0xf]
      %v7408 = vld [vmem:[%s12 + $0x1c] sm:$0xf]
      %v7409 = vperm.slane %v7400, 0
      %v7418 = vunpack.c.l.b16 %v7401
      %v7419 = vunpack.c.l.b16 %v7402
      %v7420 = vunpack.c.l.b16 %v7403
      %v7421 = vunpack.c.l.b16 %v7404
      %v7422 = vunpack.c.l.b16 %v7405
      %v7423 = vunpack.c.l.b16 %v7406
      %v7424 = vunpack.c.l.b16 %v7407
      %v7425 = vunpack.c.l.b16 %v7408
      %v7426 = vpack.c.b16 %v7419, %v7418
      %v7427 = vpack.c.b16 %v7421, %v7420
      %v7428 = vpack.c.b16 %v7423, %v7422
      %v7429 = vpack.c.b16 %v7425, %v7424
      %v7434 = vsel %vm2656, %v5327, 0
      %7436 = vmatpush.bf16.msra.mxu0 0
      %7437 = vmatpush.bf16.msra.mxu0 0
      %7438 = vmatpush.bf16.msra.mxu0 0
      %7439 = vmatpush.bf16.msra.mxu0 0
      %7440 = vmatpush.bf16.msra.mxu0 %v7429
      %7441 = vmatpush.bf16.msra.mxu0 %v7428
      %7442 = vmatpush.bf16.msra.mxu0 %v7427
      %7443 = vmatpush.bf16.msra.mxu0 %v7426
      %7444 = vmatmul.bf16.gmra.mxu0 %v7434
      %v7445 = vpop.f32.mrf.mxu0
      %v7446 = vadd.f32 %v7409, %v7445
      %v7447 = vpop.f32.mrf.mxu0
      %7448 = vdwg.mxu0
      %v7449 = vld [vmem:[%s15 + $0xc] sm:$0x1]
      %v7450 = vld [vmem:[%s13] sm:$0xf]
      %v7451 = vld [vmem:[%s13 + $0x4] sm:$0xf]
      %v7452 = vld [vmem:[%s13 + $0x8] sm:$0xf]
      %v7453 = vld [vmem:[%s13 + $0xc] sm:$0xf]
      %v7454 = vperm.slane %v7449, 0
      %v7459 = vunpack.c.l.b16 %v7450
      %v7460 = vunpack.c.l.b16 %v7451
      %v7461 = vunpack.c.l.b16 %v7452
      %v7462 = vunpack.c.l.b16 %v7453
      %v7463 = vpack.c.b16 %v7460, %v7459
      %v7464 = vpack.c.b16 %v7462, %v7461
      %v7468 = vsel %vm3174, %v6066, 0
      %7470 = vmatpush.bf16.msra.mxu0 0
      %7471 = vmatpush.bf16.msra.mxu0 0
      %7472 = vmatpush.bf16.msra.mxu0 0
      %7473 = vmatpush.bf16.msra.mxu0 0
      %7474 = vmatpush.bf16.msra.mxu0 0
      %7475 = vmatpush.bf16.msra.mxu0 0
      %7476 = vmatpush.bf16.msra.mxu0 %v7464
      %7477 = vmatpush.bf16.msra.mxu0 %v7463
      %7478 = vmatmul.bf16.gmra.mxu0 %v7468
      %v7479 = vpop.f32.mrf.mxu0
      %v7480 = vadd.f32 %v7454, %v7479
      %v7481 = vpop.f32.mrf.mxu0
      %v7482 = vadd.f32 %v7454, %v7481
      %7483 = vdwg.mxu0
      %v7484 = vld [vmem:[%s15 + $0xd] sm:$0x1]
      %v7485 = vpack.c.bf16 %v7393, %v7392
      %v7486 = vpack.c.bf16 %v7395, %v7394
      %v7487 = vpack.c.bf16 %v7397, %v7396
      %v7488 = vpack.c.bf16 %v7399, %v7398
      %v7489 = vld [vmem:[%s14] sm:$0xf]
      %v7490 = vld [vmem:[%s14 + $0x4] sm:$0xf]
      %v7491 = vperm.slane %v7484, 0
      %v7494 = vunpack.c.l.b16 %v7489
      %v7495 = vunpack.c.l.b16 %v7490
      %v7496 = vpack.c.b16 %v7495, %v7494
      %v7499 = vsel %vm2683, %v7485, 0
      %v7502 = vsel %vm2683, %v7486, 0
      %v7505 = vsel %vm2683, %v7487, 0
      %v7508 = vsel %vm2683, %v7488, 0
      %7510 = vmatpush.bf16.msra.mxu0 0
      %7511 = vmatpush.bf16.msra.mxu0 0
      %7512 = vmatpush.bf16.msra.mxu0 0
      %7513 = vmatpush.bf16.msra.mxu0 0
      %7514 = vmatpush.bf16.msra.mxu0 0
      %7515 = vmatpush.bf16.msra.mxu0 0
      %7516 = vmatpush.bf16.msra.mxu0 0
      %7517 = vmatpush.bf16.msra.mxu0 %v7496
      %7518 = vmatmul.bf16.gmra.mxu0 %v7499
      %v7519 = vpop.f32.mrf.mxu0
      %v7520 = vadd.f32 %v7491, %v7519
      %v7521 = vpop.f32.mrf.mxu0
      %v7522 = vadd.f32 %v7491, %v7521
      %7523 = vmatmul.bf16.gmra.mxu0 %v7502
      %v7524 = vpop.f32.mrf.mxu0
      %v7525 = vadd.f32 %v7491, %v7524
      %v7526 = vpop.f32.mrf.mxu0
      %v7527 = vadd.f32 %v7491, %v7526
      %7528 = vmatmul.bf16.gmra.mxu0 %v7505
      %v7529 = vpop.f32.mrf.mxu0
      %v7530 = vadd.f32 %v7491, %v7529
      %v7531 = vpop.f32.mrf.mxu0
      %v7532 = vadd.f32 %v7491, %v7531
      %7533 = vmatmul.bf16.gmra.mxu0 %v7508
      %v7534 = vpop.f32.mrf.mxu0
      %v7535 = vadd.f32 %v7491, %v7534
      %v7536 = vpop.f32.mrf.mxu0
      %v7537 = vadd.f32 %v7491, %v7536
      %7538 = vdwg.mxu0
      %v7539 = vmul.f32 %v2636, %v7392
      %v7540 = vmul.f32 %v2637, %v7393
      %v7541 = vmul.f32 %v2638, %v7394
      %v7542 = vmul.f32 %v2639, %v7395
      %v7543 = vmul.f32 %v2640, %v7396
      %v7544 = vmul.f32 %v2641, %v7397
      %v7545 = vmul.f32 %v2642, %v7398
      %v7546 = vmul.f32 %v2643, %v7399
      %v7547 = vsel %vm2683, %v7539, 0.0
      %7548 = vadd.xlane.f32.xlu0 %v7547
      %v7549 = vpop.xlane.xlu0 %7548
      %v7550 = vsel %vm2683, %v7540, 0.0
      %7551 = vadd.xlane.f32.xlu0 %v7550
      %v7552 = vpop.xlane.xlu0 %7551
      %v7553 = vsel %vm2683, %v7541, 0.0
      %7554 = vadd.xlane.f32.xlu0 %v7553
      %v7555 = vpop.xlane.xlu0 %7554
      %v7556 = vsel %vm2683, %v7542, 0.0
      %7557 = vadd.xlane.f32.xlu0 %v7556
      %v7558 = vpop.xlane.xlu0 %7557
      %v7559 = vsel %vm2683, %v7543, 0.0
      %7560 = vadd.xlane.f32.xlu0 %v7559
      %v7561 = vpop.xlane.xlu0 %7560
      %v7562 = vsel %vm2683, %v7544, 0.0
      %7563 = vadd.xlane.f32.xlu0 %v7562
      %v7564 = vpop.xlane.xlu0 %7563
      %v7565 = vsel %vm2683, %v7545, 0.0
      %7566 = vadd.xlane.f32.xlu0 %v7565
      %v7567 = vpop.xlane.xlu0 %7566
      %v7568 = vsel %vm2683, %v7546, 0.0
      %7569 = vadd.xlane.f32.xlu0 %v7568
      %v7570 = vpop.xlane.xlu0 %7569
      %v7571 = vmul.f32 %v2636, %v2636
      %v7572 = vmul.f32 %v2637, %v2637
      %v7573 = vmul.f32 %v2638, %v2638
      %v7574 = vmul.f32 %v2639, %v2639
      %v7575 = vmul.f32 %v2640, %v2640
      %v7576 = vmul.f32 %v2641, %v2641
      %v7577 = vmul.f32 %v2642, %v2642
      %v7578 = vmul.f32 %v2643, %v2643
      %v7579 = vsel %vm2683, %v7571, 0.0
      %7580 = vadd.xlane.f32.xlu0 %v7579
      %v7581 = vpop.xlane.xlu0 %7580
      %v7582 = vsel %vm2683, %v7572, 0.0
      %7583 = vadd.xlane.f32.xlu0 %v7582
      %v7584 = vpop.xlane.xlu0 %7583
      %v7585 = vsel %vm2683, %v7573, 0.0
      %7586 = vadd.xlane.f32.xlu0 %v7585
      %v7587 = vpop.xlane.xlu0 %7586
      %v7588 = vsel %vm2683, %v7574, 0.0
      %7589 = vadd.xlane.f32.xlu0 %v7588
      %v7590 = vpop.xlane.xlu0 %7589
      %v7591 = vsel %vm2683, %v7575, 0.0
      %7592 = vadd.xlane.f32.xlu0 %v7591
      %v7593 = vpop.xlane.xlu0 %7592
      %v7594 = vsel %vm2683, %v7576, 0.0
      %7595 = vadd.xlane.f32.xlu0 %v7594
      %v7596 = vpop.xlane.xlu0 %7595
      %v7597 = vsel %vm2683, %v7577, 0.0
      %7598 = vadd.xlane.f32.xlu0 %v7597
      %v7599 = vpop.xlane.xlu0 %7598
      %v7600 = vsel %vm2683, %v7578, 0.0
      %7601 = vadd.xlane.f32.xlu0 %v7600
      %v7602 = vpop.xlane.xlu0 %7601
      %v7603 = vmul.f32 %v7392, %v7392
      %v7604 = vmul.f32 %v7393, %v7393
      %v7605 = vmul.f32 %v7394, %v7394
      %v7606 = vmul.f32 %v7395, %v7395
      %v7607 = vmul.f32 %v7396, %v7396
      %v7608 = vmul.f32 %v7397, %v7397
      %v7609 = vmul.f32 %v7398, %v7398
      %v7610 = vmul.f32 %v7399, %v7399
      %v7611 = vsel %vm2683, %v7603, 0.0
      %7612 = vadd.xlane.f32.xlu0 %v7611
      %v7613 = vpop.xlane.xlu0 %7612
      %v7614 = vsel %vm2683, %v7604, 0.0
      %7615 = vadd.xlane.f32.xlu0 %v7614
      %v7616 = vpop.xlane.xlu0 %7615
      %v7617 = vsel %vm2683, %v7605, 0.0
      %7618 = vadd.xlane.f32.xlu0 %v7617
      %v7619 = vpop.xlane.xlu0 %7618
      %v7620 = vsel %vm2683, %v7606, 0.0
      %7621 = vadd.xlane.f32.xlu0 %v7620
      %v7622 = vpop.xlane.xlu0 %7621
      %v7623 = vsel %vm2683, %v7607, 0.0
      %7624 = vadd.xlane.f32.xlu0 %v7623
      %v7625 = vpop.xlane.xlu0 %7624
      %v7626 = vsel %vm2683, %v7608, 0.0
      %7627 = vadd.xlane.f32.xlu0 %v7626
      %v7628 = vpop.xlane.xlu0 %7627
      %v7629 = vsel %vm2683, %v7609, 0.0
      %7630 = vadd.xlane.f32.xlu0 %v7629
      %v7631 = vpop.xlane.xlu0 %7630
      %v7632 = vsel %vm2683, %v7610, 0.0
      %7633 = vadd.xlane.f32.xlu0 %v7632
      %v7634 = vpop.xlane.xlu0 %7633
      %v7635 = vadd.f32 %v7581, 1e-08
      %v7636 = vadd.f32 %v7584, 1e-08
      %v7637 = vadd.f32 %v7587, 1e-08
      %v7638 = vadd.f32 %v7590, 1e-08
      %v7639 = vadd.f32 %v7593, 1e-08
      %v7640 = vadd.f32 %v7596, 1e-08
      %v7641 = vadd.f32 %v7599, 1e-08
      %v7642 = vadd.f32 %v7602, 1e-08
      %v7643 = vrsqrt.pop %v7635
      %v7644 = vmul.f32 %v7643, %v7635
      %v7645 = vmul.f32 %v7644, %v7643
      %v7646 = vmul.f32 0.5, %v7645
      %v7647 = vsub.f32 1.5, %v7646
      %v7648 = vmul.f32 %v7643, %v7647
      %vm7649 = vweird.f32 %v7635
      %vm7650 = vweird.f32 %v7643
      %vm7651 = vmor %vm7649, %vm7650
      %v7652 = vsel %vm7651, %v7643, %v7648
      %v7653 = vrsqrt.pop %v7636
      %v7654 = vmul.f32 %v7653, %v7636
      %v7655 = vmul.f32 %v7654, %v7653
      %v7656 = vmul.f32 0.5, %v7655
      %v7657 = vsub.f32 1.5, %v7656
      %v7658 = vmul.f32 %v7653, %v7657
      %vm7659 = vweird.f32 %v7636
      %vm7660 = vweird.f32 %v7653
      %vm7661 = vmor %vm7659, %vm7660
      %v7662 = vsel %vm7661, %v7653, %v7658
      %v7663 = vrsqrt.pop %v7637
      %v7664 = vmul.f32 %v7663, %v7637
      %v7665 = vmul.f32 %v7664, %v7663
      %v7666 = vmul.f32 0.5, %v7665
      %v7667 = vsub.f32 1.5, %v7666
      %v7668 = vmul.f32 %v7663, %v7667
      %vm7669 = vweird.f32 %v7637
      %vm7670 = vweird.f32 %v7663
      %vm7671 = vmor %vm7669, %vm7670
      %v7672 = vsel %vm7671, %v7663, %v7668
      %v7673 = vrsqrt.pop %v7638
      %v7674 = vmul.f32 %v7673, %v7638
      %v7675 = vmul.f32 %v7674, %v7673
      %v7676 = vmul.f32 0.5, %v7675
      %v7677 = vsub.f32 1.5, %v7676
      %v7678 = vmul.f32 %v7673, %v7677
      %vm7679 = vweird.f32 %v7638
      %vm7680 = vweird.f32 %v7673
      %vm7681 = vmor %vm7679, %vm7680
      %v7682 = vsel %vm7681, %v7673, %v7678
      %v7683 = vrsqrt.pop %v7639
      %v7684 = vmul.f32 %v7683, %v7639
      %v7685 = vmul.f32 %v7684, %v7683
      %v7686 = vmul.f32 0.5, %v7685
      %v7687 = vsub.f32 1.5, %v7686
      %v7688 = vmul.f32 %v7683, %v7687
      %vm7689 = vweird.f32 %v7639
      %vm7690 = vweird.f32 %v7683
      %vm7691 = vmor %vm7689, %vm7690
      %v7692 = vsel %vm7691, %v7683, %v7688
      %v7693 = vrsqrt.pop %v7640
      %v7694 = vmul.f32 %v7693, %v7640
      %v7695 = vmul.f32 %v7694, %v7693
      %v7696 = vmul.f32 0.5, %v7695
      %v7697 = vsub.f32 1.5, %v7696
      %v7698 = vmul.f32 %v7693, %v7697
      %vm7699 = vweird.f32 %v7640
      %vm7700 = vweird.f32 %v7693
      %vm7701 = vmor %vm7699, %vm7700
      %v7702 = vsel %vm7701, %v7693, %v7698
      %v7703 = vrsqrt.pop %v7641
      %v7704 = vmul.f32 %v7703, %v7641
      %v7705 = vmul.f32 %v7704, %v7703
      %v7706 = vmul.f32 0.5, %v7705
      %v7707 = vsub.f32 1.5, %v7706
      %v7708 = vmul.f32 %v7703, %v7707
      %vm7709 = vweird.f32 %v7641
      %vm7710 = vweird.f32 %v7703
      %vm7711 = vmor %vm7709, %vm7710
      %v7712 = vsel %vm7711, %v7703, %v7708
      %v7713 = vrsqrt.pop %v7642
      %v7714 = vmul.f32 %v7713, %v7642
      %v7715 = vmul.f32 %v7714, %v7713
      %v7716 = vmul.f32 0.5, %v7715
      %v7717 = vsub.f32 1.5, %v7716
      %v7718 = vmul.f32 %v7713, %v7717
      %vm7719 = vweird.f32 %v7642
      %vm7720 = vweird.f32 %v7713
      %vm7721 = vmor %vm7719, %vm7720
      %v7722 = vsel %vm7721, %v7713, %v7718
      %v7723 = vadd.f32 %v7613, 1e-08
      %v7724 = vadd.f32 %v7616, 1e-08
      %v7725 = vadd.f32 %v7619, 1e-08
      %v7726 = vadd.f32 %v7622, 1e-08
      %v7727 = vadd.f32 %v7625, 1e-08
      %v7728 = vadd.f32 %v7628, 1e-08
      %v7729 = vadd.f32 %v7631, 1e-08
      %v7730 = vadd.f32 %v7634, 1e-08
      %v7731 = vrsqrt.pop %v7723
      %v7732 = vmul.f32 %v7731, %v7723
      %v7733 = vmul.f32 %v7732, %v7731
      %v7734 = vmul.f32 0.5, %v7733
      %v7735 = vsub.f32 1.5, %v7734
      %v7736 = vmul.f32 %v7731, %v7735
      %vm7737 = vweird.f32 %v7723
      %vm7738 = vweird.f32 %v7731
      %vm7739 = vmor %vm7737, %vm7738
      %v7740 = vsel %vm7739, %v7731, %v7736
      %v7741 = vrsqrt.pop %v7724
      %v7742 = vmul.f32 %v7741, %v7724
      %v7743 = vmul.f32 %v7742, %v7741
      %v7744 = vmul.f32 0.5, %v7743
      %v7745 = vsub.f32 1.5, %v7744
      %v7746 = vmul.f32 %v7741, %v7745
      %vm7747 = vweird.f32 %v7724
      %vm7748 = vweird.f32 %v7741
      %vm7749 = vmor %vm7747, %vm7748
      %v7750 = vsel %vm7749, %v7741, %v7746
      %v7751 = vrsqrt.pop %v7725
      %v7752 = vmul.f32 %v7751, %v7725
      %v7753 = vmul.f32 %v7752, %v7751
      %v7754 = vmul.f32 0.5, %v7753
      %v7755 = vsub.f32 1.5, %v7754
      %v7756 = vmul.f32 %v7751, %v7755
      %vm7757 = vweird.f32 %v7725
      %vm7758 = vweird.f32 %v7751
      %vm7759 = vmor %vm7757, %vm7758
      %v7760 = vsel %vm7759, %v7751, %v7756
      %v7761 = vrsqrt.pop %v7726
      %v7762 = vmul.f32 %v7761, %v7726
      %v7763 = vmul.f32 %v7762, %v7761
      %v7764 = vmul.f32 0.5, %v7763
      %v7765 = vsub.f32 1.5, %v7764
      %v7766 = vmul.f32 %v7761, %v7765
      %vm7767 = vweird.f32 %v7726
      %vm7768 = vweird.f32 %v7761
      %vm7769 = vmor %vm7767, %vm7768
      %v7770 = vsel %vm7769, %v7761, %v7766
      %v7771 = vrsqrt.pop %v7727
      %v7772 = vmul.f32 %v7771, %v7727
      %v7773 = vmul.f32 %v7772, %v7771
      %v7774 = vmul.f32 0.5, %v7773
      %v7775 = vsub.f32 1.5, %v7774
      %v7776 = vmul.f32 %v7771, %v7775
      %vm7777 = vweird.f32 %v7727
      %vm7778 = vweird.f32 %v7771
      %vm7779 = vmor %vm7777, %vm7778
      %v7780 = vsel %vm7779, %v7771, %v7776
      %v7781 = vrsqrt.pop %v7728
      %v7782 = vmul.f32 %v7781, %v7728
      %v7783 = vmul.f32 %v7782, %v7781
      %v7784 = vmul.f32 0.5, %v7783
      %v7785 = vsub.f32 1.5, %v7784
      %v7786 = vmul.f32 %v7781, %v7785
      %vm7787 = vweird.f32 %v7728
      %vm7788 = vweird.f32 %v7781
      %vm7789 = vmor %vm7787, %vm7788
      %v7790 = vsel %vm7789, %v7781, %v7786
      %v7791 = vrsqrt.pop %v7729
      %v7792 = vmul.f32 %v7791, %v7729
      %v7793 = vmul.f32 %v7792, %v7791
      %v7794 = vmul.f32 0.5, %v7793
      %v7795 = vsub.f32 1.5, %v7794
      %v7796 = vmul.f32 %v7791, %v7795
      %vm7797 = vweird.f32 %v7729
      %vm7798 = vweird.f32 %v7791
      %vm7799 = vmor %vm7797, %vm7798
      %v7800 = vsel %vm7799, %v7791, %v7796
      %v7801 = vrsqrt.pop %v7730
      %v7802 = vmul.f32 %v7801, %v7730
      %v7803 = vmul.f32 %v7802, %v7801
      %v7804 = vmul.f32 0.5, %v7803
      %v7805 = vsub.f32 1.5, %v7804
      %v7806 = vmul.f32 %v7801, %v7805
      %vm7807 = vweird.f32 %v7730
      %vm7808 = vweird.f32 %v7801
      %vm7809 = vmor %vm7807, %vm7808
      %v7810 = vsel %vm7809, %v7801, %v7806
      %v7811 = vmul.f32 %v7652, %v7740
      %v7812 = vmul.f32 %v7662, %v7750
      %v7813 = vmul.f32 %v7672, %v7760
      %v7814 = vmul.f32 %v7682, %v7770
      %v7815 = vmul.f32 %v7692, %v7780
      %v7816 = vmul.f32 %v7702, %v7790
      %v7817 = vmul.f32 %v7712, %v7800
      %v7818 = vmul.f32 %v7722, %v7810
      %v7819 = vmul.f32 %v7549, %v7811
      %v7820 = vmul.f32 %v7552, %v7812
      %v7821 = vmul.f32 %v7555, %v7813
      %v7822 = vmul.f32 %v7558, %v7814
      %v7823 = vmul.f32 %v7561, %v7815
      %v7824 = vmul.f32 %v7564, %v7816
      %v7825 = vmul.f32 %v7567, %v7817
      %v7826 = vmul.f32 %v7570, %v7818
      %v7827 = vsub.f32 1.0, %v7819
      %v7828 = vsub.f32 1.0, %v7820
      %v7829 = vsub.f32 1.0, %v7821
      %v7830 = vsub.f32 1.0, %v7822
      %v7831 = vsub.f32 1.0, %v7823
      %v7832 = vsub.f32 1.0, %v7824
      %v7833 = vsub.f32 1.0, %v7825
      %v7834 = vsub.f32 1.0, %v7826
      %v7835 = vmul.f32 %v2636, %v7520
      %v7836 = vmul.f32 %v2637, %v7522
      %v7837 = vmul.f32 %v2638, %v7525
      %v7838 = vmul.f32 %v2639, %v7527
      %v7839 = vmul.f32 %v2640, %v7530
      %v7840 = vmul.f32 %v2641, %v7532
      %v7841 = vmul.f32 %v2642, %v7535
      %v7842 = vmul.f32 %v2643, %v7537
      %v7843 = vsel %vm2683, %v7835, 0.0
      %7844 = vadd.xlane.f32.xlu0 %v7843
      %v7845 = vpop.xlane.xlu0 %7844
      %v7846 = vsel %vm2683, %v7836, 0.0
      %7847 = vadd.xlane.f32.xlu0 %v7846
      %v7848 = vpop.xlane.xlu0 %7847
      %v7849 = vsel %vm2683, %v7837, 0.0
      %7850 = vadd.xlane.f32.xlu0 %v7849
      %v7851 = vpop.xlane.xlu0 %7850
      %v7852 = vsel %vm2683, %v7838, 0.0
      %7853 = vadd.xlane.f32.xlu0 %v7852
      %v7854 = vpop.xlane.xlu0 %7853
      %v7855 = vsel %vm2683, %v7839, 0.0
      %7856 = vadd.xlane.f32.xlu0 %v7855
      %v7857 = vpop.xlane.xlu0 %7856
      %v7858 = vsel %vm2683, %v7840, 0.0
      %7859 = vadd.xlane.f32.xlu0 %v7858
      %v7860 = vpop.xlane.xlu0 %7859
      %v7861 = vsel %vm2683, %v7841, 0.0
      %7862 = vadd.xlane.f32.xlu0 %v7861
      %v7863 = vpop.xlane.xlu0 %7862
      %v7864 = vsel %vm2683, %v7842, 0.0
      %7865 = vadd.xlane.f32.xlu0 %v7864
      %v7866 = vpop.xlane.xlu0 %7865
      %v7867 = vmul.f32 %v7520, %v7520
      %v7868 = vmul.f32 %v7522, %v7522
      %v7869 = vmul.f32 %v7525, %v7525
      %v7870 = vmul.f32 %v7527, %v7527
      %v7871 = vmul.f32 %v7530, %v7530
      %v7872 = vmul.f32 %v7532, %v7532
      %v7873 = vmul.f32 %v7535, %v7535
      %v7874 = vmul.f32 %v7537, %v7537
      %v7875 = vsel %vm2683, %v7867, 0.0
      %7876 = vadd.xlane.f32.xlu0 %v7875
      %v7877 = vpop.xlane.xlu0 %7876
      %v7878 = vsel %vm2683, %v7868, 0.0
      %7879 = vadd.xlane.f32.xlu0 %v7878
      %v7880 = vpop.xlane.xlu0 %7879
      %v7881 = vsel %vm2683, %v7869, 0.0
      %7882 = vadd.xlane.f32.xlu0 %v7881
      %v7883 = vpop.xlane.xlu0 %7882
      %v7884 = vsel %vm2683, %v7870, 0.0
      %7885 = vadd.xlane.f32.xlu0 %v7884
      %v7886 = vpop.xlane.xlu0 %7885
      %v7887 = vsel %vm2683, %v7871, 0.0
      %7888 = vadd.xlane.f32.xlu0 %v7887
      %v7889 = vpop.xlane.xlu0 %7888
      %v7890 = vsel %vm2683, %v7872, 0.0
      %7891 = vadd.xlane.f32.xlu0 %v7890
      %v7892 = vpop.xlane.xlu0 %7891
      %v7893 = vsel %vm2683, %v7873, 0.0
      %7894 = vadd.xlane.f32.xlu0 %v7893
      %v7895 = vpop.xlane.xlu0 %7894
      %v7896 = vsel %vm2683, %v7874, 0.0
      %7897 = vadd.xlane.f32.xlu0 %v7896
      %v7898 = vpop.xlane.xlu0 %7897
      %v7899 = vadd.f32 %v7877, 1e-08
      %v7900 = vadd.f32 %v7880, 1e-08
      %v7901 = vadd.f32 %v7883, 1e-08
      %v7902 = vadd.f32 %v7886, 1e-08
      %v7903 = vadd.f32 %v7889, 1e-08
      %v7904 = vadd.f32 %v7892, 1e-08
      %v7905 = vadd.f32 %v7895, 1e-08
      %v7906 = vadd.f32 %v7898, 1e-08
      %v7907 = vrsqrt.pop %v7899
      %v7908 = vmul.f32 %v7907, %v7899
      %v7909 = vmul.f32 %v7908, %v7907
      %v7910 = vmul.f32 0.5, %v7909
      %v7911 = vsub.f32 1.5, %v7910
      %v7912 = vmul.f32 %v7907, %v7911
      %vm7913 = vweird.f32 %v7899
      %vm7914 = vweird.f32 %v7907
      %vm7915 = vmor %vm7913, %vm7914
      %v7916 = vsel %vm7915, %v7907, %v7912
      %v7917 = vrsqrt.pop %v7900
      %v7918 = vmul.f32 %v7917, %v7900
      %v7919 = vmul.f32 %v7918, %v7917
      %v7920 = vmul.f32 0.5, %v7919
      %v7921 = vsub.f32 1.5, %v7920
      %v7922 = vmul.f32 %v7917, %v7921
      %vm7923 = vweird.f32 %v7900
      %vm7924 = vweird.f32 %v7917
      %vm7925 = vmor %vm7923, %vm7924
      %v7926 = vsel %vm7925, %v7917, %v7922
      %v7927 = vrsqrt.pop %v7901
      %v7928 = vmul.f32 %v7927, %v7901
      %v7929 = vmul.f32 %v7928, %v7927
      %v7930 = vmul.f32 0.5, %v7929
      %v7931 = vsub.f32 1.5, %v7930
      %v7932 = vmul.f32 %v7927, %v7931
      %vm7933 = vweird.f32 %v7901
      %vm7934 = vweird.f32 %v7927
      %vm7935 = vmor %vm7933, %vm7934
      %v7936 = vsel %vm7935, %v7927, %v7932
      %v7937 = vrsqrt.pop %v7902
      %v7938 = vmul.f32 %v7937, %v7902
      %v7939 = vmul.f32 %v7938, %v7937
      %v7940 = vmul.f32 0.5, %v7939
      %v7941 = vsub.f32 1.5, %v7940
      %v7942 = vmul.f32 %v7937, %v7941
      %vm7943 = vweird.f32 %v7902
      %vm7944 = vweird.f32 %v7937
      %vm7945 = vmor %vm7943, %vm7944
      %v7946 = vsel %vm7945, %v7937, %v7942
      %v7947 = vrsqrt.pop %v7903
      %v7948 = vmul.f32 %v7947, %v7903
      %v7949 = vmul.f32 %v7948, %v7947
      %v7950 = vmul.f32 0.5, %v7949
      %v7951 = vsub.f32 1.5, %v7950
      %v7952 = vmul.f32 %v7947, %v7951
      %vm7953 = vweird.f32 %v7903
      %vm7954 = vweird.f32 %v7947
      %vm7955 = vmor %vm7953, %vm7954
      %v7956 = vsel %vm7955, %v7947, %v7952
      %v7957 = vrsqrt.pop %v7904
      %v7958 = vmul.f32 %v7957, %v7904
      %v7959 = vmul.f32 %v7958, %v7957
      %v7960 = vmul.f32 0.5, %v7959
      %v7961 = vsub.f32 1.5, %v7960
      %v7962 = vmul.f32 %v7957, %v7961
      %vm7963 = vweird.f32 %v7904
      %vm7964 = vweird.f32 %v7957
      %vm7965 = vmor %vm7963, %vm7964
      %v7966 = vsel %vm7965, %v7957, %v7962
      %v7967 = vrsqrt.pop %v7905
      %v7968 = vmul.f32 %v7967, %v7905
      %v7969 = vmul.f32 %v7968, %v7967
      %v7970 = vmul.f32 0.5, %v7969
      %v7971 = vsub.f32 1.5, %v7970
      %v7972 = vmul.f32 %v7967, %v7971
      %vm7973 = vweird.f32 %v7905
      %vm7974 = vweird.f32 %v7967
      %vm7975 = vmor %vm7973, %vm7974
      %v7976 = vsel %vm7975, %v7967, %v7972
      %v7977 = vrsqrt.pop %v7906
      %v7978 = vmul.f32 %v7977, %v7906
      %v7979 = vmul.f32 %v7978, %v7977
      %v7980 = vmul.f32 0.5, %v7979
      %v7981 = vsub.f32 1.5, %v7980
      %v7982 = vmul.f32 %v7977, %v7981
      %vm7983 = vweird.f32 %v7906
      %vm7984 = vweird.f32 %v7977
      %vm7985 = vmor %vm7983, %vm7984
      %v7986 = vsel %vm7985, %v7977, %v7982
      %v7987 = vmul.f32 %v7652, %v7916
      %v7988 = vmul.f32 %v7662, %v7926
      %v7989 = vmul.f32 %v7672, %v7936
      %v7990 = vmul.f32 %v7682, %v7946
      %v7991 = vmul.f32 %v7692, %v7956
      %v7992 = vmul.f32 %v7702, %v7966
      %v7993 = vmul.f32 %v7712, %v7976
      %v7994 = vmul.f32 %v7722, %v7986
      %v7995 = vmul.f32 %v7845, %v7987
      %v7996 = vmul.f32 %v7848, %v7988
      %v7997 = vmul.f32 %v7851, %v7989
      %v7998 = vmul.f32 %v7854, %v7990
      %v7999 = vmul.f32 %v7857, %v7991
      %v8000 = vmul.f32 %v7860, %v7992
      %v8001 = vmul.f32 %v7863, %v7993
      %v8002 = vmul.f32 %v7866, %v7994
      %v8003 = vsub.f32 1.0, %v7995
      %v8004 = vsub.f32 1.0, %v7996
      %v8005 = vsub.f32 1.0, %v7997
      %v8006 = vsub.f32 1.0, %v7998
      %v8007 = vsub.f32 1.0, %v7999
      %v8008 = vsub.f32 1.0, %v8000
      %v8009 = vsub.f32 1.0, %v8001
      %v8010 = vsub.f32 1.0, %v8002
      %v8011 = vadd.f32 %v7827, %v8003
      %v8012 = vadd.f32 %v7828, %v8004
      %v8013 = vadd.f32 %v7829, %v8005
      %v8014 = vadd.f32 %v7830, %v8006
      %v8015 = vadd.f32 %v7831, %v8007
      %v8016 = vadd.f32 %v7832, %v8008
      %v8017 = vadd.f32 %v7833, %v8009
      %v8018 = vadd.f32 %v7834, %v8010
      %v8019 = vmul.f32 %v3136, %v6056
      %v8020 = vmul.f32 %v3137, %v6057
      %v8021 = vsel %vm3174, %v8019, 0.0
      %8022 = vadd.xlane.f32.xlu0 %v8021
      %v8023 = vpop.xlane.xlu0 %8022
      %v8024 = vsel %vm3174, %v8020, 0.0
      %8025 = vadd.xlane.f32.xlu0 %v8024
      %v8026 = vpop.xlane.xlu0 %8025
      %v8027 = vmul.f32 %v3136, %v3136
      %v8028 = vmul.f32 %v3137, %v3137
      %v8029 = vsel %vm3174, %v8027, 0.0
      %8030 = vadd.xlane.f32.xlu0 %v8029
      %v8031 = vpop.xlane.xlu0 %8030
      %v8032 = vsel %vm3174, %v8028, 0.0
      %8033 = vadd.xlane.f32.xlu0 %v8032
      %v8034 = vpop.xlane.xlu0 %8033
      %v8035 = vmul.f32 %v6056, %v6056
      %v8036 = vmul.f32 %v6057, %v6057
      %v8037 = vsel %vm3174, %v8035, 0.0
      %8038 = vadd.xlane.f32.xlu0 %v8037
      %v8039 = vpop.xlane.xlu0 %8038
      %v8040 = vsel %vm3174, %v8036, 0.0
      %8041 = vadd.xlane.f32.xlu0 %v8040
      %v8042 = vpop.xlane.xlu0 %8041
      %v8043 = vadd.f32 %v8031, 1e-08
      %v8044 = vadd.f32 %v8034, 1e-08
      %v8045 = vrsqrt.pop %v8043
      %v8046 = vmul.f32 %v8045, %v8043
      %v8047 = vmul.f32 %v8046, %v8045
      %v8048 = vmul.f32 0.5, %v8047
      %v8049 = vsub.f32 1.5, %v8048
      %v8050 = vmul.f32 %v8045, %v8049
      %vm8051 = vweird.f32 %v8043
      %vm8052 = vweird.f32 %v8045
      %vm8053 = vmor %vm8051, %vm8052
      %v8054 = vsel %vm8053, %v8045, %v8050
      %v8055 = vrsqrt.pop %v8044
      %v8056 = vmul.f32 %v8055, %v8044
      %v8057 = vmul.f32 %v8056, %v8055
      %v8058 = vmul.f32 0.5, %v8057
      %v8059 = vsub.f32 1.5, %v8058
      %v8060 = vmul.f32 %v8055, %v8059
      %vm8061 = vweird.f32 %v8044
      %vm8062 = vweird.f32 %v8055
      %vm8063 = vmor %vm8061, %vm8062
      %v8064 = vsel %vm8063, %v8055, %v8060
      %v8065 = vadd.f32 %v8039, 1e-08
      %v8066 = vadd.f32 %v8042, 1e-08
      %v8067 = vrsqrt.pop %v8065
      %v8068 = vmul.f32 %v8067, %v8065
      %v8069 = vmul.f32 %v8068, %v8067
      %v8070 = vmul.f32 0.5, %v8069
      %v8071 = vsub.f32 1.5, %v8070
      %v8072 = vmul.f32 %v8067, %v8071
      %vm8073 = vweird.f32 %v8065
      %vm8074 = vweird.f32 %v8067
      %vm8075 = vmor %vm8073, %vm8074
      %v8076 = vsel %vm8075, %v8067, %v8072
      %v8077 = vrsqrt.pop %v8066
      %v8078 = vmul.f32 %v8077, %v8066
      %v8079 = vmul.f32 %v8078, %v8077
      %v8080 = vmul.f32 0.5, %v8079
      %v8081 = vsub.f32 1.5, %v8080
      %v8082 = vmul.f32 %v8077, %v8081
      %vm8083 = vweird.f32 %v8066
      %vm8084 = vweird.f32 %v8077
      %vm8085 = vmor %vm8083, %vm8084
      %v8086 = vsel %vm8085, %v8077, %v8082
      %v8087 = vmul.f32 %v8054, %v8076
      %v8088 = vmul.f32 %v8064, %v8086
      %v8089 = vmul.f32 %v8023, %v8087
      %v8090 = vmul.f32 %v8026, %v8088
      %v8091 = vsub.f32 1.0, %v8089
      %v8092 = vsub.f32 1.0, %v8090
      %v8093 = vmul.f32 %v3136, %v7480
      %v8094 = vmul.f32 %v3137, %v7482
      %v8095 = vsel %vm3174, %v8093, 0.0
      %8096 = vadd.xlane.f32.xlu0 %v8095
      %v8097 = vpop.xlane.xlu0 %8096
      %v8098 = vsel %vm3174, %v8094, 0.0
      %8099 = vadd.xlane.f32.xlu0 %v8098
      %v8100 = vpop.xlane.xlu0 %8099
      %v8101 = vmul.f32 %v7480, %v7480
      %v8102 = vmul.f32 %v7482, %v7482
      %v8103 = vsel %vm3174, %v8101, 0.0
      %8104 = vadd.xlane.f32.xlu0 %v8103
      %v8105 = vpop.xlane.xlu0 %8104
      %v8106 = vsel %vm3174, %v8102, 0.0
      %8107 = vadd.xlane.f32.xlu0 %v8106
      %v8108 = vpop.xlane.xlu0 %8107
      %v8109 = vadd.f32 %v8105, 1e-08
      %v8110 = vadd.f32 %v8108, 1e-08
      %v8111 = vrsqrt.pop %v8109
      %v8112 = vmul.f32 %v8111, %v8109
      %v8113 = vmul.f32 %v8112, %v8111
      %v8114 = vmul.f32 0.5, %v8113
      %v8115 = vsub.f32 1.5, %v8114
      %v8116 = vmul.f32 %v8111, %v8115
      %vm8117 = vweird.f32 %v8109
      %vm8118 = vweird.f32 %v8111
      %vm8119 = vmor %vm8117, %vm8118
      %v8120 = vsel %vm8119, %v8111, %v8116
      %v8121 = vrsqrt.pop %v8110
      %v8122 = vmul.f32 %v8121, %v8110
      %v8123 = vmul.f32 %v8122, %v8121
      %v8124 = vmul.f32 0.5, %v8123
      %v8125 = vsub.f32 1.5, %v8124
      %v8126 = vmul.f32 %v8121, %v8125
      %vm8127 = vweird.f32 %v8110
      %vm8128 = vweird.f32 %v8121
      %vm8129 = vmor %vm8127, %vm8128
      %v8130 = vsel %vm8129, %v8121, %v8126
      %v8131 = vmul.f32 %v8054, %v8120
      %v8132 = vmul.f32 %v8064, %v8130
      %v8133 = vmul.f32 %v8097, %v8131
      %v8134 = vmul.f32 %v8100, %v8132
      %v8135 = vsub.f32 1.0, %v8133
      %v8136 = vsub.f32 1.0, %v8134
      %v8137 = vadd.f32 %v8091, %v8135
      %v8138 = vadd.f32 %v8092, %v8136
      %v8139 = vmul.f32 %v3617, %v5324
      %vm8140 = vcmask 519168
      %v8141 = vsel %vm8140, %v8139, 0.0
      %8142 = vadd.xlane.f32.xlu0 %v8141
      %v8143 = vpop.xlane.xlu0 %8142
      %v8144 = vmul.f32 %v3617, %v3617
      %v8145 = vsel %vm8140, %v8144, 0.0
      %8146 = vadd.xlane.f32.xlu0 %v8145
      %v8147 = vpop.xlane.xlu0 %8146
      %v8148 = vmul.f32 %v5324, %v5324
      %v8149 = vsel %vm8140, %v8148, 0.0
      %8150 = vadd.xlane.f32.xlu0 %v8149
      %v8151 = vpop.xlane.xlu0 %8150
      %v8152 = vadd.f32 %v8147, 1e-08
      %v8153 = vrsqrt.pop %v8152
      %v8154 = vmul.f32 %v8153, %v8152
      %v8155 = vmul.f32 %v8154, %v8153
      %v8156 = vmul.f32 0.5, %v8155
      %v8157 = vsub.f32 1.5, %v8156
      %v8158 = vmul.f32 %v8153, %v8157
      %vm8159 = vweird.f32 %v8152
      %vm8160 = vweird.f32 %v8153
      %vm8161 = vmor %vm8159, %vm8160
      %v8162 = vsel %vm8161, %v8153, %v8158
      %v8163 = vadd.f32 %v8151, 1e-08
      %v8164 = vrsqrt.pop %v8163
      %v8165 = vmul.f32 %v8164, %v8163
      %v8166 = vmul.f32 %v8165, %v8164
      %v8167 = vmul.f32 0.5, %v8166
      %v8168 = vsub.f32 1.5, %v8167
      %v8169 = vmul.f32 %v8164, %v8168
      %vm8170 = vweird.f32 %v8163
      %vm8171 = vweird.f32 %v8164
      %vm8172 = vmor %vm8170, %vm8171
      %v8173 = vsel %vm8172, %v8164, %v8169
      %v8174 = vmul.f32 %v8162, %v8173
      %v8175 = vmul.f32 %v8143, %v8174
      %v8176 = vsub.f32 1.0, %v8175
      %v8177 = vmul.f32 %v3617, %v7446
      %v8178 = vsel %vm8140, %v8177, 0.0
      %8179 = vadd.xlane.f32.xlu0 %v8178
      %v8180 = vpop.xlane.xlu0 %8179
      %v8181 = vmul.f32 %v7446, %v7446
      %v8182 = vsel %vm8140, %v8181, 0.0
      %8183 = vadd.xlane.f32.xlu0 %v8182
      %v8184 = vpop.xlane.xlu0 %8183
      %v8185 = vadd.f32 %v8184, 1e-08
      %v8186 = vrsqrt.pop %v8185
      %v8187 = vmul.f32 %v8186, %v8185
      %v8188 = vmul.f32 %v8187, %v8186
      %v8189 = vmul.f32 0.5, %v8188
      %v8190 = vsub.f32 1.5, %v8189
      %v8191 = vmul.f32 %v8186, %v8190
      %vm8192 = vweird.f32 %v8185
      %vm8193 = vweird.f32 %v8186
      %vm8194 = vmor %vm8192, %vm8193
      %v8195 = vsel %vm8194, %v8186, %v8191
      %v8196 = vmul.f32 %v8162, %v8195
      %v8197 = vmul.f32 %v8180, %v8196
      %v8198 = vsub.f32 1.0, %v8197
      %v8199 = vadd.f32 %v8176, %v8198
      %v8200 = vld [vmem:[%s24] sm:$0xff]
      %v8201 = vld [vmem:[%s24 + $0x20] sm:$0xff]
      %v8202 = vld [vmem:[%s24 + $0x40] sm:$0xff]
      %v8203 = vld [vmem:[%s24 + $0x60] sm:$0xff]
      %v8204 = vld [vmem:[%s24 + $0x80] sm:$0xff]
      %v8205 = vld [vmem:[%s24 + $0xa0] sm:$0xff]
      %v8206 = vld [vmem:[%s24 + $0xc0] sm:$0xff]
      %v8207 = vld [vmem:[%s24 + $0xe0] sm:$0xff]
      %v8208 = vunpack.c.l.bf16 %v8200
      %v8209 = vunpack.c.h.bf16 %v8200
      %v8210 = vunpack.c.l.bf16 %v8201
      %v8211 = vunpack.c.h.bf16 %v8201
      %v8212 = vunpack.c.l.bf16 %v8202
      %v8213 = vunpack.c.h.bf16 %v8202
      %v8214 = vunpack.c.l.bf16 %v8203
      %v8215 = vunpack.c.h.bf16 %v8203
      %v8216 = vunpack.c.l.bf16 %v8204
      %v8217 = vunpack.c.h.bf16 %v8204
      %v8218 = vunpack.c.l.bf16 %v8205
      %v8219 = vunpack.c.h.bf16 %v8205
      %v8220 = vunpack.c.l.bf16 %v8206
      %v8221 = vunpack.c.h.bf16 %v8206
      %v8222 = vunpack.c.l.bf16 %v8207
      %v8223 = vunpack.c.h.bf16 %v8207
      %v8224 = vmul.f32 %v8011, %v8208
      %v8225 = vmul.f32 %v8011, %v8209
      %v8226 = vmul.f32 %v8012, %v8210
      %v8227 = vmul.f32 %v8012, %v8211
      %v8228 = vmul.f32 %v8013, %v8212
      %v8229 = vmul.f32 %v8013, %v8213
      %v8230 = vmul.f32 %v8014, %v8214
      %v8231 = vmul.f32 %v8014, %v8215
      %v8232 = vmul.f32 %v8015, %v8216
      %v8233 = vmul.f32 %v8015, %v8217
      %v8234 = vmul.f32 %v8016, %v8218
      %v8235 = vmul.f32 %v8016, %v8219
      %v8236 = vmul.f32 %v8017, %v8220
      %v8237 = vmul.f32 %v8017, %v8221
      %v8238 = vmul.f32 %v8018, %v8222
      %v8239 = vmul.f32 %v8018, %v8223
      %v8240 = vadd.f32 %v8224, %v8226
      %v8241 = vadd.f32 %v8240, %v8228
      %v8242 = vadd.f32 %v8241, %v8230
      %v8243 = vadd.f32 %v8242, %v8232
      %v8244 = vadd.f32 %v8243, %v8234
      %v8245 = vadd.f32 %v8244, %v8236
      %v8246 = vadd.f32 %v8245, %v8238
      %v8247 = vrot.slane %v8246, 4
      %v8248 = vadd.f32 %v8246, %v8247
      %v8249 = vrot.slane %v8248, 2
      %v8250 = vadd.f32 %v8248, %v8249
      %v8251 = vrot.slane %v8250, 1
      %v8252 = vadd.f32 %v8250, %v8251
      %v8253 = vadd.f32 %v8225, %v8227
      %v8254 = vadd.f32 %v8253, %v8229
      %v8255 = vadd.f32 %v8254, %v8231
      %v8256 = vadd.f32 %v8255, %v8233
      %v8257 = vadd.f32 %v8256, %v8235
      %v8258 = vadd.f32 %v8257, %v8237
      %v8259 = vadd.f32 %v8258, %v8239
      %v8260 = vrot.slane %v8259, 4
      %v8261 = vadd.f32 %v8259, %v8260
      %v8262 = vrot.slane %v8261, 2
      %v8263 = vadd.f32 %v8261, %v8262
      %v8264 = vrot.slane %v8263, 1
      %v8265 = vadd.f32 %v8263, %v8264
      %v8266 = vadd.f32 %v8252, 0.0
      %v8267 = vadd.f32 %v8265, 0.0
      %v8268 = vld [vmem:[%s25] sm:$0xff]
      %v8269 = vld [vmem:[%s25 + $0x20] sm:$0xff]
      %v8270 = vunpack.c.l.bf16 %v8268
      %v8271 = vunpack.c.h.bf16 %v8268
      %v8272 = vunpack.c.l.bf16 %v8269
      %v8273 = vunpack.c.h.bf16 %v8269
      %v8274 = vmul.f32 %v8137, %v8270
      %v8275 = vmul.f32 %v8137, %v8271
      %v8276 = vmul.f32 %v8138, %v8272
      %v8277 = vmul.f32 %v8138, %v8273
      %v8278 = vadd.f32 %v8274, %v8276
      %v8279 = vrot.slane %v8278, 4
      %v8280 = vadd.f32 %v8278, %v8279
      %v8281 = vrot.slane %v8280, 2
      %v8282 = vadd.f32 %v8280, %v8281
      %v8283 = vrot.slane %v8282, 1
      %v8284 = vadd.f32 %v8282, %v8283
      %v8285 = vadd.f32 %v8275, %v8277
      %v8286 = vrot.slane %v8285, 4
      %v8287 = vadd.f32 %v8285, %v8286
      %v8288 = vrot.slane %v8287, 2
      %v8289 = vadd.f32 %v8287, %v8288
      %v8290 = vrot.slane %v8289, 1
      %v8291 = vadd.f32 %v8289, %v8290
      %v8292 = vadd.f32 %v8266, %v8284
      %v8293 = vadd.f32 %v8267, %v8291
      %v8294 = vld [vmem:[%s26] sm:$0xf]
      %v8295 = vunpack.c.l.bf16 %v8294
      %8297 = vst [vmem:[#allocation1] ss:$2 sm:$0xff] %v8295
      %v8298 = vld.sshfl [vmem:[#allocation1] sm:$0xff pattern:$0x75316420]
      %v8299 = vld.sshfl [vmem:[#allocation1 + $0x8] sm:$0xff pattern:$0x75316420]
      %v8302 = vmul.f32 %v8199, %v8298
      %v8303 = vmul.f32 %v8199, %v8299
      %v8304 = vsel %vm1274, %v8302, 0.0
      %v8305 = vrot.slane %v8304, 4
      %v8306 = vadd.f32 %v8304, %v8305
      %v8307 = vrot.slane %v8306, 2
      %v8308 = vadd.f32 %v8306, %v8307
      %v8309 = vrot.slane %v8308, 1
      %v8310 = vadd.f32 %v8308, %v8309
      %v8311 = vsel %vm1274, %v8303, 0.0
      %v8312 = vrot.slane %v8311, 4
      %v8313 = vadd.f32 %v8311, %v8312
      %v8314 = vrot.slane %v8313, 2
      %v8315 = vadd.f32 %v8313, %v8314
      %v8316 = vrot.slane %v8315, 1
      %v8317 = vadd.f32 %v8315, %v8316
      %v8318 = vadd.f32 %v8292, %v8310
      %v8319 = vadd.f32 %v8293, %v8317
      %v8320 = vld [vmem:[%s24 + $0x8] sm:$0xff]
      %v8321 = vld [vmem:[%s24 + $0x28] sm:$0xff]
      %v8322 = vld [vmem:[%s24 + $0x48] sm:$0xff]
      %v8323 = vld [vmem:[%s24 + $0x68] sm:$0xff]
      %v8324 = vld [vmem:[%s24 + $0x88] sm:$0xff]
      %v8325 = vld [vmem:[%s24 + $0xa8] sm:$0xff]
      %v8326 = vld [vmem:[%s24 + $0xc8] sm:$0xff]
      %v8327 = vld [vmem:[%s24 + $0xe8] sm:$0xff]
      %v8328 = vunpack.c.l.bf16 %v8320
      %v8329 = vunpack.c.h.bf16 %v8320
      %v8330 = vunpack.c.l.bf16 %v8321
      %v8331 = vunpack.c.h.bf16 %v8321
      %v8332 = vunpack.c.l.bf16 %v8322
      %v8333 = vunpack.c.h.bf16 %v8322
      %v8334 = vunpack.c.l.bf16 %v8323
      %v8335 = vunpack.c.h.bf16 %v8323
      %v8336 = vunpack.c.l.bf16 %v8324
      %v8337 = vunpack.c.h.bf16 %v8324
      %v8338 = vunpack.c.l.bf16 %v8325
      %v8339 = vunpack.c.h.bf16 %v8325
      %v8340 = vunpack.c.l.bf16 %v8326
      %v8341 = vunpack.c.h.bf16 %v8326
      %v8342 = vunpack.c.l.bf16 %v8327
      %v8343 = vunpack.c.h.bf16 %v8327
      %v8344 = vmul.f32 %v8011, %v8328
      %v8345 = vmul.f32 %v8011, %v8329
      %v8346 = vmul.f32 %v8012, %v8330
      %v8347 = vmul.f32 %v8012, %v8331
      %v8348 = vmul.f32 %v8013, %v8332
      %v8349 = vmul.f32 %v8013, %v8333
      %v8350 = vmul.f32 %v8014, %v8334
      %v8351 = vmul.f32 %v8014, %v8335
      %v8352 = vmul.f32 %v8015, %v8336
      %v8353 = vmul.f32 %v8015, %v8337
      %v8354 = vmul.f32 %v8016, %v8338
      %v8355 = vmul.f32 %v8016, %v8339
      %v8356 = vmul.f32 %v8017, %v8340
      %v8357 = vmul.f32 %v8017, %v8341
      %v8358 = vmul.f32 %v8018, %v8342
      %v8359 = vmul.f32 %v8018, %v8343
      %v8360 = vadd.f32 %v8344, %v8346
      %v8361 = vadd.f32 %v8360, %v8348
      %v8362 = vadd.f32 %v8361, %v8350
      %v8363 = vadd.f32 %v8362, %v8352
      %v8364 = vadd.f32 %v8363, %v8354
      %v8365 = vadd.f32 %v8364, %v8356
      %v8366 = vadd.f32 %v8365, %v8358
      %v8367 = vrot.slane %v8366, 4
      %v8368 = vadd.f32 %v8366, %v8367
      %v8369 = vrot.slane %v8368, 2
      %v8370 = vadd.f32 %v8368, %v8369
      %v8371 = vrot.slane %v8370, 1
      %v8372 = vadd.f32 %v8370, %v8371
      %v8373 = vadd.f32 %v8345, %v8347
      %v8374 = vadd.f32 %v8373, %v8349
      %v8375 = vadd.f32 %v8374, %v8351
      %v8376 = vadd.f32 %v8375, %v8353
      %v8377 = vadd.f32 %v8376, %v8355
      %v8378 = vadd.f32 %v8377, %v8357
      %v8379 = vadd.f32 %v8378, %v8359
      %v8380 = vrot.slane %v8379, 4
      %v8381 = vadd.f32 %v8379, %v8380
      %v8382 = vrot.slane %v8381, 2
      %v8383 = vadd.f32 %v8381, %v8382
      %v8384 = vrot.slane %v8383, 1
      %v8385 = vadd.f32 %v8383, %v8384
      %v8386 = vadd.f32 %v8372, 0.0
      %v8387 = vadd.f32 %v8385, 0.0
      %v8388 = vld [vmem:[%s25 + $0x8] sm:$0xff]
      %v8389 = vld [vmem:[%s25 + $0x28] sm:$0xff]
      %v8390 = vunpack.c.l.bf16 %v8388
      %v8391 = vunpack.c.h.bf16 %v8388
      %v8392 = vunpack.c.l.bf16 %v8389
      %v8393 = vunpack.c.h.bf16 %v8389
      %v8394 = vmul.f32 %v8137, %v8390
      %v8395 = vmul.f32 %v8137, %v8391
      %v8396 = vmul.f32 %v8138, %v8392
      %v8397 = vmul.f32 %v8138, %v8393
      %v8398 = vadd.f32 %v8394, %v8396
      %v8399 = vrot.slane %v8398, 4
      %v8400 = vadd.f32 %v8398, %v8399
      %v8401 = vrot.slane %v8400, 2
      %v8402 = vadd.f32 %v8400, %v8401
      %v8403 = vrot.slane %v8402, 1
      %v8404 = vadd.f32 %v8402, %v8403
      %v8405 = vadd.f32 %v8395, %v8397
      %v8406 = vrot.slane %v8405, 4
      %v8407 = vadd.f32 %v8405, %v8406
      %v8408 = vrot.slane %v8407, 2
      %v8409 = vadd.f32 %v8407, %v8408
      %v8410 = vrot.slane %v8409, 1
      %v8411 = vadd.f32 %v8409, %v8410
      %v8412 = vadd.f32 %v8386, %v8404
      %v8413 = vadd.f32 %v8387, %v8411
      %v8414 = vld [vmem:[%s26 + $0x4] sm:$0xf]
      %v8415 = vunpack.c.l.bf16 %v8414
      %8417 = vst [vmem:[#allocation1] ss:$2 sm:$0xff] %v8415
      %v8418 = vld.sshfl [vmem:[#allocation1] sm:$0xff pattern:$0x75316420]
      %v8419 = vld.sshfl [vmem:[#allocation1 + $0x8] sm:$0xff pattern:$0x75316420]
      %v8422 = vmul.f32 %v8199, %v8418
      %v8423 = vmul.f32 %v8199, %v8419
      %v8424 = vsel %vm1274, %v8422, 0.0
      %v8425 = vrot.slane %v8424, 4
      %v8426 = vadd.f32 %v8424, %v8425
      %v8427 = vrot.slane %v8426, 2
      %v8428 = vadd.f32 %v8426, %v8427
      %v8429 = vrot.slane %v8428, 1
      %v8430 = vadd.f32 %v8428, %v8429
      %v8431 = vsel %vm1274, %v8423, 0.0
      %v8432 = vrot.slane %v8431, 4
      %v8433 = vadd.f32 %v8431, %v8432
      %v8434 = vrot.slane %v8433, 2
      %v8435 = vadd.f32 %v8433, %v8434
      %v8436 = vrot.slane %v8435, 1
      %v8437 = vadd.f32 %v8435, %v8436
      %v8438 = vadd.f32 %v8412, %v8430
      %v8439 = vadd.f32 %v8413, %v8437
      %v8440 = vld [vmem:[%s24 + $0x10] sm:$0xff]
      %v8441 = vld [vmem:[%s24 + $0x30] sm:$0xff]
      %v8442 = vld [vmem:[%s24 + $0x50] sm:$0xff]
      %v8443 = vld [vmem:[%s24 + $0x70] sm:$0xff]
      %v8444 = vld [vmem:[%s24 + $0x90] sm:$0xff]
      %v8445 = vld [vmem:[%s24 + $0xb0] sm:$0xff]
      %v8446 = vld [vmem:[%s24 + $0xd0] sm:$0xff]
      %v8447 = vld [vmem:[%s24 + $0xf0] sm:$0xff]
      %v8448 = vunpack.c.l.bf16 %v8440
      %v8449 = vunpack.c.h.bf16 %v8440
      %v8450 = vunpack.c.l.bf16 %v8441
      %v8451 = vunpack.c.h.bf16 %v8441
      %v8452 = vunpack.c.l.bf16 %v8442
      %v8453 = vunpack.c.h.bf16 %v8442
      %v8454 = vunpack.c.l.bf16 %v8443
      %v8455 = vunpack.c.h.bf16 %v8443
      %v8456 = vunpack.c.l.bf16 %v8444
      %v8457 = vunpack.c.h.bf16 %v8444
      %v8458 = vunpack.c.l.bf16 %v8445
      %v8459 = vunpack.c.h.bf16 %v8445
      %v8460 = vunpack.c.l.bf16 %v8446
      %v8461 = vunpack.c.h.bf16 %v8446
      %v8462 = vunpack.c.l.bf16 %v8447
      %v8463 = vunpack.c.h.bf16 %v8447
      %v8464 = vmul.f32 %v8011, %v8448
      %v8465 = vmul.f32 %v8011, %v8449
      %v8466 = vmul.f32 %v8012, %v8450
      %v8467 = vmul.f32 %v8012, %v8451
      %v8468 = vmul.f32 %v8013, %v8452
      %v8469 = vmul.f32 %v8013, %v8453
      %v8470 = vmul.f32 %v8014, %v8454
      %v8471 = vmul.f32 %v8014, %v8455
      %v8472 = vmul.f32 %v8015, %v8456
      %v8473 = vmul.f32 %v8015, %v8457
      %v8474 = vmul.f32 %v8016, %v8458
      %v8475 = vmul.f32 %v8016, %v8459
      %v8476 = vmul.f32 %v8017, %v8460
      %v8477 = vmul.f32 %v8017, %v8461
      %v8478 = vmul.f32 %v8018, %v8462
      %v8479 = vmul.f32 %v8018, %v8463
      %v8480 = vadd.f32 %v8464, %v8466
      %v8481 = vadd.f32 %v8480, %v8468
      %v8482 = vadd.f32 %v8481, %v8470
      %v8483 = vadd.f32 %v8482, %v8472
      %v8484 = vadd.f32 %v8483, %v8474
      %v8485 = vadd.f32 %v8484, %v8476
      %v8486 = vadd.f32 %v8485, %v8478
      %v8487 = vrot.slane %v8486, 4
      %v8488 = vadd.f32 %v8486, %v8487
      %v8489 = vrot.slane %v8488, 2
      %v8490 = vadd.f32 %v8488, %v8489
      %v8491 = vrot.slane %v8490, 1
      %v8492 = vadd.f32 %v8490, %v8491
      %v8493 = vadd.f32 %v8465, %v8467
      %v8494 = vadd.f32 %v8493, %v8469
      %v8495 = vadd.f32 %v8494, %v8471
      %v8496 = vadd.f32 %v8495, %v8473
      %v8497 = vadd.f32 %v8496, %v8475
      %v8498 = vadd.f32 %v8497, %v8477
      %v8499 = vadd.f32 %v8498, %v8479
      %v8500 = vrot.slane %v8499, 4
      %v8501 = vadd.f32 %v8499, %v8500
      %v8502 = vrot.slane %v8501, 2
      %v8503 = vadd.f32 %v8501, %v8502
      %v8504 = vrot.slane %v8503, 1
      %v8505 = vadd.f32 %v8503, %v8504
      %v8506 = vadd.f32 %v8492, 0.0
      %v8507 = vadd.f32 %v8505, 0.0
      %v8508 = vld [vmem:[%s25 + $0x10] sm:$0xff]
      %v8509 = vld [vmem:[%s25 + $0x30] sm:$0xff]
      %v8510 = vunpack.c.l.bf16 %v8508
      %v8511 = vunpack.c.h.bf16 %v8508
      %v8512 = vunpack.c.l.bf16 %v8509
      %v8513 = vunpack.c.h.bf16 %v8509
      %v8514 = vmul.f32 %v8137, %v8510
      %v8515 = vmul.f32 %v8137, %v8511
      %v8516 = vmul.f32 %v8138, %v8512
      %v8517 = vmul.f32 %v8138, %v8513
      %v8518 = vadd.f32 %v8514, %v8516
      %v8519 = vrot.slane %v8518, 4
      %v8520 = vadd.f32 %v8518, %v8519
      %v8521 = vrot.slane %v8520, 2
      %v8522 = vadd.f32 %v8520, %v8521
      %v8523 = vrot.slane %v8522, 1
      %v8524 = vadd.f32 %v8522, %v8523
      %v8525 = vadd.f32 %v8515, %v8517
      %v8526 = vrot.slane %v8525, 4
      %v8527 = vadd.f32 %v8525, %v8526
      %v8528 = vrot.slane %v8527, 2
      %v8529 = vadd.f32 %v8527, %v8528
      %v8530 = vrot.slane %v8529, 1
      %v8531 = vadd.f32 %v8529, %v8530
      %v8532 = vadd.f32 %v8506, %v8524
      %v8533 = vadd.f32 %v8507, %v8531
      %v8534 = vld [vmem:[%s26 + $0x8] sm:$0xf]
      %v8535 = vunpack.c.l.bf16 %v8534
      %8537 = vst [vmem:[#allocation1] ss:$2 sm:$0xff] %v8535
      %v8538 = vld.sshfl [vmem:[#allocation1] sm:$0xff pattern:$0x75316420]
      %v8539 = vld.sshfl [vmem:[#allocation1 + $0x8] sm:$0xff pattern:$0x75316420]
      %v8542 = vmul.f32 %v8199, %v8538
      %v8543 = vmul.f32 %v8199, %v8539
      %v8544 = vsel %vm1274, %v8542, 0.0
      %v8545 = vrot.slane %v8544, 4
      %v8546 = vadd.f32 %v8544, %v8545
      %v8547 = vrot.slane %v8546, 2
      %v8548 = vadd.f32 %v8546, %v8547
      %v8549 = vrot.slane %v8548, 1
      %v8550 = vadd.f32 %v8548, %v8549
      %v8551 = vsel %vm1274, %v8543, 0.0
      %v8552 = vrot.slane %v8551, 4
      %v8553 = vadd.f32 %v8551, %v8552
      %v8554 = vrot.slane %v8553, 2
      %v8555 = vadd.f32 %v8553, %v8554
      %v8556 = vrot.slane %v8555, 1
      %v8557 = vadd.f32 %v8555, %v8556
      %v8558 = vadd.f32 %v8532, %v8550
      %v8559 = vadd.f32 %v8533, %v8557
      %v8560 = vld [vmem:[%s24 + $0x18] sm:$0xff]
      %v8561 = vld [vmem:[%s24 + $0x38] sm:$0xff]
      %v8562 = vld [vmem:[%s24 + $0x58] sm:$0xff]
      %v8563 = vld [vmem:[%s24 + $0x78] sm:$0xff]
      %v8564 = vld [vmem:[%s24 + $0x98] sm:$0xff]
      %v8565 = vld [vmem:[%s24 + $0xb8] sm:$0xff]
      %v8566 = vld [vmem:[%s24 + $0xd8] sm:$0xff]
      %v8567 = vld [vmem:[%s24 + $0xf8] sm:$0xff]
      %v8568 = vunpack.c.l.bf16 %v8560
      %v8569 = vunpack.c.h.bf16 %v8560
      %v8570 = vunpack.c.l.bf16 %v8561
      %v8571 = vunpack.c.h.bf16 %v8561
      %v8572 = vunpack.c.l.bf16 %v8562
      %v8573 = vunpack.c.h.bf16 %v8562
      %v8574 = vunpack.c.l.bf16 %v8563
      %v8575 = vunpack.c.h.bf16 %v8563
      %v8576 = vunpack.c.l.bf16 %v8564
      %v8577 = vunpack.c.h.bf16 %v8564
      %v8578 = vunpack.c.l.bf16 %v8565
      %v8579 = vunpack.c.h.bf16 %v8565
      %v8580 = vunpack.c.l.bf16 %v8566
      %v8581 = vunpack.c.h.bf16 %v8566
      %v8582 = vunpack.c.l.bf16 %v8567
      %v8583 = vunpack.c.h.bf16 %v8567
      %v8584 = vmul.f32 %v8011, %v8568
      %v8585 = vmul.f32 %v8011, %v8569
      %v8586 = vmul.f32 %v8012, %v8570
      %v8587 = vmul.f32 %v8012, %v8571
      %v8588 = vmul.f32 %v8013, %v8572
      %v8589 = vmul.f32 %v8013, %v8573
      %v8590 = vmul.f32 %v8014, %v8574
      %v8591 = vmul.f32 %v8014, %v8575
      %v8592 = vmul.f32 %v8015, %v8576
      %v8593 = vmul.f32 %v8015, %v8577
      %v8594 = vmul.f32 %v8016, %v8578
      %v8595 = vmul.f32 %v8016, %v8579
      %v8596 = vmul.f32 %v8017, %v8580
      %v8597 = vmul.f32 %v8017, %v8581
      %v8598 = vmul.f32 %v8018, %v8582
      %v8599 = vmul.f32 %v8018, %v8583
      %v8600 = vadd.f32 %v8584, %v8586
      %v8601 = vadd.f32 %v8600, %v8588
      %v8602 = vadd.f32 %v8601, %v8590
      %v8603 = vadd.f32 %v8602, %v8592
      %v8604 = vadd.f32 %v8603, %v8594
      %v8605 = vadd.f32 %v8604, %v8596
      %v8606 = vadd.f32 %v8605, %v8598
      %v8607 = vrot.slane %v8606, 4
      %v8608 = vadd.f32 %v8606, %v8607
      %v8609 = vrot.slane %v8608, 2
      %v8610 = vadd.f32 %v8608, %v8609
      %v8611 = vrot.slane %v8610, 1
      %v8612 = vadd.f32 %v8610, %v8611
      %v8613 = vadd.f32 %v8585, %v8587
      %v8614 = vadd.f32 %v8613, %v8589
      %v8615 = vadd.f32 %v8614, %v8591
      %v8616 = vadd.f32 %v8615, %v8593
      %v8617 = vadd.f32 %v8616, %v8595
      %v8618 = vadd.f32 %v8617, %v8597
      %v8619 = vadd.f32 %v8618, %v8599
      %v8620 = vrot.slane %v8619, 4
      %v8621 = vadd.f32 %v8619, %v8620
      %v8622 = vrot.slane %v8621, 2
      %v8623 = vadd.f32 %v8621, %v8622
      %v8624 = vrot.slane %v8623, 1
      %v8625 = vadd.f32 %v8623, %v8624
      %v8626 = vadd.f32 %v8612, 0.0
      %v8627 = vadd.f32 %v8625, 0.0
      %v8628 = vld [vmem:[%s25 + $0x18] sm:$0xff]
      %v8629 = vld [vmem:[%s25 + $0x38] sm:$0xff]
      %v8630 = vunpack.c.l.bf16 %v8628
      %v8631 = vunpack.c.h.bf16 %v8628
      %v8632 = vunpack.c.l.bf16 %v8629
      %v8633 = vunpack.c.h.bf16 %v8629
      %v8634 = vmul.f32 %v8137, %v8630
      %v8635 = vmul.f32 %v8137, %v8631
      %v8636 = vmul.f32 %v8138, %v8632
      %v8637 = vmul.f32 %v8138, %v8633
      %v8638 = vadd.f32 %v8634, %v8636
      %v8639 = vrot.slane %v8638, 4
      %v8640 = vadd.f32 %v8638, %v8639
      %v8641 = vrot.slane %v8640, 2
      %v8642 = vadd.f32 %v8640, %v8641
      %v8643 = vrot.slane %v8642, 1
      %v8644 = vadd.f32 %v8642, %v8643
      %v8645 = vadd.f32 %v8635, %v8637
      %v8646 = vrot.slane %v8645, 4
      %v8647 = vadd.f32 %v8645, %v8646
      %v8648 = vrot.slane %v8647, 2
      %v8649 = vadd.f32 %v8647, %v8648
      %v8650 = vrot.slane %v8649, 1
      %v8651 = vadd.f32 %v8649, %v8650
      %v8652 = vadd.f32 %v8626, %v8644
      %v8653 = vadd.f32 %v8627, %v8651
      %v8654 = vld [vmem:[%s26 + $0xc] sm:$0xf]
      %v8655 = vunpack.c.l.bf16 %v8654
      %8657 = vst [vmem:[#allocation1] ss:$2 sm:$0xff] %v8655
      %v8658 = vld.sshfl [vmem:[#allocation1] sm:$0xff pattern:$0x75316420]
      %v8659 = vld.sshfl [vmem:[#allocation1 + $0x8] sm:$0xff pattern:$0x75316420]
      %v8662 = vmul.f32 %v8199, %v8658
      %v8663 = vmul.f32 %v8199, %v8659
      %v8664 = vsel %vm1274, %v8662, 0.0
      %v8665 = vrot.slane %v8664, 4
      %v8666 = vadd.f32 %v8664, %v8665
      %v8667 = vrot.slane %v8666, 2
      %v8668 = vadd.f32 %v8666, %v8667
      %v8669 = vrot.slane %v8668, 1
      %v8670 = vadd.f32 %v8668, %v8669
      %v8671 = vsel %vm1274, %v8663, 0.0
      %v8672 = vrot.slane %v8671, 4
      %v8673 = vadd.f32 %v8671, %v8672
      %v8674 = vrot.slane %v8673, 2
      %v8675 = vadd.f32 %v8673, %v8674
      %v8676 = vrot.slane %v8675, 1
      %v8677 = vadd.f32 %v8675, %v8676
      %v8678 = vadd.f32 %v8652, %v8670
      %v8679 = vadd.f32 %v8653, %v8677
      %v8688 = vrot.slane %v8319, 7
      %v8689 = vrot.slane %v8438, 6
      %v8690 = vrot.slane %v8439, 5
      %v8691 = vrot.slane %v8558, 4
      %v8692 = vrot.slane %v8559, 3
      %v8693 = vrot.slane %v8678, 2
      %v8694 = vrot.slane %v8679, 1
      %vm8695 = vcmask 1040384
      %v8696 = vsel %vm8695, %v8318, %v8688
      %vm8697 = vcmask 1042434
      %v8698 = vsel %vm8697, %v8689, %v8690
      %v8699 = vsel %vm4704, %v8696, %v8698
      %vm8700 = vcmask 1044484
      %v8701 = vsel %vm8700, %v8691, %v8692
      %vm8702 = vcmask 1046534
      %v8703 = vsel %vm8702, %v8693, %v8694
      %vm8704 = vcmask 1045508
      %v8705 = vsel %vm8704, %v8701, %v8703
      %v8706 = vsel %vm1274, %v8699, %v8705
      %8708 = vst [vmem:[%s816] sm:$0xff] %v8706
      %p8709 = scmp.lt.s32.totalorder %s38, 1
      %s8710 = scalar_select %p8709, %s38, 1
      %s8711 = smul.addr %s8710, 8
      %s8712 = scalar_lea.vmem %s27, %s8711
      // Predicated region
      $region129: #{recontrast_forward.1} parent=127 // pred_check
        %p8713 = pneg %p628
      $region130: #{recontrast_forward.1} parent=127 // pred_check_branch
        %8715 = sbr.rel (%p8713) target = $region132
      $region131: #{recontrast_forward.1} parent=127 // pred_region
        _
      $region132: #{recontrast_forward.1} parent=127 // pred_fallthru
        _
    $region128: #{recontrast_forward.1} parent=5 // pred_fallthru
      _
    %p8716 = scmp.le.s32.totalorder 2, %s33
    // Predicated region
    $region133: #{recontrast_forward.1} parent=5 // pred_check
      %p8717 = pneg %p8716
    $region134: #{recontrast_forward.1} parent=5 // pred_check_branch
      %8719 = sbr.rel (%p8717) target = $region136
    $region135: #{recontrast_forward.1} parent=5 // pred_region
      %s8720 = ssub.s32 %s33, 2
      // Predicated region
      $region137: #{recontrast_forward.1} parent=135 // pred_check
        %p8721 = pneg %p634
      $region138: #{recontrast_forward.1} parent=135 // pred_check_branch
        %8723 = sbr.rel (%p8721) target = $region140
      $region139: #{recontrast_forward.1} parent=135 // pred_region
        %p8724 = scmp.lt.s32.totalorder %s39, 1
        %s8725 = scalar_select %p8724, %s39, 1
        %s8726 = smul.addr %s8725, 8
        %s8727 = scalar_lea.vmem %s27, %s8726
      $region140: #{recontrast_forward.1} parent=135 // pred_fallthru
        _
    $region136: #{recontrast_forward.1} parent=5 // pred_fallthru
      _
  $region6: #{recontrast_forward.1} parent=0 // loop_footer
    %s37 = sadd.s32 1, %s33
  $region7: #{recontrast_forward.1} parent=0 // loop_footer_branch
    %32 = sbr.rel target = $region3
  $region8: #{recontrast_forward.1} parent=0 // loop_exit
    _

</llo_original>
